<compile_context>
chip_gen: v7x
topology: tpu7x:2x2x1
jax: 0.10.0
libtpu: 0.0.40
codegen_flags: <defaults>
</compile_context>

<pallas_src>
import jax
import jax.numpy as jnp
from jax import lax
from jax.experimental import pallas as pl
from jax.experimental.pallas import tpu as pltpu

LRN_SIZE = 3
LRN_ALPHA = 5e-5
LRN_BETA = 0.75   # applied as x**(-0.75) == rsqrt(x * sqrt(x))  (EUP only)
LRN_K = 1.0

CP = 128          # lane-dense padded channel count (Cout=64 zero-padded to 128)


def _fused_conv_lrn_pool_kernel(x_ref, w_ref, b_ref, o_ref, rm_ref):
    """One (batch, pooled-row band) grid step.

    x_ref : (RIN, W, KW*Cin)  width-im2col'd padded input rows for this band
    w_ref : (KH, KW*Cin, CP)  conv weights, output channels zero-padded to 128
    b_ref : (1, CP)           bias, zero-padded to 128
    o_ref : (TH, OW, CP)      pooled output band (lane-dense block store)
    rm_ref: (TH, W, CP)       VMEM scratch: row-pooled (pre column-pool) activation
    """
    RIN, W, KWC = x_ref.shape
    KH = w_ref.shape[0]
    TH, OW, _ = o_ref.shape
    RC = RIN - (KH - 1)                  # conv rows produced in this band (= 2*TH + 1)

    x = x_ref[...]
    w = w_ref[...]

    # ---- Conv2d as KH row-shifted MXU matmuls over K = KW*Cin (no HBM im2col).
    # Each tap reuses the same thin input slab shifted by one row, so HBM traffic
    # stays at ~5x the tiny 3-channel input instead of a 25x full im2col.
    def band_dot(kh):
        slab = x[kh:kh + RC].reshape(RC * W, KWC)
        return jnp.dot(slab, w[kh], preferred_element_type=jnp.float32,
                       precision=lax.Precision.HIGHEST)

    acc = band_dot(0)
    for kh in range(1, KH):
        acc = acc + band_dot(kh)

    # ---- bias + ReLU (VPU) ----
    y = jnp.maximum(acc + b_ref[...], 0.0)

    # ---- LocalResponseNorm(size=3): 3-tap cross-channel sum of squares.
    # Channels 64..127 are exact zeros (zero weights & bias), so the lanes that
    # wrap around in the rolls contribute zero -> no edge masks needed.  Rolls run
    # on the XLU (separate issue slot) instead of burning MXU MACs on a band matmul.
    sq = y * y
    s = sq + pltpu.roll(sq, shift=1, axis=1) + pltpu.roll(sq, shift=CP - 1, axis=1)
    base = LRN_K + (LRN_ALPHA / LRN_SIZE) * s
    y = y * lax.rsqrt(base * jnp.sqrt(base))          # y * base**(-0.75), EUP only

    # ---- MaxPool2d(3, stride=2), fully vectorized (no per-window stores) ----
    y3 = y.reshape(RC, W, CP)
    ra = y3[0:2 * TH].reshape(TH, 2, W, CP)           # rows 2r, 2r+1
    rb = y3[1:2 * TH + 1].reshape(TH, 2, W, CP)       # rows 2r+1, 2r+2
    rm_ref[...] = jnp.maximum(jnp.maximum(ra[:, 0], ra[:, 1]), rb[:, 1])

    c0 = rm_ref[:, pl.ds(0, OW, 2), :]                # cols 2*ow
    c1 = rm_ref[:, pl.ds(1, OW, 2), :]                # cols 2*ow + 1
    c2 = rm_ref[:, pl.ds(2, OW, 2), :]                # cols 2*ow + 2
    o_ref[...] = jnp.maximum(jnp.maximum(c0, c1), c2)  # single lane-dense block store


def net_exit2_part1l_forward(x_nchw, w_hwio, bias, *, block_rows=16):
    """x_nchw: (N, 3, H, W); w_hwio: (5, 5, 3, 64); bias: (64,). Returns NCHW."""
    N, Cin, H, W = x_nchw.shape
    KH, KW, _, Cout = w_hwio.shape
    assert Cout <= CP and H >= 3 and W >= 3
    pad = KH // 2

    OH = (H - 3) // 2 + 1
    OW = (W - 3) // 2 + 1

    TH = min(OH, block_rows)             # pooled rows per band (biggest that fits VMEM)
    T = pl.cdiv(OH, TH)                  # number of row bands (grid axis 1)
    RC = 2 * TH + 1                      # conv rows per band
    RIN = RC + (KH - 1)                  # input rows per band (with conv halo)

    # NCHW -> NHWC, spatial zero padding for the conv.
    x = jnp.transpose(x_nchw, (0, 2, 3, 1)).astype(jnp.float32)
    xp = jnp.pad(x, ((0, 0), (pad, pad), (pad, pad), (0, 0)))

    # Width-only im2col: (N, H+2p, W, KW*Cin).  5x the tiny 3-channel input
    # (not the 25x full im2col); the kh taps become shifted matmuls in the kernel.
    xrp = jnp.concatenate([xp[:, :, kw:kw + W, :] for kw in range(KW)], axis=-1)

    # Ensure every band (incl. the OH-padding band) has valid input rows.
    rows_needed = 2 * TH * (T - 1) + RIN
    if rows_needed > xrp.shape[1]:
        xrp = jnp.pad(xrp, ((0, 0), (0, rows_needed - xrp.shape[1]), (0, 0), (0, 0)))

    # Overlapping per-band slabs; halo rows are duplicated host-side so the
    # kernel's BlockSpec blocks are plain, non-overlapping tiles.
    x_bands = jnp.stack([xrp[:, 2 * TH * t: 2 * TH * t + RIN] for t in range(T)], axis=1)

    # Weights/bias: flatten (kw, cin) -> K, zero-pad Cout -> 128 lanes.
    w_mat = jnp.pad(w_hwio.reshape(KH, KW * Cin, Cout).astype(jnp.float32),
                    ((0, 0), (0, 0), (0, CP - Cout)))
    b_mat = jnp.pad(bias.reshape(1, Cout).astype(jnp.float32),
                    ((0, 0), (0, CP - Cout)))

    out = pl.pallas_call(
        _fused_conv_lrn_pool_kernel,
        out_shape=jax.ShapeDtypeStruct((N, T, TH, OW, CP), jnp.float32),
        grid_spec=pltpu.PrefetchScalarGridSpec(
            num_scalar_prefetch=0,
            grid=(N, T),
            in_specs=[
                pl.BlockSpec((None, None, RIN, W, KW * Cin),
                             lambda n, t: (n, t, 0, 0, 0)),
                pl.BlockSpec((KH, KW * Cin, CP), lambda n, t: (0, 0, 0)),
                pl.BlockSpec((1, CP), lambda n, t: (0, 0)),
            ],
            out_specs=pl.BlockSpec((None, None, TH, OW, CP),
                                   lambda n, t: (n, t, 0, 0, 0)),
            scratch_shapes=[pltpu.VMEM((TH, W, CP), jnp.float32)],
        ),
        compiler_params=pltpu.CompilerParams(
            dimension_semantics=("parallel", "parallel"),
            vmem_limit_bytes=32 * 1024 * 1024,
        ),
    )(x_bands, w_mat, b_mat)

    pooled = out.reshape(N, T * TH, OW, CP)[:, :OH, :, :Cout]
    return jnp.transpose(pooled, (0, 3, 1, 2))          # -> NCHW


def reference_forward(x_nchw, w_hwio, bias):
    """Pure-JAX reference mirroring the PyTorch module semantics."""
    w_oihw = jnp.transpose(w_hwio, (3, 2, 0, 1))
    y = lax.conv_general_dilated(
        x_nchw.astype(jnp.float32), w_oihw.astype(jnp.float32),
        window_strides=(1, 1), padding=((2, 2), (2, 2)),
        dimension_numbers=("NCHW", "OIHW", "NCHW"),
        precision=lax.Precision.HIGHEST)
    y = y + bias.reshape(1, -1, 1, 1)
    y = jnp.maximum(y, 0.0)
    sq = y * y
    C = y.shape[1]
    spad = jnp.pad(sq, ((0, 0), (1, 1), (0, 0), (0, 0)))
    s = spad[:, 0:C] + spad[:, 1:C + 1] + spad[:, 2:C + 2]
    y = y / jnp.power(LRN_K + (LRN_ALPHA / LRN_SIZE) * s, LRN_BETA)
    return lax.reduce_window(y, -jnp.inf, lax.max,
                             (1, 1, 3, 3), (1, 1, 2, 2), "VALID")


if __name__ == "__main__":
    key = jax.random.PRNGKey(0)
    kx, kw, kb = jax.random.split(key, 3)

    N, Cin, H, W = 2, 3, 16, 16
    Cout, KH, KW = 64, 5, 5

    x = jax.random.normal(kx, (N, Cin, H, W), jnp.float32)
    w = jax.random.normal(kw, (KH, KW, Cin, Cout), jnp.float32) * 0.1
    b = jax.random.normal(kb, (Cout,), jnp.float32) * 0.1

    out = net_exit2_part1l_forward(x, w, b)
    out = jax.block_until_ready(out)

    ref = reference_forward(x, w, b)
    assert out.shape == ref.shape == (N, Cout, 7, 7), out.shape
    if not jnp.allclose(out, ref, atol=1e-4, rtol=1e-4):
        raise AssertionError("Pallas output does not match JAX reference")
    print("KERNEL_OK")
</pallas_src>

<mosaic_0001>
module attributes {stable_mosaic.version = 11 : i64} {
  func.func @_fused_conv_lrn_pool_kernel(%arg0: i32, %arg1: i32, %arg2: memref<1x1x19x16x15xf32, #tpu.memory_space<vmem>>, %arg3: memref<5x15x128xf32, #tpu.memory_space<vmem>>, %arg4: memref<1x128xf32, #tpu.memory_space<vmem>>, %arg5: memref<1x1x7x7x128xf32, #tpu.memory_space<vmem>>, %arg6: memref<7x16x128xf32, #tpu.memory_space<vmem>>) attributes {dimension_semantics = [#tpu.dimension_semantics<parallel>, #tpu.dimension_semantics<parallel>], iteration_bounds = array<i64: 2, 1>, scalar_prefetch = 0 : i64, scratch_operands = 1 : i64, tpu.core_type = #tpu.core_type<tc>, window_params = [{transform_indices = @transform_0, window_bounds = array<i64: 1, 1, 19, 16, 15>}, {pipeline_mode = #tpu.pipeline_mode<synchronous>, transform_indices = @transform_1, window_bounds = array<i64: 5, 15, 128>}, {pipeline_mode = #tpu.pipeline_mode<synchronous>, transform_indices = @transform_2, window_bounds = array<i64: 1, 128>}, {transform_indices = @transform_3, window_bounds = array<i64: 1, 1, 7, 7, 128>}]} {
    %c0 = arith.constant 0 : index
    %c0_0 = arith.constant 0 : index
    %c0_1 = arith.constant 0 : index
    %c0_2 = arith.constant 0 : index
    %c0_3 = arith.constant 0 : index
    %0 = vector.load %arg2[%c0, %c0_0, %c0_1, %c0_2, %c0_3] : memref<1x1x19x16x15xf32, #tpu.memory_space<vmem>>, vector<1x1x19x16x15xf32>
    %1 = vector.shape_cast %0 : vector<1x1x19x16x15xf32> to vector<19x16x15xf32>
    %c0_4 = arith.constant 0 : index
    %c0_5 = arith.constant 0 : index
    %c0_6 = arith.constant 0 : index
    %2 = vector.load %arg3[%c0_4, %c0_5, %c0_6] : memref<5x15x128xf32, #tpu.memory_space<vmem>>, vector<5x15x128xf32>
    %3 = vector.extract_strided_slice %1 {offsets = [0, 0, 0], sizes = [15, 16, 15], strides = [1, 1, 1]} : vector<19x16x15xf32> to vector<15x16x15xf32>
    %4 = vector.shape_cast %3 : vector<15x16x15xf32> to vector<240x15xf32>
    %5 = vector.extract_strided_slice %2 {offsets = [0, 0, 0], sizes = [1, 15, 128], strides = [1, 1, 1]} : vector<5x15x128xf32> to vector<1x15x128xf32>
    %6 = vector.shape_cast %5 : vector<1x15x128xf32> to vector<15x128xf32>
    %cst = arith.constant dense<0.000000e+00> : vector<240x128xf32>
    %7 = tpu.matmul %4, %6, %cst {dimension_numbers = #tpu.dot_dimension_numbers<[1], [0], [0], [1], [0, 0, 1, 1], [], []>, precision = #tpu.contract_precision<fp32>} : vector<240x15xf32>, vector<15x128xf32>, vector<240x128xf32> -> vector<240x128xf32>
    %8 = vector.extract_strided_slice %1 {offsets = [1, 0, 0], sizes = [15, 16, 15], strides = [1, 1, 1]} : vector<19x16x15xf32> to vector<15x16x15xf32>
    %9 = vector.shape_cast %8 : vector<15x16x15xf32> to vector<240x15xf32>
    %10 = vector.extract_strided_slice %2 {offsets = [1, 0, 0], sizes = [1, 15, 128], strides = [1, 1, 1]} : vector<5x15x128xf32> to vector<1x15x128xf32>
    %11 = vector.shape_cast %10 : vector<1x15x128xf32> to vector<15x128xf32>
    %cst_7 = arith.constant dense<0.000000e+00> : vector<240x128xf32>
    %12 = tpu.matmul %9, %11, %cst_7 {dimension_numbers = #tpu.dot_dimension_numbers<[1], [0], [0], [1], [0, 0, 1, 1], [], []>, precision = #tpu.contract_precision<fp32>} : vector<240x15xf32>, vector<15x128xf32>, vector<240x128xf32> -> vector<240x128xf32>
    %13 = arith.addf %7, %12 : vector<240x128xf32>
    %14 = vector.extract_strided_slice %1 {offsets = [2, 0, 0], sizes = [15, 16, 15], strides = [1, 1, 1]} : vector<19x16x15xf32> to vector<15x16x15xf32>
    %15 = vector.shape_cast %14 : vector<15x16x15xf32> to vector<240x15xf32>
    %16 = vector.extract_strided_slice %2 {offsets = [2, 0, 0], sizes = [1, 15, 128], strides = [1, 1, 1]} : vector<5x15x128xf32> to vector<1x15x128xf32>
    %17 = vector.shape_cast %16 : vector<1x15x128xf32> to vector<15x128xf32>
    %cst_8 = arith.constant dense<0.000000e+00> : vector<240x128xf32>
    %18 = tpu.matmul %15, %17, %cst_8 {dimension_numbers = #tpu.dot_dimension_numbers<[1], [0], [0], [1], [0, 0, 1, 1], [], []>, precision = #tpu.contract_precision<fp32>} : vector<240x15xf32>, vector<15x128xf32>, vector<240x128xf32> -> vector<240x128xf32>
    %19 = arith.addf %13, %18 : vector<240x128xf32>
    %20 = vector.extract_strided_slice %1 {offsets = [3, 0, 0], sizes = [15, 16, 15], strides = [1, 1, 1]} : vector<19x16x15xf32> to vector<15x16x15xf32>
    %21 = vector.shape_cast %20 : vector<15x16x15xf32> to vector<240x15xf32>
    %22 = vector.extract_strided_slice %2 {offsets = [3, 0, 0], sizes = [1, 15, 128], strides = [1, 1, 1]} : vector<5x15x128xf32> to vector<1x15x128xf32>
    %23 = vector.shape_cast %22 : vector<1x15x128xf32> to vector<15x128xf32>
    %cst_9 = arith.constant dense<0.000000e+00> : vector<240x128xf32>
    %24 = tpu.matmul %21, %23, %cst_9 {dimension_numbers = #tpu.dot_dimension_numbers<[1], [0], [0], [1], [0, 0, 1, 1], [], []>, precision = #tpu.contract_precision<fp32>} : vector<240x15xf32>, vector<15x128xf32>, vector<240x128xf32> -> vector<240x128xf32>
    %25 = arith.addf %19, %24 : vector<240x128xf32>
    %26 = vector.extract_strided_slice %1 {offsets = [4, 0, 0], sizes = [15, 16, 15], strides = [1, 1, 1]} : vector<19x16x15xf32> to vector<15x16x15xf32>
    %27 = vector.shape_cast %26 : vector<15x16x15xf32> to vector<240x15xf32>
    %28 = vector.extract_strided_slice %2 {offsets = [4, 0, 0], sizes = [1, 15, 128], strides = [1, 1, 1]} : vector<5x15x128xf32> to vector<1x15x128xf32>
    %29 = vector.shape_cast %28 : vector<1x15x128xf32> to vector<15x128xf32>
    %cst_10 = arith.constant dense<0.000000e+00> : vector<240x128xf32>
    %30 = tpu.matmul %27, %29, %cst_10 {dimension_numbers = #tpu.dot_dimension_numbers<[1], [0], [0], [1], [0, 0, 1, 1], [], []>, precision = #tpu.contract_precision<fp32>} : vector<240x15xf32>, vector<15x128xf32>, vector<240x128xf32> -> vector<240x128xf32>
    %31 = arith.addf %25, %30 : vector<240x128xf32>
    %c0_11 = arith.constant 0 : index
    %c0_12 = arith.constant 0 : index
    %32 = vector.load %arg4[%c0_11, %c0_12] : memref<1x128xf32, #tpu.memory_space<vmem>>, vector<1x128xf32>
    %33 = vector.broadcast %32 : vector<1x128xf32> to vector<240x128xf32>
    %34 = arith.addf %31, %33 : vector<240x128xf32>
    %cst_13 = arith.constant 0.000000e+00 : f32
    %35 = vector.broadcast %cst_13 : f32 to vector<240x128xf32>
    %36 = arith.maximumf %34, %35 : vector<240x128xf32>
    %37 = arith.mulf %36, %36 : vector<240x128xf32>
    %c1_i32 = arith.constant 1 : i32
    %38 = tpu.dynamic_rotate %37 by %c1_i32 dim 1 : vector<240x128xf32>, i32 -> vector<240x128xf32>
    %39 = arith.addf %37, %38 : vector<240x128xf32>
    %c127_i32 = arith.constant 127 : i32
    %40 = tpu.dynamic_rotate %37 by %c127_i32 dim 1 : vector<240x128xf32>, i32 -> vector<240x128xf32>
    %41 = arith.addf %39, %40 : vector<240x128xf32>
    %cst_14 = arith.constant 1.66666669E-5 : f32
    %42 = vector.broadcast %cst_14 : f32 to vector<240x128xf32>
    %43 = arith.mulf %42, %41 : vector<240x128xf32>
    %cst_15 = arith.constant 1.000000e+00 : f32
    %44 = vector.broadcast %cst_15 : f32 to vector<240x128xf32>
    %45 = arith.addf %44, %43 : vector<240x128xf32>
    %46 = math.sqrt %45 : vector<240x128xf32>
    %47 = arith.mulf %45, %46 : vector<240x128xf32>
    %48 = math.rsqrt %47 : vector<240x128xf32>
    %49 = arith.mulf %36, %48 : vector<240x128xf32>
    %50 = vector.shape_cast %49 : vector<240x128xf32> to vector<15x16x128xf32>
    %51 = vector.extract_strided_slice %50 {offsets = [0, 0, 0], sizes = [14, 16, 128], strides = [1, 1, 1]} : vector<15x16x128xf32> to vector<14x16x128xf32>
    %52 = vector.shape_cast %51 : vector<14x16x128xf32> to vector<7x2x16x128xf32>
    %53 = vector.extract_strided_slice %50 {offsets = [1, 0, 0], sizes = [14, 16, 128], strides = [1, 1, 1]} : vector<15x16x128xf32> to vector<14x16x128xf32>
    %54 = vector.shape_cast %53 : vector<14x16x128xf32> to vector<7x2x16x128xf32>
    %55 = vector.extract_strided_slice %52 {offsets = [0, 0, 0, 0], sizes = [7, 1, 16, 128], strides = [1, 1, 1, 1]} : vector<7x2x16x128xf32> to vector<7x1x16x128xf32>
    %56 = vector.shape_cast %55 : vector<7x1x16x128xf32> to vector<7x16x128xf32>
    %57 = vector.extract_strided_slice %52 {offsets = [0, 1, 0, 0], sizes = [7, 1, 16, 128], strides = [1, 1, 1, 1]} : vector<7x2x16x128xf32> to vector<7x1x16x128xf32>
    %58 = vector.shape_cast %57 : vector<7x1x16x128xf32> to vector<7x16x128xf32>
    %59 = arith.maximumf %56, %58 : vector<7x16x128xf32>
    %60 = vector.extract_strided_slice %54 {offsets = [0, 1, 0, 0], sizes = [7, 1, 16, 128], strides = [1, 1, 1, 1]} : vector<7x2x16x128xf32> to vector<7x1x16x128xf32>
    %61 = vector.shape_cast %60 : vector<7x1x16x128xf32> to vector<7x16x128xf32>
    %62 = arith.maximumf %59, %61 : vector<7x16x128xf32>
    %c0_16 = arith.constant 0 : index
    %c0_17 = arith.constant 0 : index
    %c0_18 = arith.constant 0 : index
    %63 = vector.load %arg6[%c0_16, %c0_17, %c0_18] : memref<7x16x128xf32, #tpu.memory_space<vmem>>, vector<7x16x128xf32>
    tpu.vector_store %arg6[%c0_16, %c0_17, %c0_18], %62 {strides = array<i32>} : memref<7x16x128xf32, #tpu.memory_space<vmem>>, vector<7x16x128xf32>,
    %c0_19 = arith.constant 0 : index
    %c0_20 = arith.constant 0 : index
    %c0_21 = arith.constant 0 : index
    %64 = tpu.strided_load %arg6[%c0_19, %c0_20, %c0_21] {strides = array<i32: 1, 2, 1>} : memref<7x16x128xf32, #tpu.memory_space<vmem>>, vector<7x7x128xf32>
    %c0_22 = arith.constant 0 : index
    %c1 = arith.constant 1 : index
    %c0_23 = arith.constant 0 : index
    %65 = tpu.strided_load %arg6[%c0_22, %c1, %c0_23] {strides = array<i32: 1, 2, 1>} : memref<7x16x128xf32, #tpu.memory_space<vmem>>, vector<7x7x128xf32>
    %c0_24 = arith.constant 0 : index
    %c2 = arith.constant 2 : index
    %c0_25 = arith.constant 0 : index
    %66 = tpu.strided_load %arg6[%c0_24, %c2, %c0_25] {strides = array<i32: 1, 2, 1>} : memref<7x16x128xf32, #tpu.memory_space<vmem>>, vector<7x7x128xf32>
    %67 = arith.maximumf %64, %65 : vector<7x7x128xf32>
    %68 = arith.maximumf %67, %66 : vector<7x7x128xf32>
    %c0_26 = arith.constant 0 : index
    %c0_27 = arith.constant 0 : index
    %c0_28 = arith.constant 0 : index
    %c0_29 = arith.constant 0 : index
    %c0_30 = arith.constant 0 : index
    %69 = vector.load %arg5[%c0_26, %c0_27, %c0_28, %c0_29, %c0_30] : memref<1x1x7x7x128xf32, #tpu.memory_space<vmem>>, vector<1x1x7x7x128xf32>
    %70 = vector.shape_cast %69 : vector<1x1x7x7x128xf32> to vector<7x7x128xf32>
    %71 = vector.shape_cast %68 : vector<7x7x128xf32> to vector<1x1x7x7x128xf32>
    tpu.vector_store %arg5[%c0_26, %c0_27, %c0_28, %c0_29, %c0_30], %71 {strides = array<i32>} : memref<1x1x7x7x128xf32, #tpu.memory_space<vmem>>, vector<1x1x7x7x128xf32>,
    return
  }
  func.func @transform_0(%arg0: i32, %arg1: i32) -> (i32, i32, i32, i32, i32) {
    %c0_i32 = arith.constant 0 : i32
    %c0_i32_0 = arith.constant 0 : i32
    %c0_i32_1 = arith.constant 0 : i32
    %c0_i32_2 = arith.constant 0 : i32
    return %arg0, %arg1, %c0_i32, %c0_i32_0, %c0_i32_1 : i32, i32, i32, i32, i32
  }
  func.func @transform_1(%arg0: i32, %arg1: i32) -> (i32, i32, i32) {
    %c0_i32 = arith.constant 0 : i32
    %c0_i32_0 = arith.constant 0 : i32
    %c0_i32_1 = arith.constant 0 : i32
    %c0_i32_2 = arith.constant 0 : i32
    return %c0_i32, %c0_i32_0, %c0_i32_1 : i32, i32, i32
  }
  func.func @transform_2(%arg0: i32, %arg1: i32) -> (i32, i32) {
    %c0_i32 = arith.constant 0 : i32
    %c0_i32_0 = arith.constant 0 : i32
    %c0_i32_1 = arith.constant 0 : i32
    return %c0_i32, %c0_i32_0 : i32, i32
  }
  func.func @transform_3(%arg0: i32, %arg1: i32) -> (i32, i32, i32, i32, i32) {
    %c0_i32 = arith.constant 0 : i32
    %c0_i32_0 = arith.constant 0 : i32
    %c0_i32_1 = arith.constant 0 : i32
    %c0_i32_2 = arith.constant 0 : i32
    return %arg0, %arg1, %c0_i32, %c0_i32_0, %c0_i32_1 : i32, i32, i32, i32, i32
  }
}

</mosaic_0001>

<llo_original>
// kernel: tpu_custom_call.1
$region0: #{tpu_custom_call.1}
  #allocation0 [shape = 'u32[]', space=smem, size = 0x4, offset = 0x4, fixed_abs, tag = 'smem constant byte address 0x4 - core index']
  #allocation1 [shape = 'u32[144,128]{1,0:T(1,128)}', space=vmem, size = 0x12000, scoped, tag = 'internal scratch']
  #allocation2 [shape = 'f32[7,16,128]{2,1,0:T(8,128)}', space=vmem, size = 0xe000, scoped, tag = 'scratch operand']
  %s0 = inlined_call_operand.vmem [shape: f32[2,1,19,16,15], index: 0, kind: input, shape index: {}]
  %s1 = inlined_call_operand.vmem [shape: f32[5,15,128], index: 1, kind: input, shape index: {}]
  %s2 = inlined_call_operand.vmem [shape: f32[1,128], index: 2, kind: input, shape index: {}]
  %s3 = inlined_call_operand.vmem [shape: f32[2,1,7,7,128], index: 3, kind: output, shape index: {}]
  %s4 = sld [smem:[#allocation0]]
  $region45: #{tpu_custom_call.1} parent=0
    _
  %s6 = ssub.s32 1, %s4
  %s7 = scalar_select 0, %s6, %s4
  loop: start=0, step=1, limit=4
  $region2: #{tpu_custom_call.1} parent=0 // loop_pre_header
    _
  $region3: #{tpu_custom_call.1} parent=0 // loop_header
    %s9 = sphi 0, %s13
    %p10 = scmp.ge.s32.totalorder %s9, 4
    %s16 = sphi 0, %s28
    %s17 = sphi 0, %s24
    %s18 = sphi 0, %s16
    %s19 = sphi 0, %s17
    %s20 = sphi 0, %s18
    %s21 = sphi 0, %s19
    %s33 = sphi 0, %s35
    %s36 = sphi 0, %s33
    %s37 = sphi 0, %s36
    %s53 = sphi 0, %s37
    %s57 = sphi 0, %s57
    %s59 = sphi 0, %s57
    %s60 = sphi 0, %s59
    %s74 = sphi 0, %s60
    %s78 = sphi 0, %s78
    %s80 = sphi 0, %s78
    %s81 = sphi 0, %s80
    %s95 = sphi 0, %s81
    %s103 = sphi 0, %s105
    %s106 = sphi 0, %s103
    %s107 = sphi 0, %s106
    %s123 = sphi 0, %s107
  $region4: #{tpu_custom_call.1} parent=0 // loop_header_branch
    %12 = sbr.rel (%p10) target = $region8
  $region5: #{tpu_custom_call.1} parent=0 // loop_body
    %s14 = ssub.s32 %s9, 1
    %s15 = ssub.s32 %s9, 2
    %s22 = sadd.s32 1, %s17
    %p23 = scmp.ge.s32.totalorder %s22, 1
    %s24 = scalar_select %p23, 0, %s22
    %s25 = sadd.s32 1, %s16
    %s26 = scalar_select %p23, %s25, %s16
    %p27 = scmp.ge.s32.totalorder %s26, 2
    %s28 = scalar_select %p27, 0, %s26
    %s29 = ssub.s32 %s16, %s28
    %s30 = ssub.s32 %s17, %s24
    %s31 = sor.u32 %s29, %s30
    %p32 = scmp.eq.s32.totalorder %s31, 0
    %s34 = sadd.s32 %s33, 1
    %s35 = scalar_select %p32, %s33, %s34
    %p38 = pneg %p32
    %p39 = scmp.eq.s32.totalorder %s9, 1
    %p40 = por %p38, %p39
    %p41 = scmp.ne.s32.totalorder %s33, %s36
    %p42 = scmp.eq.s32.totalorder %s9, 0
    %p43 = por %p41, %p42
    %p44 = scmp.ne.s32.totalorder %s33, %s36
    %p45 = scmp.eq.s32.totalorder %s14, 1
    %p46 = por %p44, %p45
    %p47 = scmp.ne.s32.totalorder %s36, %s37
    %p48 = scmp.eq.s32.totalorder %s14, 0
    %p49 = por %p47, %p48
    %p50 = scmp.ne.s32.totalorder %s36, %s37
    %p51 = scmp.eq.s32.totalorder %s15, 1
    %p52 = por %p50, %p51
    %p54 = scmp.ne.s32.totalorder %s37, %s53
    %p55 = scmp.eq.s32.totalorder %s15, 0
    %p56 = por %p54, %p55
    %s58 = sadd.s32 %s57, 1
    %p61 = scmp.eq.s32.totalorder %s9, 1
    %p62 = scmp.ne.s32.totalorder %s57, %s59
    %p63 = scmp.eq.s32.totalorder %s9, 0
    %p64 = por %p62, %p63
    %p65 = scmp.ne.s32.totalorder %s57, %s59
    %p66 = scmp.eq.s32.totalorder %s14, 1
    %p67 = por %p65, %p66
    %p68 = scmp.ne.s32.totalorder %s59, %s60
    %p69 = scmp.eq.s32.totalorder %s14, 0
    %p70 = por %p68, %p69
    %p71 = scmp.ne.s32.totalorder %s59, %s60
    %p72 = scmp.eq.s32.totalorder %s15, 1
    %p73 = por %p71, %p72
    %p75 = scmp.ne.s32.totalorder %s60, %s74
    %p76 = scmp.eq.s32.totalorder %s15, 0
    %p77 = por %p75, %p76
    %s79 = sadd.s32 %s78, 1
    %p82 = scmp.eq.s32.totalorder %s9, 1
    %p83 = scmp.ne.s32.totalorder %s78, %s80
    %p84 = scmp.eq.s32.totalorder %s9, 0
    %p85 = por %p83, %p84
    %p86 = scmp.ne.s32.totalorder %s78, %s80
    %p87 = scmp.eq.s32.totalorder %s14, 1
    %p88 = por %p86, %p87
    %p89 = scmp.ne.s32.totalorder %s80, %s81
    %p90 = scmp.eq.s32.totalorder %s14, 0
    %p91 = por %p89, %p90
    %p92 = scmp.ne.s32.totalorder %s80, %s81
    %p93 = scmp.eq.s32.totalorder %s15, 1
    %p94 = por %p92, %p93
    %p96 = scmp.ne.s32.totalorder %s81, %s95
    %p97 = scmp.eq.s32.totalorder %s15, 0
    %p98 = por %p96, %p97
    %s99 = ssub.s32 %s16, %s28
    %s100 = ssub.s32 %s17, %s24
    %s101 = sor.u32 %s99, %s100
    %p102 = scmp.eq.s32.totalorder %s101, 0
    %s104 = sadd.s32 %s103, 1
    %s105 = scalar_select %p102, %s103, %s104
    %p108 = pneg %p102
    %p109 = scmp.eq.s32.totalorder %s9, 1
    %p110 = por %p108, %p109
    %p111 = scmp.ne.s32.totalorder %s103, %s106
    %p112 = scmp.eq.s32.totalorder %s9, 0
    %p113 = por %p111, %p112
    %p114 = scmp.ne.s32.totalorder %s103, %s106
    %p115 = scmp.eq.s32.totalorder %s14, 1
    %p116 = por %p114, %p115
    %p117 = scmp.ne.s32.totalorder %s106, %s107
    %p118 = scmp.eq.s32.totalorder %s14, 0
    %p119 = por %p117, %p118
    %p120 = scmp.ne.s32.totalorder %s106, %s107
    %p121 = scmp.eq.s32.totalorder %s15, 1
    %p122 = por %p120, %p121
    %p124 = scmp.ne.s32.totalorder %s107, %s123
    %p125 = scmp.eq.s32.totalorder %s15, 0
    %p126 = por %p124, %p125
    %p127 = scmp.le.s32.totalorder 1, %s9
    %p128 = scmp.lt.s32.totalorder %s9, 3
    %p129 = pnand %p127, %p128
    %p130 = pneg %p129
    // Predicated region
    $region9: #{tpu_custom_call.1} parent=5 // pred_check
      _
    $region10: #{tpu_custom_call.1} parent=5 // pred_check_branch
      %132 = sbr.rel (%p129) target = $region12
    $region11: #{tpu_custom_call.1} parent=5 // pred_region
      %s133 = ssub.s32 %s9, 1
      // Predicated region
      $region13: #{tpu_custom_call.1} parent=11 // pred_check
        %p134 = pneg %p70
      $region14: #{tpu_custom_call.1} parent=11 // pred_check_branch
        %136 = sbr.rel (%p134) target = $region16
      $region15: #{tpu_custom_call.1} parent=11 // pred_region
        _
      $region16: #{tpu_custom_call.1} parent=11 // pred_fallthru
        _
      // Predicated region
      $region17: #{tpu_custom_call.1} parent=11 // pred_check
        %p137 = pneg %p91
      $region18: #{tpu_custom_call.1} parent=11 // pred_check_branch
        %139 = sbr.rel (%p137) target = $region20
      $region19: #{tpu_custom_call.1} parent=11 // pred_region
        _
      $region20: #{tpu_custom_call.1} parent=11 // pred_fallthru
        _
    $region12: #{tpu_custom_call.1} parent=5 // pred_fallthru
      _
    %p140 = scmp.lt.s32.totalorder %s9, 2
    // Predicated region
    $region21: #{tpu_custom_call.1} parent=5 // pred_check
      %p141 = pneg %p140
    $region22: #{tpu_custom_call.1} parent=5 // pred_check_branch
      %143 = sbr.rel (%p141) target = $region24
    $region23: #{tpu_custom_call.1} parent=5 // pred_region
      // Predicated region
      $region25: #{tpu_custom_call.1} parent=23 // pred_check
        %p144 = pneg %p43
      $region26: #{tpu_custom_call.1} parent=23 // pred_check_branch
        %146 = sbr.rel (%p144) target = $region28
      $region27: #{tpu_custom_call.1} parent=23 // pred_region
        %p147 = scmp.lt.s32.totalorder %s16, 1
        %s148 = scalar_select %p147, %s16, 1
        %p149 = scmp.lt.s32.totalorder %s17, 0
        %s150 = scalar_select %p149, %s17, 0
        %s151 = smul.addr %s150, 38
        %s152 = smul.addr %s148, 38
        %s153 = sadd.s32 %s151, %s152
        %s154 = smul.addr %s153, 8
        %s155 = scalar_lea.vmem %s0, %s154
      $region28: #{tpu_custom_call.1} parent=23 // pred_fallthru
        _
    $region24: #{tpu_custom_call.1} parent=5 // pred_fallthru
      _
    %p156 = scmp.le.s32.totalorder 1, %s9
    %p157 = scmp.lt.s32.totalorder %s9, 3
    %p158 = pnand %p156, %p157
    %p159 = pneg %p158
    // Predicated region
    $region29: #{tpu_custom_call.1} parent=5 // pred_check
      _
    $region30: #{tpu_custom_call.1} parent=5 // pred_check_branch
      %161 = sbr.rel (%p158) target = $region32
    $region31: #{tpu_custom_call.1} parent=5 // pred_region
      %s162 = ssub.s32 %s9, 1
      %p163 = scmp.lt.s32.totalorder %s18, 1
      %s164 = scalar_select %p163, %s18, 1
      %p165 = scmp.lt.s32.totalorder %s19, 0
      %s166 = scalar_select %p165, %s19, 0
      %s167 = smul.addr %s166, 38
      %s168 = smul.addr %s164, 38
      %s169 = sadd.s32 %s167, %s168
      %s170 = smul.addr %s169, 8
      %s171 = scalar_lea.vmem %s0, %s170
      %p172 = pneg %p49
      %p173 = pneg %p46
      %p174 = pneg %p70
      %p175 = pneg %p67
      %p176 = pneg %p91
      %p177 = pneg %p88
      %p178 = pneg %p119
      %p179 = pneg %p116
      %p180 = scmp.lt.s32.totalorder %s18, 1
      %s181 = scalar_select %p180, %s18, 1
      %p182 = scmp.lt.s32.totalorder %s19, 0
      %s183 = scalar_select %p182, %s19, 0
      %s184 = smul.addr %s183, 7
      %s185 = smul.addr %s181, 7
      %s186 = sadd.s32 %s184, %s185
      %s187 = smul.addr %s186, 8
      %s188 = scalar_lea.vmem %s3, %s187
      %p189 = scmp.lt.s32.totalorder %s18, 1
      %s190 = scalar_select %p189, %s18, 1
      %p191 = scmp.lt.s32.totalorder %s19, 0
      %s192 = scalar_select %p191, %s19, 0
      %s193 = smul.addr %s192, 38
      %s194 = smul.addr %s190, 38
      %s195 = sadd.s32 %s193, %s194
      %s196 = smul.addr %s195, 8
      %s197 = scalar_lea.vmem %s0, %s196
      %p198 = scmp.lt.s32.totalorder %s18, 1
      %s199 = scalar_select %p198, %s18, 1
      %p200 = scmp.lt.s32.totalorder %s19, 0
      %s201 = scalar_select %p200, %s19, 0
      %s202 = smul.addr %s201, 7
      %s203 = smul.addr %s199, 7
      %s204 = sadd.s32 %s202, %s203
      %s205 = smul.addr %s204, 8
      %s206 = scalar_lea.vmem %s3, %s205
      %v207 = vld [vmem:[%s197] sm:$0xff]
      %v208 = vld [vmem:[%s197 + $0x8] sm:$0xff]
      %v209 = vld [vmem:[%s197 + $0x10] sm:$0xff]
      %v210 = vld [vmem:[%s197 + $0x18] sm:$0xff]
      %v211 = vld [vmem:[%s197 + $0x20] sm:$0xff]
      %v212 = vld [vmem:[%s197 + $0x28] sm:$0xff]
      %v213 = vld [vmem:[%s197 + $0x30] sm:$0xff]
      %v214 = vld [vmem:[%s197 + $0x38] sm:$0xff]
      %v215 = vld [vmem:[%s197 + $0x40] sm:$0xff]
      %v216 = vld [vmem:[%s197 + $0x48] sm:$0xff]
      %v217 = vld [vmem:[%s197 + $0x50] sm:$0xff]
      %v218 = vld [vmem:[%s197 + $0x58] sm:$0xff]
      %v219 = vld [vmem:[%s197 + $0x60] sm:$0xff]
      %v220 = vld [vmem:[%s197 + $0x68] sm:$0xff]
      %v221 = vld [vmem:[%s197 + $0x70] sm:$0xff]
      %v222 = vld [vmem:[%s197 + $0x78] sm:$0xff]
      %v223 = vld [vmem:[%s197 + $0x80] sm:$0xff]
      %v224 = vld [vmem:[%s197 + $0x88] sm:$0xff]
      %v225 = vld [vmem:[%s197 + $0x90] sm:$0xff]
      %v226 = vld [vmem:[%s197 + $0x98] sm:$0xff]
      %v227 = vld [vmem:[%s197 + $0xa0] sm:$0xff]
      %v228 = vld [vmem:[%s197 + $0xa8] sm:$0xff]
      %v229 = vld [vmem:[%s197 + $0xb0] sm:$0xff]
      %v230 = vld [vmem:[%s197 + $0xb8] sm:$0xff]
      %v231 = vld [vmem:[%s197 + $0xc0] sm:$0xff]
      %v232 = vld [vmem:[%s197 + $0xc8] sm:$0xff]
      %v233 = vld [vmem:[%s197 + $0xd0] sm:$0xff]
      %v234 = vld [vmem:[%s197 + $0xd8] sm:$0xff]
      %v235 = vld [vmem:[%s197 + $0xe0] sm:$0xff]
      %v236 = vld [vmem:[%s197 + $0xe8] sm:$0xff]
      %v237 = vld [vmem:[%s197 + $0xf0] sm:$0xff]
      %v238 = vld [vmem:[%s197 + $0xf8] sm:$0xff]
      %v239 = vld [vmem:[%s197 + $0x100] sm:$0xff]
      %v240 = vld [vmem:[%s197 + $0x108] sm:$0xff]
      %v241 = vld [vmem:[%s197 + $0x110] sm:$0xff]
      %v242 = vld [vmem:[%s197 + $0x118] sm:$0xff]
      %v243 = vld [vmem:[%s197 + $0x120] sm:$0xff]
      %v244 = vld [vmem:[%s197 + $0x128] sm:$0xff]
      %v245 = vld [vmem:[%s1] sm:$0xff]
      %v246 = vld [vmem:[%s1 + $0x8] sm:$0x7f]
      %v247 = vld [vmem:[%s1 + $0x10] sm:$0xff]
      %v248 = vld [vmem:[%s1 + $0x18] sm:$0x7f]
      %v249 = vld [vmem:[%s1 + $0x20] sm:$0xff]
      %v250 = vld [vmem:[%s1 + $0x28] sm:$0x7f]
      %v251 = vld [vmem:[%s1 + $0x30] sm:$0xff]
      %v252 = vld [vmem:[%s1 + $0x38] sm:$0x7f]
      %v253 = vld [vmem:[%s1 + $0x40] sm:$0xff]
      %v254 = vld [vmem:[%s1 + $0x48] sm:$0x7f]
      %vm255 = vcmask 121856
      %v257 = vsel %vm255, %v209, 0
      %v260 = vsel %vm255, %v210, 0
      %v263 = vsel %vm255, %v211, 0
      %v266 = vsel %vm255, %v212, 0
      %v269 = vsel %vm255, %v213, 0
      %v272 = vsel %vm255, %v214, 0
      %v275 = vsel %vm255, %v215, 0
      %v278 = vsel %vm255, %v216, 0
      %v281 = vsel %vm255, %v217, 0
      %v284 = vsel %vm255, %v218, 0
      %v287 = vsel %vm255, %v219, 0
      %v290 = vsel %vm255, %v220, 0
      %v293 = vsel %vm255, %v221, 0
      %v296 = vsel %vm255, %v222, 0
      %v299 = vsel %vm255, %v223, 0
      %v302 = vsel %vm255, %v224, 0
      %v305 = vsel %vm255, %v225, 0
      %v308 = vsel %vm255, %v226, 0
      %v311 = vsel %vm255, %v227, 0
      %v314 = vsel %vm255, %v228, 0
      %v317 = vsel %vm255, %v229, 0
      %v320 = vsel %vm255, %v230, 0
      %v323 = vsel %vm255, %v231, 0
      %v326 = vsel %vm255, %v232, 0
      %v329 = vsel %vm255, %v233, 0
      %v332 = vsel %vm255, %v234, 0
      %v335 = vsel %vm255, %v235, 0
      %v338 = vsel %vm255, %v236, 0
      %v341 = vsel %vm255, %v237, 0
      %v344 = vsel %vm255, %v238, 0
      %vm346 = vcmask 1046528
      %v348 = vsel %vm346, %v248, 0
      %350 = vmatprep.subr.mxu0 0.0
      %v351 = vand.u32 %v247, 4294901760
      %352 = vmatpush1.msra.mxu0 %v351
      %353 = vmatprep.subr.mxu0 0.0
      %v354 = vand.u32 %v348, 4294901760
      %355 = vmatpush1.msra.mxu0 %v354
      %356 = vmatprep.subr.mxu0 0.0
      %357 = vmatpush1.msra.mxu0 0.0
      %358 = vmatprep.subr.mxu0 0.0
      %359 = vmatpush1.msra.mxu0 0.0
      %360 = vmatprep.subr.mxu0 0.0
      %361 = vmatpush1.msra.mxu0 0.0
      %362 = vmatprep.subr.mxu0 0.0
      %363 = vmatpush1.msra.mxu0 0.0
      %364 = vmatprep.subr.mxu0 0.0
      %365 = vmatpush1.msra.mxu0 0.0
      %366 = vmatprep.subr.mxu0 0.0
      %367 = vmatpush1.msra.mxu0 0.0
      %368 = vmatprep.subr.mxu0 0.0
      %369 = vmatpush1.msra.mxu0 0.0
      %370 = vmatprep.subr.mxu0 0.0
      %371 = vmatpush1.msra.mxu0 0.0
      %372 = vmatprep.subr.mxu0 0.0
      %373 = vmatpush1.msra.mxu0 0.0
      %374 = vmatprep.subr.mxu0 0.0
      %375 = vmatpush1.msra.mxu0 0.0
      %376 = vmatprep.subr.mxu0 0.0
      %377 = vmatpush1.msra.mxu0 0.0
      %378 = vmatprep.subr.mxu0 0.0
      %379 = vmatpush1.msra.mxu0 0.0
      %380 = vmatprep.subr.mxu0 0.0
      %381 = vmatpush1.msra.mxu0 0.0
      %382 = vmatprep.subr.mxu0 0.0
      %383 = vmatpush1.msra.mxu0 0.0
      %384 = vmatprep.subr.mxu0 0.0
      %385 = vmatpush1.msra.mxu0 0.0
      %386 = vmatprep.subr.mxu0 0.0
      %387 = vmatpush1.msra.mxu0 0.0
      %388 = vmatprep.subr.mxu0 0.0
      %389 = vmatpush1.msra.mxu0 0.0
      %390 = vmatprep.subr.mxu0 0.0
      %391 = vmatpush1.msra.mxu0 0.0
      %392 = vmatprep.subr.mxu0 0.0
      %393 = vmatpush1.msra.mxu0 0.0
      %394 = vmatprep.subr.mxu0 0.0
      %395 = vmatpush1.msra.mxu0 0.0
      %396 = vmatprep.subr.mxu0 0.0
      %397 = vmatpush1.msra.mxu0 0.0
      %398 = vmatprep.subr.mxu0 0.0
      %399 = vmatpush1.msra.mxu0 0.0
      %400 = vmatprep.subr.mxu0 0.0
      %401 = vmatpush1.msra.mxu0 0.0
      %402 = vmatprep.subr.mxu0 0.0
      %403 = vmatpush1.msra.mxu0 0.0
      %404 = vmatprep.subr.mxu0 0.0
      %405 = vmatpush1.msra.mxu0 0.0
      %406 = vmatprep.subr.mxu0 0.0
      %407 = vmatpush1.msra.mxu0 0.0
      %408 = vmatprep.subr.mxu0 0.0
      %409 = vmatpush1.msra.mxu0 0.0
      %410 = vmatprep.subr.mxu0 0.0
      %411 = vmatpush1.msra.mxu0 0.0
      %412 = vmatprep.subr.mxu0 0.0
      %413 = vmatpush1.msra.mxu0 0.0
      %414 = vmatprep.subr.mxu0 0.0
      %415 = vmatpush1.msra.mxu0 0.0
      %416 = vmatprep.mubr.f32.mxu0 0.0
      %v417 = vand.u32 %v257, 4294901760
      %v418 = vsub.f32 %v257, %v417
      %v419 = vand.u32 %v418, 4294901760
      %v420 = vsub.f32 %v418, %v419
      %v421 = vand.u32 %v420, 4294901760
      %422 = vmatmul.mubr.f32.gmra.mrb[0].mxu0 %v421
      %v423 = vpop.f32.mrb[0].mxu0
      %v424 = vadd.f32 0.0, %v423
      %v425 = vpop.f32.mrb[0].mxu0
      %426 = vmatprep.mubr.f32.mxu0 0.0
      %v427 = vand.u32 %v260, 4294901760
      %v428 = vsub.f32 %v260, %v427
      %v429 = vand.u32 %v428, 4294901760
      %v430 = vsub.f32 %v428, %v429
      %v431 = vand.u32 %v430, 4294901760
      %432 = vmatmul.mubr.f32.gmra.mrb[0].mxu0 %v431
      %v433 = vpop.f32.mrb[0].mxu0
      %v434 = vadd.f32 0.0, %v433
      %v435 = vpop.f32.mrb[0].mxu0
      %436 = vmatprep.mubr.f32.mxu0 0.0
      %v437 = vand.u32 %v263, 4294901760
      %v438 = vsub.f32 %v263, %v437
      %v439 = vand.u32 %v438, 4294901760
      %v440 = vsub.f32 %v438, %v439
      %v441 = vand.u32 %v440, 4294901760
      %442 = vmatmul.mubr.f32.gmra.mrb[0].mxu0 %v441
      %v443 = vpop.f32.mrb[0].mxu0
      %v444 = vadd.f32 0.0, %v443
      %v445 = vpop.f32.mrb[0].mxu0
      %446 = vmatprep.mubr.f32.mxu0 0.0
      %v447 = vand.u32 %v266, 4294901760
      %v448 = vsub.f32 %v266, %v447
      %v449 = vand.u32 %v448, 4294901760
      %v450 = vsub.f32 %v448, %v449
      %v451 = vand.u32 %v450, 4294901760
      %452 = vmatmul.mubr.f32.gmra.mrb[0].mxu0 %v451
      %v453 = vpop.f32.mrb[0].mxu0
      %v454 = vadd.f32 0.0, %v453
      %v455 = vpop.f32.mrb[0].mxu0
      %456 = vmatprep.mubr.f32.mxu0 0.0
      %v457 = vand.u32 %v269, 4294901760
      %v458 = vsub.f32 %v269, %v457
      %v459 = vand.u32 %v458, 4294901760
      %v460 = vsub.f32 %v458, %v459
      %v461 = vand.u32 %v460, 4294901760
      %462 = vmatmul.mubr.f32.gmra.mrb[0].mxu0 %v461
      %v463 = vpop.f32.mrb[0].mxu0
      %v464 = vadd.f32 0.0, %v463
      %v465 = vpop.f32.mrb[0].mxu0
      %466 = vmatprep.mubr.f32.mxu0 0.0
      %v467 = vand.u32 %v272, 4294901760
      %v468 = vsub.f32 %v272, %v467
      %v469 = vand.u32 %v468, 4294901760
      %v470 = vsub.f32 %v468, %v469
      %v471 = vand.u32 %v470, 4294901760
      %472 = vmatmul.mubr.f32.gmra.mrb[0].mxu0 %v471
      %v473 = vpop.f32.mrb[0].mxu0
      %v474 = vadd.f32 0.0, %v473
      %v475 = vpop.f32.mrb[0].mxu0
      %476 = vmatprep.mubr.f32.mxu0 0.0
      %v477 = vand.u32 %v275, 4294901760
      %v478 = vsub.f32 %v275, %v477
      %v479 = vand.u32 %v478, 4294901760
      %v480 = vsub.f32 %v478, %v479
      %v481 = vand.u32 %v480, 4294901760
      %482 = vmatmul.mubr.f32.gmra.mrb[0].mxu0 %v481
      %v483 = vpop.f32.mrb[0].mxu0
      %v484 = vadd.f32 0.0, %v483
      %v485 = vpop.f32.mrb[0].mxu0
      %486 = vmatprep.mubr.f32.mxu0 0.0
      %v487 = vand.u32 %v278, 4294901760
      %v488 = vsub.f32 %v278, %v487
      %v489 = vand.u32 %v488, 4294901760
      %v490 = vsub.f32 %v488, %v489
      %v491 = vand.u32 %v490, 4294901760
      %492 = vmatmul.mubr.f32.gmra.mrb[0].mxu0 %v491
      %v493 = vpop.f32.mrb[0].mxu0
      %v494 = vadd.f32 0.0, %v493
      %v495 = vpop.f32.mrb[0].mxu0
      %496 = vmatprep.mubr.f32.mxu0 0.0
      %v497 = vand.u32 %v281, 4294901760
      %v498 = vsub.f32 %v281, %v497
      %v499 = vand.u32 %v498, 4294901760
      %v500 = vsub.f32 %v498, %v499
      %v501 = vand.u32 %v500, 4294901760
      %502 = vmatmul.mubr.f32.gmra.mrb[0].mxu0 %v501
      %v503 = vpop.f32.mrb[0].mxu0
      %v504 = vadd.f32 0.0, %v503
      %v505 = vpop.f32.mrb[0].mxu0
      %506 = vmatprep.mubr.f32.mxu0 0.0
      %v507 = vand.u32 %v284, 4294901760
      %v508 = vsub.f32 %v284, %v507
      %v509 = vand.u32 %v508, 4294901760
      %v510 = vsub.f32 %v508, %v509
      %v511 = vand.u32 %v510, 4294901760
      %512 = vmatmul.mubr.f32.gmra.mrb[0].mxu0 %v511
      %v513 = vpop.f32.mrb[0].mxu0
      %v514 = vadd.f32 0.0, %v513
      %v515 = vpop.f32.mrb[0].mxu0
      %516 = vmatprep.mubr.f32.mxu0 0.0
      %v517 = vand.u32 %v287, 4294901760
      %v518 = vsub.f32 %v287, %v517
      %v519 = vand.u32 %v518, 4294901760
      %v520 = vsub.f32 %v518, %v519
      %v521 = vand.u32 %v520, 4294901760
      %522 = vmatmul.mubr.f32.gmra.mrb[0].mxu0 %v521
      %v523 = vpop.f32.mrb[0].mxu0
      %v524 = vadd.f32 0.0, %v523
      %v525 = vpop.f32.mrb[0].mxu0
      %526 = vmatprep.mubr.f32.mxu0 0.0
      %v527 = vand.u32 %v290, 4294901760
      %v528 = vsub.f32 %v290, %v527
      %v529 = vand.u32 %v528, 4294901760
      %v530 = vsub.f32 %v528, %v529
      %v531 = vand.u32 %v530, 4294901760
      %532 = vmatmul.mubr.f32.gmra.mrb[0].mxu0 %v531
      %v533 = vpop.f32.mrb[0].mxu0
      %v534 = vadd.f32 0.0, %v533
      %v535 = vpop.f32.mrb[0].mxu0
      %536 = vmatprep.mubr.f32.mxu0 0.0
      %v537 = vand.u32 %v293, 4294901760
      %v538 = vsub.f32 %v293, %v537
      %v539 = vand.u32 %v538, 4294901760
      %v540 = vsub.f32 %v538, %v539
      %v541 = vand.u32 %v540, 4294901760
      %542 = vmatmul.mubr.f32.gmra.mrb[0].mxu0 %v541
      %v543 = vpop.f32.mrb[0].mxu0
      %v544 = vadd.f32 0.0, %v543
      %v545 = vpop.f32.mrb[0].mxu0
      %546 = vmatprep.mubr.f32.mxu0 0.0
      %v547 = vand.u32 %v296, 4294901760
      %v548 = vsub.f32 %v296, %v547
      %v549 = vand.u32 %v548, 4294901760
      %v550 = vsub.f32 %v548, %v549
      %v551 = vand.u32 %v550, 4294901760
      %552 = vmatmul.mubr.f32.gmra.mrb[0].mxu0 %v551
      %v553 = vpop.f32.mrb[0].mxu0
      %v554 = vadd.f32 0.0, %v553
      %v555 = vpop.f32.mrb[0].mxu0
      %556 = vmatprep.mubr.f32.mxu0 0.0
      %v557 = vand.u32 %v299, 4294901760
      %v558 = vsub.f32 %v299, %v557
      %v559 = vand.u32 %v558, 4294901760
      %v560 = vsub.f32 %v558, %v559
      %v561 = vand.u32 %v560, 4294901760
      %562 = vmatmul.mubr.f32.gmra.mrb[0].mxu0 %v561
      %v563 = vpop.f32.mrb[0].mxu0
      %v564 = vadd.f32 0.0, %v563
      %v565 = vpop.f32.mrb[0].mxu0
      %566 = vmatprep.mubr.f32.mxu0 0.0
      %v567 = vand.u32 %v302, 4294901760
      %v568 = vsub.f32 %v302, %v567
      %v569 = vand.u32 %v568, 4294901760
      %v570 = vsub.f32 %v568, %v569
      %v571 = vand.u32 %v570, 4294901760
      %572 = vmatmul.mubr.f32.gmra.mrb[0].mxu0 %v571
      %v573 = vpop.f32.mrb[0].mxu0
      %v574 = vadd.f32 0.0, %v573
      %v575 = vpop.f32.mrb[0].mxu0
      %576 = vmatprep.mubr.f32.mxu0 0.0
      %v577 = vand.u32 %v305, 4294901760
      %v578 = vsub.f32 %v305, %v577
      %v579 = vand.u32 %v578, 4294901760
      %v580 = vsub.f32 %v578, %v579
      %v581 = vand.u32 %v580, 4294901760
      %582 = vmatmul.mubr.f32.gmra.mrb[0].mxu0 %v581
      %v583 = vpop.f32.mrb[0].mxu0
      %v584 = vadd.f32 0.0, %v583
      %v585 = vpop.f32.mrb[0].mxu0
      %586 = vmatprep.mubr.f32.mxu0 0.0
      %v587 = vand.u32 %v308, 4294901760
      %v588 = vsub.f32 %v308, %v587
      %v589 = vand.u32 %v588, 4294901760
      %v590 = vsub.f32 %v588, %v589
      %v591 = vand.u32 %v590, 4294901760
      %592 = vmatmul.mubr.f32.gmra.mrb[0].mxu0 %v591
      %v593 = vpop.f32.mrb[0].mxu0
      %v594 = vadd.f32 0.0, %v593
      %v595 = vpop.f32.mrb[0].mxu0
      %596 = vmatprep.mubr.f32.mxu0 0.0
      %v597 = vand.u32 %v311, 4294901760
      %v598 = vsub.f32 %v311, %v597
      %v599 = vand.u32 %v598, 4294901760
      %v600 = vsub.f32 %v598, %v599
      %v601 = vand.u32 %v600, 4294901760
      %602 = vmatmul.mubr.f32.gmra.mrb[0].mxu0 %v601
      %v603 = vpop.f32.mrb[0].mxu0
      %v604 = vadd.f32 0.0, %v603
      %v605 = vpop.f32.mrb[0].mxu0
      %606 = vmatprep.mubr.f32.mxu0 0.0
      %v607 = vand.u32 %v314, 4294901760
      %v608 = vsub.f32 %v314, %v607
      %v609 = vand.u32 %v608, 4294901760
      %v610 = vsub.f32 %v608, %v609
      %v611 = vand.u32 %v610, 4294901760
      %612 = vmatmul.mubr.f32.gmra.mrb[0].mxu0 %v611
      %v613 = vpop.f32.mrb[0].mxu0
      %v614 = vadd.f32 0.0, %v613
      %v615 = vpop.f32.mrb[0].mxu0
      %616 = vmatprep.mubr.f32.mxu0 0.0
      %v617 = vand.u32 %v317, 4294901760
      %v618 = vsub.f32 %v317, %v617
      %v619 = vand.u32 %v618, 4294901760
      %v620 = vsub.f32 %v618, %v619
      %v621 = vand.u32 %v620, 4294901760
      %622 = vmatmul.mubr.f32.gmra.mrb[0].mxu0 %v621
      %v623 = vpop.f32.mrb[0].mxu0
      %v624 = vadd.f32 0.0, %v623
      %v625 = vpop.f32.mrb[0].mxu0
      %626 = vmatprep.mubr.f32.mxu0 0.0
      %v627 = vand.u32 %v320, 4294901760
      %v628 = vsub.f32 %v320, %v627
      %v629 = vand.u32 %v628, 4294901760
      %v630 = vsub.f32 %v628, %v629
      %v631 = vand.u32 %v630, 4294901760
      %632 = vmatmul.mubr.f32.gmra.mrb[0].mxu0 %v631
      %v633 = vpop.f32.mrb[0].mxu0
      %v634 = vadd.f32 0.0, %v633
      %v635 = vpop.f32.mrb[0].mxu0
      %636 = vmatprep.mubr.f32.mxu0 0.0
      %v637 = vand.u32 %v323, 4294901760
      %v638 = vsub.f32 %v323, %v637
      %v639 = vand.u32 %v638, 4294901760
      %v640 = vsub.f32 %v638, %v639
      %v641 = vand.u32 %v640, 4294901760
      %642 = vmatmul.mubr.f32.gmra.mrb[0].mxu0 %v641
      %v643 = vpop.f32.mrb[0].mxu0
      %v644 = vadd.f32 0.0, %v643
      %v645 = vpop.f32.mrb[0].mxu0
      %646 = vmatprep.mubr.f32.mxu0 0.0
      %v647 = vand.u32 %v326, 4294901760
      %v648 = vsub.f32 %v326, %v647
      %v649 = vand.u32 %v648, 4294901760
      %v650 = vsub.f32 %v648, %v649
      %v651 = vand.u32 %v650, 4294901760
      %652 = vmatmul.mubr.f32.gmra.mrb[0].mxu0 %v651
      %v653 = vpop.f32.mrb[0].mxu0
      %v654 = vadd.f32 0.0, %v653
      %v655 = vpop.f32.mrb[0].mxu0
      %656 = vmatprep.mubr.f32.mxu0 0.0
      %v657 = vand.u32 %v329, 4294901760
      %v658 = vsub.f32 %v329, %v657
      %v659 = vand.u32 %v658, 4294901760
      %v660 = vsub.f32 %v658, %v659
      %v661 = vand.u32 %v660, 4294901760
      %662 = vmatmul.mubr.f32.gmra.mrb[0].mxu0 %v661
      %v663 = vpop.f32.mrb[0].mxu0
      %v664 = vadd.f32 0.0, %v663
      %v665 = vpop.f32.mrb[0].mxu0
      %666 = vmatprep.mubr.f32.mxu0 0.0
      %v667 = vand.u32 %v332, 4294901760
      %v668 = vsub.f32 %v332, %v667
      %v669 = vand.u32 %v668, 4294901760
      %v670 = vsub.f32 %v668, %v669
      %v671 = vand.u32 %v670, 4294901760
      %672 = vmatmul.mubr.f32.gmra.mrb[0].mxu0 %v671
      %v673 = vpop.f32.mrb[0].mxu0
      %v674 = vadd.f32 0.0, %v673
      %v675 = vpop.f32.mrb[0].mxu0
      %676 = vmatprep.mubr.f32.mxu0 0.0
      %v677 = vand.u32 %v335, 4294901760
      %v678 = vsub.f32 %v335, %v677
      %v679 = vand.u32 %v678, 4294901760
      %v680 = vsub.f32 %v678, %v679
      %v681 = vand.u32 %v680, 4294901760
      %682 = vmatmul.mubr.f32.gmra.mrb[0].mxu0 %v681
      %v683 = vpop.f32.mrb[0].mxu0
      %v684 = vadd.f32 0.0, %v683
      %v685 = vpop.f32.mrb[0].mxu0
      %686 = vmatprep.mubr.f32.mxu0 0.0
      %v687 = vand.u32 %v338, 4294901760
      %v688 = vsub.f32 %v338, %v687
      %v689 = vand.u32 %v688, 4294901760
      %v690 = vsub.f32 %v688, %v689
      %v691 = vand.u32 %v690, 4294901760
      %692 = vmatmul.mubr.f32.gmra.mrb[0].mxu0 %v691
      %v693 = vpop.f32.mrb[0].mxu0
      %v694 = vadd.f32 0.0, %v693
      %v695 = vpop.f32.mrb[0].mxu0
      %696 = vmatprep.mubr.f32.mxu0 0.0
      %v697 = vand.u32 %v341, 4294901760
      %v698 = vsub.f32 %v341, %v697
      %v699 = vand.u32 %v698, 4294901760
      %v700 = vsub.f32 %v698, %v699
      %v701 = vand.u32 %v700, 4294901760
      %702 = vmatmul.mubr.f32.gmra.mrb[0].mxu0 %v701
      %v703 = vpop.f32.mrb[0].mxu0
      %v704 = vadd.f32 0.0, %v703
      %v705 = vpop.f32.mrb[0].mxu0
      %706 = vmatprep.mubr.f32.mxu0 0.0
      %v707 = vand.u32 %v344, 4294901760
      %v708 = vsub.f32 %v344, %v707
      %v709 = vand.u32 %v708, 4294901760
      %v710 = vsub.f32 %v708, %v709
      %v711 = vand.u32 %v710, 4294901760
      %712 = vmatmul.mubr.f32.gmra.mrb[0].mxu0 %v711
      %v713 = vpop.f32.mrb[0].mxu0
      %v714 = vadd.f32 0.0, %v713
      %v715 = vpop.f32.mrb[0].mxu0
      %716 = vdwg.mxu0
      %717 = vmatprep.subr.mxu0 0.0
      %v718 = vand.u32 %v247, 4294901760
      %v719 = vsub.f32 %v247, %v718
      %v720 = vand.u32 %v719, 4294901760
      %v721 = vsub.f32 %v719, %v720
      %v722 = vand.u32 %v721, 4294901760
      %723 = vmatpush1.msra.mxu0 %v722
      %724 = vmatprep.subr.mxu0 0.0
      %v725 = vand.u32 %v348, 4294901760
      %v726 = vsub.f32 %v348, %v725
      %v727 = vand.u32 %v726, 4294901760
      %v728 = vsub.f32 %v726, %v727
      %v729 = vand.u32 %v728, 4294901760
      %730 = vmatpush1.msra.mxu0 %v729
      %731 = vmatprep.subr.mxu0 0.0
      %732 = vmatpush1.msra.mxu0 0.0
      %733 = vmatprep.subr.mxu0 0.0
      %734 = vmatpush1.msra.mxu0 0.0
      %735 = vmatprep.subr.mxu0 0.0
      %736 = vmatpush1.msra.mxu0 0.0
      %737 = vmatprep.subr.mxu0 0.0
      %738 = vmatpush1.msra.mxu0 0.0
      %739 = vmatprep.subr.mxu0 0.0
      %740 = vmatpush1.msra.mxu0 0.0
      %741 = vmatprep.subr.mxu0 0.0
      %742 = vmatpush1.msra.mxu0 0.0
      %743 = vmatprep.subr.mxu0 0.0
      %744 = vmatpush1.msra.mxu0 0.0
      %745 = vmatprep.subr.mxu0 0.0
      %746 = vmatpush1.msra.mxu0 0.0
      %747 = vmatprep.subr.mxu0 0.0
      %748 = vmatpush1.msra.mxu0 0.0
      %749 = vmatprep.subr.mxu0 0.0
      %750 = vmatpush1.msra.mxu0 0.0
      %751 = vmatprep.subr.mxu0 0.0
      %752 = vmatpush1.msra.mxu0 0.0
      %753 = vmatprep.subr.mxu0 0.0
      %754 = vmatpush1.msra.mxu0 0.0
      %755 = vmatprep.subr.mxu0 0.0
      %756 = vmatpush1.msra.mxu0 0.0
      %757 = vmatprep.subr.mxu0 0.0
      %758 = vmatpush1.msra.mxu0 0.0
      %759 = vmatprep.subr.mxu0 0.0
      %760 = vmatpush1.msra.mxu0 0.0
      %761 = vmatprep.subr.mxu0 0.0
      %762 = vmatpush1.msra.mxu0 0.0
      %763 = vmatprep.subr.mxu0 0.0
      %764 = vmatpush1.msra.mxu0 0.0
      %765 = vmatprep.subr.mxu0 0.0
      %766 = vmatpush1.msra.mxu0 0.0
      %767 = vmatprep.subr.mxu0 0.0
      %768 = vmatpush1.msra.mxu0 0.0
      %769 = vmatprep.subr.mxu0 0.0
      %770 = vmatpush1.msra.mxu0 0.0
      %771 = vmatprep.subr.mxu0 0.0
      %772 = vmatpush1.msra.mxu0 0.0
      %773 = vmatprep.subr.mxu0 0.0
      %774 = vmatpush1.msra.mxu0 0.0
      %775 = vmatprep.subr.mxu0 0.0
      %776 = vmatpush1.msra.mxu0 0.0
      %777 = vmatprep.subr.mxu0 0.0
      %778 = vmatpush1.msra.mxu0 0.0
      %779 = vmatprep.subr.mxu0 0.0
      %780 = vmatpush1.msra.mxu0 0.0
      %781 = vmatprep.subr.mxu0 0.0
      %782 = vmatpush1.msra.mxu0 0.0
      %783 = vmatprep.subr.mxu0 0.0
      %784 = vmatpush1.msra.mxu0 0.0
      %785 = vmatprep.subr.mxu0 0.0
      %786 = vmatpush1.msra.mxu0 0.0
      %787 = vmatprep.subr.mxu0 0.0
      %788 = vmatpush1.msra.mxu0 0.0
      %789 = vmatprep.subr.mxu0 0.0
      %790 = vmatpush1.msra.mxu0 0.0
      %791 = vmatprep.mubr.f32.mxu0 0.0
      %v792 = vand.u32 %v257, 4294901760
      %793 = vmatmul.mubr.f32.gmra.mrb[0].mxu0 %v792
      %v794 = vpop.f32.mrb[0].mxu0
      %v795 = vadd.f32 %v424, %v794
      %v796 = vpop.f32.mrb[0].mxu0
      %797 = vmatprep.mubr.f32.mxu0 0.0
      %v798 = vand.u32 %v260, 4294901760
      %799 = vmatmul.mubr.f32.gmra.mrb[0].mxu0 %v798
      %v800 = vpop.f32.mrb[0].mxu0
      %v801 = vadd.f32 %v434, %v800
      %v802 = vpop.f32.mrb[0].mxu0
      %803 = vmatprep.mubr.f32.mxu0 0.0
      %v804 = vand.u32 %v263, 4294901760
      %805 = vmatmul.mubr.f32.gmra.mrb[0].mxu0 %v804
      %v806 = vpop.f32.mrb[0].mxu0
      %v807 = vadd.f32 %v444, %v806
      %v808 = vpop.f32.mrb[0].mxu0
      %809 = vmatprep.mubr.f32.mxu0 0.0
      %v810 = vand.u32 %v266, 4294901760
      %811 = vmatmul.mubr.f32.gmra.mrb[0].mxu0 %v810
      %v812 = vpop.f32.mrb[0].mxu0
      %v813 = vadd.f32 %v454, %v812
      %v814 = vpop.f32.mrb[0].mxu0
      %815 = vmatprep.mubr.f32.mxu0 0.0
      %v816 = vand.u32 %v269, 4294901760
      %817 = vmatmul.mubr.f32.gmra.mrb[0].mxu0 %v816
      %v818 = vpop.f32.mrb[0].mxu0
      %v819 = vadd.f32 %v464, %v818
      %v820 = vpop.f32.mrb[0].mxu0
      %821 = vmatprep.mubr.f32.mxu0 0.0
      %v822 = vand.u32 %v272, 4294901760
      %823 = vmatmul.mubr.f32.gmra.mrb[0].mxu0 %v822
      %v824 = vpop.f32.mrb[0].mxu0
      %v825 = vadd.f32 %v474, %v824
      %v826 = vpop.f32.mrb[0].mxu0
      %827 = vmatprep.mubr.f32.mxu0 0.0
      %v828 = vand.u32 %v275, 4294901760
      %829 = vmatmul.mubr.f32.gmra.mrb[0].mxu0 %v828
      %v830 = vpop.f32.mrb[0].mxu0
      %v831 = vadd.f32 %v484, %v830
      %v832 = vpop.f32.mrb[0].mxu0
      %833 = vmatprep.mubr.f32.mxu0 0.0
      %v834 = vand.u32 %v278, 4294901760
      %835 = vmatmul.mubr.f32.gmra.mrb[0].mxu0 %v834
      %v836 = vpop.f32.mrb[0].mxu0
      %v837 = vadd.f32 %v494, %v836
      %v838 = vpop.f32.mrb[0].mxu0
      %839 = vmatprep.mubr.f32.mxu0 0.0
      %v840 = vand.u32 %v281, 4294901760
      %841 = vmatmul.mubr.f32.gmra.mrb[0].mxu0 %v840
      %v842 = vpop.f32.mrb[0].mxu0
      %v843 = vadd.f32 %v504, %v842
      %v844 = vpop.f32.mrb[0].mxu0
      %845 = vmatprep.mubr.f32.mxu0 0.0
      %v846 = vand.u32 %v284, 4294901760
      %847 = vmatmul.mubr.f32.gmra.mrb[0].mxu0 %v846
      %v848 = vpop.f32.mrb[0].mxu0
      %v849 = vadd.f32 %v514, %v848
      %v850 = vpop.f32.mrb[0].mxu0
      %851 = vmatprep.mubr.f32.mxu0 0.0
      %v852 = vand.u32 %v287, 4294901760
      %853 = vmatmul.mubr.f32.gmra.mrb[0].mxu0 %v852
      %v854 = vpop.f32.mrb[0].mxu0
      %v855 = vadd.f32 %v524, %v854
      %v856 = vpop.f32.mrb[0].mxu0
      %857 = vmatprep.mubr.f32.mxu0 0.0
      %v858 = vand.u32 %v290, 4294901760
      %859 = vmatmul.mubr.f32.gmra.mrb[0].mxu0 %v858
      %v860 = vpop.f32.mrb[0].mxu0
      %v861 = vadd.f32 %v534, %v860
      %v862 = vpop.f32.mrb[0].mxu0
      %863 = vmatprep.mubr.f32.mxu0 0.0
      %v864 = vand.u32 %v293, 4294901760
      %865 = vmatmul.mubr.f32.gmra.mrb[0].mxu0 %v864
      %v866 = vpop.f32.mrb[0].mxu0
      %v867 = vadd.f32 %v544, %v866
      %v868 = vpop.f32.mrb[0].mxu0
      %869 = vmatprep.mubr.f32.mxu0 0.0
      %v870 = vand.u32 %v296, 4294901760
      %871 = vmatmul.mubr.f32.gmra.mrb[0].mxu0 %v870
      %v872 = vpop.f32.mrb[0].mxu0
      %v873 = vadd.f32 %v554, %v872
      %v874 = vpop.f32.mrb[0].mxu0
      %875 = vmatprep.mubr.f32.mxu0 0.0
      %v876 = vand.u32 %v299, 4294901760
      %877 = vmatmul.mubr.f32.gmra.mrb[0].mxu0 %v876
      %v878 = vpop.f32.mrb[0].mxu0
      %v879 = vadd.f32 %v564, %v878
      %v880 = vpop.f32.mrb[0].mxu0
      %881 = vmatprep.mubr.f32.mxu0 0.0
      %v882 = vand.u32 %v302, 4294901760
      %883 = vmatmul.mubr.f32.gmra.mrb[0].mxu0 %v882
      %v884 = vpop.f32.mrb[0].mxu0
      %v885 = vadd.f32 %v574, %v884
      %v886 = vpop.f32.mrb[0].mxu0
      %887 = vmatprep.mubr.f32.mxu0 0.0
      %v888 = vand.u32 %v305, 4294901760
      %889 = vmatmul.mubr.f32.gmra.mrb[0].mxu0 %v888
      %v890 = vpop.f32.mrb[0].mxu0
      %v891 = vadd.f32 %v584, %v890
      %v892 = vpop.f32.mrb[0].mxu0
      %893 = vmatprep.mubr.f32.mxu0 0.0
      %v894 = vand.u32 %v308, 4294901760
      %895 = vmatmul.mubr.f32.gmra.mrb[0].mxu0 %v894
      %v896 = vpop.f32.mrb[0].mxu0
      %v897 = vadd.f32 %v594, %v896
      %v898 = vpop.f32.mrb[0].mxu0
      %899 = vmatprep.mubr.f32.mxu0 0.0
      %v900 = vand.u32 %v311, 4294901760
      %901 = vmatmul.mubr.f32.gmra.mrb[0].mxu0 %v900
      %v902 = vpop.f32.mrb[0].mxu0
      %v903 = vadd.f32 %v604, %v902
      %v904 = vpop.f32.mrb[0].mxu0
      %905 = vmatprep.mubr.f32.mxu0 0.0
      %v906 = vand.u32 %v314, 4294901760
      %907 = vmatmul.mubr.f32.gmra.mrb[0].mxu0 %v906
      %v908 = vpop.f32.mrb[0].mxu0
      %v909 = vadd.f32 %v614, %v908
      %v910 = vpop.f32.mrb[0].mxu0
      %911 = vmatprep.mubr.f32.mxu0 0.0
      %v912 = vand.u32 %v317, 4294901760
      %913 = vmatmul.mubr.f32.gmra.mrb[0].mxu0 %v912
      %v914 = vpop.f32.mrb[0].mxu0
      %v915 = vadd.f32 %v624, %v914
      %v916 = vpop.f32.mrb[0].mxu0
      %917 = vmatprep.mubr.f32.mxu0 0.0
      %v918 = vand.u32 %v320, 4294901760
      %919 = vmatmul.mubr.f32.gmra.mrb[0].mxu0 %v918
      %v920 = vpop.f32.mrb[0].mxu0
      %v921 = vadd.f32 %v634, %v920
      %v922 = vpop.f32.mrb[0].mxu0
      %923 = vmatprep.mubr.f32.mxu0 0.0
      %v924 = vand.u32 %v323, 4294901760
      %925 = vmatmul.mubr.f32.gmra.mrb[0].mxu0 %v924
      %v926 = vpop.f32.mrb[0].mxu0
      %v927 = vadd.f32 %v644, %v926
      %v928 = vpop.f32.mrb[0].mxu0
      %929 = vmatprep.mubr.f32.mxu0 0.0
      %v930 = vand.u32 %v326, 4294901760
      %931 = vmatmul.mubr.f32.gmra.mrb[0].mxu0 %v930
      %v932 = vpop.f32.mrb[0].mxu0
      %v933 = vadd.f32 %v654, %v932
      %v934 = vpop.f32.mrb[0].mxu0
      %935 = vmatprep.mubr.f32.mxu0 0.0
      %v936 = vand.u32 %v329, 4294901760
      %937 = vmatmul.mubr.f32.gmra.mrb[0].mxu0 %v936
      %v938 = vpop.f32.mrb[0].mxu0
      %v939 = vadd.f32 %v664, %v938
      %v940 = vpop.f32.mrb[0].mxu0
      %941 = vmatprep.mubr.f32.mxu0 0.0
      %v942 = vand.u32 %v332, 4294901760
      %943 = vmatmul.mubr.f32.gmra.mrb[0].mxu0 %v942
      %v944 = vpop.f32.mrb[0].mxu0
      %v945 = vadd.f32 %v674, %v944
      %v946 = vpop.f32.mrb[0].mxu0
      %947 = vmatprep.mubr.f32.mxu0 0.0
      %v948 = vand.u32 %v335, 4294901760
      %949 = vmatmul.mubr.f32.gmra.mrb[0].mxu0 %v948
      %v950 = vpop.f32.mrb[0].mxu0
      %v951 = vadd.f32 %v684, %v950
      %v952 = vpop.f32.mrb[0].mxu0
      %953 = vmatprep.mubr.f32.mxu0 0.0
      %v954 = vand.u32 %v338, 4294901760
      %955 = vmatmul.mubr.f32.gmra.mrb[0].mxu0 %v954
      %v956 = vpop.f32.mrb[0].mxu0
      %v957 = vadd.f32 %v694, %v956
      %v958 = vpop.f32.mrb[0].mxu0
      %959 = vmatprep.mubr.f32.mxu0 0.0
      %v960 = vand.u32 %v341, 4294901760
      %961 = vmatmul.mubr.f32.gmra.mrb[0].mxu0 %v960
      %v962 = vpop.f32.mrb[0].mxu0
      %v963 = vadd.f32 %v704, %v962
      %v964 = vpop.f32.mrb[0].mxu0
      %965 = vmatprep.mubr.f32.mxu0 0.0
      %v966 = vand.u32 %v344, 4294901760
      %967 = vmatmul.mubr.f32.gmra.mrb[0].mxu0 %v966
      %v968 = vpop.f32.mrb[0].mxu0
      %v969 = vadd.f32 %v714, %v968
      %v970 = vpop.f32.mrb[0].mxu0
      %971 = vdwg.mxu0
      %972 = vmatprep.subr.mxu0 0.0
      %v973 = vand.u32 %v247, 4294901760
      %v974 = vsub.f32 %v247, %v973
      %975 = vmatpush1.msra.mxu0 %v974
      %976 = vmatprep.subr.mxu0 0.0
      %v977 = vand.u32 %v348, 4294901760
      %v978 = vsub.f32 %v348, %v977
      %979 = vmatpush1.msra.mxu0 %v978
      %980 = vmatprep.subr.mxu0 0.0
      %981 = vmatpush1.msra.mxu0 0.0
      %982 = vmatprep.subr.mxu0 0.0
      %983 = vmatpush1.msra.mxu0 0.0
      %984 = vmatprep.subr.mxu0 0.0
      %985 = vmatpush1.msra.mxu0 0.0
      %986 = vmatprep.subr.mxu0 0.0
      %987 = vmatpush1.msra.mxu0 0.0
      %988 = vmatprep.subr.mxu0 0.0
      %989 = vmatpush1.msra.mxu0 0.0
      %990 = vmatprep.subr.mxu0 0.0
      %991 = vmatpush1.msra.mxu0 0.0
      %992 = vmatprep.subr.mxu0 0.0
      %993 = vmatpush1.msra.mxu0 0.0
      %994 = vmatprep.subr.mxu0 0.0
      %995 = vmatpush1.msra.mxu0 0.0
      %996 = vmatprep.subr.mxu0 0.0
      %997 = vmatpush1.msra.mxu0 0.0
      %998 = vmatprep.subr.mxu0 0.0
      %999 = vmatpush1.msra.mxu0 0.0
      %1000 = vmatprep.subr.mxu0 0.0
      %1001 = vmatpush1.msra.mxu0 0.0
      %1002 = vmatprep.subr.mxu0 0.0
      %1003 = vmatpush1.msra.mxu0 0.0
      %1004 = vmatprep.subr.mxu0 0.0
      %1005 = vmatpush1.msra.mxu0 0.0
      %1006 = vmatprep.subr.mxu0 0.0
      %1007 = vmatpush1.msra.mxu0 0.0
      %1008 = vmatprep.subr.mxu0 0.0
      %1009 = vmatpush1.msra.mxu0 0.0
      %1010 = vmatprep.subr.mxu0 0.0
      %1011 = vmatpush1.msra.mxu0 0.0
      %1012 = vmatprep.subr.mxu0 0.0
      %1013 = vmatpush1.msra.mxu0 0.0
      %1014 = vmatprep.subr.mxu0 0.0
      %1015 = vmatpush1.msra.mxu0 0.0
      %1016 = vmatprep.subr.mxu0 0.0
      %1017 = vmatpush1.msra.mxu0 0.0
      %1018 = vmatprep.subr.mxu0 0.0
      %1019 = vmatpush1.msra.mxu0 0.0
      %1020 = vmatprep.subr.mxu0 0.0
      %1021 = vmatpush1.msra.mxu0 0.0
      %1022 = vmatprep.subr.mxu0 0.0
      %1023 = vmatpush1.msra.mxu0 0.0
      %1024 = vmatprep.subr.mxu0 0.0
      %1025 = vmatpush1.msra.mxu0 0.0
      %1026 = vmatprep.subr.mxu0 0.0
      %1027 = vmatpush1.msra.mxu0 0.0
      %1028 = vmatprep.subr.mxu0 0.0
      %1029 = vmatpush1.msra.mxu0 0.0
      %1030 = vmatprep.subr.mxu0 0.0
      %1031 = vmatpush1.msra.mxu0 0.0
      %1032 = vmatprep.subr.mxu0 0.0
      %1033 = vmatpush1.msra.mxu0 0.0
      %1034 = vmatprep.subr.mxu0 0.0
      %1035 = vmatpush1.msra.mxu0 0.0
      %1036 = vmatprep.subr.mxu0 0.0
      %1037 = vmatpush1.msra.mxu0 0.0
      %1038 = vmatprep.subr.mxu0 0.0
      %1039 = vmatpush1.msra.mxu0 0.0
      %1040 = vmatprep.mubr.f32.mxu0 0.0
      %v1041 = vand.u32 %v257, 4294901760
      %v1042 = vsub.f32 %v257, %v1041
      %1043 = vmatmul.mubr.f32.gmra.mrb[0].mxu0 %v1042
      %v1044 = vpop.f32.mrb[0].mxu0
      %v1045 = vadd.f32 %v795, %v1044
      %v1046 = vpop.f32.mrb[0].mxu0
      %1047 = vmatprep.mubr.f32.mxu0 0.0
      %v1048 = vand.u32 %v260, 4294901760
      %v1049 = vsub.f32 %v260, %v1048
      %1050 = vmatmul.mubr.f32.gmra.mrb[0].mxu0 %v1049
      %v1051 = vpop.f32.mrb[0].mxu0
      %v1052 = vadd.f32 %v801, %v1051
      %v1053 = vpop.f32.mrb[0].mxu0
      %1054 = vmatprep.mubr.f32.mxu0 0.0
      %v1055 = vand.u32 %v263, 4294901760
      %v1056 = vsub.f32 %v263, %v1055
      %1057 = vmatmul.mubr.f32.gmra.mrb[0].mxu0 %v1056
      %v1058 = vpop.f32.mrb[0].mxu0
      %v1059 = vadd.f32 %v807, %v1058
      %v1060 = vpop.f32.mrb[0].mxu0
      %1061 = vmatprep.mubr.f32.mxu0 0.0
      %v1062 = vand.u32 %v266, 4294901760
      %v1063 = vsub.f32 %v266, %v1062
      %1064 = vmatmul.mubr.f32.gmra.mrb[0].mxu0 %v1063
      %v1065 = vpop.f32.mrb[0].mxu0
      %v1066 = vadd.f32 %v813, %v1065
      %v1067 = vpop.f32.mrb[0].mxu0
      %1068 = vmatprep.mubr.f32.mxu0 0.0
      %v1069 = vand.u32 %v269, 4294901760
      %v1070 = vsub.f32 %v269, %v1069
      %1071 = vmatmul.mubr.f32.gmra.mrb[0].mxu0 %v1070
      %v1072 = vpop.f32.mrb[0].mxu0
      %v1073 = vadd.f32 %v819, %v1072
      %v1074 = vpop.f32.mrb[0].mxu0
      %1075 = vmatprep.mubr.f32.mxu0 0.0
      %v1076 = vand.u32 %v272, 4294901760
      %v1077 = vsub.f32 %v272, %v1076
      %1078 = vmatmul.mubr.f32.gmra.mrb[0].mxu0 %v1077
      %v1079 = vpop.f32.mrb[0].mxu0
      %v1080 = vadd.f32 %v825, %v1079
      %v1081 = vpop.f32.mrb[0].mxu0
      %1082 = vmatprep.mubr.f32.mxu0 0.0
      %v1083 = vand.u32 %v275, 4294901760
      %v1084 = vsub.f32 %v275, %v1083
      %1085 = vmatmul.mubr.f32.gmra.mrb[0].mxu0 %v1084
      %v1086 = vpop.f32.mrb[0].mxu0
      %v1087 = vadd.f32 %v831, %v1086
      %v1088 = vpop.f32.mrb[0].mxu0
      %1089 = vmatprep.mubr.f32.mxu0 0.0
      %v1090 = vand.u32 %v278, 4294901760
      %v1091 = vsub.f32 %v278, %v1090
      %1092 = vmatmul.mubr.f32.gmra.mrb[0].mxu0 %v1091
      %v1093 = vpop.f32.mrb[0].mxu0
      %v1094 = vadd.f32 %v837, %v1093
      %v1095 = vpop.f32.mrb[0].mxu0
      %1096 = vmatprep.mubr.f32.mxu0 0.0
      %v1097 = vand.u32 %v281, 4294901760
      %v1098 = vsub.f32 %v281, %v1097
      %1099 = vmatmul.mubr.f32.gmra.mrb[0].mxu0 %v1098
      %v1100 = vpop.f32.mrb[0].mxu0
      %v1101 = vadd.f32 %v843, %v1100
      %v1102 = vpop.f32.mrb[0].mxu0
      %1103 = vmatprep.mubr.f32.mxu0 0.0
      %v1104 = vand.u32 %v284, 4294901760
      %v1105 = vsub.f32 %v284, %v1104
      %1106 = vmatmul.mubr.f32.gmra.mrb[0].mxu0 %v1105
      %v1107 = vpop.f32.mrb[0].mxu0
      %v1108 = vadd.f32 %v849, %v1107
      %v1109 = vpop.f32.mrb[0].mxu0
      %1110 = vmatprep.mubr.f32.mxu0 0.0
      %v1111 = vand.u32 %v287, 4294901760
      %v1112 = vsub.f32 %v287, %v1111
      %1113 = vmatmul.mubr.f32.gmra.mrb[0].mxu0 %v1112
      %v1114 = vpop.f32.mrb[0].mxu0
      %v1115 = vadd.f32 %v855, %v1114
      %v1116 = vpop.f32.mrb[0].mxu0
      %1117 = vmatprep.mubr.f32.mxu0 0.0
      %v1118 = vand.u32 %v290, 4294901760
      %v1119 = vsub.f32 %v290, %v1118
      %1120 = vmatmul.mubr.f32.gmra.mrb[0].mxu0 %v1119
      %v1121 = vpop.f32.mrb[0].mxu0
      %v1122 = vadd.f32 %v861, %v1121
      %v1123 = vpop.f32.mrb[0].mxu0
      %1124 = vmatprep.mubr.f32.mxu0 0.0
      %v1125 = vand.u32 %v293, 4294901760
      %v1126 = vsub.f32 %v293, %v1125
      %1127 = vmatmul.mubr.f32.gmra.mrb[0].mxu0 %v1126
      %v1128 = vpop.f32.mrb[0].mxu0
      %v1129 = vadd.f32 %v867, %v1128
      %v1130 = vpop.f32.mrb[0].mxu0
      %1131 = vmatprep.mubr.f32.mxu0 0.0
      %v1132 = vand.u32 %v296, 4294901760
      %v1133 = vsub.f32 %v296, %v1132
      %1134 = vmatmul.mubr.f32.gmra.mrb[0].mxu0 %v1133
      %v1135 = vpop.f32.mrb[0].mxu0
      %v1136 = vadd.f32 %v873, %v1135
      %v1137 = vpop.f32.mrb[0].mxu0
      %1138 = vmatprep.mubr.f32.mxu0 0.0
      %v1139 = vand.u32 %v299, 4294901760
      %v1140 = vsub.f32 %v299, %v1139
      %1141 = vmatmul.mubr.f32.gmra.mrb[0].mxu0 %v1140
      %v1142 = vpop.f32.mrb[0].mxu0
      %v1143 = vadd.f32 %v879, %v1142
      %v1144 = vpop.f32.mrb[0].mxu0
      %1145 = vmatprep.mubr.f32.mxu0 0.0
      %v1146 = vand.u32 %v302, 4294901760
      %v1147 = vsub.f32 %v302, %v1146
      %1148 = vmatmul.mubr.f32.gmra.mrb[0].mxu0 %v1147
      %v1149 = vpop.f32.mrb[0].mxu0
      %v1150 = vadd.f32 %v885, %v1149
      %v1151 = vpop.f32.mrb[0].mxu0
      %1152 = vmatprep.mubr.f32.mxu0 0.0
      %v1153 = vand.u32 %v305, 4294901760
      %v1154 = vsub.f32 %v305, %v1153
      %1155 = vmatmul.mubr.f32.gmra.mrb[0].mxu0 %v1154
      %v1156 = vpop.f32.mrb[0].mxu0
      %v1157 = vadd.f32 %v891, %v1156
      %v1158 = vpop.f32.mrb[0].mxu0
      %1159 = vmatprep.mubr.f32.mxu0 0.0
      %v1160 = vand.u32 %v308, 4294901760
      %v1161 = vsub.f32 %v308, %v1160
      %1162 = vmatmul.mubr.f32.gmra.mrb[0].mxu0 %v1161
      %v1163 = vpop.f32.mrb[0].mxu0
      %v1164 = vadd.f32 %v897, %v1163
      %v1165 = vpop.f32.mrb[0].mxu0
      %1166 = vmatprep.mubr.f32.mxu0 0.0
      %v1167 = vand.u32 %v311, 4294901760
      %v1168 = vsub.f32 %v311, %v1167
      %1169 = vmatmul.mubr.f32.gmra.mrb[0].mxu0 %v1168
      %v1170 = vpop.f32.mrb[0].mxu0
      %v1171 = vadd.f32 %v903, %v1170
      %v1172 = vpop.f32.mrb[0].mxu0
      %1173 = vmatprep.mubr.f32.mxu0 0.0
      %v1174 = vand.u32 %v314, 4294901760
      %v1175 = vsub.f32 %v314, %v1174
      %1176 = vmatmul.mubr.f32.gmra.mrb[0].mxu0 %v1175
      %v1177 = vpop.f32.mrb[0].mxu0
      %v1178 = vadd.f32 %v909, %v1177
      %v1179 = vpop.f32.mrb[0].mxu0
      %1180 = vmatprep.mubr.f32.mxu0 0.0
      %v1181 = vand.u32 %v317, 4294901760
      %v1182 = vsub.f32 %v317, %v1181
      %1183 = vmatmul.mubr.f32.gmra.mrb[0].mxu0 %v1182
      %v1184 = vpop.f32.mrb[0].mxu0
      %v1185 = vadd.f32 %v915, %v1184
      %v1186 = vpop.f32.mrb[0].mxu0
      %1187 = vmatprep.mubr.f32.mxu0 0.0
      %v1188 = vand.u32 %v320, 4294901760
      %v1189 = vsub.f32 %v320, %v1188
      %1190 = vmatmul.mubr.f32.gmra.mrb[0].mxu0 %v1189
      %v1191 = vpop.f32.mrb[0].mxu0
      %v1192 = vadd.f32 %v921, %v1191
      %v1193 = vpop.f32.mrb[0].mxu0
      %1194 = vmatprep.mubr.f32.mxu0 0.0
      %v1195 = vand.u32 %v323, 4294901760
      %v1196 = vsub.f32 %v323, %v1195
      %1197 = vmatmul.mubr.f32.gmra.mrb[0].mxu0 %v1196
      %v1198 = vpop.f32.mrb[0].mxu0
      %v1199 = vadd.f32 %v927, %v1198
      %v1200 = vpop.f32.mrb[0].mxu0
      %1201 = vmatprep.mubr.f32.mxu0 0.0
      %v1202 = vand.u32 %v326, 4294901760
      %v1203 = vsub.f32 %v326, %v1202
      %1204 = vmatmul.mubr.f32.gmra.mrb[0].mxu0 %v1203
      %v1205 = vpop.f32.mrb[0].mxu0
      %v1206 = vadd.f32 %v933, %v1205
      %v1207 = vpop.f32.mrb[0].mxu0
      %1208 = vmatprep.mubr.f32.mxu0 0.0
      %v1209 = vand.u32 %v329, 4294901760
      %v1210 = vsub.f32 %v329, %v1209
      %1211 = vmatmul.mubr.f32.gmra.mrb[0].mxu0 %v1210
      %v1212 = vpop.f32.mrb[0].mxu0
      %v1213 = vadd.f32 %v939, %v1212
      %v1214 = vpop.f32.mrb[0].mxu0
      %1215 = vmatprep.mubr.f32.mxu0 0.0
      %v1216 = vand.u32 %v332, 4294901760
      %v1217 = vsub.f32 %v332, %v1216
      %1218 = vmatmul.mubr.f32.gmra.mrb[0].mxu0 %v1217
      %v1219 = vpop.f32.mrb[0].mxu0
      %v1220 = vadd.f32 %v945, %v1219
      %v1221 = vpop.f32.mrb[0].mxu0
      %1222 = vmatprep.mubr.f32.mxu0 0.0
      %v1223 = vand.u32 %v335, 4294901760
      %v1224 = vsub.f32 %v335, %v1223
      %1225 = vmatmul.mubr.f32.gmra.mrb[0].mxu0 %v1224
      %v1226 = vpop.f32.mrb[0].mxu0
      %v1227 = vadd.f32 %v951, %v1226
      %v1228 = vpop.f32.mrb[0].mxu0
      %1229 = vmatprep.mubr.f32.mxu0 0.0
      %v1230 = vand.u32 %v338, 4294901760
      %v1231 = vsub.f32 %v338, %v1230
      %1232 = vmatmul.mubr.f32.gmra.mrb[0].mxu0 %v1231
      %v1233 = vpop.f32.mrb[0].mxu0
      %v1234 = vadd.f32 %v957, %v1233
      %v1235 = vpop.f32.mrb[0].mxu0
      %1236 = vmatprep.mubr.f32.mxu0 0.0
      %v1237 = vand.u32 %v341, 4294901760
      %v1238 = vsub.f32 %v341, %v1237
      %1239 = vmatmul.mubr.f32.gmra.mrb[0].mxu0 %v1238
      %v1240 = vpop.f32.mrb[0].mxu0
      %v1241 = vadd.f32 %v963, %v1240
      %v1242 = vpop.f32.mrb[0].mxu0
      %1243 = vmatprep.mubr.f32.mxu0 0.0
      %v1244 = vand.u32 %v344, 4294901760
      %v1245 = vsub.f32 %v344, %v1244
      %1246 = vmatmul.mubr.f32.gmra.mrb[0].mxu0 %v1245
      %v1247 = vpop.f32.mrb[0].mxu0
      %v1248 = vadd.f32 %v969, %v1247
      %v1249 = vpop.f32.mrb[0].mxu0
      %1250 = vdwg.mxu0
      %1251 = vmatprep.subr.mxu0 0.0
      %v1252 = vand.u32 %v247, 4294901760
      %1253 = vmatpush1.msra.mxu0 %v1252
      %1254 = vmatprep.subr.mxu0 0.0
      %v1255 = vand.u32 %v348, 4294901760
      %1256 = vmatpush1.msra.mxu0 %v1255
      %1257 = vmatprep.subr.mxu0 0.0
      %1258 = vmatpush1.msra.mxu0 0.0
      %1259 = vmatprep.subr.mxu0 0.0
      %1260 = vmatpush1.msra.mxu0 0.0
      %1261 = vmatprep.subr.mxu0 0.0
      %1262 = vmatpush1.msra.mxu0 0.0
      %1263 = vmatprep.subr.mxu0 0.0
      %1264 = vmatpush1.msra.mxu0 0.0
      %1265 = vmatprep.subr.mxu0 0.0
      %1266 = vmatpush1.msra.mxu0 0.0
      %1267 = vmatprep.subr.mxu0 0.0
      %1268 = vmatpush1.msra.mxu0 0.0
      %1269 = vmatprep.subr.mxu0 0.0
      %1270 = vmatpush1.msra.mxu0 0.0
      %1271 = vmatprep.subr.mxu0 0.0
      %1272 = vmatpush1.msra.mxu0 0.0
      %1273 = vmatprep.subr.mxu0 0.0
      %1274 = vmatpush1.msra.mxu0 0.0
      %1275 = vmatprep.subr.mxu0 0.0
      %1276 = vmatpush1.msra.mxu0 0.0
      %1277 = vmatprep.subr.mxu0 0.0
      %1278 = vmatpush1.msra.mxu0 0.0
      %1279 = vmatprep.subr.mxu0 0.0
      %1280 = vmatpush1.msra.mxu0 0.0
      %1281 = vmatprep.subr.mxu0 0.0
      %1282 = vmatpush1.msra.mxu0 0.0
      %1283 = vmatprep.subr.mxu0 0.0
      %1284 = vmatpush1.msra.mxu0 0.0
      %1285 = vmatprep.subr.mxu0 0.0
      %1286 = vmatpush1.msra.mxu0 0.0
      %1287 = vmatprep.subr.mxu0 0.0
      %1288 = vmatpush1.msra.mxu0 0.0
      %1289 = vmatprep.subr.mxu0 0.0
      %1290 = vmatpush1.msra.mxu0 0.0
      %1291 = vmatprep.subr.mxu0 0.0
      %1292 = vmatpush1.msra.mxu0 0.0
      %1293 = vmatprep.subr.mxu0 0.0
      %1294 = vmatpush1.msra.mxu0 0.0
      %1295 = vmatprep.subr.mxu0 0.0
      %1296 = vmatpush1.msra.mxu0 0.0
      %1297 = vmatprep.subr.mxu0 0.0
      %1298 = vmatpush1.msra.mxu0 0.0
      %1299 = vmatprep.subr.mxu0 0.0
      %1300 = vmatpush1.msra.mxu0 0.0
      %1301 = vmatprep.subr.mxu0 0.0
      %1302 = vmatpush1.msra.mxu0 0.0
      %1303 = vmatprep.subr.mxu0 0.0
      %1304 = vmatpush1.msra.mxu0 0.0
      %1305 = vmatprep.subr.mxu0 0.0
      %1306 = vmatpush1.msra.mxu0 0.0
      %1307 = vmatprep.subr.mxu0 0.0
      %1308 = vmatpush1.msra.mxu0 0.0
      %1309 = vmatprep.subr.mxu0 0.0
      %1310 = vmatpush1.msra.mxu0 0.0
      %1311 = vmatprep.subr.mxu0 0.0
      %1312 = vmatpush1.msra.mxu0 0.0
      %1313 = vmatprep.subr.mxu0 0.0
      %1314 = vmatpush1.msra.mxu0 0.0
      %1315 = vmatprep.subr.mxu0 0.0
      %1316 = vmatpush1.msra.mxu0 0.0
      %1317 = vmatprep.mubr.f32.mxu0 0.0
      %v1318 = vand.u32 %v257, 4294901760
      %v1319 = vsub.f32 %v257, %v1318
      %v1320 = vand.u32 %v1319, 4294901760
      %1321 = vmatmul.mubr.f32.gmra.mrb[0].mxu0 %v1320
      %v1322 = vpop.f32.mrb[0].mxu0
      %v1323 = vadd.f32 %v1045, %v1322
      %v1324 = vpop.f32.mrb[0].mxu0
      %1325 = vmatprep.mubr.f32.mxu0 0.0
      %v1326 = vand.u32 %v260, 4294901760
      %v1327 = vsub.f32 %v260, %v1326
      %v1328 = vand.u32 %v1327, 4294901760
      %1329 = vmatmul.mubr.f32.gmra.mrb[0].mxu0 %v1328
      %v1330 = vpop.f32.mrb[0].mxu0
      %v1331 = vadd.f32 %v1052, %v1330
      %v1332 = vpop.f32.mrb[0].mxu0
      %1333 = vmatprep.mubr.f32.mxu0 0.0
      %v1334 = vand.u32 %v263, 4294901760
      %v1335 = vsub.f32 %v263, %v1334
      %v1336 = vand.u32 %v1335, 4294901760
      %1337 = vmatmul.mubr.f32.gmra.mrb[0].mxu0 %v1336
      %v1338 = vpop.f32.mrb[0].mxu0
      %v1339 = vadd.f32 %v1059, %v1338
      %v1340 = vpop.f32.mrb[0].mxu0
      %1341 = vmatprep.mubr.f32.mxu0 0.0
      %v1342 = vand.u32 %v266, 4294901760
      %v1343 = vsub.f32 %v266, %v1342
      %v1344 = vand.u32 %v1343, 4294901760
      %1345 = vmatmul.mubr.f32.gmra.mrb[0].mxu0 %v1344
      %v1346 = vpop.f32.mrb[0].mxu0
      %v1347 = vadd.f32 %v1066, %v1346
      %v1348 = vpop.f32.mrb[0].mxu0
      %1349 = vmatprep.mubr.f32.mxu0 0.0
      %v1350 = vand.u32 %v269, 4294901760
      %v1351 = vsub.f32 %v269, %v1350
      %v1352 = vand.u32 %v1351, 4294901760
      %1353 = vmatmul.mubr.f32.gmra.mrb[0].mxu0 %v1352
      %v1354 = vpop.f32.mrb[0].mxu0
      %v1355 = vadd.f32 %v1073, %v1354
      %v1356 = vpop.f32.mrb[0].mxu0
      %1357 = vmatprep.mubr.f32.mxu0 0.0
      %v1358 = vand.u32 %v272, 4294901760
      %v1359 = vsub.f32 %v272, %v1358
      %v1360 = vand.u32 %v1359, 4294901760
      %1361 = vmatmul.mubr.f32.gmra.mrb[0].mxu0 %v1360
      %v1362 = vpop.f32.mrb[0].mxu0
      %v1363 = vadd.f32 %v1080, %v1362
      %v1364 = vpop.f32.mrb[0].mxu0
      %1365 = vmatprep.mubr.f32.mxu0 0.0
      %v1366 = vand.u32 %v275, 4294901760
      %v1367 = vsub.f32 %v275, %v1366
      %v1368 = vand.u32 %v1367, 4294901760
      %1369 = vmatmul.mubr.f32.gmra.mrb[0].mxu0 %v1368
      %v1370 = vpop.f32.mrb[0].mxu0
      %v1371 = vadd.f32 %v1087, %v1370
      %v1372 = vpop.f32.mrb[0].mxu0
      %1373 = vmatprep.mubr.f32.mxu0 0.0
      %v1374 = vand.u32 %v278, 4294901760
      %v1375 = vsub.f32 %v278, %v1374
      %v1376 = vand.u32 %v1375, 4294901760
      %1377 = vmatmul.mubr.f32.gmra.mrb[0].mxu0 %v1376
      %v1378 = vpop.f32.mrb[0].mxu0
      %v1379 = vadd.f32 %v1094, %v1378
      %v1380 = vpop.f32.mrb[0].mxu0
      %1381 = vmatprep.mubr.f32.mxu0 0.0
      %v1382 = vand.u32 %v281, 4294901760
      %v1383 = vsub.f32 %v281, %v1382
      %v1384 = vand.u32 %v1383, 4294901760
      %1385 = vmatmul.mubr.f32.gmra.mrb[0].mxu0 %v1384
      %v1386 = vpop.f32.mrb[0].mxu0
      %v1387 = vadd.f32 %v1101, %v1386
      %v1388 = vpop.f32.mrb[0].mxu0
      %1389 = vmatprep.mubr.f32.mxu0 0.0
      %v1390 = vand.u32 %v284, 4294901760
      %v1391 = vsub.f32 %v284, %v1390
      %v1392 = vand.u32 %v1391, 4294901760
      %1393 = vmatmul.mubr.f32.gmra.mrb[0].mxu0 %v1392
      %v1394 = vpop.f32.mrb[0].mxu0
      %v1395 = vadd.f32 %v1108, %v1394
      %v1396 = vpop.f32.mrb[0].mxu0
      %1397 = vmatprep.mubr.f32.mxu0 0.0
      %v1398 = vand.u32 %v287, 4294901760
      %v1399 = vsub.f32 %v287, %v1398
      %v1400 = vand.u32 %v1399, 4294901760
      %1401 = vmatmul.mubr.f32.gmra.mrb[0].mxu0 %v1400
      %v1402 = vpop.f32.mrb[0].mxu0
      %v1403 = vadd.f32 %v1115, %v1402
      %v1404 = vpop.f32.mrb[0].mxu0
      %1405 = vmatprep.mubr.f32.mxu0 0.0
      %v1406 = vand.u32 %v290, 4294901760
      %v1407 = vsub.f32 %v290, %v1406
      %v1408 = vand.u32 %v1407, 4294901760
      %1409 = vmatmul.mubr.f32.gmra.mrb[0].mxu0 %v1408
      %v1410 = vpop.f32.mrb[0].mxu0
      %v1411 = vadd.f32 %v1122, %v1410
      %v1412 = vpop.f32.mrb[0].mxu0
      %1413 = vmatprep.mubr.f32.mxu0 0.0
      %v1414 = vand.u32 %v293, 4294901760
      %v1415 = vsub.f32 %v293, %v1414
      %v1416 = vand.u32 %v1415, 4294901760
      %1417 = vmatmul.mubr.f32.gmra.mrb[0].mxu0 %v1416
      %v1418 = vpop.f32.mrb[0].mxu0
      %v1419 = vadd.f32 %v1129, %v1418
      %v1420 = vpop.f32.mrb[0].mxu0
      %1421 = vmatprep.mubr.f32.mxu0 0.0
      %v1422 = vand.u32 %v296, 4294901760
      %v1423 = vsub.f32 %v296, %v1422
      %v1424 = vand.u32 %v1423, 4294901760
      %1425 = vmatmul.mubr.f32.gmra.mrb[0].mxu0 %v1424
      %v1426 = vpop.f32.mrb[0].mxu0
      %v1427 = vadd.f32 %v1136, %v1426
      %v1428 = vpop.f32.mrb[0].mxu0
      %1429 = vmatprep.mubr.f32.mxu0 0.0
      %v1430 = vand.u32 %v299, 4294901760
      %v1431 = vsub.f32 %v299, %v1430
      %v1432 = vand.u32 %v1431, 4294901760
      %1433 = vmatmul.mubr.f32.gmra.mrb[0].mxu0 %v1432
      %v1434 = vpop.f32.mrb[0].mxu0
      %v1435 = vadd.f32 %v1143, %v1434
      %v1436 = vpop.f32.mrb[0].mxu0
      %1437 = vmatprep.mubr.f32.mxu0 0.0
      %v1438 = vand.u32 %v302, 4294901760
      %v1439 = vsub.f32 %v302, %v1438
      %v1440 = vand.u32 %v1439, 4294901760
      %1441 = vmatmul.mubr.f32.gmra.mrb[0].mxu0 %v1440
      %v1442 = vpop.f32.mrb[0].mxu0
      %v1443 = vadd.f32 %v1150, %v1442
      %v1444 = vpop.f32.mrb[0].mxu0
      %1445 = vmatprep.mubr.f32.mxu0 0.0
      %v1446 = vand.u32 %v305, 4294901760
      %v1447 = vsub.f32 %v305, %v1446
      %v1448 = vand.u32 %v1447, 4294901760
      %1449 = vmatmul.mubr.f32.gmra.mrb[0].mxu0 %v1448
      %v1450 = vpop.f32.mrb[0].mxu0
      %v1451 = vadd.f32 %v1157, %v1450
      %v1452 = vpop.f32.mrb[0].mxu0
      %1453 = vmatprep.mubr.f32.mxu0 0.0
      %v1454 = vand.u32 %v308, 4294901760
      %v1455 = vsub.f32 %v308, %v1454
      %v1456 = vand.u32 %v1455, 4294901760
      %1457 = vmatmul.mubr.f32.gmra.mrb[0].mxu0 %v1456
      %v1458 = vpop.f32.mrb[0].mxu0
      %v1459 = vadd.f32 %v1164, %v1458
      %v1460 = vpop.f32.mrb[0].mxu0
      %1461 = vmatprep.mubr.f32.mxu0 0.0
      %v1462 = vand.u32 %v311, 4294901760
      %v1463 = vsub.f32 %v311, %v1462
      %v1464 = vand.u32 %v1463, 4294901760
      %1465 = vmatmul.mubr.f32.gmra.mrb[0].mxu0 %v1464
      %v1466 = vpop.f32.mrb[0].mxu0
      %v1467 = vadd.f32 %v1171, %v1466
      %v1468 = vpop.f32.mrb[0].mxu0
      %1469 = vmatprep.mubr.f32.mxu0 0.0
      %v1470 = vand.u32 %v314, 4294901760
      %v1471 = vsub.f32 %v314, %v1470
      %v1472 = vand.u32 %v1471, 4294901760
      %1473 = vmatmul.mubr.f32.gmra.mrb[0].mxu0 %v1472
      %v1474 = vpop.f32.mrb[0].mxu0
      %v1475 = vadd.f32 %v1178, %v1474
      %v1476 = vpop.f32.mrb[0].mxu0
      %1477 = vmatprep.mubr.f32.mxu0 0.0
      %v1478 = vand.u32 %v317, 4294901760
      %v1479 = vsub.f32 %v317, %v1478
      %v1480 = vand.u32 %v1479, 4294901760
      %1481 = vmatmul.mubr.f32.gmra.mrb[0].mxu0 %v1480
      %v1482 = vpop.f32.mrb[0].mxu0
      %v1483 = vadd.f32 %v1185, %v1482
      %v1484 = vpop.f32.mrb[0].mxu0
      %1485 = vmatprep.mubr.f32.mxu0 0.0
      %v1486 = vand.u32 %v320, 4294901760
      %v1487 = vsub.f32 %v320, %v1486
      %v1488 = vand.u32 %v1487, 4294901760
      %1489 = vmatmul.mubr.f32.gmra.mrb[0].mxu0 %v1488
      %v1490 = vpop.f32.mrb[0].mxu0
      %v1491 = vadd.f32 %v1192, %v1490
      %v1492 = vpop.f32.mrb[0].mxu0
      %1493 = vmatprep.mubr.f32.mxu0 0.0
      %v1494 = vand.u32 %v323, 4294901760
      %v1495 = vsub.f32 %v323, %v1494
      %v1496 = vand.u32 %v1495, 4294901760
      %1497 = vmatmul.mubr.f32.gmra.mrb[0].mxu0 %v1496
      %v1498 = vpop.f32.mrb[0].mxu0
      %v1499 = vadd.f32 %v1199, %v1498
      %v1500 = vpop.f32.mrb[0].mxu0
      %1501 = vmatprep.mubr.f32.mxu0 0.0
      %v1502 = vand.u32 %v326, 4294901760
      %v1503 = vsub.f32 %v326, %v1502
      %v1504 = vand.u32 %v1503, 4294901760
      %1505 = vmatmul.mubr.f32.gmra.mrb[0].mxu0 %v1504
      %v1506 = vpop.f32.mrb[0].mxu0
      %v1507 = vadd.f32 %v1206, %v1506
      %v1508 = vpop.f32.mrb[0].mxu0
      %1509 = vmatprep.mubr.f32.mxu0 0.0
      %v1510 = vand.u32 %v329, 4294901760
      %v1511 = vsub.f32 %v329, %v1510
      %v1512 = vand.u32 %v1511, 4294901760
      %1513 = vmatmul.mubr.f32.gmra.mrb[0].mxu0 %v1512
      %v1514 = vpop.f32.mrb[0].mxu0
      %v1515 = vadd.f32 %v1213, %v1514
      %v1516 = vpop.f32.mrb[0].mxu0
      %1517 = vmatprep.mubr.f32.mxu0 0.0
      %v1518 = vand.u32 %v332, 4294901760
      %v1519 = vsub.f32 %v332, %v1518
      %v1520 = vand.u32 %v1519, 4294901760
      %1521 = vmatmul.mubr.f32.gmra.mrb[0].mxu0 %v1520
      %v1522 = vpop.f32.mrb[0].mxu0
      %v1523 = vadd.f32 %v1220, %v1522
      %v1524 = vpop.f32.mrb[0].mxu0
      %1525 = vmatprep.mubr.f32.mxu0 0.0
      %v1526 = vand.u32 %v335, 4294901760
      %v1527 = vsub.f32 %v335, %v1526
      %v1528 = vand.u32 %v1527, 4294901760
      %1529 = vmatmul.mubr.f32.gmra.mrb[0].mxu0 %v1528
      %v1530 = vpop.f32.mrb[0].mxu0
      %v1531 = vadd.f32 %v1227, %v1530
      %v1532 = vpop.f32.mrb[0].mxu0
      %1533 = vmatprep.mubr.f32.mxu0 0.0
      %v1534 = vand.u32 %v338, 4294901760
      %v1535 = vsub.f32 %v338, %v1534
      %v1536 = vand.u32 %v1535, 4294901760
      %1537 = vmatmul.mubr.f32.gmra.mrb[0].mxu0 %v1536
      %v1538 = vpop.f32.mrb[0].mxu0
      %v1539 = vadd.f32 %v1234, %v1538
      %v1540 = vpop.f32.mrb[0].mxu0
      %1541 = vmatprep.mubr.f32.mxu0 0.0
      %v1542 = vand.u32 %v341, 4294901760
      %v1543 = vsub.f32 %v341, %v1542
      %v1544 = vand.u32 %v1543, 4294901760
      %1545 = vmatmul.mubr.f32.gmra.mrb[0].mxu0 %v1544
      %v1546 = vpop.f32.mrb[0].mxu0
      %v1547 = vadd.f32 %v1241, %v1546
      %v1548 = vpop.f32.mrb[0].mxu0
      %1549 = vmatprep.mubr.f32.mxu0 0.0
      %v1550 = vand.u32 %v344, 4294901760
      %v1551 = vsub.f32 %v344, %v1550
      %v1552 = vand.u32 %v1551, 4294901760
      %1553 = vmatmul.mubr.f32.gmra.mrb[0].mxu0 %v1552
      %v1554 = vpop.f32.mrb[0].mxu0
      %v1555 = vadd.f32 %v1248, %v1554
      %v1556 = vpop.f32.mrb[0].mxu0
      %1557 = vdwg.mxu0
      %1558 = vmatprep.subr.mxu0 0.0
      %v1559 = vand.u32 %v247, 4294901760
      %v1560 = vsub.f32 %v247, %v1559
      %v1561 = vand.u32 %v1560, 4294901760
      %1562 = vmatpush1.msra.mxu0 %v1561
      %1563 = vmatprep.subr.mxu0 0.0
      %v1564 = vand.u32 %v348, 4294901760
      %v1565 = vsub.f32 %v348, %v1564
      %v1566 = vand.u32 %v1565, 4294901760
      %1567 = vmatpush1.msra.mxu0 %v1566
      %1568 = vmatprep.subr.mxu0 0.0
      %1569 = vmatpush1.msra.mxu0 0.0
      %1570 = vmatprep.subr.mxu0 0.0
      %1571 = vmatpush1.msra.mxu0 0.0
      %1572 = vmatprep.subr.mxu0 0.0
      %1573 = vmatpush1.msra.mxu0 0.0
      %1574 = vmatprep.subr.mxu0 0.0
      %1575 = vmatpush1.msra.mxu0 0.0
      %1576 = vmatprep.subr.mxu0 0.0
      %1577 = vmatpush1.msra.mxu0 0.0
      %1578 = vmatprep.subr.mxu0 0.0
      %1579 = vmatpush1.msra.mxu0 0.0
      %1580 = vmatprep.subr.mxu0 0.0
      %1581 = vmatpush1.msra.mxu0 0.0
      %1582 = vmatprep.subr.mxu0 0.0
      %1583 = vmatpush1.msra.mxu0 0.0
      %1584 = vmatprep.subr.mxu0 0.0
      %1585 = vmatpush1.msra.mxu0 0.0
      %1586 = vmatprep.subr.mxu0 0.0
      %1587 = vmatpush1.msra.mxu0 0.0
      %1588 = vmatprep.subr.mxu0 0.0
      %1589 = vmatpush1.msra.mxu0 0.0
      %1590 = vmatprep.subr.mxu0 0.0
      %1591 = vmatpush1.msra.mxu0 0.0
      %1592 = vmatprep.subr.mxu0 0.0
      %1593 = vmatpush1.msra.mxu0 0.0
      %1594 = vmatprep.subr.mxu0 0.0
      %1595 = vmatpush1.msra.mxu0 0.0
      %1596 = vmatprep.subr.mxu0 0.0
      %1597 = vmatpush1.msra.mxu0 0.0
      %1598 = vmatprep.subr.mxu0 0.0
      %1599 = vmatpush1.msra.mxu0 0.0
      %1600 = vmatprep.subr.mxu0 0.0
      %1601 = vmatpush1.msra.mxu0 0.0
      %1602 = vmatprep.subr.mxu0 0.0
      %1603 = vmatpush1.msra.mxu0 0.0
      %1604 = vmatprep.subr.mxu0 0.0
      %1605 = vmatpush1.msra.mxu0 0.0
      %1606 = vmatprep.subr.mxu0 0.0
      %1607 = vmatpush1.msra.mxu0 0.0
      %1608 = vmatprep.subr.mxu0 0.0
      %1609 = vmatpush1.msra.mxu0 0.0
      %1610 = vmatprep.subr.mxu0 0.0
      %1611 = vmatpush1.msra.mxu0 0.0
      %1612 = vmatprep.subr.mxu0 0.0
      %1613 = vmatpush1.msra.mxu0 0.0
      %1614 = vmatprep.subr.mxu0 0.0
      %1615 = vmatpush1.msra.mxu0 0.0
      %1616 = vmatprep.subr.mxu0 0.0
      %1617 = vmatpush1.msra.mxu0 0.0
      %1618 = vmatprep.subr.mxu0 0.0
      %1619 = vmatpush1.msra.mxu0 0.0
      %1620 = vmatprep.subr.mxu0 0.0
      %1621 = vmatpush1.msra.mxu0 0.0
      %1622 = vmatprep.subr.mxu0 0.0
      %1623 = vmatpush1.msra.mxu0 0.0
      %1624 = vmatprep.subr.mxu0 0.0
      %1625 = vmatpush1.msra.mxu0 0.0
      %1626 = vmatprep.subr.mxu0 0.0
      %1627 = vmatpush1.msra.mxu0 0.0
      %1628 = vmatprep.mubr.f32.mxu0 0.0
      %v1629 = vand.u32 %v257, 4294901760
      %1630 = vmatmul.mubr.f32.gmra.mrb[0].mxu0 %v1629
      %v1631 = vpop.f32.mrb[0].mxu0
      %v1632 = vadd.f32 %v1323, %v1631
      %v1633 = vpop.f32.mrb[0].mxu0
      %1634 = vmatprep.mubr.f32.mxu0 0.0
      %v1635 = vand.u32 %v260, 4294901760
      %1636 = vmatmul.mubr.f32.gmra.mrb[0].mxu0 %v1635
      %v1637 = vpop.f32.mrb[0].mxu0
      %v1638 = vadd.f32 %v1331, %v1637
      %v1639 = vpop.f32.mrb[0].mxu0
      %1640 = vmatprep.mubr.f32.mxu0 0.0
      %v1641 = vand.u32 %v263, 4294901760
      %1642 = vmatmul.mubr.f32.gmra.mrb[0].mxu0 %v1641
      %v1643 = vpop.f32.mrb[0].mxu0
      %v1644 = vadd.f32 %v1339, %v1643
      %v1645 = vpop.f32.mrb[0].mxu0
      %1646 = vmatprep.mubr.f32.mxu0 0.0
      %v1647 = vand.u32 %v266, 4294901760
      %1648 = vmatmul.mubr.f32.gmra.mrb[0].mxu0 %v1647
      %v1649 = vpop.f32.mrb[0].mxu0
      %v1650 = vadd.f32 %v1347, %v1649
      %v1651 = vpop.f32.mrb[0].mxu0
      %1652 = vmatprep.mubr.f32.mxu0 0.0
      %v1653 = vand.u32 %v269, 4294901760
      %1654 = vmatmul.mubr.f32.gmra.mrb[0].mxu0 %v1653
      %v1655 = vpop.f32.mrb[0].mxu0
      %v1656 = vadd.f32 %v1355, %v1655
      %v1657 = vpop.f32.mrb[0].mxu0
      %1658 = vmatprep.mubr.f32.mxu0 0.0
      %v1659 = vand.u32 %v272, 4294901760
      %1660 = vmatmul.mubr.f32.gmra.mrb[0].mxu0 %v1659
      %v1661 = vpop.f32.mrb[0].mxu0
      %v1662 = vadd.f32 %v1363, %v1661
      %v1663 = vpop.f32.mrb[0].mxu0
      %1664 = vmatprep.mubr.f32.mxu0 0.0
      %v1665 = vand.u32 %v275, 4294901760
      %1666 = vmatmul.mubr.f32.gmra.mrb[0].mxu0 %v1665
      %v1667 = vpop.f32.mrb[0].mxu0
      %v1668 = vadd.f32 %v1371, %v1667
      %v1669 = vpop.f32.mrb[0].mxu0
      %1670 = vmatprep.mubr.f32.mxu0 0.0
      %v1671 = vand.u32 %v278, 4294901760
      %1672 = vmatmul.mubr.f32.gmra.mrb[0].mxu0 %v1671
      %v1673 = vpop.f32.mrb[0].mxu0
      %v1674 = vadd.f32 %v1379, %v1673
      %v1675 = vpop.f32.mrb[0].mxu0
      %1676 = vmatprep.mubr.f32.mxu0 0.0
      %v1677 = vand.u32 %v281, 4294901760
      %1678 = vmatmul.mubr.f32.gmra.mrb[0].mxu0 %v1677
      %v1679 = vpop.f32.mrb[0].mxu0
      %v1680 = vadd.f32 %v1387, %v1679
      %v1681 = vpop.f32.mrb[0].mxu0
      %1682 = vmatprep.mubr.f32.mxu0 0.0
      %v1683 = vand.u32 %v284, 4294901760
      %1684 = vmatmul.mubr.f32.gmra.mrb[0].mxu0 %v1683
      %v1685 = vpop.f32.mrb[0].mxu0
      %v1686 = vadd.f32 %v1395, %v1685
      %v1687 = vpop.f32.mrb[0].mxu0
      %1688 = vmatprep.mubr.f32.mxu0 0.0
      %v1689 = vand.u32 %v287, 4294901760
      %1690 = vmatmul.mubr.f32.gmra.mrb[0].mxu0 %v1689
      %v1691 = vpop.f32.mrb[0].mxu0
      %v1692 = vadd.f32 %v1403, %v1691
      %v1693 = vpop.f32.mrb[0].mxu0
      %1694 = vmatprep.mubr.f32.mxu0 0.0
      %v1695 = vand.u32 %v290, 4294901760
      %1696 = vmatmul.mubr.f32.gmra.mrb[0].mxu0 %v1695
      %v1697 = vpop.f32.mrb[0].mxu0
      %v1698 = vadd.f32 %v1411, %v1697
      %v1699 = vpop.f32.mrb[0].mxu0
      %1700 = vmatprep.mubr.f32.mxu0 0.0
      %v1701 = vand.u32 %v293, 4294901760
      %1702 = vmatmul.mubr.f32.gmra.mrb[0].mxu0 %v1701
      %v1703 = vpop.f32.mrb[0].mxu0
      %v1704 = vadd.f32 %v1419, %v1703
      %v1705 = vpop.f32.mrb[0].mxu0
      %1706 = vmatprep.mubr.f32.mxu0 0.0
      %v1707 = vand.u32 %v296, 4294901760
      %1708 = vmatmul.mubr.f32.gmra.mrb[0].mxu0 %v1707
      %v1709 = vpop.f32.mrb[0].mxu0
      %v1710 = vadd.f32 %v1427, %v1709
      %v1711 = vpop.f32.mrb[0].mxu0
      %1712 = vmatprep.mubr.f32.mxu0 0.0
      %v1713 = vand.u32 %v299, 4294901760
      %1714 = vmatmul.mubr.f32.gmra.mrb[0].mxu0 %v1713
      %v1715 = vpop.f32.mrb[0].mxu0
      %v1716 = vadd.f32 %v1435, %v1715
      %v1717 = vpop.f32.mrb[0].mxu0
      %1718 = vmatprep.mubr.f32.mxu0 0.0
      %v1719 = vand.u32 %v302, 4294901760
      %1720 = vmatmul.mubr.f32.gmra.mrb[0].mxu0 %v1719
      %v1721 = vpop.f32.mrb[0].mxu0
      %v1722 = vadd.f32 %v1443, %v1721
      %v1723 = vpop.f32.mrb[0].mxu0
      %1724 = vmatprep.mubr.f32.mxu0 0.0
      %v1725 = vand.u32 %v305, 4294901760
      %1726 = vmatmul.mubr.f32.gmra.mrb[0].mxu0 %v1725
      %v1727 = vpop.f32.mrb[0].mxu0
      %v1728 = vadd.f32 %v1451, %v1727
      %v1729 = vpop.f32.mrb[0].mxu0
      %1730 = vmatprep.mubr.f32.mxu0 0.0
      %v1731 = vand.u32 %v308, 4294901760
      %1732 = vmatmul.mubr.f32.gmra.mrb[0].mxu0 %v1731
      %v1733 = vpop.f32.mrb[0].mxu0
      %v1734 = vadd.f32 %v1459, %v1733
      %v1735 = vpop.f32.mrb[0].mxu0
      %1736 = vmatprep.mubr.f32.mxu0 0.0
      %v1737 = vand.u32 %v311, 4294901760
      %1738 = vmatmul.mubr.f32.gmra.mrb[0].mxu0 %v1737
      %v1739 = vpop.f32.mrb[0].mxu0
      %v1740 = vadd.f32 %v1467, %v1739
      %v1741 = vpop.f32.mrb[0].mxu0
      %1742 = vmatprep.mubr.f32.mxu0 0.0
      %v1743 = vand.u32 %v314, 4294901760
      %1744 = vmatmul.mubr.f32.gmra.mrb[0].mxu0 %v1743
      %v1745 = vpop.f32.mrb[0].mxu0
      %v1746 = vadd.f32 %v1475, %v1745
      %v1747 = vpop.f32.mrb[0].mxu0
      %1748 = vmatprep.mubr.f32.mxu0 0.0
      %v1749 = vand.u32 %v317, 4294901760
      %1750 = vmatmul.mubr.f32.gmra.mrb[0].mxu0 %v1749
      %v1751 = vpop.f32.mrb[0].mxu0
      %v1752 = vadd.f32 %v1483, %v1751
      %v1753 = vpop.f32.mrb[0].mxu0
      %1754 = vmatprep.mubr.f32.mxu0 0.0
      %v1755 = vand.u32 %v320, 4294901760
      %1756 = vmatmul.mubr.f32.gmra.mrb[0].mxu0 %v1755
      %v1757 = vpop.f32.mrb[0].mxu0
      %v1758 = vadd.f32 %v1491, %v1757
      %v1759 = vpop.f32.mrb[0].mxu0
      %1760 = vmatprep.mubr.f32.mxu0 0.0
      %v1761 = vand.u32 %v323, 4294901760
      %1762 = vmatmul.mubr.f32.gmra.mrb[0].mxu0 %v1761
      %v1763 = vpop.f32.mrb[0].mxu0
      %v1764 = vadd.f32 %v1499, %v1763
      %v1765 = vpop.f32.mrb[0].mxu0
      %1766 = vmatprep.mubr.f32.mxu0 0.0
      %v1767 = vand.u32 %v326, 4294901760
      %1768 = vmatmul.mubr.f32.gmra.mrb[0].mxu0 %v1767
      %v1769 = vpop.f32.mrb[0].mxu0
      %v1770 = vadd.f32 %v1507, %v1769
      %v1771 = vpop.f32.mrb[0].mxu0
      %1772 = vmatprep.mubr.f32.mxu0 0.0
      %v1773 = vand.u32 %v329, 4294901760
      %1774 = vmatmul.mubr.f32.gmra.mrb[0].mxu0 %v1773
      %v1775 = vpop.f32.mrb[0].mxu0
      %v1776 = vadd.f32 %v1515, %v1775
      %v1777 = vpop.f32.mrb[0].mxu0
      %1778 = vmatprep.mubr.f32.mxu0 0.0
      %v1779 = vand.u32 %v332, 4294901760
      %1780 = vmatmul.mubr.f32.gmra.mrb[0].mxu0 %v1779
      %v1781 = vpop.f32.mrb[0].mxu0
      %v1782 = vadd.f32 %v1523, %v1781
      %v1783 = vpop.f32.mrb[0].mxu0
      %1784 = vmatprep.mubr.f32.mxu0 0.0
      %v1785 = vand.u32 %v335, 4294901760
      %1786 = vmatmul.mubr.f32.gmra.mrb[0].mxu0 %v1785
      %v1787 = vpop.f32.mrb[0].mxu0
      %v1788 = vadd.f32 %v1531, %v1787
      %v1789 = vpop.f32.mrb[0].mxu0
      %1790 = vmatprep.mubr.f32.mxu0 0.0
      %v1791 = vand.u32 %v338, 4294901760
      %1792 = vmatmul.mubr.f32.gmra.mrb[0].mxu0 %v1791
      %v1793 = vpop.f32.mrb[0].mxu0
      %v1794 = vadd.f32 %v1539, %v1793
      %v1795 = vpop.f32.mrb[0].mxu0
      %1796 = vmatprep.mubr.f32.mxu0 0.0
      %v1797 = vand.u32 %v341, 4294901760
      %1798 = vmatmul.mubr.f32.gmra.mrb[0].mxu0 %v1797
      %v1799 = vpop.f32.mrb[0].mxu0
      %v1800 = vadd.f32 %v1547, %v1799
      %v1801 = vpop.f32.mrb[0].mxu0
      %1802 = vmatprep.mubr.f32.mxu0 0.0
      %v1803 = vand.u32 %v344, 4294901760
      %1804 = vmatmul.mubr.f32.gmra.mrb[0].mxu0 %v1803
      %v1805 = vpop.f32.mrb[0].mxu0
      %v1806 = vadd.f32 %v1555, %v1805
      %v1807 = vpop.f32.mrb[0].mxu0
      %1808 = vdwg.mxu0
      %1809 = vmatprep.subr.mxu0 0.0
      %v1810 = vand.u32 %v247, 4294901760
      %1811 = vmatpush1.msra.mxu0 %v1810
      %1812 = vmatprep.subr.mxu0 0.0
      %v1813 = vand.u32 %v348, 4294901760
      %1814 = vmatpush1.msra.mxu0 %v1813
      %1815 = vmatprep.subr.mxu0 0.0
      %1816 = vmatpush1.msra.mxu0 0.0
      %1817 = vmatprep.subr.mxu0 0.0
      %1818 = vmatpush1.msra.mxu0 0.0
      %1819 = vmatprep.subr.mxu0 0.0
      %1820 = vmatpush1.msra.mxu0 0.0
      %1821 = vmatprep.subr.mxu0 0.0
      %1822 = vmatpush1.msra.mxu0 0.0
      %1823 = vmatprep.subr.mxu0 0.0
      %1824 = vmatpush1.msra.mxu0 0.0
      %1825 = vmatprep.subr.mxu0 0.0
      %1826 = vmatpush1.msra.mxu0 0.0
      %1827 = vmatprep.subr.mxu0 0.0
      %1828 = vmatpush1.msra.mxu0 0.0
      %1829 = vmatprep.subr.mxu0 0.0
      %1830 = vmatpush1.msra.mxu0 0.0
      %1831 = vmatprep.subr.mxu0 0.0
      %1832 = vmatpush1.msra.mxu0 0.0
      %1833 = vmatprep.subr.mxu0 0.0
      %1834 = vmatpush1.msra.mxu0 0.0
      %1835 = vmatprep.subr.mxu0 0.0
      %1836 = vmatpush1.msra.mxu0 0.0
      %1837 = vmatprep.subr.mxu0 0.0
      %1838 = vmatpush1.msra.mxu0 0.0
      %1839 = vmatprep.subr.mxu0 0.0
      %1840 = vmatpush1.msra.mxu0 0.0
      %1841 = vmatprep.subr.mxu0 0.0
      %1842 = vmatpush1.msra.mxu0 0.0
      %1843 = vmatprep.subr.mxu0 0.0
      %1844 = vmatpush1.msra.mxu0 0.0
      %1845 = vmatprep.subr.mxu0 0.0
      %1846 = vmatpush1.msra.mxu0 0.0
      %1847 = vmatprep.subr.mxu0 0.0
      %1848 = vmatpush1.msra.mxu0 0.0
      %1849 = vmatprep.subr.mxu0 0.0
      %1850 = vmatpush1.msra.mxu0 0.0
      %1851 = vmatprep.subr.mxu0 0.0
      %1852 = vmatpush1.msra.mxu0 0.0
      %1853 = vmatprep.subr.mxu0 0.0
      %1854 = vmatpush1.msra.mxu0 0.0
      %1855 = vmatprep.subr.mxu0 0.0
      %1856 = vmatpush1.msra.mxu0 0.0
      %1857 = vmatprep.subr.mxu0 0.0
      %1858 = vmatpush1.msra.mxu0 0.0
      %1859 = vmatprep.subr.mxu0 0.0
      %1860 = vmatpush1.msra.mxu0 0.0
      %1861 = vmatprep.subr.mxu0 0.0
      %1862 = vmatpush1.msra.mxu0 0.0
      %1863 = vmatprep.subr.mxu0 0.0
      %1864 = vmatpush1.msra.mxu0 0.0
      %1865 = vmatprep.subr.mxu0 0.0
      %1866 = vmatpush1.msra.mxu0 0.0
      %1867 = vmatprep.subr.mxu0 0.0
      %1868 = vmatpush1.msra.mxu0 0.0
      %1869 = vmatprep.subr.mxu0 0.0
      %1870 = vmatpush1.msra.mxu0 0.0
      %1871 = vmatprep.subr.mxu0 0.0
      %1872 = vmatpush1.msra.mxu0 0.0
      %1873 = vmatprep.subr.mxu0 0.0
      %1874 = vmatpush1.msra.mxu0 0.0
      %1875 = vmatprep.mubr.f32.mxu0 0.0
      %v1876 = vand.u32 %v257, 4294901760
      %1877 = vmatmul.mubr.f32.gmra.mrb[0].mxu0 %v1876
      %v1878 = vpop.f32.mrb[0].mxu0
      %v1879 = vadd.f32 %v1632, %v1878
      %v1880 = vpop.f32.mrb[0].mxu0
      %1881 = vmatprep.mubr.f32.mxu0 0.0
      %v1882 = vand.u32 %v260, 4294901760
      %1883 = vmatmul.mubr.f32.gmra.mrb[0].mxu0 %v1882
      %v1884 = vpop.f32.mrb[0].mxu0
      %v1885 = vadd.f32 %v1638, %v1884
      %v1886 = vpop.f32.mrb[0].mxu0
      %1887 = vmatprep.mubr.f32.mxu0 0.0
      %v1888 = vand.u32 %v263, 4294901760
      %1889 = vmatmul.mubr.f32.gmra.mrb[0].mxu0 %v1888
      %v1890 = vpop.f32.mrb[0].mxu0
      %v1891 = vadd.f32 %v1644, %v1890
      %v1892 = vpop.f32.mrb[0].mxu0
      %1893 = vmatprep.mubr.f32.mxu0 0.0
      %v1894 = vand.u32 %v266, 4294901760
      %1895 = vmatmul.mubr.f32.gmra.mrb[0].mxu0 %v1894
      %v1896 = vpop.f32.mrb[0].mxu0
      %v1897 = vadd.f32 %v1650, %v1896
      %v1898 = vpop.f32.mrb[0].mxu0
      %1899 = vmatprep.mubr.f32.mxu0 0.0
      %v1900 = vand.u32 %v269, 4294901760
      %1901 = vmatmul.mubr.f32.gmra.mrb[0].mxu0 %v1900
      %v1902 = vpop.f32.mrb[0].mxu0
      %v1903 = vadd.f32 %v1656, %v1902
      %v1904 = vpop.f32.mrb[0].mxu0
      %1905 = vmatprep.mubr.f32.mxu0 0.0
      %v1906 = vand.u32 %v272, 4294901760
      %1907 = vmatmul.mubr.f32.gmra.mrb[0].mxu0 %v1906
      %v1908 = vpop.f32.mrb[0].mxu0
      %v1909 = vadd.f32 %v1662, %v1908
      %v1910 = vpop.f32.mrb[0].mxu0
      %1911 = vmatprep.mubr.f32.mxu0 0.0
      %v1912 = vand.u32 %v275, 4294901760
      %1913 = vmatmul.mubr.f32.gmra.mrb[0].mxu0 %v1912
      %v1914 = vpop.f32.mrb[0].mxu0
      %v1915 = vadd.f32 %v1668, %v1914
      %v1916 = vpop.f32.mrb[0].mxu0
      %1917 = vmatprep.mubr.f32.mxu0 0.0
      %v1918 = vand.u32 %v278, 4294901760
      %1919 = vmatmul.mubr.f32.gmra.mrb[0].mxu0 %v1918
      %v1920 = vpop.f32.mrb[0].mxu0
      %v1921 = vadd.f32 %v1674, %v1920
      %v1922 = vpop.f32.mrb[0].mxu0
      %1923 = vmatprep.mubr.f32.mxu0 0.0
      %v1924 = vand.u32 %v281, 4294901760
      %1925 = vmatmul.mubr.f32.gmra.mrb[0].mxu0 %v1924
      %v1926 = vpop.f32.mrb[0].mxu0
      %v1927 = vadd.f32 %v1680, %v1926
      %v1928 = vpop.f32.mrb[0].mxu0
      %1929 = vmatprep.mubr.f32.mxu0 0.0
      %v1930 = vand.u32 %v284, 4294901760
      %1931 = vmatmul.mubr.f32.gmra.mrb[0].mxu0 %v1930
      %v1932 = vpop.f32.mrb[0].mxu0
      %v1933 = vadd.f32 %v1686, %v1932
      %v1934 = vpop.f32.mrb[0].mxu0
      %1935 = vmatprep.mubr.f32.mxu0 0.0
      %v1936 = vand.u32 %v287, 4294901760
      %1937 = vmatmul.mubr.f32.gmra.mrb[0].mxu0 %v1936
      %v1938 = vpop.f32.mrb[0].mxu0
      %v1939 = vadd.f32 %v1692, %v1938
      %v1940 = vpop.f32.mrb[0].mxu0
      %1941 = vmatprep.mubr.f32.mxu0 0.0
      %v1942 = vand.u32 %v290, 4294901760
      %1943 = vmatmul.mubr.f32.gmra.mrb[0].mxu0 %v1942
      %v1944 = vpop.f32.mrb[0].mxu0
      %v1945 = vadd.f32 %v1698, %v1944
      %v1946 = vpop.f32.mrb[0].mxu0
      %1947 = vmatprep.mubr.f32.mxu0 0.0
      %v1948 = vand.u32 %v293, 4294901760
      %1949 = vmatmul.mubr.f32.gmra.mrb[0].mxu0 %v1948
      %v1950 = vpop.f32.mrb[0].mxu0
      %v1951 = vadd.f32 %v1704, %v1950
      %v1952 = vpop.f32.mrb[0].mxu0
      %1953 = vmatprep.mubr.f32.mxu0 0.0
      %v1954 = vand.u32 %v296, 4294901760
      %1955 = vmatmul.mubr.f32.gmra.mrb[0].mxu0 %v1954
      %v1956 = vpop.f32.mrb[0].mxu0
      %v1957 = vadd.f32 %v1710, %v1956
      %v1958 = vpop.f32.mrb[0].mxu0
      %1959 = vmatprep.mubr.f32.mxu0 0.0
      %v1960 = vand.u32 %v299, 4294901760
      %1961 = vmatmul.mubr.f32.gmra.mrb[0].mxu0 %v1960
      %v1962 = vpop.f32.mrb[0].mxu0
      %v1963 = vadd.f32 %v1716, %v1962
      %v1964 = vpop.f32.mrb[0].mxu0
      %1965 = vmatprep.mubr.f32.mxu0 0.0
      %v1966 = vand.u32 %v302, 4294901760
      %1967 = vmatmul.mubr.f32.gmra.mrb[0].mxu0 %v1966
      %v1968 = vpop.f32.mrb[0].mxu0
      %v1969 = vadd.f32 %v1722, %v1968
      %v1970 = vpop.f32.mrb[0].mxu0
      %1971 = vmatprep.mubr.f32.mxu0 0.0
      %v1972 = vand.u32 %v305, 4294901760
      %1973 = vmatmul.mubr.f32.gmra.mrb[0].mxu0 %v1972
      %v1974 = vpop.f32.mrb[0].mxu0
      %v1975 = vadd.f32 %v1728, %v1974
      %v1976 = vpop.f32.mrb[0].mxu0
      %1977 = vmatprep.mubr.f32.mxu0 0.0
      %v1978 = vand.u32 %v308, 4294901760
      %1979 = vmatmul.mubr.f32.gmra.mrb[0].mxu0 %v1978
      %v1980 = vpop.f32.mrb[0].mxu0
      %v1981 = vadd.f32 %v1734, %v1980
      %v1982 = vpop.f32.mrb[0].mxu0
      %1983 = vmatprep.mubr.f32.mxu0 0.0
      %v1984 = vand.u32 %v311, 4294901760
      %1985 = vmatmul.mubr.f32.gmra.mrb[0].mxu0 %v1984
      %v1986 = vpop.f32.mrb[0].mxu0
      %v1987 = vadd.f32 %v1740, %v1986
      %v1988 = vpop.f32.mrb[0].mxu0
      %1989 = vmatprep.mubr.f32.mxu0 0.0
      %v1990 = vand.u32 %v314, 4294901760
      %1991 = vmatmul.mubr.f32.gmra.mrb[0].mxu0 %v1990
      %v1992 = vpop.f32.mrb[0].mxu0
      %v1993 = vadd.f32 %v1746, %v1992
      %v1994 = vpop.f32.mrb[0].mxu0
      %1995 = vmatprep.mubr.f32.mxu0 0.0
      %v1996 = vand.u32 %v317, 4294901760
      %1997 = vmatmul.mubr.f32.gmra.mrb[0].mxu0 %v1996
      %v1998 = vpop.f32.mrb[0].mxu0
      %v1999 = vadd.f32 %v1752, %v1998
      %v2000 = vpop.f32.mrb[0].mxu0
      %2001 = vmatprep.mubr.f32.mxu0 0.0
      %v2002 = vand.u32 %v320, 4294901760
      %2003 = vmatmul.mubr.f32.gmra.mrb[0].mxu0 %v2002
      %v2004 = vpop.f32.mrb[0].mxu0
      %v2005 = vadd.f32 %v1758, %v2004
      %v2006 = vpop.f32.mrb[0].mxu0
      %2007 = vmatprep.mubr.f32.mxu0 0.0
      %v2008 = vand.u32 %v323, 4294901760
      %2009 = vmatmul.mubr.f32.gmra.mrb[0].mxu0 %v2008
      %v2010 = vpop.f32.mrb[0].mxu0
      %v2011 = vadd.f32 %v1764, %v2010
      %v2012 = vpop.f32.mrb[0].mxu0
      %2013 = vmatprep.mubr.f32.mxu0 0.0
      %v2014 = vand.u32 %v326, 4294901760
      %2015 = vmatmul.mubr.f32.gmra.mrb[0].mxu0 %v2014
      %v2016 = vpop.f32.mrb[0].mxu0
      %v2017 = vadd.f32 %v1770, %v2016
      %v2018 = vpop.f32.mrb[0].mxu0
      %2019 = vmatprep.mubr.f32.mxu0 0.0
      %v2020 = vand.u32 %v329, 4294901760
      %2021 = vmatmul.mubr.f32.gmra.mrb[0].mxu0 %v2020
      %v2022 = vpop.f32.mrb[0].mxu0
      %v2023 = vadd.f32 %v1776, %v2022
      %v2024 = vpop.f32.mrb[0].mxu0
      %2025 = vmatprep.mubr.f32.mxu0 0.0
      %v2026 = vand.u32 %v332, 4294901760
      %2027 = vmatmul.mubr.f32.gmra.mrb[0].mxu0 %v2026
      %v2028 = vpop.f32.mrb[0].mxu0
      %v2029 = vadd.f32 %v1782, %v2028
      %v2030 = vpop.f32.mrb[0].mxu0
      %2031 = vmatprep.mubr.f32.mxu0 0.0
      %v2032 = vand.u32 %v335, 4294901760
      %2033 = vmatmul.mubr.f32.gmra.mrb[0].mxu0 %v2032
      %v2034 = vpop.f32.mrb[0].mxu0
      %v2035 = vadd.f32 %v1788, %v2034
      %v2036 = vpop.f32.mrb[0].mxu0
      %2037 = vmatprep.mubr.f32.mxu0 0.0
      %v2038 = vand.u32 %v338, 4294901760
      %2039 = vmatmul.mubr.f32.gmra.mrb[0].mxu0 %v2038
      %v2040 = vpop.f32.mrb[0].mxu0
      %v2041 = vadd.f32 %v1794, %v2040
      %v2042 = vpop.f32.mrb[0].mxu0
      %2043 = vmatprep.mubr.f32.mxu0 0.0
      %v2044 = vand.u32 %v341, 4294901760
      %2045 = vmatmul.mubr.f32.gmra.mrb[0].mxu0 %v2044
      %v2046 = vpop.f32.mrb[0].mxu0
      %v2047 = vadd.f32 %v1800, %v2046
      %v2048 = vpop.f32.mrb[0].mxu0
      %2049 = vmatprep.mubr.f32.mxu0 0.0
      %v2050 = vand.u32 %v344, 4294901760
      %2051 = vmatmul.mubr.f32.gmra.mrb[0].mxu0 %v2050
      %v2052 = vpop.f32.mrb[0].mxu0
      %v2053 = vadd.f32 %v1806, %v2052
      %v2054 = vpop.f32.mrb[0].mxu0
      %2055 = vdwg.mxu0
      %v2057 = vsel %vm255, %v207, 0
      %v2060 = vsel %vm255, %v208, 0
      %v2063 = vsel %vm346, %v246, 0
      %2065 = vmatprep.subr.mxu0 0.0
      %v2066 = vand.u32 %v245, 4294901760
      %2067 = vmatpush1.msra.mxu0 %v2066
      %2068 = vmatprep.subr.mxu0 0.0
      %v2069 = vand.u32 %v2063, 4294901760
      %2070 = vmatpush1.msra.mxu0 %v2069
      %2071 = vmatprep.subr.mxu0 0.0
      %2072 = vmatpush1.msra.mxu0 0.0
      %2073 = vmatprep.subr.mxu0 0.0
      %2074 = vmatpush1.msra.mxu0 0.0
      %2075 = vmatprep.subr.mxu0 0.0
      %2076 = vmatpush1.msra.mxu0 0.0
      %2077 = vmatprep.subr.mxu0 0.0
      %2078 = vmatpush1.msra.mxu0 0.0
      %2079 = vmatprep.subr.mxu0 0.0
      %2080 = vmatpush1.msra.mxu0 0.0
      %2081 = vmatprep.subr.mxu0 0.0
      %2082 = vmatpush1.msra.mxu0 0.0
      %2083 = vmatprep.subr.mxu0 0.0
      %2084 = vmatpush1.msra.mxu0 0.0
      %2085 = vmatprep.subr.mxu0 0.0
      %2086 = vmatpush1.msra.mxu0 0.0
      %2087 = vmatprep.subr.mxu0 0.0
      %2088 = vmatpush1.msra.mxu0 0.0
      %2089 = vmatprep.subr.mxu0 0.0
      %2090 = vmatpush1.msra.mxu0 0.0
      %2091 = vmatprep.subr.mxu0 0.0
      %2092 = vmatpush1.msra.mxu0 0.0
      %2093 = vmatprep.subr.mxu0 0.0
      %2094 = vmatpush1.msra.mxu0 0.0
      %2095 = vmatprep.subr.mxu0 0.0
      %2096 = vmatpush1.msra.mxu0 0.0
      %2097 = vmatprep.subr.mxu0 0.0
      %2098 = vmatpush1.msra.mxu0 0.0
      %2099 = vmatprep.subr.mxu0 0.0
      %2100 = vmatpush1.msra.mxu0 0.0
      %2101 = vmatprep.subr.mxu0 0.0
      %2102 = vmatpush1.msra.mxu0 0.0
      %2103 = vmatprep.subr.mxu0 0.0
      %2104 = vmatpush1.msra.mxu0 0.0
      %2105 = vmatprep.subr.mxu0 0.0
      %2106 = vmatpush1.msra.mxu0 0.0
      %2107 = vmatprep.subr.mxu0 0.0
      %2108 = vmatpush1.msra.mxu0 0.0
      %2109 = vmatprep.subr.mxu0 0.0
      %2110 = vmatpush1.msra.mxu0 0.0
      %2111 = vmatprep.subr.mxu0 0.0
      %2112 = vmatpush1.msra.mxu0 0.0
      %2113 = vmatprep.subr.mxu0 0.0
      %2114 = vmatpush1.msra.mxu0 0.0
      %2115 = vmatprep.subr.mxu0 0.0
      %2116 = vmatpush1.msra.mxu0 0.0
      %2117 = vmatprep.subr.mxu0 0.0
      %2118 = vmatpush1.msra.mxu0 0.0
      %2119 = vmatprep.subr.mxu0 0.0
      %2120 = vmatpush1.msra.mxu0 0.0
      %2121 = vmatprep.subr.mxu0 0.0
      %2122 = vmatpush1.msra.mxu0 0.0
      %2123 = vmatprep.subr.mxu0 0.0
      %2124 = vmatpush1.msra.mxu0 0.0
      %2125 = vmatprep.subr.mxu0 0.0
      %2126 = vmatpush1.msra.mxu0 0.0
      %2127 = vmatprep.subr.mxu0 0.0
      %2128 = vmatpush1.msra.mxu0 0.0
      %2129 = vmatprep.subr.mxu0 0.0
      %2130 = vmatpush1.msra.mxu0 0.0
      %2131 = vmatprep.mubr.f32.mxu0 0.0
      %v2132 = vand.u32 %v2057, 4294901760
      %v2133 = vsub.f32 %v2057, %v2132
      %v2134 = vand.u32 %v2133, 4294901760
      %v2135 = vsub.f32 %v2133, %v2134
      %v2136 = vand.u32 %v2135, 4294901760
      %2137 = vmatmul.mubr.f32.gmra.mrb[0].mxu0 %v2136
      %v2138 = vpop.f32.mrb[0].mxu0
      %v2139 = vadd.f32 %v1879, %v2138
      %v2140 = vpop.f32.mrb[0].mxu0
      %2141 = vmatprep.mubr.f32.mxu0 0.0
      %v2142 = vand.u32 %v2060, 4294901760
      %v2143 = vsub.f32 %v2060, %v2142
      %v2144 = vand.u32 %v2143, 4294901760
      %v2145 = vsub.f32 %v2143, %v2144
      %v2146 = vand.u32 %v2145, 4294901760
      %2147 = vmatmul.mubr.f32.gmra.mrb[0].mxu0 %v2146
      %v2148 = vpop.f32.mrb[0].mxu0
      %v2149 = vadd.f32 %v1885, %v2148
      %v2150 = vpop.f32.mrb[0].mxu0
      %2151 = vmatprep.mubr.f32.mxu0 0.0
      %v2152 = vand.u32 %v257, 4294901760
      %v2153 = vsub.f32 %v257, %v2152
      %v2154 = vand.u32 %v2153, 4294901760
      %v2155 = vsub.f32 %v2153, %v2154
      %v2156 = vand.u32 %v2155, 4294901760
      %2157 = vmatmul.mubr.f32.gmra.mrb[0].mxu0 %v2156
      %v2158 = vpop.f32.mrb[0].mxu0
      %v2159 = vadd.f32 %v1891, %v2158
      %v2160 = vpop.f32.mrb[0].mxu0
      %2161 = vmatprep.mubr.f32.mxu0 0.0
      %v2162 = vand.u32 %v260, 4294901760
      %v2163 = vsub.f32 %v260, %v2162
      %v2164 = vand.u32 %v2163, 4294901760
      %v2165 = vsub.f32 %v2163, %v2164
      %v2166 = vand.u32 %v2165, 4294901760
      %2167 = vmatmul.mubr.f32.gmra.mrb[0].mxu0 %v2166
      %v2168 = vpop.f32.mrb[0].mxu0
      %v2169 = vadd.f32 %v1897, %v2168
      %v2170 = vpop.f32.mrb[0].mxu0
      %2171 = vmatprep.mubr.f32.mxu0 0.0
      %v2172 = vand.u32 %v263, 4294901760
      %v2173 = vsub.f32 %v263, %v2172
      %v2174 = vand.u32 %v2173, 4294901760
      %v2175 = vsub.f32 %v2173, %v2174
      %v2176 = vand.u32 %v2175, 4294901760
      %2177 = vmatmul.mubr.f32.gmra.mrb[0].mxu0 %v2176
      %v2178 = vpop.f32.mrb[0].mxu0
      %v2179 = vadd.f32 %v1903, %v2178
      %v2180 = vpop.f32.mrb[0].mxu0
      %2181 = vmatprep.mubr.f32.mxu0 0.0
      %v2182 = vand.u32 %v266, 4294901760
      %v2183 = vsub.f32 %v266, %v2182
      %v2184 = vand.u32 %v2183, 4294901760
      %v2185 = vsub.f32 %v2183, %v2184
      %v2186 = vand.u32 %v2185, 4294901760
      %2187 = vmatmul.mubr.f32.gmra.mrb[0].mxu0 %v2186
      %v2188 = vpop.f32.mrb[0].mxu0
      %v2189 = vadd.f32 %v1909, %v2188
      %v2190 = vpop.f32.mrb[0].mxu0
      %2191 = vmatprep.mubr.f32.mxu0 0.0
      %v2192 = vand.u32 %v269, 4294901760
      %v2193 = vsub.f32 %v269, %v2192
      %v2194 = vand.u32 %v2193, 4294901760
      %v2195 = vsub.f32 %v2193, %v2194
      %v2196 = vand.u32 %v2195, 4294901760
      %2197 = vmatmul.mubr.f32.gmra.mrb[0].mxu0 %v2196
      %v2198 = vpop.f32.mrb[0].mxu0
      %v2199 = vadd.f32 %v1915, %v2198
      %v2200 = vpop.f32.mrb[0].mxu0
      %2201 = vmatprep.mubr.f32.mxu0 0.0
      %v2202 = vand.u32 %v272, 4294901760
      %v2203 = vsub.f32 %v272, %v2202
      %v2204 = vand.u32 %v2203, 4294901760
      %v2205 = vsub.f32 %v2203, %v2204
      %v2206 = vand.u32 %v2205, 4294901760
      %2207 = vmatmul.mubr.f32.gmra.mrb[0].mxu0 %v2206
      %v2208 = vpop.f32.mrb[0].mxu0
      %v2209 = vadd.f32 %v1921, %v2208
      %v2210 = vpop.f32.mrb[0].mxu0
      %2211 = vmatprep.mubr.f32.mxu0 0.0
      %v2212 = vand.u32 %v275, 4294901760
      %v2213 = vsub.f32 %v275, %v2212
      %v2214 = vand.u32 %v2213, 4294901760
      %v2215 = vsub.f32 %v2213, %v2214
      %v2216 = vand.u32 %v2215, 4294901760
      %2217 = vmatmul.mubr.f32.gmra.mrb[0].mxu0 %v2216
      %v2218 = vpop.f32.mrb[0].mxu0
      %v2219 = vadd.f32 %v1927, %v2218
      %v2220 = vpop.f32.mrb[0].mxu0
      %2221 = vmatprep.mubr.f32.mxu0 0.0
      %v2222 = vand.u32 %v278, 4294901760
      %v2223 = vsub.f32 %v278, %v2222
      %v2224 = vand.u32 %v2223, 4294901760
      %v2225 = vsub.f32 %v2223, %v2224
      %v2226 = vand.u32 %v2225, 4294901760
      %2227 = vmatmul.mubr.f32.gmra.mrb[0].mxu0 %v2226
      %v2228 = vpop.f32.mrb[0].mxu0
      %v2229 = vadd.f32 %v1933, %v2228
      %v2230 = vpop.f32.mrb[0].mxu0
      %2231 = vmatprep.mubr.f32.mxu0 0.0
      %v2232 = vand.u32 %v281, 4294901760
      %v2233 = vsub.f32 %v281, %v2232
      %v2234 = vand.u32 %v2233, 4294901760
      %v2235 = vsub.f32 %v2233, %v2234
      %v2236 = vand.u32 %v2235, 4294901760
      %2237 = vmatmul.mubr.f32.gmra.mrb[0].mxu0 %v2236
      %v2238 = vpop.f32.mrb[0].mxu0
      %v2239 = vadd.f32 %v1939, %v2238
      %v2240 = vpop.f32.mrb[0].mxu0
      %2241 = vmatprep.mubr.f32.mxu0 0.0
      %v2242 = vand.u32 %v284, 4294901760
      %v2243 = vsub.f32 %v284, %v2242
      %v2244 = vand.u32 %v2243, 4294901760
      %v2245 = vsub.f32 %v2243, %v2244
      %v2246 = vand.u32 %v2245, 4294901760
      %2247 = vmatmul.mubr.f32.gmra.mrb[0].mxu0 %v2246
      %v2248 = vpop.f32.mrb[0].mxu0
      %v2249 = vadd.f32 %v1945, %v2248
      %v2250 = vpop.f32.mrb[0].mxu0
      %2251 = vmatprep.mubr.f32.mxu0 0.0
      %v2252 = vand.u32 %v287, 4294901760
      %v2253 = vsub.f32 %v287, %v2252
      %v2254 = vand.u32 %v2253, 4294901760
      %v2255 = vsub.f32 %v2253, %v2254
      %v2256 = vand.u32 %v2255, 4294901760
      %2257 = vmatmul.mubr.f32.gmra.mrb[0].mxu0 %v2256
      %v2258 = vpop.f32.mrb[0].mxu0
      %v2259 = vadd.f32 %v1951, %v2258
      %v2260 = vpop.f32.mrb[0].mxu0
      %2261 = vmatprep.mubr.f32.mxu0 0.0
      %v2262 = vand.u32 %v290, 4294901760
      %v2263 = vsub.f32 %v290, %v2262
      %v2264 = vand.u32 %v2263, 4294901760
      %v2265 = vsub.f32 %v2263, %v2264
      %v2266 = vand.u32 %v2265, 4294901760
      %2267 = vmatmul.mubr.f32.gmra.mrb[0].mxu0 %v2266
      %v2268 = vpop.f32.mrb[0].mxu0
      %v2269 = vadd.f32 %v1957, %v2268
      %v2270 = vpop.f32.mrb[0].mxu0
      %2271 = vmatprep.mubr.f32.mxu0 0.0
      %v2272 = vand.u32 %v293, 4294901760
      %v2273 = vsub.f32 %v293, %v2272
      %v2274 = vand.u32 %v2273, 4294901760
      %v2275 = vsub.f32 %v2273, %v2274
      %v2276 = vand.u32 %v2275, 4294901760
      %2277 = vmatmul.mubr.f32.gmra.mrb[0].mxu0 %v2276
      %v2278 = vpop.f32.mrb[0].mxu0
      %v2279 = vadd.f32 %v1963, %v2278
      %v2280 = vpop.f32.mrb[0].mxu0
      %2281 = vmatprep.mubr.f32.mxu0 0.0
      %v2282 = vand.u32 %v296, 4294901760
      %v2283 = vsub.f32 %v296, %v2282
      %v2284 = vand.u32 %v2283, 4294901760
      %v2285 = vsub.f32 %v2283, %v2284
      %v2286 = vand.u32 %v2285, 4294901760
      %2287 = vmatmul.mubr.f32.gmra.mrb[0].mxu0 %v2286
      %v2288 = vpop.f32.mrb[0].mxu0
      %v2289 = vadd.f32 %v1969, %v2288
      %v2290 = vpop.f32.mrb[0].mxu0
      %2291 = vmatprep.mubr.f32.mxu0 0.0
      %v2292 = vand.u32 %v299, 4294901760
      %v2293 = vsub.f32 %v299, %v2292
      %v2294 = vand.u32 %v2293, 4294901760
      %v2295 = vsub.f32 %v2293, %v2294
      %v2296 = vand.u32 %v2295, 4294901760
      %2297 = vmatmul.mubr.f32.gmra.mrb[0].mxu0 %v2296
      %v2298 = vpop.f32.mrb[0].mxu0
      %v2299 = vadd.f32 %v1975, %v2298
      %v2300 = vpop.f32.mrb[0].mxu0
      %2301 = vmatprep.mubr.f32.mxu0 0.0
      %v2302 = vand.u32 %v302, 4294901760
      %v2303 = vsub.f32 %v302, %v2302
      %v2304 = vand.u32 %v2303, 4294901760
      %v2305 = vsub.f32 %v2303, %v2304
      %v2306 = vand.u32 %v2305, 4294901760
      %2307 = vmatmul.mubr.f32.gmra.mrb[0].mxu0 %v2306
      %v2308 = vpop.f32.mrb[0].mxu0
      %v2309 = vadd.f32 %v1981, %v2308
      %v2310 = vpop.f32.mrb[0].mxu0
      %2311 = vmatprep.mubr.f32.mxu0 0.0
      %v2312 = vand.u32 %v305, 4294901760
      %v2313 = vsub.f32 %v305, %v2312
      %v2314 = vand.u32 %v2313, 4294901760
      %v2315 = vsub.f32 %v2313, %v2314
      %v2316 = vand.u32 %v2315, 4294901760
      %2317 = vmatmul.mubr.f32.gmra.mrb[0].mxu0 %v2316
      %v2318 = vpop.f32.mrb[0].mxu0
      %v2319 = vadd.f32 %v1987, %v2318
      %v2320 = vpop.f32.mrb[0].mxu0
      %2321 = vmatprep.mubr.f32.mxu0 0.0
      %v2322 = vand.u32 %v308, 4294901760
      %v2323 = vsub.f32 %v308, %v2322
      %v2324 = vand.u32 %v2323, 4294901760
      %v2325 = vsub.f32 %v2323, %v2324
      %v2326 = vand.u32 %v2325, 4294901760
      %2327 = vmatmul.mubr.f32.gmra.mrb[0].mxu0 %v2326
      %v2328 = vpop.f32.mrb[0].mxu0
      %v2329 = vadd.f32 %v1993, %v2328
      %v2330 = vpop.f32.mrb[0].mxu0
      %2331 = vmatprep.mubr.f32.mxu0 0.0
      %v2332 = vand.u32 %v311, 4294901760
      %v2333 = vsub.f32 %v311, %v2332
      %v2334 = vand.u32 %v2333, 4294901760
      %v2335 = vsub.f32 %v2333, %v2334
      %v2336 = vand.u32 %v2335, 4294901760
      %2337 = vmatmul.mubr.f32.gmra.mrb[0].mxu0 %v2336
      %v2338 = vpop.f32.mrb[0].mxu0
      %v2339 = vadd.f32 %v1999, %v2338
      %v2340 = vpop.f32.mrb[0].mxu0
      %2341 = vmatprep.mubr.f32.mxu0 0.0
      %v2342 = vand.u32 %v314, 4294901760
      %v2343 = vsub.f32 %v314, %v2342
      %v2344 = vand.u32 %v2343, 4294901760
      %v2345 = vsub.f32 %v2343, %v2344
      %v2346 = vand.u32 %v2345, 4294901760
      %2347 = vmatmul.mubr.f32.gmra.mrb[0].mxu0 %v2346
      %v2348 = vpop.f32.mrb[0].mxu0
      %v2349 = vadd.f32 %v2005, %v2348
      %v2350 = vpop.f32.mrb[0].mxu0
      %2351 = vmatprep.mubr.f32.mxu0 0.0
      %v2352 = vand.u32 %v317, 4294901760
      %v2353 = vsub.f32 %v317, %v2352
      %v2354 = vand.u32 %v2353, 4294901760
      %v2355 = vsub.f32 %v2353, %v2354
      %v2356 = vand.u32 %v2355, 4294901760
      %2357 = vmatmul.mubr.f32.gmra.mrb[0].mxu0 %v2356
      %v2358 = vpop.f32.mrb[0].mxu0
      %v2359 = vadd.f32 %v2011, %v2358
      %v2360 = vpop.f32.mrb[0].mxu0
      %2361 = vmatprep.mubr.f32.mxu0 0.0
      %v2362 = vand.u32 %v320, 4294901760
      %v2363 = vsub.f32 %v320, %v2362
      %v2364 = vand.u32 %v2363, 4294901760
      %v2365 = vsub.f32 %v2363, %v2364
      %v2366 = vand.u32 %v2365, 4294901760
      %2367 = vmatmul.mubr.f32.gmra.mrb[0].mxu0 %v2366
      %v2368 = vpop.f32.mrb[0].mxu0
      %v2369 = vadd.f32 %v2017, %v2368
      %v2370 = vpop.f32.mrb[0].mxu0
      %2371 = vmatprep.mubr.f32.mxu0 0.0
      %v2372 = vand.u32 %v323, 4294901760
      %v2373 = vsub.f32 %v323, %v2372
      %v2374 = vand.u32 %v2373, 4294901760
      %v2375 = vsub.f32 %v2373, %v2374
      %v2376 = vand.u32 %v2375, 4294901760
      %2377 = vmatmul.mubr.f32.gmra.mrb[0].mxu0 %v2376
      %v2378 = vpop.f32.mrb[0].mxu0
      %v2379 = vadd.f32 %v2023, %v2378
      %v2380 = vpop.f32.mrb[0].mxu0
      %2381 = vmatprep.mubr.f32.mxu0 0.0
      %v2382 = vand.u32 %v326, 4294901760
      %v2383 = vsub.f32 %v326, %v2382
      %v2384 = vand.u32 %v2383, 4294901760
      %v2385 = vsub.f32 %v2383, %v2384
      %v2386 = vand.u32 %v2385, 4294901760
      %2387 = vmatmul.mubr.f32.gmra.mrb[0].mxu0 %v2386
      %v2388 = vpop.f32.mrb[0].mxu0
      %v2389 = vadd.f32 %v2029, %v2388
      %v2390 = vpop.f32.mrb[0].mxu0
      %2391 = vmatprep.mubr.f32.mxu0 0.0
      %v2392 = vand.u32 %v329, 4294901760
      %v2393 = vsub.f32 %v329, %v2392
      %v2394 = vand.u32 %v2393, 4294901760
      %v2395 = vsub.f32 %v2393, %v2394
      %v2396 = vand.u32 %v2395, 4294901760
      %2397 = vmatmul.mubr.f32.gmra.mrb[0].mxu0 %v2396
      %v2398 = vpop.f32.mrb[0].mxu0
      %v2399 = vadd.f32 %v2035, %v2398
      %v2400 = vpop.f32.mrb[0].mxu0
      %2401 = vmatprep.mubr.f32.mxu0 0.0
      %v2402 = vand.u32 %v332, 4294901760
      %v2403 = vsub.f32 %v332, %v2402
      %v2404 = vand.u32 %v2403, 4294901760
      %v2405 = vsub.f32 %v2403, %v2404
      %v2406 = vand.u32 %v2405, 4294901760
      %2407 = vmatmul.mubr.f32.gmra.mrb[0].mxu0 %v2406
      %v2408 = vpop.f32.mrb[0].mxu0
      %v2409 = vadd.f32 %v2041, %v2408
      %v2410 = vpop.f32.mrb[0].mxu0
      %2411 = vmatprep.mubr.f32.mxu0 0.0
      %v2412 = vand.u32 %v335, 4294901760
      %v2413 = vsub.f32 %v335, %v2412
      %v2414 = vand.u32 %v2413, 4294901760
      %v2415 = vsub.f32 %v2413, %v2414
      %v2416 = vand.u32 %v2415, 4294901760
      %2417 = vmatmul.mubr.f32.gmra.mrb[0].mxu0 %v2416
      %v2418 = vpop.f32.mrb[0].mxu0
      %v2419 = vadd.f32 %v2047, %v2418
      %v2420 = vpop.f32.mrb[0].mxu0
      %2421 = vmatprep.mubr.f32.mxu0 0.0
      %v2422 = vand.u32 %v338, 4294901760
      %v2423 = vsub.f32 %v338, %v2422
      %v2424 = vand.u32 %v2423, 4294901760
      %v2425 = vsub.f32 %v2423, %v2424
      %v2426 = vand.u32 %v2425, 4294901760
      %2427 = vmatmul.mubr.f32.gmra.mrb[0].mxu0 %v2426
      %v2428 = vpop.f32.mrb[0].mxu0
      %v2429 = vadd.f32 %v2053, %v2428
      %v2430 = vpop.f32.mrb[0].mxu0
      %2431 = vdwg.mxu0
      %2432 = vmatprep.subr.mxu0 0.0
      %v2433 = vand.u32 %v245, 4294901760
      %v2434 = vsub.f32 %v245, %v2433
      %v2435 = vand.u32 %v2434, 4294901760
      %v2436 = vsub.f32 %v2434, %v2435
      %v2437 = vand.u32 %v2436, 4294901760
      %2438 = vmatpush1.msra.mxu0 %v2437
      %2439 = vmatprep.subr.mxu0 0.0
      %v2440 = vand.u32 %v2063, 4294901760
      %v2441 = vsub.f32 %v2063, %v2440
      %v2442 = vand.u32 %v2441, 4294901760
      %v2443 = vsub.f32 %v2441, %v2442
      %v2444 = vand.u32 %v2443, 4294901760
      %2445 = vmatpush1.msra.mxu0 %v2444
      %2446 = vmatprep.subr.mxu0 0.0
      %2447 = vmatpush1.msra.mxu0 0.0
      %2448 = vmatprep.subr.mxu0 0.0
      %2449 = vmatpush1.msra.mxu0 0.0
      %2450 = vmatprep.subr.mxu0 0.0
      %2451 = vmatpush1.msra.mxu0 0.0
      %2452 = vmatprep.subr.mxu0 0.0
      %2453 = vmatpush1.msra.mxu0 0.0
      %2454 = vmatprep.subr.mxu0 0.0
      %2455 = vmatpush1.msra.mxu0 0.0
      %2456 = vmatprep.subr.mxu0 0.0
      %2457 = vmatpush1.msra.mxu0 0.0
      %2458 = vmatprep.subr.mxu0 0.0
      %2459 = vmatpush1.msra.mxu0 0.0
      %2460 = vmatprep.subr.mxu0 0.0
      %2461 = vmatpush1.msra.mxu0 0.0
      %2462 = vmatprep.subr.mxu0 0.0
      %2463 = vmatpush1.msra.mxu0 0.0
      %2464 = vmatprep.subr.mxu0 0.0
      %2465 = vmatpush1.msra.mxu0 0.0
      %2466 = vmatprep.subr.mxu0 0.0
      %2467 = vmatpush1.msra.mxu0 0.0
      %2468 = vmatprep.subr.mxu0 0.0
      %2469 = vmatpush1.msra.mxu0 0.0
      %2470 = vmatprep.subr.mxu0 0.0
      %2471 = vmatpush1.msra.mxu0 0.0
      %2472 = vmatprep.subr.mxu0 0.0
      %2473 = vmatpush1.msra.mxu0 0.0
      %2474 = vmatprep.subr.mxu0 0.0
      %2475 = vmatpush1.msra.mxu0 0.0
      %2476 = vmatprep.subr.mxu0 0.0
      %2477 = vmatpush1.msra.mxu0 0.0
      %2478 = vmatprep.subr.mxu0 0.0
      %2479 = vmatpush1.msra.mxu0 0.0
      %2480 = vmatprep.subr.mxu0 0.0
      %2481 = vmatpush1.msra.mxu0 0.0
      %2482 = vmatprep.subr.mxu0 0.0
      %2483 = vmatpush1.msra.mxu0 0.0
      %2484 = vmatprep.subr.mxu0 0.0
      %2485 = vmatpush1.msra.mxu0 0.0
      %2486 = vmatprep.subr.mxu0 0.0
      %2487 = vmatpush1.msra.mxu0 0.0
      %2488 = vmatprep.subr.mxu0 0.0
      %2489 = vmatpush1.msra.mxu0 0.0
      %2490 = vmatprep.subr.mxu0 0.0
      %2491 = vmatpush1.msra.mxu0 0.0
      %2492 = vmatprep.subr.mxu0 0.0
      %2493 = vmatpush1.msra.mxu0 0.0
      %2494 = vmatprep.subr.mxu0 0.0
      %2495 = vmatpush1.msra.mxu0 0.0
      %2496 = vmatprep.subr.mxu0 0.0
      %2497 = vmatpush1.msra.mxu0 0.0
      %2498 = vmatprep.subr.mxu0 0.0
      %2499 = vmatpush1.msra.mxu0 0.0
      %2500 = vmatprep.subr.mxu0 0.0
      %2501 = vmatpush1.msra.mxu0 0.0
      %2502 = vmatprep.subr.mxu0 0.0
      %2503 = vmatpush1.msra.mxu0 0.0
      %2504 = vmatprep.subr.mxu0 0.0
      %2505 = vmatpush1.msra.mxu0 0.0
      %2506 = vmatprep.mubr.f32.mxu0 0.0
      %v2507 = vand.u32 %v2057, 4294901760
      %2508 = vmatmul.mubr.f32.gmra.mrb[0].mxu0 %v2507
      %v2509 = vpop.f32.mrb[0].mxu0
      %v2510 = vadd.f32 %v2139, %v2509
      %v2511 = vpop.f32.mrb[0].mxu0
      %2512 = vmatprep.mubr.f32.mxu0 0.0
      %v2513 = vand.u32 %v2060, 4294901760
      %2514 = vmatmul.mubr.f32.gmra.mrb[0].mxu0 %v2513
      %v2515 = vpop.f32.mrb[0].mxu0
      %v2516 = vadd.f32 %v2149, %v2515
      %v2517 = vpop.f32.mrb[0].mxu0
      %2518 = vmatprep.mubr.f32.mxu0 0.0
      %v2519 = vand.u32 %v257, 4294901760
      %2520 = vmatmul.mubr.f32.gmra.mrb[0].mxu0 %v2519
      %v2521 = vpop.f32.mrb[0].mxu0
      %v2522 = vadd.f32 %v2159, %v2521
      %v2523 = vpop.f32.mrb[0].mxu0
      %2524 = vmatprep.mubr.f32.mxu0 0.0
      %v2525 = vand.u32 %v260, 4294901760
      %2526 = vmatmul.mubr.f32.gmra.mrb[0].mxu0 %v2525
      %v2527 = vpop.f32.mrb[0].mxu0
      %v2528 = vadd.f32 %v2169, %v2527
      %v2529 = vpop.f32.mrb[0].mxu0
      %2530 = vmatprep.mubr.f32.mxu0 0.0
      %v2531 = vand.u32 %v263, 4294901760
      %2532 = vmatmul.mubr.f32.gmra.mrb[0].mxu0 %v2531
      %v2533 = vpop.f32.mrb[0].mxu0
      %v2534 = vadd.f32 %v2179, %v2533
      %v2535 = vpop.f32.mrb[0].mxu0
      %2536 = vmatprep.mubr.f32.mxu0 0.0
      %v2537 = vand.u32 %v266, 4294901760
      %2538 = vmatmul.mubr.f32.gmra.mrb[0].mxu0 %v2537
      %v2539 = vpop.f32.mrb[0].mxu0
      %v2540 = vadd.f32 %v2189, %v2539
      %v2541 = vpop.f32.mrb[0].mxu0
      %2542 = vmatprep.mubr.f32.mxu0 0.0
      %v2543 = vand.u32 %v269, 4294901760
      %2544 = vmatmul.mubr.f32.gmra.mrb[0].mxu0 %v2543
      %v2545 = vpop.f32.mrb[0].mxu0
      %v2546 = vadd.f32 %v2199, %v2545
      %v2547 = vpop.f32.mrb[0].mxu0
      %2548 = vmatprep.mubr.f32.mxu0 0.0
      %v2549 = vand.u32 %v272, 4294901760
      %2550 = vmatmul.mubr.f32.gmra.mrb[0].mxu0 %v2549
      %v2551 = vpop.f32.mrb[0].mxu0
      %v2552 = vadd.f32 %v2209, %v2551
      %v2553 = vpop.f32.mrb[0].mxu0
      %2554 = vmatprep.mubr.f32.mxu0 0.0
      %v2555 = vand.u32 %v275, 4294901760
      %2556 = vmatmul.mubr.f32.gmra.mrb[0].mxu0 %v2555
      %v2557 = vpop.f32.mrb[0].mxu0
      %v2558 = vadd.f32 %v2219, %v2557
      %v2559 = vpop.f32.mrb[0].mxu0
      %2560 = vmatprep.mubr.f32.mxu0 0.0
      %v2561 = vand.u32 %v278, 4294901760
      %2562 = vmatmul.mubr.f32.gmra.mrb[0].mxu0 %v2561
      %v2563 = vpop.f32.mrb[0].mxu0
      %v2564 = vadd.f32 %v2229, %v2563
      %v2565 = vpop.f32.mrb[0].mxu0
      %2566 = vmatprep.mubr.f32.mxu0 0.0
      %v2567 = vand.u32 %v281, 4294901760
      %2568 = vmatmul.mubr.f32.gmra.mrb[0].mxu0 %v2567
      %v2569 = vpop.f32.mrb[0].mxu0
      %v2570 = vadd.f32 %v2239, %v2569
      %v2571 = vpop.f32.mrb[0].mxu0
      %2572 = vmatprep.mubr.f32.mxu0 0.0
      %v2573 = vand.u32 %v284, 4294901760
      %2574 = vmatmul.mubr.f32.gmra.mrb[0].mxu0 %v2573
      %v2575 = vpop.f32.mrb[0].mxu0
      %v2576 = vadd.f32 %v2249, %v2575
      %v2577 = vpop.f32.mrb[0].mxu0
      %2578 = vmatprep.mubr.f32.mxu0 0.0
      %v2579 = vand.u32 %v287, 4294901760
      %2580 = vmatmul.mubr.f32.gmra.mrb[0].mxu0 %v2579
      %v2581 = vpop.f32.mrb[0].mxu0
      %v2582 = vadd.f32 %v2259, %v2581
      %v2583 = vpop.f32.mrb[0].mxu0
      %2584 = vmatprep.mubr.f32.mxu0 0.0
      %v2585 = vand.u32 %v290, 4294901760
      %2586 = vmatmul.mubr.f32.gmra.mrb[0].mxu0 %v2585
      %v2587 = vpop.f32.mrb[0].mxu0
      %v2588 = vadd.f32 %v2269, %v2587
      %v2589 = vpop.f32.mrb[0].mxu0
      %2590 = vmatprep.mubr.f32.mxu0 0.0
      %v2591 = vand.u32 %v293, 4294901760
      %2592 = vmatmul.mubr.f32.gmra.mrb[0].mxu0 %v2591
      %v2593 = vpop.f32.mrb[0].mxu0
      %v2594 = vadd.f32 %v2279, %v2593
      %v2595 = vpop.f32.mrb[0].mxu0
      %2596 = vmatprep.mubr.f32.mxu0 0.0
      %v2597 = vand.u32 %v296, 4294901760
      %2598 = vmatmul.mubr.f32.gmra.mrb[0].mxu0 %v2597
      %v2599 = vpop.f32.mrb[0].mxu0
      %v2600 = vadd.f32 %v2289, %v2599
      %v2601 = vpop.f32.mrb[0].mxu0
      %2602 = vmatprep.mubr.f32.mxu0 0.0
      %v2603 = vand.u32 %v299, 4294901760
      %2604 = vmatmul.mubr.f32.gmra.mrb[0].mxu0 %v2603
      %v2605 = vpop.f32.mrb[0].mxu0
      %v2606 = vadd.f32 %v2299, %v2605
      %v2607 = vpop.f32.mrb[0].mxu0
      %2608 = vmatprep.mubr.f32.mxu0 0.0
      %v2609 = vand.u32 %v302, 4294901760
      %2610 = vmatmul.mubr.f32.gmra.mrb[0].mxu0 %v2609
      %v2611 = vpop.f32.mrb[0].mxu0
      %v2612 = vadd.f32 %v2309, %v2611
      %v2613 = vpop.f32.mrb[0].mxu0
      %2614 = vmatprep.mubr.f32.mxu0 0.0
      %v2615 = vand.u32 %v305, 4294901760
      %2616 = vmatmul.mubr.f32.gmra.mrb[0].mxu0 %v2615
      %v2617 = vpop.f32.mrb[0].mxu0
      %v2618 = vadd.f32 %v2319, %v2617
      %v2619 = vpop.f32.mrb[0].mxu0
      %2620 = vmatprep.mubr.f32.mxu0 0.0
      %v2621 = vand.u32 %v308, 4294901760
      %2622 = vmatmul.mubr.f32.gmra.mrb[0].mxu0 %v2621
      %v2623 = vpop.f32.mrb[0].mxu0
      %v2624 = vadd.f32 %v2329, %v2623
      %v2625 = vpop.f32.mrb[0].mxu0
      %2626 = vmatprep.mubr.f32.mxu0 0.0
      %v2627 = vand.u32 %v311, 4294901760
      %2628 = vmatmul.mubr.f32.gmra.mrb[0].mxu0 %v2627
      %v2629 = vpop.f32.mrb[0].mxu0
      %v2630 = vadd.f32 %v2339, %v2629
      %v2631 = vpop.f32.mrb[0].mxu0
      %2632 = vmatprep.mubr.f32.mxu0 0.0
      %v2633 = vand.u32 %v314, 4294901760
      %2634 = vmatmul.mubr.f32.gmra.mrb[0].mxu0 %v2633
      %v2635 = vpop.f32.mrb[0].mxu0
      %v2636 = vadd.f32 %v2349, %v2635
      %v2637 = vpop.f32.mrb[0].mxu0
      %2638 = vmatprep.mubr.f32.mxu0 0.0
      %v2639 = vand.u32 %v317, 4294901760
      %2640 = vmatmul.mubr.f32.gmra.mrb[0].mxu0 %v2639
      %v2641 = vpop.f32.mrb[0].mxu0
      %v2642 = vadd.f32 %v2359, %v2641
      %v2643 = vpop.f32.mrb[0].mxu0
      %2644 = vmatprep.mubr.f32.mxu0 0.0
      %v2645 = vand.u32 %v320, 4294901760
      %2646 = vmatmul.mubr.f32.gmra.mrb[0].mxu0 %v2645
      %v2647 = vpop.f32.mrb[0].mxu0
      %v2648 = vadd.f32 %v2369, %v2647
      %v2649 = vpop.f32.mrb[0].mxu0
      %2650 = vmatprep.mubr.f32.mxu0 0.0
      %v2651 = vand.u32 %v323, 4294901760
      %2652 = vmatmul.mubr.f32.gmra.mrb[0].mxu0 %v2651
      %v2653 = vpop.f32.mrb[0].mxu0
      %v2654 = vadd.f32 %v2379, %v2653
      %v2655 = vpop.f32.mrb[0].mxu0
      %2656 = vmatprep.mubr.f32.mxu0 0.0
      %v2657 = vand.u32 %v326, 4294901760
      %2658 = vmatmul.mubr.f32.gmra.mrb[0].mxu0 %v2657
      %v2659 = vpop.f32.mrb[0].mxu0
      %v2660 = vadd.f32 %v2389, %v2659
      %v2661 = vpop.f32.mrb[0].mxu0
      %2662 = vmatprep.mubr.f32.mxu0 0.0
      %v2663 = vand.u32 %v329, 4294901760
      %2664 = vmatmul.mubr.f32.gmra.mrb[0].mxu0 %v2663
      %v2665 = vpop.f32.mrb[0].mxu0
      %v2666 = vadd.f32 %v2399, %v2665
      %v2667 = vpop.f32.mrb[0].mxu0
      %2668 = vmatprep.mubr.f32.mxu0 0.0
      %v2669 = vand.u32 %v332, 4294901760
      %2670 = vmatmul.mubr.f32.gmra.mrb[0].mxu0 %v2669
      %v2671 = vpop.f32.mrb[0].mxu0
      %v2672 = vadd.f32 %v2409, %v2671
      %v2673 = vpop.f32.mrb[0].mxu0
      %2674 = vmatprep.mubr.f32.mxu0 0.0
      %v2675 = vand.u32 %v335, 4294901760
      %2676 = vmatmul.mubr.f32.gmra.mrb[0].mxu0 %v2675
      %v2677 = vpop.f32.mrb[0].mxu0
      %v2678 = vadd.f32 %v2419, %v2677
      %v2679 = vpop.f32.mrb[0].mxu0
      %2680 = vmatprep.mubr.f32.mxu0 0.0
      %v2681 = vand.u32 %v338, 4294901760
      %2682 = vmatmul.mubr.f32.gmra.mrb[0].mxu0 %v2681
      %v2683 = vpop.f32.mrb[0].mxu0
      %v2684 = vadd.f32 %v2429, %v2683
      %v2685 = vpop.f32.mrb[0].mxu0
      %2686 = vdwg.mxu0
      %2687 = vmatprep.subr.mxu0 0.0
      %v2688 = vand.u32 %v245, 4294901760
      %v2689 = vsub.f32 %v245, %v2688
      %2690 = vmatpush1.msra.mxu0 %v2689
      %2691 = vmatprep.subr.mxu0 0.0
      %v2692 = vand.u32 %v2063, 4294901760
      %v2693 = vsub.f32 %v2063, %v2692
      %2694 = vmatpush1.msra.mxu0 %v2693
      %2695 = vmatprep.subr.mxu0 0.0
      %2696 = vmatpush1.msra.mxu0 0.0
      %2697 = vmatprep.subr.mxu0 0.0
      %2698 = vmatpush1.msra.mxu0 0.0
      %2699 = vmatprep.subr.mxu0 0.0
      %2700 = vmatpush1.msra.mxu0 0.0
      %2701 = vmatprep.subr.mxu0 0.0
      %2702 = vmatpush1.msra.mxu0 0.0
      %2703 = vmatprep.subr.mxu0 0.0
      %2704 = vmatpush1.msra.mxu0 0.0
      %2705 = vmatprep.subr.mxu0 0.0
      %2706 = vmatpush1.msra.mxu0 0.0
      %2707 = vmatprep.subr.mxu0 0.0
      %2708 = vmatpush1.msra.mxu0 0.0
      %2709 = vmatprep.subr.mxu0 0.0
      %2710 = vmatpush1.msra.mxu0 0.0
      %2711 = vmatprep.subr.mxu0 0.0
      %2712 = vmatpush1.msra.mxu0 0.0
      %2713 = vmatprep.subr.mxu0 0.0
      %2714 = vmatpush1.msra.mxu0 0.0
      %2715 = vmatprep.subr.mxu0 0.0
      %2716 = vmatpush1.msra.mxu0 0.0
      %2717 = vmatprep.subr.mxu0 0.0
      %2718 = vmatpush1.msra.mxu0 0.0
      %2719 = vmatprep.subr.mxu0 0.0
      %2720 = vmatpush1.msra.mxu0 0.0
      %2721 = vmatprep.subr.mxu0 0.0
      %2722 = vmatpush1.msra.mxu0 0.0
      %2723 = vmatprep.subr.mxu0 0.0
      %2724 = vmatpush1.msra.mxu0 0.0
      %2725 = vmatprep.subr.mxu0 0.0
      %2726 = vmatpush1.msra.mxu0 0.0
      %2727 = vmatprep.subr.mxu0 0.0
      %2728 = vmatpush1.msra.mxu0 0.0
      %2729 = vmatprep.subr.mxu0 0.0
      %2730 = vmatpush1.msra.mxu0 0.0
      %2731 = vmatprep.subr.mxu0 0.0
      %2732 = vmatpush1.msra.mxu0 0.0
      %2733 = vmatprep.subr.mxu0 0.0
      %2734 = vmatpush1.msra.mxu0 0.0
      %2735 = vmatprep.subr.mxu0 0.0
      %2736 = vmatpush1.msra.mxu0 0.0
      %2737 = vmatprep.subr.mxu0 0.0
      %2738 = vmatpush1.msra.mxu0 0.0
      %2739 = vmatprep.subr.mxu0 0.0
      %2740 = vmatpush1.msra.mxu0 0.0
      %2741 = vmatprep.subr.mxu0 0.0
      %2742 = vmatpush1.msra.mxu0 0.0
      %2743 = vmatprep.subr.mxu0 0.0
      %2744 = vmatpush1.msra.mxu0 0.0
      %2745 = vmatprep.subr.mxu0 0.0
      %2746 = vmatpush1.msra.mxu0 0.0
      %2747 = vmatprep.subr.mxu0 0.0
      %2748 = vmatpush1.msra.mxu0 0.0
      %2749 = vmatprep.subr.mxu0 0.0
      %2750 = vmatpush1.msra.mxu0 0.0
      %2751 = vmatprep.subr.mxu0 0.0
      %2752 = vmatpush1.msra.mxu0 0.0
      %2753 = vmatprep.subr.mxu0 0.0
      %2754 = vmatpush1.msra.mxu0 0.0
      %2755 = vmatprep.mubr.f32.mxu0 0.0
      %v2756 = vand.u32 %v2057, 4294901760
      %v2757 = vsub.f32 %v2057, %v2756
      %2758 = vmatmul.mubr.f32.gmra.mrb[0].mxu0 %v2757
      %v2759 = vpop.f32.mrb[0].mxu0
      %v2760 = vadd.f32 %v2510, %v2759
      %v2761 = vpop.f32.mrb[0].mxu0
      %2762 = vmatprep.mubr.f32.mxu0 0.0
      %v2763 = vand.u32 %v2060, 4294901760
      %v2764 = vsub.f32 %v2060, %v2763
      %2765 = vmatmul.mubr.f32.gmra.mrb[0].mxu0 %v2764
      %v2766 = vpop.f32.mrb[0].mxu0
      %v2767 = vadd.f32 %v2516, %v2766
      %v2768 = vpop.f32.mrb[0].mxu0
      %2769 = vmatprep.mubr.f32.mxu0 0.0
      %v2770 = vand.u32 %v257, 4294901760
      %v2771 = vsub.f32 %v257, %v2770
      %2772 = vmatmul.mubr.f32.gmra.mrb[0].mxu0 %v2771
      %v2773 = vpop.f32.mrb[0].mxu0
      %v2774 = vadd.f32 %v2522, %v2773
      %v2775 = vpop.f32.mrb[0].mxu0
      %2776 = vmatprep.mubr.f32.mxu0 0.0
      %v2777 = vand.u32 %v260, 4294901760
      %v2778 = vsub.f32 %v260, %v2777
      %2779 = vmatmul.mubr.f32.gmra.mrb[0].mxu0 %v2778
      %v2780 = vpop.f32.mrb[0].mxu0
      %v2781 = vadd.f32 %v2528, %v2780
      %v2782 = vpop.f32.mrb[0].mxu0
      %2783 = vmatprep.mubr.f32.mxu0 0.0
      %v2784 = vand.u32 %v263, 4294901760
      %v2785 = vsub.f32 %v263, %v2784
      %2786 = vmatmul.mubr.f32.gmra.mrb[0].mxu0 %v2785
      %v2787 = vpop.f32.mrb[0].mxu0
      %v2788 = vadd.f32 %v2534, %v2787
      %v2789 = vpop.f32.mrb[0].mxu0
      %2790 = vmatprep.mubr.f32.mxu0 0.0
      %v2791 = vand.u32 %v266, 4294901760
      %v2792 = vsub.f32 %v266, %v2791
      %2793 = vmatmul.mubr.f32.gmra.mrb[0].mxu0 %v2792
      %v2794 = vpop.f32.mrb[0].mxu0
      %v2795 = vadd.f32 %v2540, %v2794
      %v2796 = vpop.f32.mrb[0].mxu0
      %2797 = vmatprep.mubr.f32.mxu0 0.0
      %v2798 = vand.u32 %v269, 4294901760
      %v2799 = vsub.f32 %v269, %v2798
      %2800 = vmatmul.mubr.f32.gmra.mrb[0].mxu0 %v2799
      %v2801 = vpop.f32.mrb[0].mxu0
      %v2802 = vadd.f32 %v2546, %v2801
      %v2803 = vpop.f32.mrb[0].mxu0
      %2804 = vmatprep.mubr.f32.mxu0 0.0
      %v2805 = vand.u32 %v272, 4294901760
      %v2806 = vsub.f32 %v272, %v2805
      %2807 = vmatmul.mubr.f32.gmra.mrb[0].mxu0 %v2806
      %v2808 = vpop.f32.mrb[0].mxu0
      %v2809 = vadd.f32 %v2552, %v2808
      %v2810 = vpop.f32.mrb[0].mxu0
      %2811 = vmatprep.mubr.f32.mxu0 0.0
      %v2812 = vand.u32 %v275, 4294901760
      %v2813 = vsub.f32 %v275, %v2812
      %2814 = vmatmul.mubr.f32.gmra.mrb[0].mxu0 %v2813
      %v2815 = vpop.f32.mrb[0].mxu0
      %v2816 = vadd.f32 %v2558, %v2815
      %v2817 = vpop.f32.mrb[0].mxu0
      %2818 = vmatprep.mubr.f32.mxu0 0.0
      %v2819 = vand.u32 %v278, 4294901760
      %v2820 = vsub.f32 %v278, %v2819
      %2821 = vmatmul.mubr.f32.gmra.mrb[0].mxu0 %v2820
      %v2822 = vpop.f32.mrb[0].mxu0
      %v2823 = vadd.f32 %v2564, %v2822
      %v2824 = vpop.f32.mrb[0].mxu0
      %2825 = vmatprep.mubr.f32.mxu0 0.0
      %v2826 = vand.u32 %v281, 4294901760
      %v2827 = vsub.f32 %v281, %v2826
      %2828 = vmatmul.mubr.f32.gmra.mrb[0].mxu0 %v2827
      %v2829 = vpop.f32.mrb[0].mxu0
      %v2830 = vadd.f32 %v2570, %v2829
      %v2831 = vpop.f32.mrb[0].mxu0
      %2832 = vmatprep.mubr.f32.mxu0 0.0
      %v2833 = vand.u32 %v284, 4294901760
      %v2834 = vsub.f32 %v284, %v2833
      %2835 = vmatmul.mubr.f32.gmra.mrb[0].mxu0 %v2834
      %v2836 = vpop.f32.mrb[0].mxu0
      %v2837 = vadd.f32 %v2576, %v2836
      %v2838 = vpop.f32.mrb[0].mxu0
      %2839 = vmatprep.mubr.f32.mxu0 0.0
      %v2840 = vand.u32 %v287, 4294901760
      %v2841 = vsub.f32 %v287, %v2840
      %2842 = vmatmul.mubr.f32.gmra.mrb[0].mxu0 %v2841
      %v2843 = vpop.f32.mrb[0].mxu0
      %v2844 = vadd.f32 %v2582, %v2843
      %v2845 = vpop.f32.mrb[0].mxu0
      %2846 = vmatprep.mubr.f32.mxu0 0.0
      %v2847 = vand.u32 %v290, 4294901760
      %v2848 = vsub.f32 %v290, %v2847
      %2849 = vmatmul.mubr.f32.gmra.mrb[0].mxu0 %v2848
      %v2850 = vpop.f32.mrb[0].mxu0
      %v2851 = vadd.f32 %v2588, %v2850
      %v2852 = vpop.f32.mrb[0].mxu0
      %2853 = vmatprep.mubr.f32.mxu0 0.0
      %v2854 = vand.u32 %v293, 4294901760
      %v2855 = vsub.f32 %v293, %v2854
      %2856 = vmatmul.mubr.f32.gmra.mrb[0].mxu0 %v2855
      %v2857 = vpop.f32.mrb[0].mxu0
      %v2858 = vadd.f32 %v2594, %v2857
      %v2859 = vpop.f32.mrb[0].mxu0
      %2860 = vmatprep.mubr.f32.mxu0 0.0
      %v2861 = vand.u32 %v296, 4294901760
      %v2862 = vsub.f32 %v296, %v2861
      %2863 = vmatmul.mubr.f32.gmra.mrb[0].mxu0 %v2862
      %v2864 = vpop.f32.mrb[0].mxu0
      %v2865 = vadd.f32 %v2600, %v2864
      %v2866 = vpop.f32.mrb[0].mxu0
      %2867 = vmatprep.mubr.f32.mxu0 0.0
      %v2868 = vand.u32 %v299, 4294901760
      %v2869 = vsub.f32 %v299, %v2868
      %2870 = vmatmul.mubr.f32.gmra.mrb[0].mxu0 %v2869
      %v2871 = vpop.f32.mrb[0].mxu0
      %v2872 = vadd.f32 %v2606, %v2871
      %v2873 = vpop.f32.mrb[0].mxu0
      %2874 = vmatprep.mubr.f32.mxu0 0.0
      %v2875 = vand.u32 %v302, 4294901760
      %v2876 = vsub.f32 %v302, %v2875
      %2877 = vmatmul.mubr.f32.gmra.mrb[0].mxu0 %v2876
      %v2878 = vpop.f32.mrb[0].mxu0
      %v2879 = vadd.f32 %v2612, %v2878
      %v2880 = vpop.f32.mrb[0].mxu0
      %2881 = vmatprep.mubr.f32.mxu0 0.0
      %v2882 = vand.u32 %v305, 4294901760
      %v2883 = vsub.f32 %v305, %v2882
      %2884 = vmatmul.mubr.f32.gmra.mrb[0].mxu0 %v2883
      %v2885 = vpop.f32.mrb[0].mxu0
      %v2886 = vadd.f32 %v2618, %v2885
      %v2887 = vpop.f32.mrb[0].mxu0
      %2888 = vmatprep.mubr.f32.mxu0 0.0
      %v2889 = vand.u32 %v308, 4294901760
      %v2890 = vsub.f32 %v308, %v2889
      %2891 = vmatmul.mubr.f32.gmra.mrb[0].mxu0 %v2890
      %v2892 = vpop.f32.mrb[0].mxu0
      %v2893 = vadd.f32 %v2624, %v2892
      %v2894 = vpop.f32.mrb[0].mxu0
      %2895 = vmatprep.mubr.f32.mxu0 0.0
      %v2896 = vand.u32 %v311, 4294901760
      %v2897 = vsub.f32 %v311, %v2896
      %2898 = vmatmul.mubr.f32.gmra.mrb[0].mxu0 %v2897
      %v2899 = vpop.f32.mrb[0].mxu0
      %v2900 = vadd.f32 %v2630, %v2899
      %v2901 = vpop.f32.mrb[0].mxu0
      %2902 = vmatprep.mubr.f32.mxu0 0.0
      %v2903 = vand.u32 %v314, 4294901760
      %v2904 = vsub.f32 %v314, %v2903
      %2905 = vmatmul.mubr.f32.gmra.mrb[0].mxu0 %v2904
      %v2906 = vpop.f32.mrb[0].mxu0
      %v2907 = vadd.f32 %v2636, %v2906
      %v2908 = vpop.f32.mrb[0].mxu0
      %2909 = vmatprep.mubr.f32.mxu0 0.0
      %v2910 = vand.u32 %v317, 4294901760
      %v2911 = vsub.f32 %v317, %v2910
      %2912 = vmatmul.mubr.f32.gmra.mrb[0].mxu0 %v2911
      %v2913 = vpop.f32.mrb[0].mxu0
      %v2914 = vadd.f32 %v2642, %v2913
      %v2915 = vpop.f32.mrb[0].mxu0
      %2916 = vmatprep.mubr.f32.mxu0 0.0
      %v2917 = vand.u32 %v320, 4294901760
      %v2918 = vsub.f32 %v320, %v2917
      %2919 = vmatmul.mubr.f32.gmra.mrb[0].mxu0 %v2918
      %v2920 = vpop.f32.mrb[0].mxu0
      %v2921 = vadd.f32 %v2648, %v2920
      %v2922 = vpop.f32.mrb[0].mxu0
      %2923 = vmatprep.mubr.f32.mxu0 0.0
      %v2924 = vand.u32 %v323, 4294901760
      %v2925 = vsub.f32 %v323, %v2924
      %2926 = vmatmul.mubr.f32.gmra.mrb[0].mxu0 %v2925
      %v2927 = vpop.f32.mrb[0].mxu0
      %v2928 = vadd.f32 %v2654, %v2927
      %v2929 = vpop.f32.mrb[0].mxu0
      %2930 = vmatprep.mubr.f32.mxu0 0.0
      %v2931 = vand.u32 %v326, 4294901760
      %v2932 = vsub.f32 %v326, %v2931
      %2933 = vmatmul.mubr.f32.gmra.mrb[0].mxu0 %v2932
      %v2934 = vpop.f32.mrb[0].mxu0
      %v2935 = vadd.f32 %v2660, %v2934
      %v2936 = vpop.f32.mrb[0].mxu0
      %2937 = vmatprep.mubr.f32.mxu0 0.0
      %v2938 = vand.u32 %v329, 4294901760
      %v2939 = vsub.f32 %v329, %v2938
      %2940 = vmatmul.mubr.f32.gmra.mrb[0].mxu0 %v2939
      %v2941 = vpop.f32.mrb[0].mxu0
      %v2942 = vadd.f32 %v2666, %v2941
      %v2943 = vpop.f32.mrb[0].mxu0
      %2944 = vmatprep.mubr.f32.mxu0 0.0
      %v2945 = vand.u32 %v332, 4294901760
      %v2946 = vsub.f32 %v332, %v2945
      %2947 = vmatmul.mubr.f32.gmra.mrb[0].mxu0 %v2946
      %v2948 = vpop.f32.mrb[0].mxu0
      %v2949 = vadd.f32 %v2672, %v2948
      %v2950 = vpop.f32.mrb[0].mxu0
      %2951 = vmatprep.mubr.f32.mxu0 0.0
      %v2952 = vand.u32 %v335, 4294901760
      %v2953 = vsub.f32 %v335, %v2952
      %2954 = vmatmul.mubr.f32.gmra.mrb[0].mxu0 %v2953
      %v2955 = vpop.f32.mrb[0].mxu0
      %v2956 = vadd.f32 %v2678, %v2955
      %v2957 = vpop.f32.mrb[0].mxu0
      %2958 = vmatprep.mubr.f32.mxu0 0.0
      %v2959 = vand.u32 %v338, 4294901760
      %v2960 = vsub.f32 %v338, %v2959
      %2961 = vmatmul.mubr.f32.gmra.mrb[0].mxu0 %v2960
      %v2962 = vpop.f32.mrb[0].mxu0
      %v2963 = vadd.f32 %v2684, %v2962
      %v2964 = vpop.f32.mrb[0].mxu0
      %2965 = vdwg.mxu0
      %2966 = vmatprep.subr.mxu0 0.0
      %v2967 = vand.u32 %v245, 4294901760
      %2968 = vmatpush1.msra.mxu0 %v2967
      %2969 = vmatprep.subr.mxu0 0.0
      %v2970 = vand.u32 %v2063, 4294901760
      %2971 = vmatpush1.msra.mxu0 %v2970
      %2972 = vmatprep.subr.mxu0 0.0
      %2973 = vmatpush1.msra.mxu0 0.0
      %2974 = vmatprep.subr.mxu0 0.0
      %2975 = vmatpush1.msra.mxu0 0.0
      %2976 = vmatprep.subr.mxu0 0.0
      %2977 = vmatpush1.msra.mxu0 0.0
      %2978 = vmatprep.subr.mxu0 0.0
      %2979 = vmatpush1.msra.mxu0 0.0
      %2980 = vmatprep.subr.mxu0 0.0
      %2981 = vmatpush1.msra.mxu0 0.0
      %2982 = vmatprep.subr.mxu0 0.0
      %2983 = vmatpush1.msra.mxu0 0.0
      %2984 = vmatprep.subr.mxu0 0.0
      %2985 = vmatpush1.msra.mxu0 0.0
      %2986 = vmatprep.subr.mxu0 0.0
      %2987 = vmatpush1.msra.mxu0 0.0
      %2988 = vmatprep.subr.mxu0 0.0
      %2989 = vmatpush1.msra.mxu0 0.0
      %2990 = vmatprep.subr.mxu0 0.0
      %2991 = vmatpush1.msra.mxu0 0.0
      %2992 = vmatprep.subr.mxu0 0.0
      %2993 = vmatpush1.msra.mxu0 0.0
      %2994 = vmatprep.subr.mxu0 0.0
      %2995 = vmatpush1.msra.mxu0 0.0
      %2996 = vmatprep.subr.mxu0 0.0
      %2997 = vmatpush1.msra.mxu0 0.0
      %2998 = vmatprep.subr.mxu0 0.0
      %2999 = vmatpush1.msra.mxu0 0.0
      %3000 = vmatprep.subr.mxu0 0.0
      %3001 = vmatpush1.msra.mxu0 0.0
      %3002 = vmatprep.subr.mxu0 0.0
      %3003 = vmatpush1.msra.mxu0 0.0
      %3004 = vmatprep.subr.mxu0 0.0
      %3005 = vmatpush1.msra.mxu0 0.0
      %3006 = vmatprep.subr.mxu0 0.0
      %3007 = vmatpush1.msra.mxu0 0.0
      %3008 = vmatprep.subr.mxu0 0.0
      %3009 = vmatpush1.msra.mxu0 0.0
      %3010 = vmatprep.subr.mxu0 0.0
      %3011 = vmatpush1.msra.mxu0 0.0
      %3012 = vmatprep.subr.mxu0 0.0
      %3013 = vmatpush1.msra.mxu0 0.0
      %3014 = vmatprep.subr.mxu0 0.0
      %3015 = vmatpush1.msra.mxu0 0.0
      %3016 = vmatprep.subr.mxu0 0.0
      %3017 = vmatpush1.msra.mxu0 0.0
      %3018 = vmatprep.subr.mxu0 0.0
      %3019 = vmatpush1.msra.mxu0 0.0
      %3020 = vmatprep.subr.mxu0 0.0
      %3021 = vmatpush1.msra.mxu0 0.0
      %3022 = vmatprep.subr.mxu0 0.0
      %3023 = vmatpush1.msra.mxu0 0.0
      %3024 = vmatprep.subr.mxu0 0.0
      %3025 = vmatpush1.msra.mxu0 0.0
      %3026 = vmatprep.subr.mxu0 0.0
      %3027 = vmatpush1.msra.mxu0 0.0
      %3028 = vmatprep.subr.mxu0 0.0
      %3029 = vmatpush1.msra.mxu0 0.0
      %3030 = vmatprep.subr.mxu0 0.0
      %3031 = vmatpush1.msra.mxu0 0.0
      %3032 = vmatprep.mubr.f32.mxu0 0.0
      %v3033 = vand.u32 %v2057, 4294901760
      %v3034 = vsub.f32 %v2057, %v3033
      %v3035 = vand.u32 %v3034, 4294901760
      %3036 = vmatmul.mubr.f32.gmra.mrb[0].mxu0 %v3035
      %v3037 = vpop.f32.mrb[0].mxu0
      %v3038 = vadd.f32 %v2760, %v3037
      %v3039 = vpop.f32.mrb[0].mxu0
      %3040 = vmatprep.mubr.f32.mxu0 0.0
      %v3041 = vand.u32 %v2060, 4294901760
      %v3042 = vsub.f32 %v2060, %v3041
      %v3043 = vand.u32 %v3042, 4294901760
      %3044 = vmatmul.mubr.f32.gmra.mrb[0].mxu0 %v3043
      %v3045 = vpop.f32.mrb[0].mxu0
      %v3046 = vadd.f32 %v2767, %v3045
      %v3047 = vpop.f32.mrb[0].mxu0
      %3048 = vmatprep.mubr.f32.mxu0 0.0
      %v3049 = vand.u32 %v257, 4294901760
      %v3050 = vsub.f32 %v257, %v3049
      %v3051 = vand.u32 %v3050, 4294901760
      %3052 = vmatmul.mubr.f32.gmra.mrb[0].mxu0 %v3051
      %v3053 = vpop.f32.mrb[0].mxu0
      %v3054 = vadd.f32 %v2774, %v3053
      %v3055 = vpop.f32.mrb[0].mxu0
      %3056 = vmatprep.mubr.f32.mxu0 0.0
      %v3057 = vand.u32 %v260, 4294901760
      %v3058 = vsub.f32 %v260, %v3057
      %v3059 = vand.u32 %v3058, 4294901760
      %3060 = vmatmul.mubr.f32.gmra.mrb[0].mxu0 %v3059
      %v3061 = vpop.f32.mrb[0].mxu0
      %v3062 = vadd.f32 %v2781, %v3061
      %v3063 = vpop.f32.mrb[0].mxu0
      %3064 = vmatprep.mubr.f32.mxu0 0.0
      %v3065 = vand.u32 %v263, 4294901760
      %v3066 = vsub.f32 %v263, %v3065
      %v3067 = vand.u32 %v3066, 4294901760
      %3068 = vmatmul.mubr.f32.gmra.mrb[0].mxu0 %v3067
      %v3069 = vpop.f32.mrb[0].mxu0
      %v3070 = vadd.f32 %v2788, %v3069
      %v3071 = vpop.f32.mrb[0].mxu0
      %3072 = vmatprep.mubr.f32.mxu0 0.0
      %v3073 = vand.u32 %v266, 4294901760
      %v3074 = vsub.f32 %v266, %v3073
      %v3075 = vand.u32 %v3074, 4294901760
      %3076 = vmatmul.mubr.f32.gmra.mrb[0].mxu0 %v3075
      %v3077 = vpop.f32.mrb[0].mxu0
      %v3078 = vadd.f32 %v2795, %v3077
      %v3079 = vpop.f32.mrb[0].mxu0
      %3080 = vmatprep.mubr.f32.mxu0 0.0
      %v3081 = vand.u32 %v269, 4294901760
      %v3082 = vsub.f32 %v269, %v3081
      %v3083 = vand.u32 %v3082, 4294901760
      %3084 = vmatmul.mubr.f32.gmra.mrb[0].mxu0 %v3083
      %v3085 = vpop.f32.mrb[0].mxu0
      %v3086 = vadd.f32 %v2802, %v3085
      %v3087 = vpop.f32.mrb[0].mxu0
      %3088 = vmatprep.mubr.f32.mxu0 0.0
      %v3089 = vand.u32 %v272, 4294901760
      %v3090 = vsub.f32 %v272, %v3089
      %v3091 = vand.u32 %v3090, 4294901760
      %3092 = vmatmul.mubr.f32.gmra.mrb[0].mxu0 %v3091
      %v3093 = vpop.f32.mrb[0].mxu0
      %v3094 = vadd.f32 %v2809, %v3093
      %v3095 = vpop.f32.mrb[0].mxu0
      %3096 = vmatprep.mubr.f32.mxu0 0.0
      %v3097 = vand.u32 %v275, 4294901760
      %v3098 = vsub.f32 %v275, %v3097
      %v3099 = vand.u32 %v3098, 4294901760
      %3100 = vmatmul.mubr.f32.gmra.mrb[0].mxu0 %v3099
      %v3101 = vpop.f32.mrb[0].mxu0
      %v3102 = vadd.f32 %v2816, %v3101
      %v3103 = vpop.f32.mrb[0].mxu0
      %3104 = vmatprep.mubr.f32.mxu0 0.0
      %v3105 = vand.u32 %v278, 4294901760
      %v3106 = vsub.f32 %v278, %v3105
      %v3107 = vand.u32 %v3106, 4294901760
      %3108 = vmatmul.mubr.f32.gmra.mrb[0].mxu0 %v3107
      %v3109 = vpop.f32.mrb[0].mxu0
      %v3110 = vadd.f32 %v2823, %v3109
      %v3111 = vpop.f32.mrb[0].mxu0
      %3112 = vmatprep.mubr.f32.mxu0 0.0
      %v3113 = vand.u32 %v281, 4294901760
      %v3114 = vsub.f32 %v281, %v3113
      %v3115 = vand.u32 %v3114, 4294901760
      %3116 = vmatmul.mubr.f32.gmra.mrb[0].mxu0 %v3115
      %v3117 = vpop.f32.mrb[0].mxu0
      %v3118 = vadd.f32 %v2830, %v3117
      %v3119 = vpop.f32.mrb[0].mxu0
      %3120 = vmatprep.mubr.f32.mxu0 0.0
      %v3121 = vand.u32 %v284, 4294901760
      %v3122 = vsub.f32 %v284, %v3121
      %v3123 = vand.u32 %v3122, 4294901760
      %3124 = vmatmul.mubr.f32.gmra.mrb[0].mxu0 %v3123
      %v3125 = vpop.f32.mrb[0].mxu0
      %v3126 = vadd.f32 %v2837, %v3125
      %v3127 = vpop.f32.mrb[0].mxu0
      %3128 = vmatprep.mubr.f32.mxu0 0.0
      %v3129 = vand.u32 %v287, 4294901760
      %v3130 = vsub.f32 %v287, %v3129
      %v3131 = vand.u32 %v3130, 4294901760
      %3132 = vmatmul.mubr.f32.gmra.mrb[0].mxu0 %v3131
      %v3133 = vpop.f32.mrb[0].mxu0
      %v3134 = vadd.f32 %v2844, %v3133
      %v3135 = vpop.f32.mrb[0].mxu0
      %3136 = vmatprep.mubr.f32.mxu0 0.0
      %v3137 = vand.u32 %v290, 4294901760
      %v3138 = vsub.f32 %v290, %v3137
      %v3139 = vand.u32 %v3138, 4294901760
      %3140 = vmatmul.mubr.f32.gmra.mrb[0].mxu0 %v3139
      %v3141 = vpop.f32.mrb[0].mxu0
      %v3142 = vadd.f32 %v2851, %v3141
      %v3143 = vpop.f32.mrb[0].mxu0
      %3144 = vmatprep.mubr.f32.mxu0 0.0
      %v3145 = vand.u32 %v293, 4294901760
      %v3146 = vsub.f32 %v293, %v3145
      %v3147 = vand.u32 %v3146, 4294901760
      %3148 = vmatmul.mubr.f32.gmra.mrb[0].mxu0 %v3147
      %v3149 = vpop.f32.mrb[0].mxu0
      %v3150 = vadd.f32 %v2858, %v3149
      %v3151 = vpop.f32.mrb[0].mxu0
      %3152 = vmatprep.mubr.f32.mxu0 0.0
      %v3153 = vand.u32 %v296, 4294901760
      %v3154 = vsub.f32 %v296, %v3153
      %v3155 = vand.u32 %v3154, 4294901760
      %3156 = vmatmul.mubr.f32.gmra.mrb[0].mxu0 %v3155
      %v3157 = vpop.f32.mrb[0].mxu0
      %v3158 = vadd.f32 %v2865, %v3157
      %v3159 = vpop.f32.mrb[0].mxu0
      %3160 = vmatprep.mubr.f32.mxu0 0.0
      %v3161 = vand.u32 %v299, 4294901760
      %v3162 = vsub.f32 %v299, %v3161
      %v3163 = vand.u32 %v3162, 4294901760
      %3164 = vmatmul.mubr.f32.gmra.mrb[0].mxu0 %v3163
      %v3165 = vpop.f32.mrb[0].mxu0
      %v3166 = vadd.f32 %v2872, %v3165
      %v3167 = vpop.f32.mrb[0].mxu0
      %3168 = vmatprep.mubr.f32.mxu0 0.0
      %v3169 = vand.u32 %v302, 4294901760
      %v3170 = vsub.f32 %v302, %v3169
      %v3171 = vand.u32 %v3170, 4294901760
      %3172 = vmatmul.mubr.f32.gmra.mrb[0].mxu0 %v3171
      %v3173 = vpop.f32.mrb[0].mxu0
      %v3174 = vadd.f32 %v2879, %v3173
      %v3175 = vpop.f32.mrb[0].mxu0
      %3176 = vmatprep.mubr.f32.mxu0 0.0
      %v3177 = vand.u32 %v305, 4294901760
      %v3178 = vsub.f32 %v305, %v3177
      %v3179 = vand.u32 %v3178, 4294901760
      %3180 = vmatmul.mubr.f32.gmra.mrb[0].mxu0 %v3179
      %v3181 = vpop.f32.mrb[0].mxu0
      %v3182 = vadd.f32 %v2886, %v3181
      %v3183 = vpop.f32.mrb[0].mxu0
      %3184 = vmatprep.mubr.f32.mxu0 0.0
      %v3185 = vand.u32 %v308, 4294901760
      %v3186 = vsub.f32 %v308, %v3185
      %v3187 = vand.u32 %v3186, 4294901760
      %3188 = vmatmul.mubr.f32.gmra.mrb[0].mxu0 %v3187
      %v3189 = vpop.f32.mrb[0].mxu0
      %v3190 = vadd.f32 %v2893, %v3189
      %v3191 = vpop.f32.mrb[0].mxu0
      %3192 = vmatprep.mubr.f32.mxu0 0.0
      %v3193 = vand.u32 %v311, 4294901760
      %v3194 = vsub.f32 %v311, %v3193
      %v3195 = vand.u32 %v3194, 4294901760
      %3196 = vmatmul.mubr.f32.gmra.mrb[0].mxu0 %v3195
      %v3197 = vpop.f32.mrb[0].mxu0
      %v3198 = vadd.f32 %v2900, %v3197
      %v3199 = vpop.f32.mrb[0].mxu0
      %3200 = vmatprep.mubr.f32.mxu0 0.0
      %v3201 = vand.u32 %v314, 4294901760
      %v3202 = vsub.f32 %v314, %v3201
      %v3203 = vand.u32 %v3202, 4294901760
      %3204 = vmatmul.mubr.f32.gmra.mrb[0].mxu0 %v3203
      %v3205 = vpop.f32.mrb[0].mxu0
      %v3206 = vadd.f32 %v2907, %v3205
      %v3207 = vpop.f32.mrb[0].mxu0
      %3208 = vmatprep.mubr.f32.mxu0 0.0
      %v3209 = vand.u32 %v317, 4294901760
      %v3210 = vsub.f32 %v317, %v3209
      %v3211 = vand.u32 %v3210, 4294901760
      %3212 = vmatmul.mubr.f32.gmra.mrb[0].mxu0 %v3211
      %v3213 = vpop.f32.mrb[0].mxu0
      %v3214 = vadd.f32 %v2914, %v3213
      %v3215 = vpop.f32.mrb[0].mxu0
      %3216 = vmatprep.mubr.f32.mxu0 0.0
      %v3217 = vand.u32 %v320, 4294901760
      %v3218 = vsub.f32 %v320, %v3217
      %v3219 = vand.u32 %v3218, 4294901760
      %3220 = vmatmul.mubr.f32.gmra.mrb[0].mxu0 %v3219
      %v3221 = vpop.f32.mrb[0].mxu0
      %v3222 = vadd.f32 %v2921, %v3221
      %v3223 = vpop.f32.mrb[0].mxu0
      %3224 = vmatprep.mubr.f32.mxu0 0.0
      %v3225 = vand.u32 %v323, 4294901760
      %v3226 = vsub.f32 %v323, %v3225
      %v3227 = vand.u32 %v3226, 4294901760
      %3228 = vmatmul.mubr.f32.gmra.mrb[0].mxu0 %v3227
      %v3229 = vpop.f32.mrb[0].mxu0
      %v3230 = vadd.f32 %v2928, %v3229
      %v3231 = vpop.f32.mrb[0].mxu0
      %3232 = vmatprep.mubr.f32.mxu0 0.0
      %v3233 = vand.u32 %v326, 4294901760
      %v3234 = vsub.f32 %v326, %v3233
      %v3235 = vand.u32 %v3234, 4294901760
      %3236 = vmatmul.mubr.f32.gmra.mrb[0].mxu0 %v3235
      %v3237 = vpop.f32.mrb[0].mxu0
      %v3238 = vadd.f32 %v2935, %v3237
      %v3239 = vpop.f32.mrb[0].mxu0
      %3240 = vmatprep.mubr.f32.mxu0 0.0
      %v3241 = vand.u32 %v329, 4294901760
      %v3242 = vsub.f32 %v329, %v3241
      %v3243 = vand.u32 %v3242, 4294901760
      %3244 = vmatmul.mubr.f32.gmra.mrb[0].mxu0 %v3243
      %v3245 = vpop.f32.mrb[0].mxu0
      %v3246 = vadd.f32 %v2942, %v3245
      %v3247 = vpop.f32.mrb[0].mxu0
      %3248 = vmatprep.mubr.f32.mxu0 0.0
      %v3249 = vand.u32 %v332, 4294901760
      %v3250 = vsub.f32 %v332, %v3249
      %v3251 = vand.u32 %v3250, 4294901760
      %3252 = vmatmul.mubr.f32.gmra.mrb[0].mxu0 %v3251
      %v3253 = vpop.f32.mrb[0].mxu0
      %v3254 = vadd.f32 %v2949, %v3253
      %v3255 = vpop.f32.mrb[0].mxu0
      %3256 = vmatprep.mubr.f32.mxu0 0.0
      %v3257 = vand.u32 %v335, 4294901760
      %v3258 = vsub.f32 %v335, %v3257
      %v3259 = vand.u32 %v3258, 4294901760
      %3260 = vmatmul.mubr.f32.gmra.mrb[0].mxu0 %v3259
      %v3261 = vpop.f32.mrb[0].mxu0
      %v3262 = vadd.f32 %v2956, %v3261
      %v3263 = vpop.f32.mrb[0].mxu0
      %3264 = vmatprep.mubr.f32.mxu0 0.0
      %v3265 = vand.u32 %v338, 4294901760
      %v3266 = vsub.f32 %v338, %v3265
      %v3267 = vand.u32 %v3266, 4294901760
      %3268 = vmatmul.mubr.f32.gmra.mrb[0].mxu0 %v3267
      %v3269 = vpop.f32.mrb[0].mxu0
      %v3270 = vadd.f32 %v2963, %v3269
      %v3271 = vpop.f32.mrb[0].mxu0
      %3272 = vdwg.mxu0
      %3273 = vmatprep.subr.mxu0 0.0
      %v3274 = vand.u32 %v245, 4294901760
      %v3275 = vsub.f32 %v245, %v3274
      %v3276 = vand.u32 %v3275, 4294901760
      %3277 = vmatpush1.msra.mxu0 %v3276
      %3278 = vmatprep.subr.mxu0 0.0
      %v3279 = vand.u32 %v2063, 4294901760
      %v3280 = vsub.f32 %v2063, %v3279
      %v3281 = vand.u32 %v3280, 4294901760
      %3282 = vmatpush1.msra.mxu0 %v3281
      %3283 = vmatprep.subr.mxu0 0.0
      %3284 = vmatpush1.msra.mxu0 0.0
      %3285 = vmatprep.subr.mxu0 0.0
      %3286 = vmatpush1.msra.mxu0 0.0
      %3287 = vmatprep.subr.mxu0 0.0
      %3288 = vmatpush1.msra.mxu0 0.0
      %3289 = vmatprep.subr.mxu0 0.0
      %3290 = vmatpush1.msra.mxu0 0.0
      %3291 = vmatprep.subr.mxu0 0.0
      %3292 = vmatpush1.msra.mxu0 0.0
      %3293 = vmatprep.subr.mxu0 0.0
      %3294 = vmatpush1.msra.mxu0 0.0
      %3295 = vmatprep.subr.mxu0 0.0
      %3296 = vmatpush1.msra.mxu0 0.0
      %3297 = vmatprep.subr.mxu0 0.0
      %3298 = vmatpush1.msra.mxu0 0.0
      %3299 = vmatprep.subr.mxu0 0.0
      %3300 = vmatpush1.msra.mxu0 0.0
      %3301 = vmatprep.subr.mxu0 0.0
      %3302 = vmatpush1.msra.mxu0 0.0
      %3303 = vmatprep.subr.mxu0 0.0
      %3304 = vmatpush1.msra.mxu0 0.0
      %3305 = vmatprep.subr.mxu0 0.0
      %3306 = vmatpush1.msra.mxu0 0.0
      %3307 = vmatprep.subr.mxu0 0.0
      %3308 = vmatpush1.msra.mxu0 0.0
      %3309 = vmatprep.subr.mxu0 0.0
      %3310 = vmatpush1.msra.mxu0 0.0
      %3311 = vmatprep.subr.mxu0 0.0
      %3312 = vmatpush1.msra.mxu0 0.0
      %3313 = vmatprep.subr.mxu0 0.0
      %3314 = vmatpush1.msra.mxu0 0.0
      %3315 = vmatprep.subr.mxu0 0.0
      %3316 = vmatpush1.msra.mxu0 0.0
      %3317 = vmatprep.subr.mxu0 0.0
      %3318 = vmatpush1.msra.mxu0 0.0
      %3319 = vmatprep.subr.mxu0 0.0
      %3320 = vmatpush1.msra.mxu0 0.0
      %3321 = vmatprep.subr.mxu0 0.0
      %3322 = vmatpush1.msra.mxu0 0.0
      %3323 = vmatprep.subr.mxu0 0.0
      %3324 = vmatpush1.msra.mxu0 0.0
      %3325 = vmatprep.subr.mxu0 0.0
      %3326 = vmatpush1.msra.mxu0 0.0
      %3327 = vmatprep.subr.mxu0 0.0
      %3328 = vmatpush1.msra.mxu0 0.0
      %3329 = vmatprep.subr.mxu0 0.0
      %3330 = vmatpush1.msra.mxu0 0.0
      %3331 = vmatprep.subr.mxu0 0.0
      %3332 = vmatpush1.msra.mxu0 0.0
      %3333 = vmatprep.subr.mxu0 0.0
      %3334 = vmatpush1.msra.mxu0 0.0
      %3335 = vmatprep.subr.mxu0 0.0
      %3336 = vmatpush1.msra.mxu0 0.0
      %3337 = vmatprep.subr.mxu0 0.0
      %3338 = vmatpush1.msra.mxu0 0.0
      %3339 = vmatprep.subr.mxu0 0.0
      %3340 = vmatpush1.msra.mxu0 0.0
      %3341 = vmatprep.subr.mxu0 0.0
      %3342 = vmatpush1.msra.mxu0 0.0
      %3343 = vmatprep.mubr.f32.mxu0 0.0
      %v3344 = vand.u32 %v2057, 4294901760
      %3345 = vmatmul.mubr.f32.gmra.mrb[0].mxu0 %v3344
      %v3346 = vpop.f32.mrb[0].mxu0
      %v3347 = vadd.f32 %v3038, %v3346
      %v3348 = vpop.f32.mrb[0].mxu0
      %3349 = vmatprep.mubr.f32.mxu0 0.0
      %v3350 = vand.u32 %v2060, 4294901760
      %3351 = vmatmul.mubr.f32.gmra.mrb[0].mxu0 %v3350
      %v3352 = vpop.f32.mrb[0].mxu0
      %v3353 = vadd.f32 %v3046, %v3352
      %v3354 = vpop.f32.mrb[0].mxu0
      %3355 = vmatprep.mubr.f32.mxu0 0.0
      %v3356 = vand.u32 %v257, 4294901760
      %3357 = vmatmul.mubr.f32.gmra.mrb[0].mxu0 %v3356
      %v3358 = vpop.f32.mrb[0].mxu0
      %v3359 = vadd.f32 %v3054, %v3358
      %v3360 = vpop.f32.mrb[0].mxu0
      %3361 = vmatprep.mubr.f32.mxu0 0.0
      %v3362 = vand.u32 %v260, 4294901760
      %3363 = vmatmul.mubr.f32.gmra.mrb[0].mxu0 %v3362
      %v3364 = vpop.f32.mrb[0].mxu0
      %v3365 = vadd.f32 %v3062, %v3364
      %v3366 = vpop.f32.mrb[0].mxu0
      %3367 = vmatprep.mubr.f32.mxu0 0.0
      %v3368 = vand.u32 %v263, 4294901760
      %3369 = vmatmul.mubr.f32.gmra.mrb[0].mxu0 %v3368
      %v3370 = vpop.f32.mrb[0].mxu0
      %v3371 = vadd.f32 %v3070, %v3370
      %v3372 = vpop.f32.mrb[0].mxu0
      %3373 = vmatprep.mubr.f32.mxu0 0.0
      %v3374 = vand.u32 %v266, 4294901760
      %3375 = vmatmul.mubr.f32.gmra.mrb[0].mxu0 %v3374
      %v3376 = vpop.f32.mrb[0].mxu0
      %v3377 = vadd.f32 %v3078, %v3376
      %v3378 = vpop.f32.mrb[0].mxu0
      %3379 = vmatprep.mubr.f32.mxu0 0.0
      %v3380 = vand.u32 %v269, 4294901760
      %3381 = vmatmul.mubr.f32.gmra.mrb[0].mxu0 %v3380
      %v3382 = vpop.f32.mrb[0].mxu0
      %v3383 = vadd.f32 %v3086, %v3382
      %v3384 = vpop.f32.mrb[0].mxu0
      %3385 = vmatprep.mubr.f32.mxu0 0.0
      %v3386 = vand.u32 %v272, 4294901760
      %3387 = vmatmul.mubr.f32.gmra.mrb[0].mxu0 %v3386
      %v3388 = vpop.f32.mrb[0].mxu0
      %v3389 = vadd.f32 %v3094, %v3388
      %v3390 = vpop.f32.mrb[0].mxu0
      %3391 = vmatprep.mubr.f32.mxu0 0.0
      %v3392 = vand.u32 %v275, 4294901760
      %3393 = vmatmul.mubr.f32.gmra.mrb[0].mxu0 %v3392
      %v3394 = vpop.f32.mrb[0].mxu0
      %v3395 = vadd.f32 %v3102, %v3394
      %v3396 = vpop.f32.mrb[0].mxu0
      %3397 = vmatprep.mubr.f32.mxu0 0.0
      %v3398 = vand.u32 %v278, 4294901760
      %3399 = vmatmul.mubr.f32.gmra.mrb[0].mxu0 %v3398
      %v3400 = vpop.f32.mrb[0].mxu0
      %v3401 = vadd.f32 %v3110, %v3400
      %v3402 = vpop.f32.mrb[0].mxu0
      %3403 = vmatprep.mubr.f32.mxu0 0.0
      %v3404 = vand.u32 %v281, 4294901760
      %3405 = vmatmul.mubr.f32.gmra.mrb[0].mxu0 %v3404
      %v3406 = vpop.f32.mrb[0].mxu0
      %v3407 = vadd.f32 %v3118, %v3406
      %v3408 = vpop.f32.mrb[0].mxu0
      %3409 = vmatprep.mubr.f32.mxu0 0.0
      %v3410 = vand.u32 %v284, 4294901760
      %3411 = vmatmul.mubr.f32.gmra.mrb[0].mxu0 %v3410
      %v3412 = vpop.f32.mrb[0].mxu0
      %v3413 = vadd.f32 %v3126, %v3412
      %v3414 = vpop.f32.mrb[0].mxu0
      %3415 = vmatprep.mubr.f32.mxu0 0.0
      %v3416 = vand.u32 %v287, 4294901760
      %3417 = vmatmul.mubr.f32.gmra.mrb[0].mxu0 %v3416
      %v3418 = vpop.f32.mrb[0].mxu0
      %v3419 = vadd.f32 %v3134, %v3418
      %v3420 = vpop.f32.mrb[0].mxu0
      %3421 = vmatprep.mubr.f32.mxu0 0.0
      %v3422 = vand.u32 %v290, 4294901760
      %3423 = vmatmul.mubr.f32.gmra.mrb[0].mxu0 %v3422
      %v3424 = vpop.f32.mrb[0].mxu0
      %v3425 = vadd.f32 %v3142, %v3424
      %v3426 = vpop.f32.mrb[0].mxu0
      %3427 = vmatprep.mubr.f32.mxu0 0.0
      %v3428 = vand.u32 %v293, 4294901760
      %3429 = vmatmul.mubr.f32.gmra.mrb[0].mxu0 %v3428
      %v3430 = vpop.f32.mrb[0].mxu0
      %v3431 = vadd.f32 %v3150, %v3430
      %v3432 = vpop.f32.mrb[0].mxu0
      %3433 = vmatprep.mubr.f32.mxu0 0.0
      %v3434 = vand.u32 %v296, 4294901760
      %3435 = vmatmul.mubr.f32.gmra.mrb[0].mxu0 %v3434
      %v3436 = vpop.f32.mrb[0].mxu0
      %v3437 = vadd.f32 %v3158, %v3436
      %v3438 = vpop.f32.mrb[0].mxu0
      %3439 = vmatprep.mubr.f32.mxu0 0.0
      %v3440 = vand.u32 %v299, 4294901760
      %3441 = vmatmul.mubr.f32.gmra.mrb[0].mxu0 %v3440
      %v3442 = vpop.f32.mrb[0].mxu0
      %v3443 = vadd.f32 %v3166, %v3442
      %v3444 = vpop.f32.mrb[0].mxu0
      %3445 = vmatprep.mubr.f32.mxu0 0.0
      %v3446 = vand.u32 %v302, 4294901760
      %3447 = vmatmul.mubr.f32.gmra.mrb[0].mxu0 %v3446
      %v3448 = vpop.f32.mrb[0].mxu0
      %v3449 = vadd.f32 %v3174, %v3448
      %v3450 = vpop.f32.mrb[0].mxu0
      %3451 = vmatprep.mubr.f32.mxu0 0.0
      %v3452 = vand.u32 %v305, 4294901760
      %3453 = vmatmul.mubr.f32.gmra.mrb[0].mxu0 %v3452
      %v3454 = vpop.f32.mrb[0].mxu0
      %v3455 = vadd.f32 %v3182, %v3454
      %v3456 = vpop.f32.mrb[0].mxu0
      %3457 = vmatprep.mubr.f32.mxu0 0.0
      %v3458 = vand.u32 %v308, 4294901760
      %3459 = vmatmul.mubr.f32.gmra.mrb[0].mxu0 %v3458
      %v3460 = vpop.f32.mrb[0].mxu0
      %v3461 = vadd.f32 %v3190, %v3460
      %v3462 = vpop.f32.mrb[0].mxu0
      %3463 = vmatprep.mubr.f32.mxu0 0.0
      %v3464 = vand.u32 %v311, 4294901760
      %3465 = vmatmul.mubr.f32.gmra.mrb[0].mxu0 %v3464
      %v3466 = vpop.f32.mrb[0].mxu0
      %v3467 = vadd.f32 %v3198, %v3466
      %v3468 = vpop.f32.mrb[0].mxu0
      %3469 = vmatprep.mubr.f32.mxu0 0.0
      %v3470 = vand.u32 %v314, 4294901760
      %3471 = vmatmul.mubr.f32.gmra.mrb[0].mxu0 %v3470
      %v3472 = vpop.f32.mrb[0].mxu0
      %v3473 = vadd.f32 %v3206, %v3472
      %v3474 = vpop.f32.mrb[0].mxu0
      %3475 = vmatprep.mubr.f32.mxu0 0.0
      %v3476 = vand.u32 %v317, 4294901760
      %3477 = vmatmul.mubr.f32.gmra.mrb[0].mxu0 %v3476
      %v3478 = vpop.f32.mrb[0].mxu0
      %v3479 = vadd.f32 %v3214, %v3478
      %v3480 = vpop.f32.mrb[0].mxu0
      %3481 = vmatprep.mubr.f32.mxu0 0.0
      %v3482 = vand.u32 %v320, 4294901760
      %3483 = vmatmul.mubr.f32.gmra.mrb[0].mxu0 %v3482
      %v3484 = vpop.f32.mrb[0].mxu0
      %v3485 = vadd.f32 %v3222, %v3484
      %v3486 = vpop.f32.mrb[0].mxu0
      %3487 = vmatprep.mubr.f32.mxu0 0.0
      %v3488 = vand.u32 %v323, 4294901760
      %3489 = vmatmul.mubr.f32.gmra.mrb[0].mxu0 %v3488
      %v3490 = vpop.f32.mrb[0].mxu0
      %v3491 = vadd.f32 %v3230, %v3490
      %v3492 = vpop.f32.mrb[0].mxu0
      %3493 = vmatprep.mubr.f32.mxu0 0.0
      %v3494 = vand.u32 %v326, 4294901760
      %3495 = vmatmul.mubr.f32.gmra.mrb[0].mxu0 %v3494
      %v3496 = vpop.f32.mrb[0].mxu0
      %v3497 = vadd.f32 %v3238, %v3496
      %v3498 = vpop.f32.mrb[0].mxu0
      %3499 = vmatprep.mubr.f32.mxu0 0.0
      %v3500 = vand.u32 %v329, 4294901760
      %3501 = vmatmul.mubr.f32.gmra.mrb[0].mxu0 %v3500
      %v3502 = vpop.f32.mrb[0].mxu0
      %v3503 = vadd.f32 %v3246, %v3502
      %v3504 = vpop.f32.mrb[0].mxu0
      %3505 = vmatprep.mubr.f32.mxu0 0.0
      %v3506 = vand.u32 %v332, 4294901760
      %3507 = vmatmul.mubr.f32.gmra.mrb[0].mxu0 %v3506
      %v3508 = vpop.f32.mrb[0].mxu0
      %v3509 = vadd.f32 %v3254, %v3508
      %v3510 = vpop.f32.mrb[0].mxu0
      %3511 = vmatprep.mubr.f32.mxu0 0.0
      %v3512 = vand.u32 %v335, 4294901760
      %3513 = vmatmul.mubr.f32.gmra.mrb[0].mxu0 %v3512
      %v3514 = vpop.f32.mrb[0].mxu0
      %v3515 = vadd.f32 %v3262, %v3514
      %v3516 = vpop.f32.mrb[0].mxu0
      %3517 = vmatprep.mubr.f32.mxu0 0.0
      %v3518 = vand.u32 %v338, 4294901760
      %3519 = vmatmul.mubr.f32.gmra.mrb[0].mxu0 %v3518
      %v3520 = vpop.f32.mrb[0].mxu0
      %v3521 = vadd.f32 %v3270, %v3520
      %v3522 = vpop.f32.mrb[0].mxu0
      %3523 = vdwg.mxu0
      %3524 = vmatprep.subr.mxu0 0.0
      %v3525 = vand.u32 %v245, 4294901760
      %3526 = vmatpush1.msra.mxu0 %v3525
      %3527 = vmatprep.subr.mxu0 0.0
      %v3528 = vand.u32 %v2063, 4294901760
      %3529 = vmatpush1.msra.mxu0 %v3528
      %3530 = vmatprep.subr.mxu0 0.0
      %3531 = vmatpush1.msra.mxu0 0.0
      %3532 = vmatprep.subr.mxu0 0.0
      %3533 = vmatpush1.msra.mxu0 0.0
      %3534 = vmatprep.subr.mxu0 0.0
      %3535 = vmatpush1.msra.mxu0 0.0
      %3536 = vmatprep.subr.mxu0 0.0
      %3537 = vmatpush1.msra.mxu0 0.0
      %3538 = vmatprep.subr.mxu0 0.0
      %3539 = vmatpush1.msra.mxu0 0.0
      %3540 = vmatprep.subr.mxu0 0.0
      %3541 = vmatpush1.msra.mxu0 0.0
      %3542 = vmatprep.subr.mxu0 0.0
      %3543 = vmatpush1.msra.mxu0 0.0
      %3544 = vmatprep.subr.mxu0 0.0
      %3545 = vmatpush1.msra.mxu0 0.0
      %3546 = vmatprep.subr.mxu0 0.0
      %3547 = vmatpush1.msra.mxu0 0.0
      %3548 = vmatprep.subr.mxu0 0.0
      %3549 = vmatpush1.msra.mxu0 0.0
      %3550 = vmatprep.subr.mxu0 0.0
      %3551 = vmatpush1.msra.mxu0 0.0
      %3552 = vmatprep.subr.mxu0 0.0
      %3553 = vmatpush1.msra.mxu0 0.0
      %3554 = vmatprep.subr.mxu0 0.0
      %3555 = vmatpush1.msra.mxu0 0.0
      %3556 = vmatprep.subr.mxu0 0.0
      %3557 = vmatpush1.msra.mxu0 0.0
      %3558 = vmatprep.subr.mxu0 0.0
      %3559 = vmatpush1.msra.mxu0 0.0
      %3560 = vmatprep.subr.mxu0 0.0
      %3561 = vmatpush1.msra.mxu0 0.0
      %3562 = vmatprep.subr.mxu0 0.0
      %3563 = vmatpush1.msra.mxu0 0.0
      %3564 = vmatprep.subr.mxu0 0.0
      %3565 = vmatpush1.msra.mxu0 0.0
      %3566 = vmatprep.subr.mxu0 0.0
      %3567 = vmatpush1.msra.mxu0 0.0
      %3568 = vmatprep.subr.mxu0 0.0
      %3569 = vmatpush1.msra.mxu0 0.0
      %3570 = vmatprep.subr.mxu0 0.0
      %3571 = vmatpush1.msra.mxu0 0.0
      %3572 = vmatprep.subr.mxu0 0.0
      %3573 = vmatpush1.msra.mxu0 0.0
      %3574 = vmatprep.subr.mxu0 0.0
      %3575 = vmatpush1.msra.mxu0 0.0
      %3576 = vmatprep.subr.mxu0 0.0
      %3577 = vmatpush1.msra.mxu0 0.0
      %3578 = vmatprep.subr.mxu0 0.0
      %3579 = vmatpush1.msra.mxu0 0.0
      %3580 = vmatprep.subr.mxu0 0.0
      %3581 = vmatpush1.msra.mxu0 0.0
      %3582 = vmatprep.subr.mxu0 0.0
      %3583 = vmatpush1.msra.mxu0 0.0
      %3584 = vmatprep.subr.mxu0 0.0
      %3585 = vmatpush1.msra.mxu0 0.0
      %3586 = vmatprep.subr.mxu0 0.0
      %3587 = vmatpush1.msra.mxu0 0.0
      %3588 = vmatprep.subr.mxu0 0.0
      %3589 = vmatpush1.msra.mxu0 0.0
      %3590 = vmatprep.mubr.f32.mxu0 0.0
      %v3591 = vand.u32 %v2057, 4294901760
      %3592 = vmatmul.mubr.f32.gmra.mrb[0].mxu0 %v3591
      %v3593 = vpop.f32.mrb[0].mxu0
      %v3594 = vadd.f32 %v3347, %v3593
      %v3595 = vpop.f32.mrb[0].mxu0
      %3596 = vmatprep.mubr.f32.mxu0 0.0
      %v3597 = vand.u32 %v2060, 4294901760
      %3598 = vmatmul.mubr.f32.gmra.mrb[0].mxu0 %v3597
      %v3599 = vpop.f32.mrb[0].mxu0
      %v3600 = vadd.f32 %v3353, %v3599
      %v3601 = vpop.f32.mrb[0].mxu0
      %3602 = vmatprep.mubr.f32.mxu0 0.0
      %v3603 = vand.u32 %v257, 4294901760
      %3604 = vmatmul.mubr.f32.gmra.mrb[0].mxu0 %v3603
      %v3605 = vpop.f32.mrb[0].mxu0
      %v3606 = vadd.f32 %v3359, %v3605
      %v3607 = vpop.f32.mrb[0].mxu0
      %3608 = vmatprep.mubr.f32.mxu0 0.0
      %v3609 = vand.u32 %v260, 4294901760
      %3610 = vmatmul.mubr.f32.gmra.mrb[0].mxu0 %v3609
      %v3611 = vpop.f32.mrb[0].mxu0
      %v3612 = vadd.f32 %v3365, %v3611
      %v3613 = vpop.f32.mrb[0].mxu0
      %3614 = vmatprep.mubr.f32.mxu0 0.0
      %v3615 = vand.u32 %v263, 4294901760
      %3616 = vmatmul.mubr.f32.gmra.mrb[0].mxu0 %v3615
      %v3617 = vpop.f32.mrb[0].mxu0
      %v3618 = vadd.f32 %v3371, %v3617
      %v3619 = vpop.f32.mrb[0].mxu0
      %3620 = vmatprep.mubr.f32.mxu0 0.0
      %v3621 = vand.u32 %v266, 4294901760
      %3622 = vmatmul.mubr.f32.gmra.mrb[0].mxu0 %v3621
      %v3623 = vpop.f32.mrb[0].mxu0
      %v3624 = vadd.f32 %v3377, %v3623
      %v3625 = vpop.f32.mrb[0].mxu0
      %3626 = vmatprep.mubr.f32.mxu0 0.0
      %v3627 = vand.u32 %v269, 4294901760
      %3628 = vmatmul.mubr.f32.gmra.mrb[0].mxu0 %v3627
      %v3629 = vpop.f32.mrb[0].mxu0
      %v3630 = vadd.f32 %v3383, %v3629
      %v3631 = vpop.f32.mrb[0].mxu0
      %3632 = vmatprep.mubr.f32.mxu0 0.0
      %v3633 = vand.u32 %v272, 4294901760
      %3634 = vmatmul.mubr.f32.gmra.mrb[0].mxu0 %v3633
      %v3635 = vpop.f32.mrb[0].mxu0
      %v3636 = vadd.f32 %v3389, %v3635
      %v3637 = vpop.f32.mrb[0].mxu0
      %3638 = vmatprep.mubr.f32.mxu0 0.0
      %v3639 = vand.u32 %v275, 4294901760
      %3640 = vmatmul.mubr.f32.gmra.mrb[0].mxu0 %v3639
      %v3641 = vpop.f32.mrb[0].mxu0
      %v3642 = vadd.f32 %v3395, %v3641
      %v3643 = vpop.f32.mrb[0].mxu0
      %3644 = vmatprep.mubr.f32.mxu0 0.0
      %v3645 = vand.u32 %v278, 4294901760
      %3646 = vmatmul.mubr.f32.gmra.mrb[0].mxu0 %v3645
      %v3647 = vpop.f32.mrb[0].mxu0
      %v3648 = vadd.f32 %v3401, %v3647
      %v3649 = vpop.f32.mrb[0].mxu0
      %3650 = vmatprep.mubr.f32.mxu0 0.0
      %v3651 = vand.u32 %v281, 4294901760
      %3652 = vmatmul.mubr.f32.gmra.mrb[0].mxu0 %v3651
      %v3653 = vpop.f32.mrb[0].mxu0
      %v3654 = vadd.f32 %v3407, %v3653
      %v3655 = vpop.f32.mrb[0].mxu0
      %3656 = vmatprep.mubr.f32.mxu0 0.0
      %v3657 = vand.u32 %v284, 4294901760
      %3658 = vmatmul.mubr.f32.gmra.mrb[0].mxu0 %v3657
      %v3659 = vpop.f32.mrb[0].mxu0
      %v3660 = vadd.f32 %v3413, %v3659
      %v3661 = vpop.f32.mrb[0].mxu0
      %3662 = vmatprep.mubr.f32.mxu0 0.0
      %v3663 = vand.u32 %v287, 4294901760
      %3664 = vmatmul.mubr.f32.gmra.mrb[0].mxu0 %v3663
      %v3665 = vpop.f32.mrb[0].mxu0
      %v3666 = vadd.f32 %v3419, %v3665
      %v3667 = vpop.f32.mrb[0].mxu0
      %3668 = vmatprep.mubr.f32.mxu0 0.0
      %v3669 = vand.u32 %v290, 4294901760
      %3670 = vmatmul.mubr.f32.gmra.mrb[0].mxu0 %v3669
      %v3671 = vpop.f32.mrb[0].mxu0
      %v3672 = vadd.f32 %v3425, %v3671
      %v3673 = vpop.f32.mrb[0].mxu0
      %3674 = vmatprep.mubr.f32.mxu0 0.0
      %v3675 = vand.u32 %v293, 4294901760
      %3676 = vmatmul.mubr.f32.gmra.mrb[0].mxu0 %v3675
      %v3677 = vpop.f32.mrb[0].mxu0
      %v3678 = vadd.f32 %v3431, %v3677
      %v3679 = vpop.f32.mrb[0].mxu0
      %3680 = vmatprep.mubr.f32.mxu0 0.0
      %v3681 = vand.u32 %v296, 4294901760
      %3682 = vmatmul.mubr.f32.gmra.mrb[0].mxu0 %v3681
      %v3683 = vpop.f32.mrb[0].mxu0
      %v3684 = vadd.f32 %v3437, %v3683
      %v3685 = vpop.f32.mrb[0].mxu0
      %3686 = vmatprep.mubr.f32.mxu0 0.0
      %v3687 = vand.u32 %v299, 4294901760
      %3688 = vmatmul.mubr.f32.gmra.mrb[0].mxu0 %v3687
      %v3689 = vpop.f32.mrb[0].mxu0
      %v3690 = vadd.f32 %v3443, %v3689
      %v3691 = vpop.f32.mrb[0].mxu0
      %3692 = vmatprep.mubr.f32.mxu0 0.0
      %v3693 = vand.u32 %v302, 4294901760
      %3694 = vmatmul.mubr.f32.gmra.mrb[0].mxu0 %v3693
      %v3695 = vpop.f32.mrb[0].mxu0
      %v3696 = vadd.f32 %v3449, %v3695
      %v3697 = vpop.f32.mrb[0].mxu0
      %3698 = vmatprep.mubr.f32.mxu0 0.0
      %v3699 = vand.u32 %v305, 4294901760
      %3700 = vmatmul.mubr.f32.gmra.mrb[0].mxu0 %v3699
      %v3701 = vpop.f32.mrb[0].mxu0
      %v3702 = vadd.f32 %v3455, %v3701
      %v3703 = vpop.f32.mrb[0].mxu0
      %3704 = vmatprep.mubr.f32.mxu0 0.0
      %v3705 = vand.u32 %v308, 4294901760
      %3706 = vmatmul.mubr.f32.gmra.mrb[0].mxu0 %v3705
      %v3707 = vpop.f32.mrb[0].mxu0
      %v3708 = vadd.f32 %v3461, %v3707
      %v3709 = vpop.f32.mrb[0].mxu0
      %3710 = vmatprep.mubr.f32.mxu0 0.0
      %v3711 = vand.u32 %v311, 4294901760
      %3712 = vmatmul.mubr.f32.gmra.mrb[0].mxu0 %v3711
      %v3713 = vpop.f32.mrb[0].mxu0
      %v3714 = vadd.f32 %v3467, %v3713
      %v3715 = vpop.f32.mrb[0].mxu0
      %3716 = vmatprep.mubr.f32.mxu0 0.0
      %v3717 = vand.u32 %v314, 4294901760
      %3718 = vmatmul.mubr.f32.gmra.mrb[0].mxu0 %v3717
      %v3719 = vpop.f32.mrb[0].mxu0
      %v3720 = vadd.f32 %v3473, %v3719
      %v3721 = vpop.f32.mrb[0].mxu0
      %3722 = vmatprep.mubr.f32.mxu0 0.0
      %v3723 = vand.u32 %v317, 4294901760
      %3724 = vmatmul.mubr.f32.gmra.mrb[0].mxu0 %v3723
      %v3725 = vpop.f32.mrb[0].mxu0
      %v3726 = vadd.f32 %v3479, %v3725
      %v3727 = vpop.f32.mrb[0].mxu0
      %3728 = vmatprep.mubr.f32.mxu0 0.0
      %v3729 = vand.u32 %v320, 4294901760
      %3730 = vmatmul.mubr.f32.gmra.mrb[0].mxu0 %v3729
      %v3731 = vpop.f32.mrb[0].mxu0
      %v3732 = vadd.f32 %v3485, %v3731
      %v3733 = vpop.f32.mrb[0].mxu0
      %3734 = vmatprep.mubr.f32.mxu0 0.0
      %v3735 = vand.u32 %v323, 4294901760
      %3736 = vmatmul.mubr.f32.gmra.mrb[0].mxu0 %v3735
      %v3737 = vpop.f32.mrb[0].mxu0
      %v3738 = vadd.f32 %v3491, %v3737
      %v3739 = vpop.f32.mrb[0].mxu0
      %3740 = vmatprep.mubr.f32.mxu0 0.0
      %v3741 = vand.u32 %v326, 4294901760
      %3742 = vmatmul.mubr.f32.gmra.mrb[0].mxu0 %v3741
      %v3743 = vpop.f32.mrb[0].mxu0
      %v3744 = vadd.f32 %v3497, %v3743
      %v3745 = vpop.f32.mrb[0].mxu0
      %3746 = vmatprep.mubr.f32.mxu0 0.0
      %v3747 = vand.u32 %v329, 4294901760
      %3748 = vmatmul.mubr.f32.gmra.mrb[0].mxu0 %v3747
      %v3749 = vpop.f32.mrb[0].mxu0
      %v3750 = vadd.f32 %v3503, %v3749
      %v3751 = vpop.f32.mrb[0].mxu0
      %3752 = vmatprep.mubr.f32.mxu0 0.0
      %v3753 = vand.u32 %v332, 4294901760
      %3754 = vmatmul.mubr.f32.gmra.mrb[0].mxu0 %v3753
      %v3755 = vpop.f32.mrb[0].mxu0
      %v3756 = vadd.f32 %v3509, %v3755
      %v3757 = vpop.f32.mrb[0].mxu0
      %3758 = vmatprep.mubr.f32.mxu0 0.0
      %v3759 = vand.u32 %v335, 4294901760
      %3760 = vmatmul.mubr.f32.gmra.mrb[0].mxu0 %v3759
      %v3761 = vpop.f32.mrb[0].mxu0
      %v3762 = vadd.f32 %v3515, %v3761
      %v3763 = vpop.f32.mrb[0].mxu0
      %3764 = vmatprep.mubr.f32.mxu0 0.0
      %v3765 = vand.u32 %v338, 4294901760
      %3766 = vmatmul.mubr.f32.gmra.mrb[0].mxu0 %v3765
      %v3767 = vpop.f32.mrb[0].mxu0
      %v3768 = vadd.f32 %v3521, %v3767
      %v3769 = vpop.f32.mrb[0].mxu0
      %3770 = vdwg.mxu0
      %v3772 = vsel %vm255, %v239, 0
      %v3775 = vsel %vm255, %v240, 0
      %v3778 = vsel %vm346, %v250, 0
      %3780 = vmatprep.subr.mxu0 0.0
      %v3781 = vand.u32 %v249, 4294901760
      %3782 = vmatpush1.msra.mxu0 %v3781
      %3783 = vmatprep.subr.mxu0 0.0
      %v3784 = vand.u32 %v3778, 4294901760
      %3785 = vmatpush1.msra.mxu0 %v3784
      %3786 = vmatprep.subr.mxu0 0.0
      %3787 = vmatpush1.msra.mxu0 0.0
      %3788 = vmatprep.subr.mxu0 0.0
      %3789 = vmatpush1.msra.mxu0 0.0
      %3790 = vmatprep.subr.mxu0 0.0
      %3791 = vmatpush1.msra.mxu0 0.0
      %3792 = vmatprep.subr.mxu0 0.0
      %3793 = vmatpush1.msra.mxu0 0.0
      %3794 = vmatprep.subr.mxu0 0.0
      %3795 = vmatpush1.msra.mxu0 0.0
      %3796 = vmatprep.subr.mxu0 0.0
      %3797 = vmatpush1.msra.mxu0 0.0
      %3798 = vmatprep.subr.mxu0 0.0
      %3799 = vmatpush1.msra.mxu0 0.0
      %3800 = vmatprep.subr.mxu0 0.0
      %3801 = vmatpush1.msra.mxu0 0.0
      %3802 = vmatprep.subr.mxu0 0.0
      %3803 = vmatpush1.msra.mxu0 0.0
      %3804 = vmatprep.subr.mxu0 0.0
      %3805 = vmatpush1.msra.mxu0 0.0
      %3806 = vmatprep.subr.mxu0 0.0
      %3807 = vmatpush1.msra.mxu0 0.0
      %3808 = vmatprep.subr.mxu0 0.0
      %3809 = vmatpush1.msra.mxu0 0.0
      %3810 = vmatprep.subr.mxu0 0.0
      %3811 = vmatpush1.msra.mxu0 0.0
      %3812 = vmatprep.subr.mxu0 0.0
      %3813 = vmatpush1.msra.mxu0 0.0
      %3814 = vmatprep.subr.mxu0 0.0
      %3815 = vmatpush1.msra.mxu0 0.0
      %3816 = vmatprep.subr.mxu0 0.0
      %3817 = vmatpush1.msra.mxu0 0.0
      %3818 = vmatprep.subr.mxu0 0.0
      %3819 = vmatpush1.msra.mxu0 0.0
      %3820 = vmatprep.subr.mxu0 0.0
      %3821 = vmatpush1.msra.mxu0 0.0
      %3822 = vmatprep.subr.mxu0 0.0
      %3823 = vmatpush1.msra.mxu0 0.0
      %3824 = vmatprep.subr.mxu0 0.0
      %3825 = vmatpush1.msra.mxu0 0.0
      %3826 = vmatprep.subr.mxu0 0.0
      %3827 = vmatpush1.msra.mxu0 0.0
      %3828 = vmatprep.subr.mxu0 0.0
      %3829 = vmatpush1.msra.mxu0 0.0
      %3830 = vmatprep.subr.mxu0 0.0
      %3831 = vmatpush1.msra.mxu0 0.0
      %3832 = vmatprep.subr.mxu0 0.0
      %3833 = vmatpush1.msra.mxu0 0.0
      %3834 = vmatprep.subr.mxu0 0.0
      %3835 = vmatpush1.msra.mxu0 0.0
      %3836 = vmatprep.subr.mxu0 0.0
      %3837 = vmatpush1.msra.mxu0 0.0
      %3838 = vmatprep.subr.mxu0 0.0
      %3839 = vmatpush1.msra.mxu0 0.0
      %3840 = vmatprep.subr.mxu0 0.0
      %3841 = vmatpush1.msra.mxu0 0.0
      %3842 = vmatprep.subr.mxu0 0.0
      %3843 = vmatpush1.msra.mxu0 0.0
      %3844 = vmatprep.subr.mxu0 0.0
      %3845 = vmatpush1.msra.mxu0 0.0
      %3846 = vmatprep.mubr.f32.mxu0 0.0
      %v3847 = vand.u32 %v263, 4294901760
      %v3848 = vsub.f32 %v263, %v3847
      %v3849 = vand.u32 %v3848, 4294901760
      %v3850 = vsub.f32 %v3848, %v3849
      %v3851 = vand.u32 %v3850, 4294901760
      %3852 = vmatmul.mubr.f32.gmra.mrb[0].mxu0 %v3851
      %v3853 = vpop.f32.mrb[0].mxu0
      %v3854 = vadd.f32 0.0, %v3853
      %v3855 = vpop.f32.mrb[0].mxu0
      %3856 = vmatprep.mubr.f32.mxu0 0.0
      %v3857 = vand.u32 %v266, 4294901760
      %v3858 = vsub.f32 %v266, %v3857
      %v3859 = vand.u32 %v3858, 4294901760
      %v3860 = vsub.f32 %v3858, %v3859
      %v3861 = vand.u32 %v3860, 4294901760
      %3862 = vmatmul.mubr.f32.gmra.mrb[0].mxu0 %v3861
      %v3863 = vpop.f32.mrb[0].mxu0
      %v3864 = vadd.f32 0.0, %v3863
      %v3865 = vpop.f32.mrb[0].mxu0
      %3866 = vmatprep.mubr.f32.mxu0 0.0
      %v3867 = vand.u32 %v269, 4294901760
      %v3868 = vsub.f32 %v269, %v3867
      %v3869 = vand.u32 %v3868, 4294901760
      %v3870 = vsub.f32 %v3868, %v3869
      %v3871 = vand.u32 %v3870, 4294901760
      %3872 = vmatmul.mubr.f32.gmra.mrb[0].mxu0 %v3871
      %v3873 = vpop.f32.mrb[0].mxu0
      %v3874 = vadd.f32 0.0, %v3873
      %v3875 = vpop.f32.mrb[0].mxu0
      %3876 = vmatprep.mubr.f32.mxu0 0.0
      %v3877 = vand.u32 %v272, 4294901760
      %v3878 = vsub.f32 %v272, %v3877
      %v3879 = vand.u32 %v3878, 4294901760
      %v3880 = vsub.f32 %v3878, %v3879
      %v3881 = vand.u32 %v3880, 4294901760
      %3882 = vmatmul.mubr.f32.gmra.mrb[0].mxu0 %v3881
      %v3883 = vpop.f32.mrb[0].mxu0
      %v3884 = vadd.f32 0.0, %v3883
      %v3885 = vpop.f32.mrb[0].mxu0
      %3886 = vmatprep.mubr.f32.mxu0 0.0
      %v3887 = vand.u32 %v275, 4294901760
      %v3888 = vsub.f32 %v275, %v3887
      %v3889 = vand.u32 %v3888, 4294901760
      %v3890 = vsub.f32 %v3888, %v3889
      %v3891 = vand.u32 %v3890, 4294901760
      %3892 = vmatmul.mubr.f32.gmra.mrb[0].mxu0 %v3891
      %v3893 = vpop.f32.mrb[0].mxu0
      %v3894 = vadd.f32 0.0, %v3893
      %v3895 = vpop.f32.mrb[0].mxu0
      %3896 = vmatprep.mubr.f32.mxu0 0.0
      %v3897 = vand.u32 %v278, 4294901760
      %v3898 = vsub.f32 %v278, %v3897
      %v3899 = vand.u32 %v3898, 4294901760
      %v3900 = vsub.f32 %v3898, %v3899
      %v3901 = vand.u32 %v3900, 4294901760
      %3902 = vmatmul.mubr.f32.gmra.mrb[0].mxu0 %v3901
      %v3903 = vpop.f32.mrb[0].mxu0
      %v3904 = vadd.f32 0.0, %v3903
      %v3905 = vpop.f32.mrb[0].mxu0
      %3906 = vmatprep.mubr.f32.mxu0 0.0
      %v3907 = vand.u32 %v281, 4294901760
      %v3908 = vsub.f32 %v281, %v3907
      %v3909 = vand.u32 %v3908, 4294901760
      %v3910 = vsub.f32 %v3908, %v3909
      %v3911 = vand.u32 %v3910, 4294901760
      %3912 = vmatmul.mubr.f32.gmra.mrb[0].mxu0 %v3911
      %v3913 = vpop.f32.mrb[0].mxu0
      %v3914 = vadd.f32 0.0, %v3913
      %v3915 = vpop.f32.mrb[0].mxu0
      %3916 = vmatprep.mubr.f32.mxu0 0.0
      %v3917 = vand.u32 %v284, 4294901760
      %v3918 = vsub.f32 %v284, %v3917
      %v3919 = vand.u32 %v3918, 4294901760
      %v3920 = vsub.f32 %v3918, %v3919
      %v3921 = vand.u32 %v3920, 4294901760
      %3922 = vmatmul.mubr.f32.gmra.mrb[0].mxu0 %v3921
      %v3923 = vpop.f32.mrb[0].mxu0
      %v3924 = vadd.f32 0.0, %v3923
      %v3925 = vpop.f32.mrb[0].mxu0
      %3926 = vmatprep.mubr.f32.mxu0 0.0
      %v3927 = vand.u32 %v287, 4294901760
      %v3928 = vsub.f32 %v287, %v3927
      %v3929 = vand.u32 %v3928, 4294901760
      %v3930 = vsub.f32 %v3928, %v3929
      %v3931 = vand.u32 %v3930, 4294901760
      %3932 = vmatmul.mubr.f32.gmra.mrb[0].mxu0 %v3931
      %v3933 = vpop.f32.mrb[0].mxu0
      %v3934 = vadd.f32 0.0, %v3933
      %v3935 = vpop.f32.mrb[0].mxu0
      %3936 = vmatprep.mubr.f32.mxu0 0.0
      %v3937 = vand.u32 %v290, 4294901760
      %v3938 = vsub.f32 %v290, %v3937
      %v3939 = vand.u32 %v3938, 4294901760
      %v3940 = vsub.f32 %v3938, %v3939
      %v3941 = vand.u32 %v3940, 4294901760
      %3942 = vmatmul.mubr.f32.gmra.mrb[0].mxu0 %v3941
      %v3943 = vpop.f32.mrb[0].mxu0
      %v3944 = vadd.f32 0.0, %v3943
      %v3945 = vpop.f32.mrb[0].mxu0
      %3946 = vmatprep.mubr.f32.mxu0 0.0
      %v3947 = vand.u32 %v293, 4294901760
      %v3948 = vsub.f32 %v293, %v3947
      %v3949 = vand.u32 %v3948, 4294901760
      %v3950 = vsub.f32 %v3948, %v3949
      %v3951 = vand.u32 %v3950, 4294901760
      %3952 = vmatmul.mubr.f32.gmra.mrb[0].mxu0 %v3951
      %v3953 = vpop.f32.mrb[0].mxu0
      %v3954 = vadd.f32 0.0, %v3953
      %v3955 = vpop.f32.mrb[0].mxu0
      %3956 = vmatprep.mubr.f32.mxu0 0.0
      %v3957 = vand.u32 %v296, 4294901760
      %v3958 = vsub.f32 %v296, %v3957
      %v3959 = vand.u32 %v3958, 4294901760
      %v3960 = vsub.f32 %v3958, %v3959
      %v3961 = vand.u32 %v3960, 4294901760
      %3962 = vmatmul.mubr.f32.gmra.mrb[0].mxu0 %v3961
      %v3963 = vpop.f32.mrb[0].mxu0
      %v3964 = vadd.f32 0.0, %v3963
      %v3965 = vpop.f32.mrb[0].mxu0
      %3966 = vmatprep.mubr.f32.mxu0 0.0
      %v3967 = vand.u32 %v299, 4294901760
      %v3968 = vsub.f32 %v299, %v3967
      %v3969 = vand.u32 %v3968, 4294901760
      %v3970 = vsub.f32 %v3968, %v3969
      %v3971 = vand.u32 %v3970, 4294901760
      %3972 = vmatmul.mubr.f32.gmra.mrb[0].mxu0 %v3971
      %v3973 = vpop.f32.mrb[0].mxu0
      %v3974 = vadd.f32 0.0, %v3973
      %v3975 = vpop.f32.mrb[0].mxu0
      %3976 = vmatprep.mubr.f32.mxu0 0.0
      %v3977 = vand.u32 %v302, 4294901760
      %v3978 = vsub.f32 %v302, %v3977
      %v3979 = vand.u32 %v3978, 4294901760
      %v3980 = vsub.f32 %v3978, %v3979
      %v3981 = vand.u32 %v3980, 4294901760
      %3982 = vmatmul.mubr.f32.gmra.mrb[0].mxu0 %v3981
      %v3983 = vpop.f32.mrb[0].mxu0
      %v3984 = vadd.f32 0.0, %v3983
      %v3985 = vpop.f32.mrb[0].mxu0
      %3986 = vmatprep.mubr.f32.mxu0 0.0
      %v3987 = vand.u32 %v305, 4294901760
      %v3988 = vsub.f32 %v305, %v3987
      %v3989 = vand.u32 %v3988, 4294901760
      %v3990 = vsub.f32 %v3988, %v3989
      %v3991 = vand.u32 %v3990, 4294901760
      %3992 = vmatmul.mubr.f32.gmra.mrb[0].mxu0 %v3991
      %v3993 = vpop.f32.mrb[0].mxu0
      %v3994 = vadd.f32 0.0, %v3993
      %v3995 = vpop.f32.mrb[0].mxu0
      %3996 = vmatprep.mubr.f32.mxu0 0.0
      %v3997 = vand.u32 %v308, 4294901760
      %v3998 = vsub.f32 %v308, %v3997
      %v3999 = vand.u32 %v3998, 4294901760
      %v4000 = vsub.f32 %v3998, %v3999
      %v4001 = vand.u32 %v4000, 4294901760
      %4002 = vmatmul.mubr.f32.gmra.mrb[0].mxu0 %v4001
      %v4003 = vpop.f32.mrb[0].mxu0
      %v4004 = vadd.f32 0.0, %v4003
      %v4005 = vpop.f32.mrb[0].mxu0
      %4006 = vmatprep.mubr.f32.mxu0 0.0
      %v4007 = vand.u32 %v311, 4294901760
      %v4008 = vsub.f32 %v311, %v4007
      %v4009 = vand.u32 %v4008, 4294901760
      %v4010 = vsub.f32 %v4008, %v4009
      %v4011 = vand.u32 %v4010, 4294901760
      %4012 = vmatmul.mubr.f32.gmra.mrb[0].mxu0 %v4011
      %v4013 = vpop.f32.mrb[0].mxu0
      %v4014 = vadd.f32 0.0, %v4013
      %v4015 = vpop.f32.mrb[0].mxu0
      %4016 = vmatprep.mubr.f32.mxu0 0.0
      %v4017 = vand.u32 %v314, 4294901760
      %v4018 = vsub.f32 %v314, %v4017
      %v4019 = vand.u32 %v4018, 4294901760
      %v4020 = vsub.f32 %v4018, %v4019
      %v4021 = vand.u32 %v4020, 4294901760
      %4022 = vmatmul.mubr.f32.gmra.mrb[0].mxu0 %v4021
      %v4023 = vpop.f32.mrb[0].mxu0
      %v4024 = vadd.f32 0.0, %v4023
      %v4025 = vpop.f32.mrb[0].mxu0
      %4026 = vmatprep.mubr.f32.mxu0 0.0
      %v4027 = vand.u32 %v317, 4294901760
      %v4028 = vsub.f32 %v317, %v4027
      %v4029 = vand.u32 %v4028, 4294901760
      %v4030 = vsub.f32 %v4028, %v4029
      %v4031 = vand.u32 %v4030, 4294901760
      %4032 = vmatmul.mubr.f32.gmra.mrb[0].mxu0 %v4031
      %v4033 = vpop.f32.mrb[0].mxu0
      %v4034 = vadd.f32 0.0, %v4033
      %v4035 = vpop.f32.mrb[0].mxu0
      %4036 = vmatprep.mubr.f32.mxu0 0.0
      %v4037 = vand.u32 %v320, 4294901760
      %v4038 = vsub.f32 %v320, %v4037
      %v4039 = vand.u32 %v4038, 4294901760
      %v4040 = vsub.f32 %v4038, %v4039
      %v4041 = vand.u32 %v4040, 4294901760
      %4042 = vmatmul.mubr.f32.gmra.mrb[0].mxu0 %v4041
      %v4043 = vpop.f32.mrb[0].mxu0
      %v4044 = vadd.f32 0.0, %v4043
      %v4045 = vpop.f32.mrb[0].mxu0
      %4046 = vmatprep.mubr.f32.mxu0 0.0
      %v4047 = vand.u32 %v323, 4294901760
      %v4048 = vsub.f32 %v323, %v4047
      %v4049 = vand.u32 %v4048, 4294901760
      %v4050 = vsub.f32 %v4048, %v4049
      %v4051 = vand.u32 %v4050, 4294901760
      %4052 = vmatmul.mubr.f32.gmra.mrb[0].mxu0 %v4051
      %v4053 = vpop.f32.mrb[0].mxu0
      %v4054 = vadd.f32 0.0, %v4053
      %v4055 = vpop.f32.mrb[0].mxu0
      %4056 = vmatprep.mubr.f32.mxu0 0.0
      %v4057 = vand.u32 %v326, 4294901760
      %v4058 = vsub.f32 %v326, %v4057
      %v4059 = vand.u32 %v4058, 4294901760
      %v4060 = vsub.f32 %v4058, %v4059
      %v4061 = vand.u32 %v4060, 4294901760
      %4062 = vmatmul.mubr.f32.gmra.mrb[0].mxu0 %v4061
      %v4063 = vpop.f32.mrb[0].mxu0
      %v4064 = vadd.f32 0.0, %v4063
      %v4065 = vpop.f32.mrb[0].mxu0
      %4066 = vmatprep.mubr.f32.mxu0 0.0
      %v4067 = vand.u32 %v329, 4294901760
      %v4068 = vsub.f32 %v329, %v4067
      %v4069 = vand.u32 %v4068, 4294901760
      %v4070 = vsub.f32 %v4068, %v4069
      %v4071 = vand.u32 %v4070, 4294901760
      %4072 = vmatmul.mubr.f32.gmra.mrb[0].mxu0 %v4071
      %v4073 = vpop.f32.mrb[0].mxu0
      %v4074 = vadd.f32 0.0, %v4073
      %v4075 = vpop.f32.mrb[0].mxu0
      %4076 = vmatprep.mubr.f32.mxu0 0.0
      %v4077 = vand.u32 %v332, 4294901760
      %v4078 = vsub.f32 %v332, %v4077
      %v4079 = vand.u32 %v4078, 4294901760
      %v4080 = vsub.f32 %v4078, %v4079
      %v4081 = vand.u32 %v4080, 4294901760
      %4082 = vmatmul.mubr.f32.gmra.mrb[0].mxu0 %v4081
      %v4083 = vpop.f32.mrb[0].mxu0
      %v4084 = vadd.f32 0.0, %v4083
      %v4085 = vpop.f32.mrb[0].mxu0
      %4086 = vmatprep.mubr.f32.mxu0 0.0
      %v4087 = vand.u32 %v335, 4294901760
      %v4088 = vsub.f32 %v335, %v4087
      %v4089 = vand.u32 %v4088, 4294901760
      %v4090 = vsub.f32 %v4088, %v4089
      %v4091 = vand.u32 %v4090, 4294901760
      %4092 = vmatmul.mubr.f32.gmra.mrb[0].mxu0 %v4091
      %v4093 = vpop.f32.mrb[0].mxu0
      %v4094 = vadd.f32 0.0, %v4093
      %v4095 = vpop.f32.mrb[0].mxu0
      %4096 = vmatprep.mubr.f32.mxu0 0.0
      %v4097 = vand.u32 %v338, 4294901760
      %v4098 = vsub.f32 %v338, %v4097
      %v4099 = vand.u32 %v4098, 4294901760
      %v4100 = vsub.f32 %v4098, %v4099
      %v4101 = vand.u32 %v4100, 4294901760
      %4102 = vmatmul.mubr.f32.gmra.mrb[0].mxu0 %v4101
      %v4103 = vpop.f32.mrb[0].mxu0
      %v4104 = vadd.f32 0.0, %v4103
      %v4105 = vpop.f32.mrb[0].mxu0
      %4106 = vmatprep.mubr.f32.mxu0 0.0
      %v4107 = vand.u32 %v341, 4294901760
      %v4108 = vsub.f32 %v341, %v4107
      %v4109 = vand.u32 %v4108, 4294901760
      %v4110 = vsub.f32 %v4108, %v4109
      %v4111 = vand.u32 %v4110, 4294901760
      %4112 = vmatmul.mubr.f32.gmra.mrb[0].mxu0 %v4111
      %v4113 = vpop.f32.mrb[0].mxu0
      %v4114 = vadd.f32 0.0, %v4113
      %v4115 = vpop.f32.mrb[0].mxu0
      %4116 = vmatprep.mubr.f32.mxu0 0.0
      %v4117 = vand.u32 %v344, 4294901760
      %v4118 = vsub.f32 %v344, %v4117
      %v4119 = vand.u32 %v4118, 4294901760
      %v4120 = vsub.f32 %v4118, %v4119
      %v4121 = vand.u32 %v4120, 4294901760
      %4122 = vmatmul.mubr.f32.gmra.mrb[0].mxu0 %v4121
      %v4123 = vpop.f32.mrb[0].mxu0
      %v4124 = vadd.f32 0.0, %v4123
      %v4125 = vpop.f32.mrb[0].mxu0
      %4126 = vmatprep.mubr.f32.mxu0 0.0
      %v4127 = vand.u32 %v3772, 4294901760
      %v4128 = vsub.f32 %v3772, %v4127
      %v4129 = vand.u32 %v4128, 4294901760
      %v4130 = vsub.f32 %v4128, %v4129
      %v4131 = vand.u32 %v4130, 4294901760
      %4132 = vmatmul.mubr.f32.gmra.mrb[0].mxu0 %v4131
      %v4133 = vpop.f32.mrb[0].mxu0
      %v4134 = vadd.f32 0.0, %v4133
      %v4135 = vpop.f32.mrb[0].mxu0
      %4136 = vmatprep.mubr.f32.mxu0 0.0
      %v4137 = vand.u32 %v3775, 4294901760
      %v4138 = vsub.f32 %v3775, %v4137
      %v4139 = vand.u32 %v4138, 4294901760
      %v4140 = vsub.f32 %v4138, %v4139
      %v4141 = vand.u32 %v4140, 4294901760
      %4142 = vmatmul.mubr.f32.gmra.mrb[0].mxu0 %v4141
      %v4143 = vpop.f32.mrb[0].mxu0
      %v4144 = vadd.f32 0.0, %v4143
      %v4145 = vpop.f32.mrb[0].mxu0
      %4146 = vdwg.mxu0
      %4147 = vmatprep.subr.mxu0 0.0
      %v4148 = vand.u32 %v249, 4294901760
      %v4149 = vsub.f32 %v249, %v4148
      %v4150 = vand.u32 %v4149, 4294901760
      %v4151 = vsub.f32 %v4149, %v4150
      %v4152 = vand.u32 %v4151, 4294901760
      %4153 = vmatpush1.msra.mxu0 %v4152
      %4154 = vmatprep.subr.mxu0 0.0
      %v4155 = vand.u32 %v3778, 4294901760
      %v4156 = vsub.f32 %v3778, %v4155
      %v4157 = vand.u32 %v4156, 4294901760
      %v4158 = vsub.f32 %v4156, %v4157
      %v4159 = vand.u32 %v4158, 4294901760
      %4160 = vmatpush1.msra.mxu0 %v4159
      %4161 = vmatprep.subr.mxu0 0.0
      %4162 = vmatpush1.msra.mxu0 0.0
      %4163 = vmatprep.subr.mxu0 0.0
      %4164 = vmatpush1.msra.mxu0 0.0
      %4165 = vmatprep.subr.mxu0 0.0
      %4166 = vmatpush1.msra.mxu0 0.0
      %4167 = vmatprep.subr.mxu0 0.0
      %4168 = vmatpush1.msra.mxu0 0.0
      %4169 = vmatprep.subr.mxu0 0.0
      %4170 = vmatpush1.msra.mxu0 0.0
      %4171 = vmatprep.subr.mxu0 0.0
      %4172 = vmatpush1.msra.mxu0 0.0
      %4173 = vmatprep.subr.mxu0 0.0
      %4174 = vmatpush1.msra.mxu0 0.0
      %4175 = vmatprep.subr.mxu0 0.0
      %4176 = vmatpush1.msra.mxu0 0.0
      %4177 = vmatprep.subr.mxu0 0.0
      %4178 = vmatpush1.msra.mxu0 0.0
      %4179 = vmatprep.subr.mxu0 0.0
      %4180 = vmatpush1.msra.mxu0 0.0
      %4181 = vmatprep.subr.mxu0 0.0
      %4182 = vmatpush1.msra.mxu0 0.0
      %4183 = vmatprep.subr.mxu0 0.0
      %4184 = vmatpush1.msra.mxu0 0.0
      %4185 = vmatprep.subr.mxu0 0.0
      %4186 = vmatpush1.msra.mxu0 0.0
      %4187 = vmatprep.subr.mxu0 0.0
      %4188 = vmatpush1.msra.mxu0 0.0
      %4189 = vmatprep.subr.mxu0 0.0
      %4190 = vmatpush1.msra.mxu0 0.0
      %4191 = vmatprep.subr.mxu0 0.0
      %4192 = vmatpush1.msra.mxu0 0.0
      %4193 = vmatprep.subr.mxu0 0.0
      %4194 = vmatpush1.msra.mxu0 0.0
      %4195 = vmatprep.subr.mxu0 0.0
      %4196 = vmatpush1.msra.mxu0 0.0
      %4197 = vmatprep.subr.mxu0 0.0
      %4198 = vmatpush1.msra.mxu0 0.0
      %4199 = vmatprep.subr.mxu0 0.0
      %4200 = vmatpush1.msra.mxu0 0.0
      %4201 = vmatprep.subr.mxu0 0.0
      %4202 = vmatpush1.msra.mxu0 0.0
      %4203 = vmatprep.subr.mxu0 0.0
      %4204 = vmatpush1.msra.mxu0 0.0
      %4205 = vmatprep.subr.mxu0 0.0
      %4206 = vmatpush1.msra.mxu0 0.0
      %4207 = vmatprep.subr.mxu0 0.0
      %4208 = vmatpush1.msra.mxu0 0.0
      %4209 = vmatprep.subr.mxu0 0.0
      %4210 = vmatpush1.msra.mxu0 0.0
      %4211 = vmatprep.subr.mxu0 0.0
      %4212 = vmatpush1.msra.mxu0 0.0
      %4213 = vmatprep.subr.mxu0 0.0
      %4214 = vmatpush1.msra.mxu0 0.0
      %4215 = vmatprep.subr.mxu0 0.0
      %4216 = vmatpush1.msra.mxu0 0.0
      %4217 = vmatprep.subr.mxu0 0.0
      %4218 = vmatpush1.msra.mxu0 0.0
      %4219 = vmatprep.subr.mxu0 0.0
      %4220 = vmatpush1.msra.mxu0 0.0
      %4221 = vmatprep.mubr.f32.mxu0 0.0
      %v4222 = vand.u32 %v263, 4294901760
      %4223 = vmatmul.mubr.f32.gmra.mrb[0].mxu0 %v4222
      %v4224 = vpop.f32.mrb[0].mxu0
      %v4225 = vadd.f32 %v3854, %v4224
      %v4226 = vpop.f32.mrb[0].mxu0
      %4227 = vmatprep.mubr.f32.mxu0 0.0
      %v4228 = vand.u32 %v266, 4294901760
      %4229 = vmatmul.mubr.f32.gmra.mrb[0].mxu0 %v4228
      %v4230 = vpop.f32.mrb[0].mxu0
      %v4231 = vadd.f32 %v3864, %v4230
      %v4232 = vpop.f32.mrb[0].mxu0
      %4233 = vmatprep.mubr.f32.mxu0 0.0
      %v4234 = vand.u32 %v269, 4294901760
      %4235 = vmatmul.mubr.f32.gmra.mrb[0].mxu0 %v4234
      %v4236 = vpop.f32.mrb[0].mxu0
      %v4237 = vadd.f32 %v3874, %v4236
      %v4238 = vpop.f32.mrb[0].mxu0
      %4239 = vmatprep.mubr.f32.mxu0 0.0
      %v4240 = vand.u32 %v272, 4294901760
      %4241 = vmatmul.mubr.f32.gmra.mrb[0].mxu0 %v4240
      %v4242 = vpop.f32.mrb[0].mxu0
      %v4243 = vadd.f32 %v3884, %v4242
      %v4244 = vpop.f32.mrb[0].mxu0
      %4245 = vmatprep.mubr.f32.mxu0 0.0
      %v4246 = vand.u32 %v275, 4294901760
      %4247 = vmatmul.mubr.f32.gmra.mrb[0].mxu0 %v4246
      %v4248 = vpop.f32.mrb[0].mxu0
      %v4249 = vadd.f32 %v3894, %v4248
      %v4250 = vpop.f32.mrb[0].mxu0
      %4251 = vmatprep.mubr.f32.mxu0 0.0
      %v4252 = vand.u32 %v278, 4294901760
      %4253 = vmatmul.mubr.f32.gmra.mrb[0].mxu0 %v4252
      %v4254 = vpop.f32.mrb[0].mxu0
      %v4255 = vadd.f32 %v3904, %v4254
      %v4256 = vpop.f32.mrb[0].mxu0
      %4257 = vmatprep.mubr.f32.mxu0 0.0
      %v4258 = vand.u32 %v281, 4294901760
      %4259 = vmatmul.mubr.f32.gmra.mrb[0].mxu0 %v4258
      %v4260 = vpop.f32.mrb[0].mxu0
      %v4261 = vadd.f32 %v3914, %v4260
      %v4262 = vpop.f32.mrb[0].mxu0
      %4263 = vmatprep.mubr.f32.mxu0 0.0
      %v4264 = vand.u32 %v284, 4294901760
      %4265 = vmatmul.mubr.f32.gmra.mrb[0].mxu0 %v4264
      %v4266 = vpop.f32.mrb[0].mxu0
      %v4267 = vadd.f32 %v3924, %v4266
      %v4268 = vpop.f32.mrb[0].mxu0
      %4269 = vmatprep.mubr.f32.mxu0 0.0
      %v4270 = vand.u32 %v287, 4294901760
      %4271 = vmatmul.mubr.f32.gmra.mrb[0].mxu0 %v4270
      %v4272 = vpop.f32.mrb[0].mxu0
      %v4273 = vadd.f32 %v3934, %v4272
      %v4274 = vpop.f32.mrb[0].mxu0
      %4275 = vmatprep.mubr.f32.mxu0 0.0
      %v4276 = vand.u32 %v290, 4294901760
      %4277 = vmatmul.mubr.f32.gmra.mrb[0].mxu0 %v4276
      %v4278 = vpop.f32.mrb[0].mxu0
      %v4279 = vadd.f32 %v3944, %v4278
      %v4280 = vpop.f32.mrb[0].mxu0
      %4281 = vmatprep.mubr.f32.mxu0 0.0
      %v4282 = vand.u32 %v293, 4294901760
      %4283 = vmatmul.mubr.f32.gmra.mrb[0].mxu0 %v4282
      %v4284 = vpop.f32.mrb[0].mxu0
      %v4285 = vadd.f32 %v3954, %v4284
      %v4286 = vpop.f32.mrb[0].mxu0
      %4287 = vmatprep.mubr.f32.mxu0 0.0
      %v4288 = vand.u32 %v296, 4294901760
      %4289 = vmatmul.mubr.f32.gmra.mrb[0].mxu0 %v4288
      %v4290 = vpop.f32.mrb[0].mxu0
      %v4291 = vadd.f32 %v3964, %v4290
      %v4292 = vpop.f32.mrb[0].mxu0
      %4293 = vmatprep.mubr.f32.mxu0 0.0
      %v4294 = vand.u32 %v299, 4294901760
      %4295 = vmatmul.mubr.f32.gmra.mrb[0].mxu0 %v4294
      %v4296 = vpop.f32.mrb[0].mxu0
      %v4297 = vadd.f32 %v3974, %v4296
      %v4298 = vpop.f32.mrb[0].mxu0
      %4299 = vmatprep.mubr.f32.mxu0 0.0
      %v4300 = vand.u32 %v302, 4294901760
      %4301 = vmatmul.mubr.f32.gmra.mrb[0].mxu0 %v4300
      %v4302 = vpop.f32.mrb[0].mxu0
      %v4303 = vadd.f32 %v3984, %v4302
      %v4304 = vpop.f32.mrb[0].mxu0
      %4305 = vmatprep.mubr.f32.mxu0 0.0
      %v4306 = vand.u32 %v305, 4294901760
      %4307 = vmatmul.mubr.f32.gmra.mrb[0].mxu0 %v4306
      %v4308 = vpop.f32.mrb[0].mxu0
      %v4309 = vadd.f32 %v3994, %v4308
      %v4310 = vpop.f32.mrb[0].mxu0
      %4311 = vmatprep.mubr.f32.mxu0 0.0
      %v4312 = vand.u32 %v308, 4294901760
      %4313 = vmatmul.mubr.f32.gmra.mrb[0].mxu0 %v4312
      %v4314 = vpop.f32.mrb[0].mxu0
      %v4315 = vadd.f32 %v4004, %v4314
      %v4316 = vpop.f32.mrb[0].mxu0
      %4317 = vmatprep.mubr.f32.mxu0 0.0
      %v4318 = vand.u32 %v311, 4294901760
      %4319 = vmatmul.mubr.f32.gmra.mrb[0].mxu0 %v4318
      %v4320 = vpop.f32.mrb[0].mxu0
      %v4321 = vadd.f32 %v4014, %v4320
      %v4322 = vpop.f32.mrb[0].mxu0
      %4323 = vmatprep.mubr.f32.mxu0 0.0
      %v4324 = vand.u32 %v314, 4294901760
      %4325 = vmatmul.mubr.f32.gmra.mrb[0].mxu0 %v4324
      %v4326 = vpop.f32.mrb[0].mxu0
      %v4327 = vadd.f32 %v4024, %v4326
      %v4328 = vpop.f32.mrb[0].mxu0
      %4329 = vmatprep.mubr.f32.mxu0 0.0
      %v4330 = vand.u32 %v317, 4294901760
      %4331 = vmatmul.mubr.f32.gmra.mrb[0].mxu0 %v4330
      %v4332 = vpop.f32.mrb[0].mxu0
      %v4333 = vadd.f32 %v4034, %v4332
      %v4334 = vpop.f32.mrb[0].mxu0
      %4335 = vmatprep.mubr.f32.mxu0 0.0
      %v4336 = vand.u32 %v320, 4294901760
      %4337 = vmatmul.mubr.f32.gmra.mrb[0].mxu0 %v4336
      %v4338 = vpop.f32.mrb[0].mxu0
      %v4339 = vadd.f32 %v4044, %v4338
      %v4340 = vpop.f32.mrb[0].mxu0
      %4341 = vmatprep.mubr.f32.mxu0 0.0
      %v4342 = vand.u32 %v323, 4294901760
      %4343 = vmatmul.mubr.f32.gmra.mrb[0].mxu0 %v4342
      %v4344 = vpop.f32.mrb[0].mxu0
      %v4345 = vadd.f32 %v4054, %v4344
      %v4346 = vpop.f32.mrb[0].mxu0
      %4347 = vmatprep.mubr.f32.mxu0 0.0
      %v4348 = vand.u32 %v326, 4294901760
      %4349 = vmatmul.mubr.f32.gmra.mrb[0].mxu0 %v4348
      %v4350 = vpop.f32.mrb[0].mxu0
      %v4351 = vadd.f32 %v4064, %v4350
      %v4352 = vpop.f32.mrb[0].mxu0
      %4353 = vmatprep.mubr.f32.mxu0 0.0
      %v4354 = vand.u32 %v329, 4294901760
      %4355 = vmatmul.mubr.f32.gmra.mrb[0].mxu0 %v4354
      %v4356 = vpop.f32.mrb[0].mxu0
      %v4357 = vadd.f32 %v4074, %v4356
      %v4358 = vpop.f32.mrb[0].mxu0
      %4359 = vmatprep.mubr.f32.mxu0 0.0
      %v4360 = vand.u32 %v332, 4294901760
      %4361 = vmatmul.mubr.f32.gmra.mrb[0].mxu0 %v4360
      %v4362 = vpop.f32.mrb[0].mxu0
      %v4363 = vadd.f32 %v4084, %v4362
      %v4364 = vpop.f32.mrb[0].mxu0
      %4365 = vmatprep.mubr.f32.mxu0 0.0
      %v4366 = vand.u32 %v335, 4294901760
      %4367 = vmatmul.mubr.f32.gmra.mrb[0].mxu0 %v4366
      %v4368 = vpop.f32.mrb[0].mxu0
      %v4369 = vadd.f32 %v4094, %v4368
      %v4370 = vpop.f32.mrb[0].mxu0
      %4371 = vmatprep.mubr.f32.mxu0 0.0
      %v4372 = vand.u32 %v338, 4294901760
      %4373 = vmatmul.mubr.f32.gmra.mrb[0].mxu0 %v4372
      %v4374 = vpop.f32.mrb[0].mxu0
      %v4375 = vadd.f32 %v4104, %v4374
      %v4376 = vpop.f32.mrb[0].mxu0
      %4377 = vmatprep.mubr.f32.mxu0 0.0
      %v4378 = vand.u32 %v341, 4294901760
      %4379 = vmatmul.mubr.f32.gmra.mrb[0].mxu0 %v4378
      %v4380 = vpop.f32.mrb[0].mxu0
      %v4381 = vadd.f32 %v4114, %v4380
      %v4382 = vpop.f32.mrb[0].mxu0
      %4383 = vmatprep.mubr.f32.mxu0 0.0
      %v4384 = vand.u32 %v344, 4294901760
      %4385 = vmatmul.mubr.f32.gmra.mrb[0].mxu0 %v4384
      %v4386 = vpop.f32.mrb[0].mxu0
      %v4387 = vadd.f32 %v4124, %v4386
      %v4388 = vpop.f32.mrb[0].mxu0
      %4389 = vmatprep.mubr.f32.mxu0 0.0
      %v4390 = vand.u32 %v3772, 4294901760
      %4391 = vmatmul.mubr.f32.gmra.mrb[0].mxu0 %v4390
      %v4392 = vpop.f32.mrb[0].mxu0
      %v4393 = vadd.f32 %v4134, %v4392
      %v4394 = vpop.f32.mrb[0].mxu0
      %4395 = vmatprep.mubr.f32.mxu0 0.0
      %v4396 = vand.u32 %v3775, 4294901760
      %4397 = vmatmul.mubr.f32.gmra.mrb[0].mxu0 %v4396
      %v4398 = vpop.f32.mrb[0].mxu0
      %v4399 = vadd.f32 %v4144, %v4398
      %v4400 = vpop.f32.mrb[0].mxu0
      %4401 = vdwg.mxu0
      %4402 = vmatprep.subr.mxu0 0.0
      %v4403 = vand.u32 %v249, 4294901760
      %v4404 = vsub.f32 %v249, %v4403
      %4405 = vmatpush1.msra.mxu0 %v4404
      %4406 = vmatprep.subr.mxu0 0.0
      %v4407 = vand.u32 %v3778, 4294901760
      %v4408 = vsub.f32 %v3778, %v4407
      %4409 = vmatpush1.msra.mxu0 %v4408
      %4410 = vmatprep.subr.mxu0 0.0
      %4411 = vmatpush1.msra.mxu0 0.0
      %4412 = vmatprep.subr.mxu0 0.0
      %4413 = vmatpush1.msra.mxu0 0.0
      %4414 = vmatprep.subr.mxu0 0.0
      %4415 = vmatpush1.msra.mxu0 0.0
      %4416 = vmatprep.subr.mxu0 0.0
      %4417 = vmatpush1.msra.mxu0 0.0
      %4418 = vmatprep.subr.mxu0 0.0
      %4419 = vmatpush1.msra.mxu0 0.0
      %4420 = vmatprep.subr.mxu0 0.0
      %4421 = vmatpush1.msra.mxu0 0.0
      %4422 = vmatprep.subr.mxu0 0.0
      %4423 = vmatpush1.msra.mxu0 0.0
      %4424 = vmatprep.subr.mxu0 0.0
      %4425 = vmatpush1.msra.mxu0 0.0
      %4426 = vmatprep.subr.mxu0 0.0
      %4427 = vmatpush1.msra.mxu0 0.0
      %4428 = vmatprep.subr.mxu0 0.0
      %4429 = vmatpush1.msra.mxu0 0.0
      %4430 = vmatprep.subr.mxu0 0.0
      %4431 = vmatpush1.msra.mxu0 0.0
      %4432 = vmatprep.subr.mxu0 0.0
      %4433 = vmatpush1.msra.mxu0 0.0
      %4434 = vmatprep.subr.mxu0 0.0
      %4435 = vmatpush1.msra.mxu0 0.0
      %4436 = vmatprep.subr.mxu0 0.0
      %4437 = vmatpush1.msra.mxu0 0.0
      %4438 = vmatprep.subr.mxu0 0.0
      %4439 = vmatpush1.msra.mxu0 0.0
      %4440 = vmatprep.subr.mxu0 0.0
      %4441 = vmatpush1.msra.mxu0 0.0
      %4442 = vmatprep.subr.mxu0 0.0
      %4443 = vmatpush1.msra.mxu0 0.0
      %4444 = vmatprep.subr.mxu0 0.0
      %4445 = vmatpush1.msra.mxu0 0.0
      %4446 = vmatprep.subr.mxu0 0.0
      %4447 = vmatpush1.msra.mxu0 0.0
      %4448 = vmatprep.subr.mxu0 0.0
      %4449 = vmatpush1.msra.mxu0 0.0
      %4450 = vmatprep.subr.mxu0 0.0
      %4451 = vmatpush1.msra.mxu0 0.0
      %4452 = vmatprep.subr.mxu0 0.0
      %4453 = vmatpush1.msra.mxu0 0.0
      %4454 = vmatprep.subr.mxu0 0.0
      %4455 = vmatpush1.msra.mxu0 0.0
      %4456 = vmatprep.subr.mxu0 0.0
      %4457 = vmatpush1.msra.mxu0 0.0
      %4458 = vmatprep.subr.mxu0 0.0
      %4459 = vmatpush1.msra.mxu0 0.0
      %4460 = vmatprep.subr.mxu0 0.0
      %4461 = vmatpush1.msra.mxu0 0.0
      %4462 = vmatprep.subr.mxu0 0.0
      %4463 = vmatpush1.msra.mxu0 0.0
      %4464 = vmatprep.subr.mxu0 0.0
      %4465 = vmatpush1.msra.mxu0 0.0
      %4466 = vmatprep.subr.mxu0 0.0
      %4467 = vmatpush1.msra.mxu0 0.0
      %4468 = vmatprep.subr.mxu0 0.0
      %4469 = vmatpush1.msra.mxu0 0.0
      %4470 = vmatprep.mubr.f32.mxu0 0.0
      %v4471 = vand.u32 %v263, 4294901760
      %v4472 = vsub.f32 %v263, %v4471
      %4473 = vmatmul.mubr.f32.gmra.mrb[0].mxu0 %v4472
      %v4474 = vpop.f32.mrb[0].mxu0
      %v4475 = vadd.f32 %v4225, %v4474
      %v4476 = vpop.f32.mrb[0].mxu0
      %4477 = vmatprep.mubr.f32.mxu0 0.0
      %v4478 = vand.u32 %v266, 4294901760
      %v4479 = vsub.f32 %v266, %v4478
      %4480 = vmatmul.mubr.f32.gmra.mrb[0].mxu0 %v4479
      %v4481 = vpop.f32.mrb[0].mxu0
      %v4482 = vadd.f32 %v4231, %v4481
      %v4483 = vpop.f32.mrb[0].mxu0
      %4484 = vmatprep.mubr.f32.mxu0 0.0
      %v4485 = vand.u32 %v269, 4294901760
      %v4486 = vsub.f32 %v269, %v4485
      %4487 = vmatmul.mubr.f32.gmra.mrb[0].mxu0 %v4486
      %v4488 = vpop.f32.mrb[0].mxu0
      %v4489 = vadd.f32 %v4237, %v4488
      %v4490 = vpop.f32.mrb[0].mxu0
      %4491 = vmatprep.mubr.f32.mxu0 0.0
      %v4492 = vand.u32 %v272, 4294901760
      %v4493 = vsub.f32 %v272, %v4492
      %4494 = vmatmul.mubr.f32.gmra.mrb[0].mxu0 %v4493
      %v4495 = vpop.f32.mrb[0].mxu0
      %v4496 = vadd.f32 %v4243, %v4495
      %v4497 = vpop.f32.mrb[0].mxu0
      %4498 = vmatprep.mubr.f32.mxu0 0.0
      %v4499 = vand.u32 %v275, 4294901760
      %v4500 = vsub.f32 %v275, %v4499
      %4501 = vmatmul.mubr.f32.gmra.mrb[0].mxu0 %v4500
      %v4502 = vpop.f32.mrb[0].mxu0
      %v4503 = vadd.f32 %v4249, %v4502
      %v4504 = vpop.f32.mrb[0].mxu0
      %4505 = vmatprep.mubr.f32.mxu0 0.0
      %v4506 = vand.u32 %v278, 4294901760
      %v4507 = vsub.f32 %v278, %v4506
      %4508 = vmatmul.mubr.f32.gmra.mrb[0].mxu0 %v4507
      %v4509 = vpop.f32.mrb[0].mxu0
      %v4510 = vadd.f32 %v4255, %v4509
      %v4511 = vpop.f32.mrb[0].mxu0
      %4512 = vmatprep.mubr.f32.mxu0 0.0
      %v4513 = vand.u32 %v281, 4294901760
      %v4514 = vsub.f32 %v281, %v4513
      %4515 = vmatmul.mubr.f32.gmra.mrb[0].mxu0 %v4514
      %v4516 = vpop.f32.mrb[0].mxu0
      %v4517 = vadd.f32 %v4261, %v4516
      %v4518 = vpop.f32.mrb[0].mxu0
      %4519 = vmatprep.mubr.f32.mxu0 0.0
      %v4520 = vand.u32 %v284, 4294901760
      %v4521 = vsub.f32 %v284, %v4520
      %4522 = vmatmul.mubr.f32.gmra.mrb[0].mxu0 %v4521
      %v4523 = vpop.f32.mrb[0].mxu0
      %v4524 = vadd.f32 %v4267, %v4523
      %v4525 = vpop.f32.mrb[0].mxu0
      %4526 = vmatprep.mubr.f32.mxu0 0.0
      %v4527 = vand.u32 %v287, 4294901760
      %v4528 = vsub.f32 %v287, %v4527
      %4529 = vmatmul.mubr.f32.gmra.mrb[0].mxu0 %v4528
      %v4530 = vpop.f32.mrb[0].mxu0
      %v4531 = vadd.f32 %v4273, %v4530
      %v4532 = vpop.f32.mrb[0].mxu0
      %4533 = vmatprep.mubr.f32.mxu0 0.0
      %v4534 = vand.u32 %v290, 4294901760
      %v4535 = vsub.f32 %v290, %v4534
      %4536 = vmatmul.mubr.f32.gmra.mrb[0].mxu0 %v4535
      %v4537 = vpop.f32.mrb[0].mxu0
      %v4538 = vadd.f32 %v4279, %v4537
      %v4539 = vpop.f32.mrb[0].mxu0
      %4540 = vmatprep.mubr.f32.mxu0 0.0
      %v4541 = vand.u32 %v293, 4294901760
      %v4542 = vsub.f32 %v293, %v4541
      %4543 = vmatmul.mubr.f32.gmra.mrb[0].mxu0 %v4542
      %v4544 = vpop.f32.mrb[0].mxu0
      %v4545 = vadd.f32 %v4285, %v4544
      %v4546 = vpop.f32.mrb[0].mxu0
      %4547 = vmatprep.mubr.f32.mxu0 0.0
      %v4548 = vand.u32 %v296, 4294901760
      %v4549 = vsub.f32 %v296, %v4548
      %4550 = vmatmul.mubr.f32.gmra.mrb[0].mxu0 %v4549
      %v4551 = vpop.f32.mrb[0].mxu0
      %v4552 = vadd.f32 %v4291, %v4551
      %v4553 = vpop.f32.mrb[0].mxu0
      %4554 = vmatprep.mubr.f32.mxu0 0.0
      %v4555 = vand.u32 %v299, 4294901760
      %v4556 = vsub.f32 %v299, %v4555
      %4557 = vmatmul.mubr.f32.gmra.mrb[0].mxu0 %v4556
      %v4558 = vpop.f32.mrb[0].mxu0
      %v4559 = vadd.f32 %v4297, %v4558
      %v4560 = vpop.f32.mrb[0].mxu0
      %4561 = vmatprep.mubr.f32.mxu0 0.0
      %v4562 = vand.u32 %v302, 4294901760
      %v4563 = vsub.f32 %v302, %v4562
      %4564 = vmatmul.mubr.f32.gmra.mrb[0].mxu0 %v4563
      %v4565 = vpop.f32.mrb[0].mxu0
      %v4566 = vadd.f32 %v4303, %v4565
      %v4567 = vpop.f32.mrb[0].mxu0
      %4568 = vmatprep.mubr.f32.mxu0 0.0
      %v4569 = vand.u32 %v305, 4294901760
      %v4570 = vsub.f32 %v305, %v4569
      %4571 = vmatmul.mubr.f32.gmra.mrb[0].mxu0 %v4570
      %v4572 = vpop.f32.mrb[0].mxu0
      %v4573 = vadd.f32 %v4309, %v4572
      %v4574 = vpop.f32.mrb[0].mxu0
      %4575 = vmatprep.mubr.f32.mxu0 0.0
      %v4576 = vand.u32 %v308, 4294901760
      %v4577 = vsub.f32 %v308, %v4576
      %4578 = vmatmul.mubr.f32.gmra.mrb[0].mxu0 %v4577
      %v4579 = vpop.f32.mrb[0].mxu0
      %v4580 = vadd.f32 %v4315, %v4579
      %v4581 = vpop.f32.mrb[0].mxu0
      %4582 = vmatprep.mubr.f32.mxu0 0.0
      %v4583 = vand.u32 %v311, 4294901760
      %v4584 = vsub.f32 %v311, %v4583
      %4585 = vmatmul.mubr.f32.gmra.mrb[0].mxu0 %v4584
      %v4586 = vpop.f32.mrb[0].mxu0
      %v4587 = vadd.f32 %v4321, %v4586
      %v4588 = vpop.f32.mrb[0].mxu0
      %4589 = vmatprep.mubr.f32.mxu0 0.0
      %v4590 = vand.u32 %v314, 4294901760
      %v4591 = vsub.f32 %v314, %v4590
      %4592 = vmatmul.mubr.f32.gmra.mrb[0].mxu0 %v4591
      %v4593 = vpop.f32.mrb[0].mxu0
      %v4594 = vadd.f32 %v4327, %v4593
      %v4595 = vpop.f32.mrb[0].mxu0
      %4596 = vmatprep.mubr.f32.mxu0 0.0
      %v4597 = vand.u32 %v317, 4294901760
      %v4598 = vsub.f32 %v317, %v4597
      %4599 = vmatmul.mubr.f32.gmra.mrb[0].mxu0 %v4598
      %v4600 = vpop.f32.mrb[0].mxu0
      %v4601 = vadd.f32 %v4333, %v4600
      %v4602 = vpop.f32.mrb[0].mxu0
      %4603 = vmatprep.mubr.f32.mxu0 0.0
      %v4604 = vand.u32 %v320, 4294901760
      %v4605 = vsub.f32 %v320, %v4604
      %4606 = vmatmul.mubr.f32.gmra.mrb[0].mxu0 %v4605
      %v4607 = vpop.f32.mrb[0].mxu0
      %v4608 = vadd.f32 %v4339, %v4607
      %v4609 = vpop.f32.mrb[0].mxu0
      %4610 = vmatprep.mubr.f32.mxu0 0.0
      %v4611 = vand.u32 %v323, 4294901760
      %v4612 = vsub.f32 %v323, %v4611
      %4613 = vmatmul.mubr.f32.gmra.mrb[0].mxu0 %v4612
      %v4614 = vpop.f32.mrb[0].mxu0
      %v4615 = vadd.f32 %v4345, %v4614
      %v4616 = vpop.f32.mrb[0].mxu0
      %4617 = vmatprep.mubr.f32.mxu0 0.0
      %v4618 = vand.u32 %v326, 4294901760
      %v4619 = vsub.f32 %v326, %v4618
      %4620 = vmatmul.mubr.f32.gmra.mrb[0].mxu0 %v4619
      %v4621 = vpop.f32.mrb[0].mxu0
      %v4622 = vadd.f32 %v4351, %v4621
      %v4623 = vpop.f32.mrb[0].mxu0
      %4624 = vmatprep.mubr.f32.mxu0 0.0
      %v4625 = vand.u32 %v329, 4294901760
      %v4626 = vsub.f32 %v329, %v4625
      %4627 = vmatmul.mubr.f32.gmra.mrb[0].mxu0 %v4626
      %v4628 = vpop.f32.mrb[0].mxu0
      %v4629 = vadd.f32 %v4357, %v4628
      %v4630 = vpop.f32.mrb[0].mxu0
      %4631 = vmatprep.mubr.f32.mxu0 0.0
      %v4632 = vand.u32 %v332, 4294901760
      %v4633 = vsub.f32 %v332, %v4632
      %4634 = vmatmul.mubr.f32.gmra.mrb[0].mxu0 %v4633
      %v4635 = vpop.f32.mrb[0].mxu0
      %v4636 = vadd.f32 %v4363, %v4635
      %v4637 = vpop.f32.mrb[0].mxu0
      %4638 = vmatprep.mubr.f32.mxu0 0.0
      %v4639 = vand.u32 %v335, 4294901760
      %v4640 = vsub.f32 %v335, %v4639
      %4641 = vmatmul.mubr.f32.gmra.mrb[0].mxu0 %v4640
      %v4642 = vpop.f32.mrb[0].mxu0
      %v4643 = vadd.f32 %v4369, %v4642
      %v4644 = vpop.f32.mrb[0].mxu0
      %4645 = vmatprep.mubr.f32.mxu0 0.0
      %v4646 = vand.u32 %v338, 4294901760
      %v4647 = vsub.f32 %v338, %v4646
      %4648 = vmatmul.mubr.f32.gmra.mrb[0].mxu0 %v4647
      %v4649 = vpop.f32.mrb[0].mxu0
      %v4650 = vadd.f32 %v4375, %v4649
      %v4651 = vpop.f32.mrb[0].mxu0
      %4652 = vmatprep.mubr.f32.mxu0 0.0
      %v4653 = vand.u32 %v341, 4294901760
      %v4654 = vsub.f32 %v341, %v4653
      %4655 = vmatmul.mubr.f32.gmra.mrb[0].mxu0 %v4654
      %v4656 = vpop.f32.mrb[0].mxu0
      %v4657 = vadd.f32 %v4381, %v4656
      %v4658 = vpop.f32.mrb[0].mxu0
      %4659 = vmatprep.mubr.f32.mxu0 0.0
      %v4660 = vand.u32 %v344, 4294901760
      %v4661 = vsub.f32 %v344, %v4660
      %4662 = vmatmul.mubr.f32.gmra.mrb[0].mxu0 %v4661
      %v4663 = vpop.f32.mrb[0].mxu0
      %v4664 = vadd.f32 %v4387, %v4663
      %v4665 = vpop.f32.mrb[0].mxu0
      %4666 = vmatprep.mubr.f32.mxu0 0.0
      %v4667 = vand.u32 %v3772, 4294901760
      %v4668 = vsub.f32 %v3772, %v4667
      %4669 = vmatmul.mubr.f32.gmra.mrb[0].mxu0 %v4668
      %v4670 = vpop.f32.mrb[0].mxu0
      %v4671 = vadd.f32 %v4393, %v4670
      %v4672 = vpop.f32.mrb[0].mxu0
      %4673 = vmatprep.mubr.f32.mxu0 0.0
      %v4674 = vand.u32 %v3775, 4294901760
      %v4675 = vsub.f32 %v3775, %v4674
      %4676 = vmatmul.mubr.f32.gmra.mrb[0].mxu0 %v4675
      %v4677 = vpop.f32.mrb[0].mxu0
      %v4678 = vadd.f32 %v4399, %v4677
      %v4679 = vpop.f32.mrb[0].mxu0
      %4680 = vdwg.mxu0
      %4681 = vmatprep.subr.mxu0 0.0
      %v4682 = vand.u32 %v249, 4294901760
      %4683 = vmatpush1.msra.mxu0 %v4682
      %4684 = vmatprep.subr.mxu0 0.0
      %v4685 = vand.u32 %v3778, 4294901760
      %4686 = vmatpush1.msra.mxu0 %v4685
      %4687 = vmatprep.subr.mxu0 0.0
      %4688 = vmatpush1.msra.mxu0 0.0
      %4689 = vmatprep.subr.mxu0 0.0
      %4690 = vmatpush1.msra.mxu0 0.0
      %4691 = vmatprep.subr.mxu0 0.0
      %4692 = vmatpush1.msra.mxu0 0.0
      %4693 = vmatprep.subr.mxu0 0.0
      %4694 = vmatpush1.msra.mxu0 0.0
      %4695 = vmatprep.subr.mxu0 0.0
      %4696 = vmatpush1.msra.mxu0 0.0
      %4697 = vmatprep.subr.mxu0 0.0
      %4698 = vmatpush1.msra.mxu0 0.0
      %4699 = vmatprep.subr.mxu0 0.0
      %4700 = vmatpush1.msra.mxu0 0.0
      %4701 = vmatprep.subr.mxu0 0.0
      %4702 = vmatpush1.msra.mxu0 0.0
      %4703 = vmatprep.subr.mxu0 0.0
      %4704 = vmatpush1.msra.mxu0 0.0
      %4705 = vmatprep.subr.mxu0 0.0
      %4706 = vmatpush1.msra.mxu0 0.0
      %4707 = vmatprep.subr.mxu0 0.0
      %4708 = vmatpush1.msra.mxu0 0.0
      %4709 = vmatprep.subr.mxu0 0.0
      %4710 = vmatpush1.msra.mxu0 0.0
      %4711 = vmatprep.subr.mxu0 0.0
      %4712 = vmatpush1.msra.mxu0 0.0
      %4713 = vmatprep.subr.mxu0 0.0
      %4714 = vmatpush1.msra.mxu0 0.0
      %4715 = vmatprep.subr.mxu0 0.0
      %4716 = vmatpush1.msra.mxu0 0.0
      %4717 = vmatprep.subr.mxu0 0.0
      %4718 = vmatpush1.msra.mxu0 0.0
      %4719 = vmatprep.subr.mxu0 0.0
      %4720 = vmatpush1.msra.mxu0 0.0
      %4721 = vmatprep.subr.mxu0 0.0
      %4722 = vmatpush1.msra.mxu0 0.0
      %4723 = vmatprep.subr.mxu0 0.0
      %4724 = vmatpush1.msra.mxu0 0.0
      %4725 = vmatprep.subr.mxu0 0.0
      %4726 = vmatpush1.msra.mxu0 0.0
      %4727 = vmatprep.subr.mxu0 0.0
      %4728 = vmatpush1.msra.mxu0 0.0
      %4729 = vmatprep.subr.mxu0 0.0
      %4730 = vmatpush1.msra.mxu0 0.0
      %4731 = vmatprep.subr.mxu0 0.0
      %4732 = vmatpush1.msra.mxu0 0.0
      %4733 = vmatprep.subr.mxu0 0.0
      %4734 = vmatpush1.msra.mxu0 0.0
      %4735 = vmatprep.subr.mxu0 0.0
      %4736 = vmatpush1.msra.mxu0 0.0
      %4737 = vmatprep.subr.mxu0 0.0
      %4738 = vmatpush1.msra.mxu0 0.0
      %4739 = vmatprep.subr.mxu0 0.0
      %4740 = vmatpush1.msra.mxu0 0.0
      %4741 = vmatprep.subr.mxu0 0.0
      %4742 = vmatpush1.msra.mxu0 0.0
      %4743 = vmatprep.subr.mxu0 0.0
      %4744 = vmatpush1.msra.mxu0 0.0
      %4745 = vmatprep.subr.mxu0 0.0
      %4746 = vmatpush1.msra.mxu0 0.0
      %4747 = vmatprep.mubr.f32.mxu0 0.0
      %v4748 = vand.u32 %v263, 4294901760
      %v4749 = vsub.f32 %v263, %v4748
      %v4750 = vand.u32 %v4749, 4294901760
      %4751 = vmatmul.mubr.f32.gmra.mrb[0].mxu0 %v4750
      %v4752 = vpop.f32.mrb[0].mxu0
      %v4753 = vadd.f32 %v4475, %v4752
      %v4754 = vpop.f32.mrb[0].mxu0
      %4755 = vmatprep.mubr.f32.mxu0 0.0
      %v4756 = vand.u32 %v266, 4294901760
      %v4757 = vsub.f32 %v266, %v4756
      %v4758 = vand.u32 %v4757, 4294901760
      %4759 = vmatmul.mubr.f32.gmra.mrb[0].mxu0 %v4758
      %v4760 = vpop.f32.mrb[0].mxu0
      %v4761 = vadd.f32 %v4482, %v4760
      %v4762 = vpop.f32.mrb[0].mxu0
      %4763 = vmatprep.mubr.f32.mxu0 0.0
      %v4764 = vand.u32 %v269, 4294901760
      %v4765 = vsub.f32 %v269, %v4764
      %v4766 = vand.u32 %v4765, 4294901760
      %4767 = vmatmul.mubr.f32.gmra.mrb[0].mxu0 %v4766
      %v4768 = vpop.f32.mrb[0].mxu0
      %v4769 = vadd.f32 %v4489, %v4768
      %v4770 = vpop.f32.mrb[0].mxu0
      %4771 = vmatprep.mubr.f32.mxu0 0.0
      %v4772 = vand.u32 %v272, 4294901760
      %v4773 = vsub.f32 %v272, %v4772
      %v4774 = vand.u32 %v4773, 4294901760
      %4775 = vmatmul.mubr.f32.gmra.mrb[0].mxu0 %v4774
      %v4776 = vpop.f32.mrb[0].mxu0
      %v4777 = vadd.f32 %v4496, %v4776
      %v4778 = vpop.f32.mrb[0].mxu0
      %4779 = vmatprep.mubr.f32.mxu0 0.0
      %v4780 = vand.u32 %v275, 4294901760
      %v4781 = vsub.f32 %v275, %v4780
      %v4782 = vand.u32 %v4781, 4294901760
      %4783 = vmatmul.mubr.f32.gmra.mrb[0].mxu0 %v4782
      %v4784 = vpop.f32.mrb[0].mxu0
      %v4785 = vadd.f32 %v4503, %v4784
      %v4786 = vpop.f32.mrb[0].mxu0
      %4787 = vmatprep.mubr.f32.mxu0 0.0
      %v4788 = vand.u32 %v278, 4294901760
      %v4789 = vsub.f32 %v278, %v4788
      %v4790 = vand.u32 %v4789, 4294901760
      %4791 = vmatmul.mubr.f32.gmra.mrb[0].mxu0 %v4790
      %v4792 = vpop.f32.mrb[0].mxu0
      %v4793 = vadd.f32 %v4510, %v4792
      %v4794 = vpop.f32.mrb[0].mxu0
      %4795 = vmatprep.mubr.f32.mxu0 0.0
      %v4796 = vand.u32 %v281, 4294901760
      %v4797 = vsub.f32 %v281, %v4796
      %v4798 = vand.u32 %v4797, 4294901760
      %4799 = vmatmul.mubr.f32.gmra.mrb[0].mxu0 %v4798
      %v4800 = vpop.f32.mrb[0].mxu0
      %v4801 = vadd.f32 %v4517, %v4800
      %v4802 = vpop.f32.mrb[0].mxu0
      %4803 = vmatprep.mubr.f32.mxu0 0.0
      %v4804 = vand.u32 %v284, 4294901760
      %v4805 = vsub.f32 %v284, %v4804
      %v4806 = vand.u32 %v4805, 4294901760
      %4807 = vmatmul.mubr.f32.gmra.mrb[0].mxu0 %v4806
      %v4808 = vpop.f32.mrb[0].mxu0
      %v4809 = vadd.f32 %v4524, %v4808
      %v4810 = vpop.f32.mrb[0].mxu0
      %4811 = vmatprep.mubr.f32.mxu0 0.0
      %v4812 = vand.u32 %v287, 4294901760
      %v4813 = vsub.f32 %v287, %v4812
      %v4814 = vand.u32 %v4813, 4294901760
      %4815 = vmatmul.mubr.f32.gmra.mrb[0].mxu0 %v4814
      %v4816 = vpop.f32.mrb[0].mxu0
      %v4817 = vadd.f32 %v4531, %v4816
      %v4818 = vpop.f32.mrb[0].mxu0
      %4819 = vmatprep.mubr.f32.mxu0 0.0
      %v4820 = vand.u32 %v290, 4294901760
      %v4821 = vsub.f32 %v290, %v4820
      %v4822 = vand.u32 %v4821, 4294901760
      %4823 = vmatmul.mubr.f32.gmra.mrb[0].mxu0 %v4822
      %v4824 = vpop.f32.mrb[0].mxu0
      %v4825 = vadd.f32 %v4538, %v4824
      %v4826 = vpop.f32.mrb[0].mxu0
      %4827 = vmatprep.mubr.f32.mxu0 0.0
      %v4828 = vand.u32 %v293, 4294901760
      %v4829 = vsub.f32 %v293, %v4828
      %v4830 = vand.u32 %v4829, 4294901760
      %4831 = vmatmul.mubr.f32.gmra.mrb[0].mxu0 %v4830
      %v4832 = vpop.f32.mrb[0].mxu0
      %v4833 = vadd.f32 %v4545, %v4832
      %v4834 = vpop.f32.mrb[0].mxu0
      %4835 = vmatprep.mubr.f32.mxu0 0.0
      %v4836 = vand.u32 %v296, 4294901760
      %v4837 = vsub.f32 %v296, %v4836
      %v4838 = vand.u32 %v4837, 4294901760
      %4839 = vmatmul.mubr.f32.gmra.mrb[0].mxu0 %v4838
      %v4840 = vpop.f32.mrb[0].mxu0
      %v4841 = vadd.f32 %v4552, %v4840
      %v4842 = vpop.f32.mrb[0].mxu0
      %4843 = vmatprep.mubr.f32.mxu0 0.0
      %v4844 = vand.u32 %v299, 4294901760
      %v4845 = vsub.f32 %v299, %v4844
      %v4846 = vand.u32 %v4845, 4294901760
      %4847 = vmatmul.mubr.f32.gmra.mrb[0].mxu0 %v4846
      %v4848 = vpop.f32.mrb[0].mxu0
      %v4849 = vadd.f32 %v4559, %v4848
      %v4850 = vpop.f32.mrb[0].mxu0
      %4851 = vmatprep.mubr.f32.mxu0 0.0
      %v4852 = vand.u32 %v302, 4294901760
      %v4853 = vsub.f32 %v302, %v4852
      %v4854 = vand.u32 %v4853, 4294901760
      %4855 = vmatmul.mubr.f32.gmra.mrb[0].mxu0 %v4854
      %v4856 = vpop.f32.mrb[0].mxu0
      %v4857 = vadd.f32 %v4566, %v4856
      %v4858 = vpop.f32.mrb[0].mxu0
      %4859 = vmatprep.mubr.f32.mxu0 0.0
      %v4860 = vand.u32 %v305, 4294901760
      %v4861 = vsub.f32 %v305, %v4860
      %v4862 = vand.u32 %v4861, 4294901760
      %4863 = vmatmul.mubr.f32.gmra.mrb[0].mxu0 %v4862
      %v4864 = vpop.f32.mrb[0].mxu0
      %v4865 = vadd.f32 %v4573, %v4864
      %v4866 = vpop.f32.mrb[0].mxu0
      %4867 = vmatprep.mubr.f32.mxu0 0.0
      %v4868 = vand.u32 %v308, 4294901760
      %v4869 = vsub.f32 %v308, %v4868
      %v4870 = vand.u32 %v4869, 4294901760
      %4871 = vmatmul.mubr.f32.gmra.mrb[0].mxu0 %v4870
      %v4872 = vpop.f32.mrb[0].mxu0
      %v4873 = vadd.f32 %v4580, %v4872
      %v4874 = vpop.f32.mrb[0].mxu0
      %4875 = vmatprep.mubr.f32.mxu0 0.0
      %v4876 = vand.u32 %v311, 4294901760
      %v4877 = vsub.f32 %v311, %v4876
      %v4878 = vand.u32 %v4877, 4294901760
      %4879 = vmatmul.mubr.f32.gmra.mrb[0].mxu0 %v4878
      %v4880 = vpop.f32.mrb[0].mxu0
      %v4881 = vadd.f32 %v4587, %v4880
      %v4882 = vpop.f32.mrb[0].mxu0
      %4883 = vmatprep.mubr.f32.mxu0 0.0
      %v4884 = vand.u32 %v314, 4294901760
      %v4885 = vsub.f32 %v314, %v4884
      %v4886 = vand.u32 %v4885, 4294901760
      %4887 = vmatmul.mubr.f32.gmra.mrb[0].mxu0 %v4886
      %v4888 = vpop.f32.mrb[0].mxu0
      %v4889 = vadd.f32 %v4594, %v4888
      %v4890 = vpop.f32.mrb[0].mxu0
      %4891 = vmatprep.mubr.f32.mxu0 0.0
      %v4892 = vand.u32 %v317, 4294901760
      %v4893 = vsub.f32 %v317, %v4892
      %v4894 = vand.u32 %v4893, 4294901760
      %4895 = vmatmul.mubr.f32.gmra.mrb[0].mxu0 %v4894
      %v4896 = vpop.f32.mrb[0].mxu0
      %v4897 = vadd.f32 %v4601, %v4896
      %v4898 = vpop.f32.mrb[0].mxu0
      %4899 = vmatprep.mubr.f32.mxu0 0.0
      %v4900 = vand.u32 %v320, 4294901760
      %v4901 = vsub.f32 %v320, %v4900
      %v4902 = vand.u32 %v4901, 4294901760
      %4903 = vmatmul.mubr.f32.gmra.mrb[0].mxu0 %v4902
      %v4904 = vpop.f32.mrb[0].mxu0
      %v4905 = vadd.f32 %v4608, %v4904
      %v4906 = vpop.f32.mrb[0].mxu0
      %4907 = vmatprep.mubr.f32.mxu0 0.0
      %v4908 = vand.u32 %v323, 4294901760
      %v4909 = vsub.f32 %v323, %v4908
      %v4910 = vand.u32 %v4909, 4294901760
      %4911 = vmatmul.mubr.f32.gmra.mrb[0].mxu0 %v4910
      %v4912 = vpop.f32.mrb[0].mxu0
      %v4913 = vadd.f32 %v4615, %v4912
      %v4914 = vpop.f32.mrb[0].mxu0
      %4915 = vmatprep.mubr.f32.mxu0 0.0
      %v4916 = vand.u32 %v326, 4294901760
      %v4917 = vsub.f32 %v326, %v4916
      %v4918 = vand.u32 %v4917, 4294901760
      %4919 = vmatmul.mubr.f32.gmra.mrb[0].mxu0 %v4918
      %v4920 = vpop.f32.mrb[0].mxu0
      %v4921 = vadd.f32 %v4622, %v4920
      %v4922 = vpop.f32.mrb[0].mxu0
      %4923 = vmatprep.mubr.f32.mxu0 0.0
      %v4924 = vand.u32 %v329, 4294901760
      %v4925 = vsub.f32 %v329, %v4924
      %v4926 = vand.u32 %v4925, 4294901760
      %4927 = vmatmul.mubr.f32.gmra.mrb[0].mxu0 %v4926
      %v4928 = vpop.f32.mrb[0].mxu0
      %v4929 = vadd.f32 %v4629, %v4928
      %v4930 = vpop.f32.mrb[0].mxu0
      %4931 = vmatprep.mubr.f32.mxu0 0.0
      %v4932 = vand.u32 %v332, 4294901760
      %v4933 = vsub.f32 %v332, %v4932
      %v4934 = vand.u32 %v4933, 4294901760
      %4935 = vmatmul.mubr.f32.gmra.mrb[0].mxu0 %v4934
      %v4936 = vpop.f32.mrb[0].mxu0
      %v4937 = vadd.f32 %v4636, %v4936
      %v4938 = vpop.f32.mrb[0].mxu0
      %4939 = vmatprep.mubr.f32.mxu0 0.0
      %v4940 = vand.u32 %v335, 4294901760
      %v4941 = vsub.f32 %v335, %v4940
      %v4942 = vand.u32 %v4941, 4294901760
      %4943 = vmatmul.mubr.f32.gmra.mrb[0].mxu0 %v4942
      %v4944 = vpop.f32.mrb[0].mxu0
      %v4945 = vadd.f32 %v4643, %v4944
      %v4946 = vpop.f32.mrb[0].mxu0
      %4947 = vmatprep.mubr.f32.mxu0 0.0
      %v4948 = vand.u32 %v338, 4294901760
      %v4949 = vsub.f32 %v338, %v4948
      %v4950 = vand.u32 %v4949, 4294901760
      %4951 = vmatmul.mubr.f32.gmra.mrb[0].mxu0 %v4950
      %v4952 = vpop.f32.mrb[0].mxu0
      %v4953 = vadd.f32 %v4650, %v4952
      %v4954 = vpop.f32.mrb[0].mxu0
      %4955 = vmatprep.mubr.f32.mxu0 0.0
      %v4956 = vand.u32 %v341, 4294901760
      %v4957 = vsub.f32 %v341, %v4956
      %v4958 = vand.u32 %v4957, 4294901760
      %4959 = vmatmul.mubr.f32.gmra.mrb[0].mxu0 %v4958
      %v4960 = vpop.f32.mrb[0].mxu0
      %v4961 = vadd.f32 %v4657, %v4960
      %v4962 = vpop.f32.mrb[0].mxu0
      %4963 = vmatprep.mubr.f32.mxu0 0.0
      %v4964 = vand.u32 %v344, 4294901760
      %v4965 = vsub.f32 %v344, %v4964
      %v4966 = vand.u32 %v4965, 4294901760
      %4967 = vmatmul.mubr.f32.gmra.mrb[0].mxu0 %v4966
      %v4968 = vpop.f32.mrb[0].mxu0
      %v4969 = vadd.f32 %v4664, %v4968
      %v4970 = vpop.f32.mrb[0].mxu0
      %4971 = vmatprep.mubr.f32.mxu0 0.0
      %v4972 = vand.u32 %v3772, 4294901760
      %v4973 = vsub.f32 %v3772, %v4972
      %v4974 = vand.u32 %v4973, 4294901760
      %4975 = vmatmul.mubr.f32.gmra.mrb[0].mxu0 %v4974
      %v4976 = vpop.f32.mrb[0].mxu0
      %v4977 = vadd.f32 %v4671, %v4976
      %v4978 = vpop.f32.mrb[0].mxu0
      %4979 = vmatprep.mubr.f32.mxu0 0.0
      %v4980 = vand.u32 %v3775, 4294901760
      %v4981 = vsub.f32 %v3775, %v4980
      %v4982 = vand.u32 %v4981, 4294901760
      %4983 = vmatmul.mubr.f32.gmra.mrb[0].mxu0 %v4982
      %v4984 = vpop.f32.mrb[0].mxu0
      %v4985 = vadd.f32 %v4678, %v4984
      %v4986 = vpop.f32.mrb[0].mxu0
      %4987 = vdwg.mxu0
      %4988 = vmatprep.subr.mxu0 0.0
      %v4989 = vand.u32 %v249, 4294901760
      %v4990 = vsub.f32 %v249, %v4989
      %v4991 = vand.u32 %v4990, 4294901760
      %4992 = vmatpush1.msra.mxu0 %v4991
      %4993 = vmatprep.subr.mxu0 0.0
      %v4994 = vand.u32 %v3778, 4294901760
      %v4995 = vsub.f32 %v3778, %v4994
      %v4996 = vand.u32 %v4995, 4294901760
      %4997 = vmatpush1.msra.mxu0 %v4996
      %4998 = vmatprep.subr.mxu0 0.0
      %4999 = vmatpush1.msra.mxu0 0.0
      %5000 = vmatprep.subr.mxu0 0.0
      %5001 = vmatpush1.msra.mxu0 0.0
      %5002 = vmatprep.subr.mxu0 0.0
      %5003 = vmatpush1.msra.mxu0 0.0
      %5004 = vmatprep.subr.mxu0 0.0
      %5005 = vmatpush1.msra.mxu0 0.0
      %5006 = vmatprep.subr.mxu0 0.0
      %5007 = vmatpush1.msra.mxu0 0.0
      %5008 = vmatprep.subr.mxu0 0.0
      %5009 = vmatpush1.msra.mxu0 0.0
      %5010 = vmatprep.subr.mxu0 0.0
      %5011 = vmatpush1.msra.mxu0 0.0
      %5012 = vmatprep.subr.mxu0 0.0
      %5013 = vmatpush1.msra.mxu0 0.0
      %5014 = vmatprep.subr.mxu0 0.0
      %5015 = vmatpush1.msra.mxu0 0.0
      %5016 = vmatprep.subr.mxu0 0.0
      %5017 = vmatpush1.msra.mxu0 0.0
      %5018 = vmatprep.subr.mxu0 0.0
      %5019 = vmatpush1.msra.mxu0 0.0
      %5020 = vmatprep.subr.mxu0 0.0
      %5021 = vmatpush1.msra.mxu0 0.0
      %5022 = vmatprep.subr.mxu0 0.0
      %5023 = vmatpush1.msra.mxu0 0.0
      %5024 = vmatprep.subr.mxu0 0.0
      %5025 = vmatpush1.msra.mxu0 0.0
      %5026 = vmatprep.subr.mxu0 0.0
      %5027 = vmatpush1.msra.mxu0 0.0
      %5028 = vmatprep.subr.mxu0 0.0
      %5029 = vmatpush1.msra.mxu0 0.0
      %5030 = vmatprep.subr.mxu0 0.0
      %5031 = vmatpush1.msra.mxu0 0.0
      %5032 = vmatprep.subr.mxu0 0.0
      %5033 = vmatpush1.msra.mxu0 0.0
      %5034 = vmatprep.subr.mxu0 0.0
      %5035 = vmatpush1.msra.mxu0 0.0
      %5036 = vmatprep.subr.mxu0 0.0
      %5037 = vmatpush1.msra.mxu0 0.0
      %5038 = vmatprep.subr.mxu0 0.0
      %5039 = vmatpush1.msra.mxu0 0.0
      %5040 = vmatprep.subr.mxu0 0.0
      %5041 = vmatpush1.msra.mxu0 0.0
      %5042 = vmatprep.subr.mxu0 0.0
      %5043 = vmatpush1.msra.mxu0 0.0
      %5044 = vmatprep.subr.mxu0 0.0
      %5045 = vmatpush1.msra.mxu0 0.0
      %5046 = vmatprep.subr.mxu0 0.0
      %5047 = vmatpush1.msra.mxu0 0.0
      %5048 = vmatprep.subr.mxu0 0.0
      %5049 = vmatpush1.msra.mxu0 0.0
      %5050 = vmatprep.subr.mxu0 0.0
      %5051 = vmatpush1.msra.mxu0 0.0
      %5052 = vmatprep.subr.mxu0 0.0
      %5053 = vmatpush1.msra.mxu0 0.0
      %5054 = vmatprep.subr.mxu0 0.0
      %5055 = vmatpush1.msra.mxu0 0.0
      %5056 = vmatprep.subr.mxu0 0.0
      %5057 = vmatpush1.msra.mxu0 0.0
      %5058 = vmatprep.mubr.f32.mxu0 0.0
      %v5059 = vand.u32 %v263, 4294901760
      %5060 = vmatmul.mubr.f32.gmra.mrb[0].mxu0 %v5059
      %v5061 = vpop.f32.mrb[0].mxu0
      %v5062 = vadd.f32 %v4753, %v5061
      %v5063 = vpop.f32.mrb[0].mxu0
      %5064 = vmatprep.mubr.f32.mxu0 0.0
      %v5065 = vand.u32 %v266, 4294901760
      %5066 = vmatmul.mubr.f32.gmra.mrb[0].mxu0 %v5065
      %v5067 = vpop.f32.mrb[0].mxu0
      %v5068 = vadd.f32 %v4761, %v5067
      %v5069 = vpop.f32.mrb[0].mxu0
      %5070 = vmatprep.mubr.f32.mxu0 0.0
      %v5071 = vand.u32 %v269, 4294901760
      %5072 = vmatmul.mubr.f32.gmra.mrb[0].mxu0 %v5071
      %v5073 = vpop.f32.mrb[0].mxu0
      %v5074 = vadd.f32 %v4769, %v5073
      %v5075 = vpop.f32.mrb[0].mxu0
      %5076 = vmatprep.mubr.f32.mxu0 0.0
      %v5077 = vand.u32 %v272, 4294901760
      %5078 = vmatmul.mubr.f32.gmra.mrb[0].mxu0 %v5077
      %v5079 = vpop.f32.mrb[0].mxu0
      %v5080 = vadd.f32 %v4777, %v5079
      %v5081 = vpop.f32.mrb[0].mxu0
      %5082 = vmatprep.mubr.f32.mxu0 0.0
      %v5083 = vand.u32 %v275, 4294901760
      %5084 = vmatmul.mubr.f32.gmra.mrb[0].mxu0 %v5083
      %v5085 = vpop.f32.mrb[0].mxu0
      %v5086 = vadd.f32 %v4785, %v5085
      %v5087 = vpop.f32.mrb[0].mxu0
      %5088 = vmatprep.mubr.f32.mxu0 0.0
      %v5089 = vand.u32 %v278, 4294901760
      %5090 = vmatmul.mubr.f32.gmra.mrb[0].mxu0 %v5089
      %v5091 = vpop.f32.mrb[0].mxu0
      %v5092 = vadd.f32 %v4793, %v5091
      %v5093 = vpop.f32.mrb[0].mxu0
      %5094 = vmatprep.mubr.f32.mxu0 0.0
      %v5095 = vand.u32 %v281, 4294901760
      %5096 = vmatmul.mubr.f32.gmra.mrb[0].mxu0 %v5095
      %v5097 = vpop.f32.mrb[0].mxu0
      %v5098 = vadd.f32 %v4801, %v5097
      %v5099 = vpop.f32.mrb[0].mxu0
      %5100 = vmatprep.mubr.f32.mxu0 0.0
      %v5101 = vand.u32 %v284, 4294901760
      %5102 = vmatmul.mubr.f32.gmra.mrb[0].mxu0 %v5101
      %v5103 = vpop.f32.mrb[0].mxu0
      %v5104 = vadd.f32 %v4809, %v5103
      %v5105 = vpop.f32.mrb[0].mxu0
      %5106 = vmatprep.mubr.f32.mxu0 0.0
      %v5107 = vand.u32 %v287, 4294901760
      %5108 = vmatmul.mubr.f32.gmra.mrb[0].mxu0 %v5107
      %v5109 = vpop.f32.mrb[0].mxu0
      %v5110 = vadd.f32 %v4817, %v5109
      %v5111 = vpop.f32.mrb[0].mxu0
      %5112 = vmatprep.mubr.f32.mxu0 0.0
      %v5113 = vand.u32 %v290, 4294901760
      %5114 = vmatmul.mubr.f32.gmra.mrb[0].mxu0 %v5113
      %v5115 = vpop.f32.mrb[0].mxu0
      %v5116 = vadd.f32 %v4825, %v5115
      %v5117 = vpop.f32.mrb[0].mxu0
      %5118 = vmatprep.mubr.f32.mxu0 0.0
      %v5119 = vand.u32 %v293, 4294901760
      %5120 = vmatmul.mubr.f32.gmra.mrb[0].mxu0 %v5119
      %v5121 = vpop.f32.mrb[0].mxu0
      %v5122 = vadd.f32 %v4833, %v5121
      %v5123 = vpop.f32.mrb[0].mxu0
      %5124 = vmatprep.mubr.f32.mxu0 0.0
      %v5125 = vand.u32 %v296, 4294901760
      %5126 = vmatmul.mubr.f32.gmra.mrb[0].mxu0 %v5125
      %v5127 = vpop.f32.mrb[0].mxu0
      %v5128 = vadd.f32 %v4841, %v5127
      %v5129 = vpop.f32.mrb[0].mxu0
      %5130 = vmatprep.mubr.f32.mxu0 0.0
      %v5131 = vand.u32 %v299, 4294901760
      %5132 = vmatmul.mubr.f32.gmra.mrb[0].mxu0 %v5131
      %v5133 = vpop.f32.mrb[0].mxu0
      %v5134 = vadd.f32 %v4849, %v5133
      %v5135 = vpop.f32.mrb[0].mxu0
      %5136 = vmatprep.mubr.f32.mxu0 0.0
      %v5137 = vand.u32 %v302, 4294901760
      %5138 = vmatmul.mubr.f32.gmra.mrb[0].mxu0 %v5137
      %v5139 = vpop.f32.mrb[0].mxu0
      %v5140 = vadd.f32 %v4857, %v5139
      %v5141 = vpop.f32.mrb[0].mxu0
      %5142 = vmatprep.mubr.f32.mxu0 0.0
      %v5143 = vand.u32 %v305, 4294901760
      %5144 = vmatmul.mubr.f32.gmra.mrb[0].mxu0 %v5143
      %v5145 = vpop.f32.mrb[0].mxu0
      %v5146 = vadd.f32 %v4865, %v5145
      %v5147 = vpop.f32.mrb[0].mxu0
      %5148 = vmatprep.mubr.f32.mxu0 0.0
      %v5149 = vand.u32 %v308, 4294901760
      %5150 = vmatmul.mubr.f32.gmra.mrb[0].mxu0 %v5149
      %v5151 = vpop.f32.mrb[0].mxu0
      %v5152 = vadd.f32 %v4873, %v5151
      %v5153 = vpop.f32.mrb[0].mxu0
      %5154 = vmatprep.mubr.f32.mxu0 0.0
      %v5155 = vand.u32 %v311, 4294901760
      %5156 = vmatmul.mubr.f32.gmra.mrb[0].mxu0 %v5155
      %v5157 = vpop.f32.mrb[0].mxu0
      %v5158 = vadd.f32 %v4881, %v5157
      %v5159 = vpop.f32.mrb[0].mxu0
      %5160 = vmatprep.mubr.f32.mxu0 0.0
      %v5161 = vand.u32 %v314, 4294901760
      %5162 = vmatmul.mubr.f32.gmra.mrb[0].mxu0 %v5161
      %v5163 = vpop.f32.mrb[0].mxu0
      %v5164 = vadd.f32 %v4889, %v5163
      %v5165 = vpop.f32.mrb[0].mxu0
      %5166 = vmatprep.mubr.f32.mxu0 0.0
      %v5167 = vand.u32 %v317, 4294901760
      %5168 = vmatmul.mubr.f32.gmra.mrb[0].mxu0 %v5167
      %v5169 = vpop.f32.mrb[0].mxu0
      %v5170 = vadd.f32 %v4897, %v5169
      %v5171 = vpop.f32.mrb[0].mxu0
      %5172 = vmatprep.mubr.f32.mxu0 0.0
      %v5173 = vand.u32 %v320, 4294901760
      %5174 = vmatmul.mubr.f32.gmra.mrb[0].mxu0 %v5173
      %v5175 = vpop.f32.mrb[0].mxu0
      %v5176 = vadd.f32 %v4905, %v5175
      %v5177 = vpop.f32.mrb[0].mxu0
      %5178 = vmatprep.mubr.f32.mxu0 0.0
      %v5179 = vand.u32 %v323, 4294901760
      %5180 = vmatmul.mubr.f32.gmra.mrb[0].mxu0 %v5179
      %v5181 = vpop.f32.mrb[0].mxu0
      %v5182 = vadd.f32 %v4913, %v5181
      %v5183 = vpop.f32.mrb[0].mxu0
      %5184 = vmatprep.mubr.f32.mxu0 0.0
      %v5185 = vand.u32 %v326, 4294901760
      %5186 = vmatmul.mubr.f32.gmra.mrb[0].mxu0 %v5185
      %v5187 = vpop.f32.mrb[0].mxu0
      %v5188 = vadd.f32 %v4921, %v5187
      %v5189 = vpop.f32.mrb[0].mxu0
      %5190 = vmatprep.mubr.f32.mxu0 0.0
      %v5191 = vand.u32 %v329, 4294901760
      %5192 = vmatmul.mubr.f32.gmra.mrb[0].mxu0 %v5191
      %v5193 = vpop.f32.mrb[0].mxu0
      %v5194 = vadd.f32 %v4929, %v5193
      %v5195 = vpop.f32.mrb[0].mxu0
      %5196 = vmatprep.mubr.f32.mxu0 0.0
      %v5197 = vand.u32 %v332, 4294901760
      %5198 = vmatmul.mubr.f32.gmra.mrb[0].mxu0 %v5197
      %v5199 = vpop.f32.mrb[0].mxu0
      %v5200 = vadd.f32 %v4937, %v5199
      %v5201 = vpop.f32.mrb[0].mxu0
      %5202 = vmatprep.mubr.f32.mxu0 0.0
      %v5203 = vand.u32 %v335, 4294901760
      %5204 = vmatmul.mubr.f32.gmra.mrb[0].mxu0 %v5203
      %v5205 = vpop.f32.mrb[0].mxu0
      %v5206 = vadd.f32 %v4945, %v5205
      %v5207 = vpop.f32.mrb[0].mxu0
      %5208 = vmatprep.mubr.f32.mxu0 0.0
      %v5209 = vand.u32 %v338, 4294901760
      %5210 = vmatmul.mubr.f32.gmra.mrb[0].mxu0 %v5209
      %v5211 = vpop.f32.mrb[0].mxu0
      %v5212 = vadd.f32 %v4953, %v5211
      %v5213 = vpop.f32.mrb[0].mxu0
      %5214 = vmatprep.mubr.f32.mxu0 0.0
      %v5215 = vand.u32 %v341, 4294901760
      %5216 = vmatmul.mubr.f32.gmra.mrb[0].mxu0 %v5215
      %v5217 = vpop.f32.mrb[0].mxu0
      %v5218 = vadd.f32 %v4961, %v5217
      %v5219 = vpop.f32.mrb[0].mxu0
      %5220 = vmatprep.mubr.f32.mxu0 0.0
      %v5221 = vand.u32 %v344, 4294901760
      %5222 = vmatmul.mubr.f32.gmra.mrb[0].mxu0 %v5221
      %v5223 = vpop.f32.mrb[0].mxu0
      %v5224 = vadd.f32 %v4969, %v5223
      %v5225 = vpop.f32.mrb[0].mxu0
      %5226 = vmatprep.mubr.f32.mxu0 0.0
      %v5227 = vand.u32 %v3772, 4294901760
      %5228 = vmatmul.mubr.f32.gmra.mrb[0].mxu0 %v5227
      %v5229 = vpop.f32.mrb[0].mxu0
      %v5230 = vadd.f32 %v4977, %v5229
      %v5231 = vpop.f32.mrb[0].mxu0
      %5232 = vmatprep.mubr.f32.mxu0 0.0
      %v5233 = vand.u32 %v3775, 4294901760
      %5234 = vmatmul.mubr.f32.gmra.mrb[0].mxu0 %v5233
      %v5235 = vpop.f32.mrb[0].mxu0
      %v5236 = vadd.f32 %v4985, %v5235
      %v5237 = vpop.f32.mrb[0].mxu0
      %5238 = vdwg.mxu0
      %5239 = vmatprep.subr.mxu0 0.0
      %v5240 = vand.u32 %v249, 4294901760
      %5241 = vmatpush1.msra.mxu0 %v5240
      %5242 = vmatprep.subr.mxu0 0.0
      %v5243 = vand.u32 %v3778, 4294901760
      %5244 = vmatpush1.msra.mxu0 %v5243
      %5245 = vmatprep.subr.mxu0 0.0
      %5246 = vmatpush1.msra.mxu0 0.0
      %5247 = vmatprep.subr.mxu0 0.0
      %5248 = vmatpush1.msra.mxu0 0.0
      %5249 = vmatprep.subr.mxu0 0.0
      %5250 = vmatpush1.msra.mxu0 0.0
      %5251 = vmatprep.subr.mxu0 0.0
      %5252 = vmatpush1.msra.mxu0 0.0
      %5253 = vmatprep.subr.mxu0 0.0
      %5254 = vmatpush1.msra.mxu0 0.0
      %5255 = vmatprep.subr.mxu0 0.0
      %5256 = vmatpush1.msra.mxu0 0.0
      %5257 = vmatprep.subr.mxu0 0.0
      %5258 = vmatpush1.msra.mxu0 0.0
      %5259 = vmatprep.subr.mxu0 0.0
      %5260 = vmatpush1.msra.mxu0 0.0
      %5261 = vmatprep.subr.mxu0 0.0
      %5262 = vmatpush1.msra.mxu0 0.0
      %5263 = vmatprep.subr.mxu0 0.0
      %5264 = vmatpush1.msra.mxu0 0.0
      %5265 = vmatprep.subr.mxu0 0.0
      %5266 = vmatpush1.msra.mxu0 0.0
      %5267 = vmatprep.subr.mxu0 0.0
      %5268 = vmatpush1.msra.mxu0 0.0
      %5269 = vmatprep.subr.mxu0 0.0
      %5270 = vmatpush1.msra.mxu0 0.0
      %5271 = vmatprep.subr.mxu0 0.0
      %5272 = vmatpush1.msra.mxu0 0.0
      %5273 = vmatprep.subr.mxu0 0.0
      %5274 = vmatpush1.msra.mxu0 0.0
      %5275 = vmatprep.subr.mxu0 0.0
      %5276 = vmatpush1.msra.mxu0 0.0
      %5277 = vmatprep.subr.mxu0 0.0
      %5278 = vmatpush1.msra.mxu0 0.0
      %5279 = vmatprep.subr.mxu0 0.0
      %5280 = vmatpush1.msra.mxu0 0.0
      %5281 = vmatprep.subr.mxu0 0.0
      %5282 = vmatpush1.msra.mxu0 0.0
      %5283 = vmatprep.subr.mxu0 0.0
      %5284 = vmatpush1.msra.mxu0 0.0
      %5285 = vmatprep.subr.mxu0 0.0
      %5286 = vmatpush1.msra.mxu0 0.0
      %5287 = vmatprep.subr.mxu0 0.0
      %5288 = vmatpush1.msra.mxu0 0.0
      %5289 = vmatprep.subr.mxu0 0.0
      %5290 = vmatpush1.msra.mxu0 0.0
      %5291 = vmatprep.subr.mxu0 0.0
      %5292 = vmatpush1.msra.mxu0 0.0
      %5293 = vmatprep.subr.mxu0 0.0
      %5294 = vmatpush1.msra.mxu0 0.0
      %5295 = vmatprep.subr.mxu0 0.0
      %5296 = vmatpush1.msra.mxu0 0.0
      %5297 = vmatprep.subr.mxu0 0.0
      %5298 = vmatpush1.msra.mxu0 0.0
      %5299 = vmatprep.subr.mxu0 0.0
      %5300 = vmatpush1.msra.mxu0 0.0
      %5301 = vmatprep.subr.mxu0 0.0
      %5302 = vmatpush1.msra.mxu0 0.0
      %5303 = vmatprep.subr.mxu0 0.0
      %5304 = vmatpush1.msra.mxu0 0.0
      %5305 = vmatprep.mubr.f32.mxu0 0.0
      %v5306 = vand.u32 %v263, 4294901760
      %5307 = vmatmul.mubr.f32.gmra.mrb[0].mxu0 %v5306
      %v5308 = vpop.f32.mrb[0].mxu0
      %v5309 = vadd.f32 %v5062, %v5308
      %v5310 = vpop.f32.mrb[0].mxu0
      %5311 = vmatprep.mubr.f32.mxu0 0.0
      %v5312 = vand.u32 %v266, 4294901760
      %5313 = vmatmul.mubr.f32.gmra.mrb[0].mxu0 %v5312
      %v5314 = vpop.f32.mrb[0].mxu0
      %v5315 = vadd.f32 %v5068, %v5314
      %v5316 = vpop.f32.mrb[0].mxu0
      %5317 = vmatprep.mubr.f32.mxu0 0.0
      %v5318 = vand.u32 %v269, 4294901760
      %5319 = vmatmul.mubr.f32.gmra.mrb[0].mxu0 %v5318
      %v5320 = vpop.f32.mrb[0].mxu0
      %v5321 = vadd.f32 %v5074, %v5320
      %v5322 = vpop.f32.mrb[0].mxu0
      %5323 = vmatprep.mubr.f32.mxu0 0.0
      %v5324 = vand.u32 %v272, 4294901760
      %5325 = vmatmul.mubr.f32.gmra.mrb[0].mxu0 %v5324
      %v5326 = vpop.f32.mrb[0].mxu0
      %v5327 = vadd.f32 %v5080, %v5326
      %v5328 = vpop.f32.mrb[0].mxu0
      %5329 = vmatprep.mubr.f32.mxu0 0.0
      %v5330 = vand.u32 %v275, 4294901760
      %5331 = vmatmul.mubr.f32.gmra.mrb[0].mxu0 %v5330
      %v5332 = vpop.f32.mrb[0].mxu0
      %v5333 = vadd.f32 %v5086, %v5332
      %v5334 = vpop.f32.mrb[0].mxu0
      %5335 = vmatprep.mubr.f32.mxu0 0.0
      %v5336 = vand.u32 %v278, 4294901760
      %5337 = vmatmul.mubr.f32.gmra.mrb[0].mxu0 %v5336
      %v5338 = vpop.f32.mrb[0].mxu0
      %v5339 = vadd.f32 %v5092, %v5338
      %v5340 = vpop.f32.mrb[0].mxu0
      %5341 = vmatprep.mubr.f32.mxu0 0.0
      %v5342 = vand.u32 %v281, 4294901760
      %5343 = vmatmul.mubr.f32.gmra.mrb[0].mxu0 %v5342
      %v5344 = vpop.f32.mrb[0].mxu0
      %v5345 = vadd.f32 %v5098, %v5344
      %v5346 = vpop.f32.mrb[0].mxu0
      %5347 = vmatprep.mubr.f32.mxu0 0.0
      %v5348 = vand.u32 %v284, 4294901760
      %5349 = vmatmul.mubr.f32.gmra.mrb[0].mxu0 %v5348
      %v5350 = vpop.f32.mrb[0].mxu0
      %v5351 = vadd.f32 %v5104, %v5350
      %v5352 = vpop.f32.mrb[0].mxu0
      %5353 = vmatprep.mubr.f32.mxu0 0.0
      %v5354 = vand.u32 %v287, 4294901760
      %5355 = vmatmul.mubr.f32.gmra.mrb[0].mxu0 %v5354
      %v5356 = vpop.f32.mrb[0].mxu0
      %v5357 = vadd.f32 %v5110, %v5356
      %v5358 = vpop.f32.mrb[0].mxu0
      %5359 = vmatprep.mubr.f32.mxu0 0.0
      %v5360 = vand.u32 %v290, 4294901760
      %5361 = vmatmul.mubr.f32.gmra.mrb[0].mxu0 %v5360
      %v5362 = vpop.f32.mrb[0].mxu0
      %v5363 = vadd.f32 %v5116, %v5362
      %v5364 = vpop.f32.mrb[0].mxu0
      %5365 = vmatprep.mubr.f32.mxu0 0.0
      %v5366 = vand.u32 %v293, 4294901760
      %5367 = vmatmul.mubr.f32.gmra.mrb[0].mxu0 %v5366
      %v5368 = vpop.f32.mrb[0].mxu0
      %v5369 = vadd.f32 %v5122, %v5368
      %v5370 = vpop.f32.mrb[0].mxu0
      %5371 = vmatprep.mubr.f32.mxu0 0.0
      %v5372 = vand.u32 %v296, 4294901760
      %5373 = vmatmul.mubr.f32.gmra.mrb[0].mxu0 %v5372
      %v5374 = vpop.f32.mrb[0].mxu0
      %v5375 = vadd.f32 %v5128, %v5374
      %v5376 = vpop.f32.mrb[0].mxu0
      %5377 = vmatprep.mubr.f32.mxu0 0.0
      %v5378 = vand.u32 %v299, 4294901760
      %5379 = vmatmul.mubr.f32.gmra.mrb[0].mxu0 %v5378
      %v5380 = vpop.f32.mrb[0].mxu0
      %v5381 = vadd.f32 %v5134, %v5380
      %v5382 = vpop.f32.mrb[0].mxu0
      %5383 = vmatprep.mubr.f32.mxu0 0.0
      %v5384 = vand.u32 %v302, 4294901760
      %5385 = vmatmul.mubr.f32.gmra.mrb[0].mxu0 %v5384
      %v5386 = vpop.f32.mrb[0].mxu0
      %v5387 = vadd.f32 %v5140, %v5386
      %v5388 = vpop.f32.mrb[0].mxu0
      %5389 = vmatprep.mubr.f32.mxu0 0.0
      %v5390 = vand.u32 %v305, 4294901760
      %5391 = vmatmul.mubr.f32.gmra.mrb[0].mxu0 %v5390
      %v5392 = vpop.f32.mrb[0].mxu0
      %v5393 = vadd.f32 %v5146, %v5392
      %v5394 = vpop.f32.mrb[0].mxu0
      %5395 = vmatprep.mubr.f32.mxu0 0.0
      %v5396 = vand.u32 %v308, 4294901760
      %5397 = vmatmul.mubr.f32.gmra.mrb[0].mxu0 %v5396
      %v5398 = vpop.f32.mrb[0].mxu0
      %v5399 = vadd.f32 %v5152, %v5398
      %v5400 = vpop.f32.mrb[0].mxu0
      %5401 = vmatprep.mubr.f32.mxu0 0.0
      %v5402 = vand.u32 %v311, 4294901760
      %5403 = vmatmul.mubr.f32.gmra.mrb[0].mxu0 %v5402
      %v5404 = vpop.f32.mrb[0].mxu0
      %v5405 = vadd.f32 %v5158, %v5404
      %v5406 = vpop.f32.mrb[0].mxu0
      %5407 = vmatprep.mubr.f32.mxu0 0.0
      %v5408 = vand.u32 %v314, 4294901760
      %5409 = vmatmul.mubr.f32.gmra.mrb[0].mxu0 %v5408
      %v5410 = vpop.f32.mrb[0].mxu0
      %v5411 = vadd.f32 %v5164, %v5410
      %v5412 = vpop.f32.mrb[0].mxu0
      %5413 = vmatprep.mubr.f32.mxu0 0.0
      %v5414 = vand.u32 %v317, 4294901760
      %5415 = vmatmul.mubr.f32.gmra.mrb[0].mxu0 %v5414
      %v5416 = vpop.f32.mrb[0].mxu0
      %v5417 = vadd.f32 %v5170, %v5416
      %v5418 = vpop.f32.mrb[0].mxu0
      %5419 = vmatprep.mubr.f32.mxu0 0.0
      %v5420 = vand.u32 %v320, 4294901760
      %5421 = vmatmul.mubr.f32.gmra.mrb[0].mxu0 %v5420
      %v5422 = vpop.f32.mrb[0].mxu0
      %v5423 = vadd.f32 %v5176, %v5422
      %v5424 = vpop.f32.mrb[0].mxu0
      %5425 = vmatprep.mubr.f32.mxu0 0.0
      %v5426 = vand.u32 %v323, 4294901760
      %5427 = vmatmul.mubr.f32.gmra.mrb[0].mxu0 %v5426
      %v5428 = vpop.f32.mrb[0].mxu0
      %v5429 = vadd.f32 %v5182, %v5428
      %v5430 = vpop.f32.mrb[0].mxu0
      %5431 = vmatprep.mubr.f32.mxu0 0.0
      %v5432 = vand.u32 %v326, 4294901760
      %5433 = vmatmul.mubr.f32.gmra.mrb[0].mxu0 %v5432
      %v5434 = vpop.f32.mrb[0].mxu0
      %v5435 = vadd.f32 %v5188, %v5434
      %v5436 = vpop.f32.mrb[0].mxu0
      %5437 = vmatprep.mubr.f32.mxu0 0.0
      %v5438 = vand.u32 %v329, 4294901760
      %5439 = vmatmul.mubr.f32.gmra.mrb[0].mxu0 %v5438
      %v5440 = vpop.f32.mrb[0].mxu0
      %v5441 = vadd.f32 %v5194, %v5440
      %v5442 = vpop.f32.mrb[0].mxu0
      %5443 = vmatprep.mubr.f32.mxu0 0.0
      %v5444 = vand.u32 %v332, 4294901760
      %5445 = vmatmul.mubr.f32.gmra.mrb[0].mxu0 %v5444
      %v5446 = vpop.f32.mrb[0].mxu0
      %v5447 = vadd.f32 %v5200, %v5446
      %v5448 = vpop.f32.mrb[0].mxu0
      %5449 = vmatprep.mubr.f32.mxu0 0.0
      %v5450 = vand.u32 %v335, 4294901760
      %5451 = vmatmul.mubr.f32.gmra.mrb[0].mxu0 %v5450
      %v5452 = vpop.f32.mrb[0].mxu0
      %v5453 = vadd.f32 %v5206, %v5452
      %v5454 = vpop.f32.mrb[0].mxu0
      %5455 = vmatprep.mubr.f32.mxu0 0.0
      %v5456 = vand.u32 %v338, 4294901760
      %5457 = vmatmul.mubr.f32.gmra.mrb[0].mxu0 %v5456
      %v5458 = vpop.f32.mrb[0].mxu0
      %v5459 = vadd.f32 %v5212, %v5458
      %v5460 = vpop.f32.mrb[0].mxu0
      %5461 = vmatprep.mubr.f32.mxu0 0.0
      %v5462 = vand.u32 %v341, 4294901760
      %5463 = vmatmul.mubr.f32.gmra.mrb[0].mxu0 %v5462
      %v5464 = vpop.f32.mrb[0].mxu0
      %v5465 = vadd.f32 %v5218, %v5464
      %v5466 = vpop.f32.mrb[0].mxu0
      %5467 = vmatprep.mubr.f32.mxu0 0.0
      %v5468 = vand.u32 %v344, 4294901760
      %5469 = vmatmul.mubr.f32.gmra.mrb[0].mxu0 %v5468
      %v5470 = vpop.f32.mrb[0].mxu0
      %v5471 = vadd.f32 %v5224, %v5470
      %v5472 = vpop.f32.mrb[0].mxu0
      %5473 = vmatprep.mubr.f32.mxu0 0.0
      %v5474 = vand.u32 %v3772, 4294901760
      %5475 = vmatmul.mubr.f32.gmra.mrb[0].mxu0 %v5474
      %v5476 = vpop.f32.mrb[0].mxu0
      %v5477 = vadd.f32 %v5230, %v5476
      %v5478 = vpop.f32.mrb[0].mxu0
      %5479 = vmatprep.mubr.f32.mxu0 0.0
      %v5480 = vand.u32 %v3775, 4294901760
      %5481 = vmatmul.mubr.f32.gmra.mrb[0].mxu0 %v5480
      %v5482 = vpop.f32.mrb[0].mxu0
      %v5483 = vadd.f32 %v5236, %v5482
      %v5484 = vpop.f32.mrb[0].mxu0
      %5485 = vdwg.mxu0
      %v5486 = vadd.f32 %v3594, %v5309
      %v5487 = vadd.f32 %v3600, %v5315
      %v5488 = vadd.f32 %v3606, %v5321
      %v5489 = vadd.f32 %v3612, %v5327
      %v5490 = vadd.f32 %v3618, %v5333
      %v5491 = vadd.f32 %v3624, %v5339
      %v5492 = vadd.f32 %v3630, %v5345
      %v5493 = vadd.f32 %v3636, %v5351
      %v5494 = vadd.f32 %v3642, %v5357
      %v5495 = vadd.f32 %v3648, %v5363
      %v5496 = vadd.f32 %v3654, %v5369
      %v5497 = vadd.f32 %v3660, %v5375
      %v5498 = vadd.f32 %v3666, %v5381
      %v5499 = vadd.f32 %v3672, %v5387
      %v5500 = vadd.f32 %v3678, %v5393
      %v5501 = vadd.f32 %v3684, %v5399
      %v5502 = vadd.f32 %v3690, %v5405
      %v5503 = vadd.f32 %v3696, %v5411
      %v5504 = vadd.f32 %v3702, %v5417
      %v5505 = vadd.f32 %v3708, %v5423
      %v5506 = vadd.f32 %v3714, %v5429
      %v5507 = vadd.f32 %v3720, %v5435
      %v5508 = vadd.f32 %v3726, %v5441
      %v5509 = vadd.f32 %v3732, %v5447
      %v5510 = vadd.f32 %v3738, %v5453
      %v5511 = vadd.f32 %v3744, %v5459
      %v5512 = vadd.f32 %v3750, %v5465
      %v5513 = vadd.f32 %v3756, %v5471
      %v5514 = vadd.f32 %v3762, %v5477
      %v5515 = vadd.f32 %v3768, %v5483
      %v5517 = vsel %vm255, %v241, 0
      %v5520 = vsel %vm255, %v242, 0
      %v5523 = vsel %vm346, %v252, 0
      %5525 = vmatprep.subr.mxu0 0.0
      %v5526 = vand.u32 %v251, 4294901760
      %5527 = vmatpush1.msra.mxu0 %v5526
      %5528 = vmatprep.subr.mxu0 0.0
      %v5529 = vand.u32 %v5523, 4294901760
      %5530 = vmatpush1.msra.mxu0 %v5529
      %5531 = vmatprep.subr.mxu0 0.0
      %5532 = vmatpush1.msra.mxu0 0.0
      %5533 = vmatprep.subr.mxu0 0.0
      %5534 = vmatpush1.msra.mxu0 0.0
      %5535 = vmatprep.subr.mxu0 0.0
      %5536 = vmatpush1.msra.mxu0 0.0
      %5537 = vmatprep.subr.mxu0 0.0
      %5538 = vmatpush1.msra.mxu0 0.0
      %5539 = vmatprep.subr.mxu0 0.0
      %5540 = vmatpush1.msra.mxu0 0.0
      %5541 = vmatprep.subr.mxu0 0.0
      %5542 = vmatpush1.msra.mxu0 0.0
      %5543 = vmatprep.subr.mxu0 0.0
      %5544 = vmatpush1.msra.mxu0 0.0
      %5545 = vmatprep.subr.mxu0 0.0
      %5546 = vmatpush1.msra.mxu0 0.0
      %5547 = vmatprep.subr.mxu0 0.0
      %5548 = vmatpush1.msra.mxu0 0.0
      %5549 = vmatprep.subr.mxu0 0.0
      %5550 = vmatpush1.msra.mxu0 0.0
      %5551 = vmatprep.subr.mxu0 0.0
      %5552 = vmatpush1.msra.mxu0 0.0
      %5553 = vmatprep.subr.mxu0 0.0
      %5554 = vmatpush1.msra.mxu0 0.0
      %5555 = vmatprep.subr.mxu0 0.0
      %5556 = vmatpush1.msra.mxu0 0.0
      %5557 = vmatprep.subr.mxu0 0.0
      %5558 = vmatpush1.msra.mxu0 0.0
      %5559 = vmatprep.subr.mxu0 0.0
      %5560 = vmatpush1.msra.mxu0 0.0
      %5561 = vmatprep.subr.mxu0 0.0
      %5562 = vmatpush1.msra.mxu0 0.0
      %5563 = vmatprep.subr.mxu0 0.0
      %5564 = vmatpush1.msra.mxu0 0.0
      %5565 = vmatprep.subr.mxu0 0.0
      %5566 = vmatpush1.msra.mxu0 0.0
      %5567 = vmatprep.subr.mxu0 0.0
      %5568 = vmatpush1.msra.mxu0 0.0
      %5569 = vmatprep.subr.mxu0 0.0
      %5570 = vmatpush1.msra.mxu0 0.0
      %5571 = vmatprep.subr.mxu0 0.0
      %5572 = vmatpush1.msra.mxu0 0.0
      %5573 = vmatprep.subr.mxu0 0.0
      %5574 = vmatpush1.msra.mxu0 0.0
      %5575 = vmatprep.subr.mxu0 0.0
      %5576 = vmatpush1.msra.mxu0 0.0
      %5577 = vmatprep.subr.mxu0 0.0
      %5578 = vmatpush1.msra.mxu0 0.0
      %5579 = vmatprep.subr.mxu0 0.0
      %5580 = vmatpush1.msra.mxu0 0.0
      %5581 = vmatprep.subr.mxu0 0.0
      %5582 = vmatpush1.msra.mxu0 0.0
      %5583 = vmatprep.subr.mxu0 0.0
      %5584 = vmatpush1.msra.mxu0 0.0
      %5585 = vmatprep.subr.mxu0 0.0
      %5586 = vmatpush1.msra.mxu0 0.0
      %5587 = vmatprep.subr.mxu0 0.0
      %5588 = vmatpush1.msra.mxu0 0.0
      %5589 = vmatprep.subr.mxu0 0.0
      %5590 = vmatpush1.msra.mxu0 0.0
      %5591 = vmatprep.mubr.f32.mxu0 0.0
      %v5592 = vand.u32 %v269, 4294901760
      %v5593 = vsub.f32 %v269, %v5592
      %v5594 = vand.u32 %v5593, 4294901760
      %v5595 = vsub.f32 %v5593, %v5594
      %v5596 = vand.u32 %v5595, 4294901760
      %5597 = vmatmul.mubr.f32.gmra.mrb[0].mxu0 %v5596
      %v5598 = vpop.f32.mrb[0].mxu0
      %v5599 = vadd.f32 0.0, %v5598
      %v5600 = vpop.f32.mrb[0].mxu0
      %5601 = vmatprep.mubr.f32.mxu0 0.0
      %v5602 = vand.u32 %v272, 4294901760
      %v5603 = vsub.f32 %v272, %v5602
      %v5604 = vand.u32 %v5603, 4294901760
      %v5605 = vsub.f32 %v5603, %v5604
      %v5606 = vand.u32 %v5605, 4294901760
      %5607 = vmatmul.mubr.f32.gmra.mrb[0].mxu0 %v5606
      %v5608 = vpop.f32.mrb[0].mxu0
      %v5609 = vadd.f32 0.0, %v5608
      %v5610 = vpop.f32.mrb[0].mxu0
      %5611 = vmatprep.mubr.f32.mxu0 0.0
      %v5612 = vand.u32 %v275, 4294901760
      %v5613 = vsub.f32 %v275, %v5612
      %v5614 = vand.u32 %v5613, 4294901760
      %v5615 = vsub.f32 %v5613, %v5614
      %v5616 = vand.u32 %v5615, 4294901760
      %5617 = vmatmul.mubr.f32.gmra.mrb[0].mxu0 %v5616
      %v5618 = vpop.f32.mrb[0].mxu0
      %v5619 = vadd.f32 0.0, %v5618
      %v5620 = vpop.f32.mrb[0].mxu0
      %5621 = vmatprep.mubr.f32.mxu0 0.0
      %v5622 = vand.u32 %v278, 4294901760
      %v5623 = vsub.f32 %v278, %v5622
      %v5624 = vand.u32 %v5623, 4294901760
      %v5625 = vsub.f32 %v5623, %v5624
      %v5626 = vand.u32 %v5625, 4294901760
      %5627 = vmatmul.mubr.f32.gmra.mrb[0].mxu0 %v5626
      %v5628 = vpop.f32.mrb[0].mxu0
      %v5629 = vadd.f32 0.0, %v5628
      %v5630 = vpop.f32.mrb[0].mxu0
      %5631 = vmatprep.mubr.f32.mxu0 0.0
      %v5632 = vand.u32 %v281, 4294901760
      %v5633 = vsub.f32 %v281, %v5632
      %v5634 = vand.u32 %v5633, 4294901760
      %v5635 = vsub.f32 %v5633, %v5634
      %v5636 = vand.u32 %v5635, 4294901760
      %5637 = vmatmul.mubr.f32.gmra.mrb[0].mxu0 %v5636
      %v5638 = vpop.f32.mrb[0].mxu0
      %v5639 = vadd.f32 0.0, %v5638
      %v5640 = vpop.f32.mrb[0].mxu0
      %5641 = vmatprep.mubr.f32.mxu0 0.0
      %v5642 = vand.u32 %v284, 4294901760
      %v5643 = vsub.f32 %v284, %v5642
      %v5644 = vand.u32 %v5643, 4294901760
      %v5645 = vsub.f32 %v5643, %v5644
      %v5646 = vand.u32 %v5645, 4294901760
      %5647 = vmatmul.mubr.f32.gmra.mrb[0].mxu0 %v5646
      %v5648 = vpop.f32.mrb[0].mxu0
      %v5649 = vadd.f32 0.0, %v5648
      %v5650 = vpop.f32.mrb[0].mxu0
      %5651 = vmatprep.mubr.f32.mxu0 0.0
      %v5652 = vand.u32 %v287, 4294901760
      %v5653 = vsub.f32 %v287, %v5652
      %v5654 = vand.u32 %v5653, 4294901760
      %v5655 = vsub.f32 %v5653, %v5654
      %v5656 = vand.u32 %v5655, 4294901760
      %5657 = vmatmul.mubr.f32.gmra.mrb[0].mxu0 %v5656
      %v5658 = vpop.f32.mrb[0].mxu0
      %v5659 = vadd.f32 0.0, %v5658
      %v5660 = vpop.f32.mrb[0].mxu0
      %5661 = vmatprep.mubr.f32.mxu0 0.0
      %v5662 = vand.u32 %v290, 4294901760
      %v5663 = vsub.f32 %v290, %v5662
      %v5664 = vand.u32 %v5663, 4294901760
      %v5665 = vsub.f32 %v5663, %v5664
      %v5666 = vand.u32 %v5665, 4294901760
      %5667 = vmatmul.mubr.f32.gmra.mrb[0].mxu0 %v5666
      %v5668 = vpop.f32.mrb[0].mxu0
      %v5669 = vadd.f32 0.0, %v5668
      %v5670 = vpop.f32.mrb[0].mxu0
      %5671 = vmatprep.mubr.f32.mxu0 0.0
      %v5672 = vand.u32 %v293, 4294901760
      %v5673 = vsub.f32 %v293, %v5672
      %v5674 = vand.u32 %v5673, 4294901760
      %v5675 = vsub.f32 %v5673, %v5674
      %v5676 = vand.u32 %v5675, 4294901760
      %5677 = vmatmul.mubr.f32.gmra.mrb[0].mxu0 %v5676
      %v5678 = vpop.f32.mrb[0].mxu0
      %v5679 = vadd.f32 0.0, %v5678
      %v5680 = vpop.f32.mrb[0].mxu0
      %5681 = vmatprep.mubr.f32.mxu0 0.0
      %v5682 = vand.u32 %v296, 4294901760
      %v5683 = vsub.f32 %v296, %v5682
      %v5684 = vand.u32 %v5683, 4294901760
      %v5685 = vsub.f32 %v5683, %v5684
      %v5686 = vand.u32 %v5685, 4294901760
      %5687 = vmatmul.mubr.f32.gmra.mrb[0].mxu0 %v5686
      %v5688 = vpop.f32.mrb[0].mxu0
      %v5689 = vadd.f32 0.0, %v5688
      %v5690 = vpop.f32.mrb[0].mxu0
      %5691 = vmatprep.mubr.f32.mxu0 0.0
      %v5692 = vand.u32 %v299, 4294901760
      %v5693 = vsub.f32 %v299, %v5692
      %v5694 = vand.u32 %v5693, 4294901760
      %v5695 = vsub.f32 %v5693, %v5694
      %v5696 = vand.u32 %v5695, 4294901760
      %5697 = vmatmul.mubr.f32.gmra.mrb[0].mxu0 %v5696
      %v5698 = vpop.f32.mrb[0].mxu0
      %v5699 = vadd.f32 0.0, %v5698
      %v5700 = vpop.f32.mrb[0].mxu0
      %5701 = vmatprep.mubr.f32.mxu0 0.0
      %v5702 = vand.u32 %v302, 4294901760
      %v5703 = vsub.f32 %v302, %v5702
      %v5704 = vand.u32 %v5703, 4294901760
      %v5705 = vsub.f32 %v5703, %v5704
      %v5706 = vand.u32 %v5705, 4294901760
      %5707 = vmatmul.mubr.f32.gmra.mrb[0].mxu0 %v5706
      %v5708 = vpop.f32.mrb[0].mxu0
      %v5709 = vadd.f32 0.0, %v5708
      %v5710 = vpop.f32.mrb[0].mxu0
      %5711 = vmatprep.mubr.f32.mxu0 0.0
      %v5712 = vand.u32 %v305, 4294901760
      %v5713 = vsub.f32 %v305, %v5712
      %v5714 = vand.u32 %v5713, 4294901760
      %v5715 = vsub.f32 %v5713, %v5714
      %v5716 = vand.u32 %v5715, 4294901760
      %5717 = vmatmul.mubr.f32.gmra.mrb[0].mxu0 %v5716
      %v5718 = vpop.f32.mrb[0].mxu0
      %v5719 = vadd.f32 0.0, %v5718
      %v5720 = vpop.f32.mrb[0].mxu0
      %5721 = vmatprep.mubr.f32.mxu0 0.0
      %v5722 = vand.u32 %v308, 4294901760
      %v5723 = vsub.f32 %v308, %v5722
      %v5724 = vand.u32 %v5723, 4294901760
      %v5725 = vsub.f32 %v5723, %v5724
      %v5726 = vand.u32 %v5725, 4294901760
      %5727 = vmatmul.mubr.f32.gmra.mrb[0].mxu0 %v5726
      %v5728 = vpop.f32.mrb[0].mxu0
      %v5729 = vadd.f32 0.0, %v5728
      %v5730 = vpop.f32.mrb[0].mxu0
      %5731 = vmatprep.mubr.f32.mxu0 0.0
      %v5732 = vand.u32 %v311, 4294901760
      %v5733 = vsub.f32 %v311, %v5732
      %v5734 = vand.u32 %v5733, 4294901760
      %v5735 = vsub.f32 %v5733, %v5734
      %v5736 = vand.u32 %v5735, 4294901760
      %5737 = vmatmul.mubr.f32.gmra.mrb[0].mxu0 %v5736
      %v5738 = vpop.f32.mrb[0].mxu0
      %v5739 = vadd.f32 0.0, %v5738
      %v5740 = vpop.f32.mrb[0].mxu0
      %5741 = vmatprep.mubr.f32.mxu0 0.0
      %v5742 = vand.u32 %v314, 4294901760
      %v5743 = vsub.f32 %v314, %v5742
      %v5744 = vand.u32 %v5743, 4294901760
      %v5745 = vsub.f32 %v5743, %v5744
      %v5746 = vand.u32 %v5745, 4294901760
      %5747 = vmatmul.mubr.f32.gmra.mrb[0].mxu0 %v5746
      %v5748 = vpop.f32.mrb[0].mxu0
      %v5749 = vadd.f32 0.0, %v5748
      %v5750 = vpop.f32.mrb[0].mxu0
      %5751 = vmatprep.mubr.f32.mxu0 0.0
      %v5752 = vand.u32 %v317, 4294901760
      %v5753 = vsub.f32 %v317, %v5752
      %v5754 = vand.u32 %v5753, 4294901760
      %v5755 = vsub.f32 %v5753, %v5754
      %v5756 = vand.u32 %v5755, 4294901760
      %5757 = vmatmul.mubr.f32.gmra.mrb[0].mxu0 %v5756
      %v5758 = vpop.f32.mrb[0].mxu0
      %v5759 = vadd.f32 0.0, %v5758
      %v5760 = vpop.f32.mrb[0].mxu0
      %5761 = vmatprep.mubr.f32.mxu0 0.0
      %v5762 = vand.u32 %v320, 4294901760
      %v5763 = vsub.f32 %v320, %v5762
      %v5764 = vand.u32 %v5763, 4294901760
      %v5765 = vsub.f32 %v5763, %v5764
      %v5766 = vand.u32 %v5765, 4294901760
      %5767 = vmatmul.mubr.f32.gmra.mrb[0].mxu0 %v5766
      %v5768 = vpop.f32.mrb[0].mxu0
      %v5769 = vadd.f32 0.0, %v5768
      %v5770 = vpop.f32.mrb[0].mxu0
      %5771 = vmatprep.mubr.f32.mxu0 0.0
      %v5772 = vand.u32 %v323, 4294901760
      %v5773 = vsub.f32 %v323, %v5772
      %v5774 = vand.u32 %v5773, 4294901760
      %v5775 = vsub.f32 %v5773, %v5774
      %v5776 = vand.u32 %v5775, 4294901760
      %5777 = vmatmul.mubr.f32.gmra.mrb[0].mxu0 %v5776
      %v5778 = vpop.f32.mrb[0].mxu0
      %v5779 = vadd.f32 0.0, %v5778
      %v5780 = vpop.f32.mrb[0].mxu0
      %5781 = vmatprep.mubr.f32.mxu0 0.0
      %v5782 = vand.u32 %v326, 4294901760
      %v5783 = vsub.f32 %v326, %v5782
      %v5784 = vand.u32 %v5783, 4294901760
      %v5785 = vsub.f32 %v5783, %v5784
      %v5786 = vand.u32 %v5785, 4294901760
      %5787 = vmatmul.mubr.f32.gmra.mrb[0].mxu0 %v5786
      %v5788 = vpop.f32.mrb[0].mxu0
      %v5789 = vadd.f32 0.0, %v5788
      %v5790 = vpop.f32.mrb[0].mxu0
      %5791 = vmatprep.mubr.f32.mxu0 0.0
      %v5792 = vand.u32 %v329, 4294901760
      %v5793 = vsub.f32 %v329, %v5792
      %v5794 = vand.u32 %v5793, 4294901760
      %v5795 = vsub.f32 %v5793, %v5794
      %v5796 = vand.u32 %v5795, 4294901760
      %5797 = vmatmul.mubr.f32.gmra.mrb[0].mxu0 %v5796
      %v5798 = vpop.f32.mrb[0].mxu0
      %v5799 = vadd.f32 0.0, %v5798
      %v5800 = vpop.f32.mrb[0].mxu0
      %5801 = vmatprep.mubr.f32.mxu0 0.0
      %v5802 = vand.u32 %v332, 4294901760
      %v5803 = vsub.f32 %v332, %v5802
      %v5804 = vand.u32 %v5803, 4294901760
      %v5805 = vsub.f32 %v5803, %v5804
      %v5806 = vand.u32 %v5805, 4294901760
      %5807 = vmatmul.mubr.f32.gmra.mrb[0].mxu0 %v5806
      %v5808 = vpop.f32.mrb[0].mxu0
      %v5809 = vadd.f32 0.0, %v5808
      %v5810 = vpop.f32.mrb[0].mxu0
      %5811 = vmatprep.mubr.f32.mxu0 0.0
      %v5812 = vand.u32 %v335, 4294901760
      %v5813 = vsub.f32 %v335, %v5812
      %v5814 = vand.u32 %v5813, 4294901760
      %v5815 = vsub.f32 %v5813, %v5814
      %v5816 = vand.u32 %v5815, 4294901760
      %5817 = vmatmul.mubr.f32.gmra.mrb[0].mxu0 %v5816
      %v5818 = vpop.f32.mrb[0].mxu0
      %v5819 = vadd.f32 0.0, %v5818
      %v5820 = vpop.f32.mrb[0].mxu0
      %5821 = vmatprep.mubr.f32.mxu0 0.0
      %v5822 = vand.u32 %v338, 4294901760
      %v5823 = vsub.f32 %v338, %v5822
      %v5824 = vand.u32 %v5823, 4294901760
      %v5825 = vsub.f32 %v5823, %v5824
      %v5826 = vand.u32 %v5825, 4294901760
      %5827 = vmatmul.mubr.f32.gmra.mrb[0].mxu0 %v5826
      %v5828 = vpop.f32.mrb[0].mxu0
      %v5829 = vadd.f32 0.0, %v5828
      %v5830 = vpop.f32.mrb[0].mxu0
      %5831 = vmatprep.mubr.f32.mxu0 0.0
      %v5832 = vand.u32 %v341, 4294901760
      %v5833 = vsub.f32 %v341, %v5832
      %v5834 = vand.u32 %v5833, 4294901760
      %v5835 = vsub.f32 %v5833, %v5834
      %v5836 = vand.u32 %v5835, 4294901760
      %5837 = vmatmul.mubr.f32.gmra.mrb[0].mxu0 %v5836
      %v5838 = vpop.f32.mrb[0].mxu0
      %v5839 = vadd.f32 0.0, %v5838
      %v5840 = vpop.f32.mrb[0].mxu0
      %5841 = vmatprep.mubr.f32.mxu0 0.0
      %v5842 = vand.u32 %v344, 4294901760
      %v5843 = vsub.f32 %v344, %v5842
      %v5844 = vand.u32 %v5843, 4294901760
      %v5845 = vsub.f32 %v5843, %v5844
      %v5846 = vand.u32 %v5845, 4294901760
      %5847 = vmatmul.mubr.f32.gmra.mrb[0].mxu0 %v5846
      %v5848 = vpop.f32.mrb[0].mxu0
      %v5849 = vadd.f32 0.0, %v5848
      %v5850 = vpop.f32.mrb[0].mxu0
      %5851 = vmatprep.mubr.f32.mxu0 0.0
      %v5852 = vand.u32 %v3772, 4294901760
      %v5853 = vsub.f32 %v3772, %v5852
      %v5854 = vand.u32 %v5853, 4294901760
      %v5855 = vsub.f32 %v5853, %v5854
      %v5856 = vand.u32 %v5855, 4294901760
      %5857 = vmatmul.mubr.f32.gmra.mrb[0].mxu0 %v5856
      %v5858 = vpop.f32.mrb[0].mxu0
      %v5859 = vadd.f32 0.0, %v5858
      %v5860 = vpop.f32.mrb[0].mxu0
      %5861 = vmatprep.mubr.f32.mxu0 0.0
      %v5862 = vand.u32 %v3775, 4294901760
      %v5863 = vsub.f32 %v3775, %v5862
      %v5864 = vand.u32 %v5863, 4294901760
      %v5865 = vsub.f32 %v5863, %v5864
      %v5866 = vand.u32 %v5865, 4294901760
      %5867 = vmatmul.mubr.f32.gmra.mrb[0].mxu0 %v5866
      %v5868 = vpop.f32.mrb[0].mxu0
      %v5869 = vadd.f32 0.0, %v5868
      %v5870 = vpop.f32.mrb[0].mxu0
      %5871 = vmatprep.mubr.f32.mxu0 0.0
      %v5872 = vand.u32 %v5517, 4294901760
      %v5873 = vsub.f32 %v5517, %v5872
      %v5874 = vand.u32 %v5873, 4294901760
      %v5875 = vsub.f32 %v5873, %v5874
      %v5876 = vand.u32 %v5875, 4294901760
      %5877 = vmatmul.mubr.f32.gmra.mrb[0].mxu0 %v5876
      %v5878 = vpop.f32.mrb[0].mxu0
      %v5879 = vadd.f32 0.0, %v5878
      %v5880 = vpop.f32.mrb[0].mxu0
      %5881 = vmatprep.mubr.f32.mxu0 0.0
      %v5882 = vand.u32 %v5520, 4294901760
      %v5883 = vsub.f32 %v5520, %v5882
      %v5884 = vand.u32 %v5883, 4294901760
      %v5885 = vsub.f32 %v5883, %v5884
      %v5886 = vand.u32 %v5885, 4294901760
      %5887 = vmatmul.mubr.f32.gmra.mrb[0].mxu0 %v5886
      %v5888 = vpop.f32.mrb[0].mxu0
      %v5889 = vadd.f32 0.0, %v5888
      %v5890 = vpop.f32.mrb[0].mxu0
      %5891 = vdwg.mxu0
      %5892 = vmatprep.subr.mxu0 0.0
      %v5893 = vand.u32 %v251, 4294901760
      %v5894 = vsub.f32 %v251, %v5893
      %v5895 = vand.u32 %v5894, 4294901760
      %v5896 = vsub.f32 %v5894, %v5895
      %v5897 = vand.u32 %v5896, 4294901760
      %5898 = vmatpush1.msra.mxu0 %v5897
      %5899 = vmatprep.subr.mxu0 0.0
      %v5900 = vand.u32 %v5523, 4294901760
      %v5901 = vsub.f32 %v5523, %v5900
      %v5902 = vand.u32 %v5901, 4294901760
      %v5903 = vsub.f32 %v5901, %v5902
      %v5904 = vand.u32 %v5903, 4294901760
      %5905 = vmatpush1.msra.mxu0 %v5904
      %5906 = vmatprep.subr.mxu0 0.0
      %5907 = vmatpush1.msra.mxu0 0.0
      %5908 = vmatprep.subr.mxu0 0.0
      %5909 = vmatpush1.msra.mxu0 0.0
      %5910 = vmatprep.subr.mxu0 0.0
      %5911 = vmatpush1.msra.mxu0 0.0
      %5912 = vmatprep.subr.mxu0 0.0
      %5913 = vmatpush1.msra.mxu0 0.0
      %5914 = vmatprep.subr.mxu0 0.0
      %5915 = vmatpush1.msra.mxu0 0.0
      %5916 = vmatprep.subr.mxu0 0.0
      %5917 = vmatpush1.msra.mxu0 0.0
      %5918 = vmatprep.subr.mxu0 0.0
      %5919 = vmatpush1.msra.mxu0 0.0
      %5920 = vmatprep.subr.mxu0 0.0
      %5921 = vmatpush1.msra.mxu0 0.0
      %5922 = vmatprep.subr.mxu0 0.0
      %5923 = vmatpush1.msra.mxu0 0.0
      %5924 = vmatprep.subr.mxu0 0.0
      %5925 = vmatpush1.msra.mxu0 0.0
      %5926 = vmatprep.subr.mxu0 0.0
      %5927 = vmatpush1.msra.mxu0 0.0
      %5928 = vmatprep.subr.mxu0 0.0
      %5929 = vmatpush1.msra.mxu0 0.0
      %5930 = vmatprep.subr.mxu0 0.0
      %5931 = vmatpush1.msra.mxu0 0.0
      %5932 = vmatprep.subr.mxu0 0.0
      %5933 = vmatpush1.msra.mxu0 0.0
      %5934 = vmatprep.subr.mxu0 0.0
      %5935 = vmatpush1.msra.mxu0 0.0
      %5936 = vmatprep.subr.mxu0 0.0
      %5937 = vmatpush1.msra.mxu0 0.0
      %5938 = vmatprep.subr.mxu0 0.0
      %5939 = vmatpush1.msra.mxu0 0.0
      %5940 = vmatprep.subr.mxu0 0.0
      %5941 = vmatpush1.msra.mxu0 0.0
      %5942 = vmatprep.subr.mxu0 0.0
      %5943 = vmatpush1.msra.mxu0 0.0
      %5944 = vmatprep.subr.mxu0 0.0
      %5945 = vmatpush1.msra.mxu0 0.0
      %5946 = vmatprep.subr.mxu0 0.0
      %5947 = vmatpush1.msra.mxu0 0.0
      %5948 = vmatprep.subr.mxu0 0.0
      %5949 = vmatpush1.msra.mxu0 0.0
      %5950 = vmatprep.subr.mxu0 0.0
      %5951 = vmatpush1.msra.mxu0 0.0
      %5952 = vmatprep.subr.mxu0 0.0
      %5953 = vmatpush1.msra.mxu0 0.0
      %5954 = vmatprep.subr.mxu0 0.0
      %5955 = vmatpush1.msra.mxu0 0.0
      %5956 = vmatprep.subr.mxu0 0.0
      %5957 = vmatpush1.msra.mxu0 0.0
      %5958 = vmatprep.subr.mxu0 0.0
      %5959 = vmatpush1.msra.mxu0 0.0
      %5960 = vmatprep.subr.mxu0 0.0
      %5961 = vmatpush1.msra.mxu0 0.0
      %5962 = vmatprep.subr.mxu0 0.0
      %5963 = vmatpush1.msra.mxu0 0.0
      %5964 = vmatprep.subr.mxu0 0.0
      %5965 = vmatpush1.msra.mxu0 0.0
      %5966 = vmatprep.mubr.f32.mxu0 0.0
      %v5967 = vand.u32 %v269, 4294901760
      %5968 = vmatmul.mubr.f32.gmra.mrb[0].mxu0 %v5967
      %v5969 = vpop.f32.mrb[0].mxu0
      %v5970 = vadd.f32 %v5599, %v5969
      %v5971 = vpop.f32.mrb[0].mxu0
      %5972 = vmatprep.mubr.f32.mxu0 0.0
      %v5973 = vand.u32 %v272, 4294901760
      %5974 = vmatmul.mubr.f32.gmra.mrb[0].mxu0 %v5973
      %v5975 = vpop.f32.mrb[0].mxu0
      %v5976 = vadd.f32 %v5609, %v5975
      %v5977 = vpop.f32.mrb[0].mxu0
      %5978 = vmatprep.mubr.f32.mxu0 0.0
      %v5979 = vand.u32 %v275, 4294901760
      %5980 = vmatmul.mubr.f32.gmra.mrb[0].mxu0 %v5979
      %v5981 = vpop.f32.mrb[0].mxu0
      %v5982 = vadd.f32 %v5619, %v5981
      %v5983 = vpop.f32.mrb[0].mxu0
      %5984 = vmatprep.mubr.f32.mxu0 0.0
      %v5985 = vand.u32 %v278, 4294901760
      %5986 = vmatmul.mubr.f32.gmra.mrb[0].mxu0 %v5985
      %v5987 = vpop.f32.mrb[0].mxu0
      %v5988 = vadd.f32 %v5629, %v5987
      %v5989 = vpop.f32.mrb[0].mxu0
      %5990 = vmatprep.mubr.f32.mxu0 0.0
      %v5991 = vand.u32 %v281, 4294901760
      %5992 = vmatmul.mubr.f32.gmra.mrb[0].mxu0 %v5991
      %v5993 = vpop.f32.mrb[0].mxu0
      %v5994 = vadd.f32 %v5639, %v5993
      %v5995 = vpop.f32.mrb[0].mxu0
      %5996 = vmatprep.mubr.f32.mxu0 0.0
      %v5997 = vand.u32 %v284, 4294901760
      %5998 = vmatmul.mubr.f32.gmra.mrb[0].mxu0 %v5997
      %v5999 = vpop.f32.mrb[0].mxu0
      %v6000 = vadd.f32 %v5649, %v5999
      %v6001 = vpop.f32.mrb[0].mxu0
      %6002 = vmatprep.mubr.f32.mxu0 0.0
      %v6003 = vand.u32 %v287, 4294901760
      %6004 = vmatmul.mubr.f32.gmra.mrb[0].mxu0 %v6003
      %v6005 = vpop.f32.mrb[0].mxu0
      %v6006 = vadd.f32 %v5659, %v6005
      %v6007 = vpop.f32.mrb[0].mxu0
      %6008 = vmatprep.mubr.f32.mxu0 0.0
      %v6009 = vand.u32 %v290, 4294901760
      %6010 = vmatmul.mubr.f32.gmra.mrb[0].mxu0 %v6009
      %v6011 = vpop.f32.mrb[0].mxu0
      %v6012 = vadd.f32 %v5669, %v6011
      %v6013 = vpop.f32.mrb[0].mxu0
      %6014 = vmatprep.mubr.f32.mxu0 0.0
      %v6015 = vand.u32 %v293, 4294901760
      %6016 = vmatmul.mubr.f32.gmra.mrb[0].mxu0 %v6015
      %v6017 = vpop.f32.mrb[0].mxu0
      %v6018 = vadd.f32 %v5679, %v6017
      %v6019 = vpop.f32.mrb[0].mxu0
      %6020 = vmatprep.mubr.f32.mxu0 0.0
      %v6021 = vand.u32 %v296, 4294901760
      %6022 = vmatmul.mubr.f32.gmra.mrb[0].mxu0 %v6021
      %v6023 = vpop.f32.mrb[0].mxu0
      %v6024 = vadd.f32 %v5689, %v6023
      %v6025 = vpop.f32.mrb[0].mxu0
      %6026 = vmatprep.mubr.f32.mxu0 0.0
      %v6027 = vand.u32 %v299, 4294901760
      %6028 = vmatmul.mubr.f32.gmra.mrb[0].mxu0 %v6027
      %v6029 = vpop.f32.mrb[0].mxu0
      %v6030 = vadd.f32 %v5699, %v6029
      %v6031 = vpop.f32.mrb[0].mxu0
      %6032 = vmatprep.mubr.f32.mxu0 0.0
      %v6033 = vand.u32 %v302, 4294901760
      %6034 = vmatmul.mubr.f32.gmra.mrb[0].mxu0 %v6033
      %v6035 = vpop.f32.mrb[0].mxu0
      %v6036 = vadd.f32 %v5709, %v6035
      %v6037 = vpop.f32.mrb[0].mxu0
      %6038 = vmatprep.mubr.f32.mxu0 0.0
      %v6039 = vand.u32 %v305, 4294901760
      %6040 = vmatmul.mubr.f32.gmra.mrb[0].mxu0 %v6039
      %v6041 = vpop.f32.mrb[0].mxu0
      %v6042 = vadd.f32 %v5719, %v6041
      %v6043 = vpop.f32.mrb[0].mxu0
      %6044 = vmatprep.mubr.f32.mxu0 0.0
      %v6045 = vand.u32 %v308, 4294901760
      %6046 = vmatmul.mubr.f32.gmra.mrb[0].mxu0 %v6045
      %v6047 = vpop.f32.mrb[0].mxu0
      %v6048 = vadd.f32 %v5729, %v6047
      %v6049 = vpop.f32.mrb[0].mxu0
      %6050 = vmatprep.mubr.f32.mxu0 0.0
      %v6051 = vand.u32 %v311, 4294901760
      %6052 = vmatmul.mubr.f32.gmra.mrb[0].mxu0 %v6051
      %v6053 = vpop.f32.mrb[0].mxu0
      %v6054 = vadd.f32 %v5739, %v6053
      %v6055 = vpop.f32.mrb[0].mxu0
      %6056 = vmatprep.mubr.f32.mxu0 0.0
      %v6057 = vand.u32 %v314, 4294901760
      %6058 = vmatmul.mubr.f32.gmra.mrb[0].mxu0 %v6057
      %v6059 = vpop.f32.mrb[0].mxu0
      %v6060 = vadd.f32 %v5749, %v6059
      %v6061 = vpop.f32.mrb[0].mxu0
      %6062 = vmatprep.mubr.f32.mxu0 0.0
      %v6063 = vand.u32 %v317, 4294901760
      %6064 = vmatmul.mubr.f32.gmra.mrb[0].mxu0 %v6063
      %v6065 = vpop.f32.mrb[0].mxu0
      %v6066 = vadd.f32 %v5759, %v6065
      %v6067 = vpop.f32.mrb[0].mxu0
      %6068 = vmatprep.mubr.f32.mxu0 0.0
      %v6069 = vand.u32 %v320, 4294901760
      %6070 = vmatmul.mubr.f32.gmra.mrb[0].mxu0 %v6069
      %v6071 = vpop.f32.mrb[0].mxu0
      %v6072 = vadd.f32 %v5769, %v6071
      %v6073 = vpop.f32.mrb[0].mxu0
      %6074 = vmatprep.mubr.f32.mxu0 0.0
      %v6075 = vand.u32 %v323, 4294901760
      %6076 = vmatmul.mubr.f32.gmra.mrb[0].mxu0 %v6075
      %v6077 = vpop.f32.mrb[0].mxu0
      %v6078 = vadd.f32 %v5779, %v6077
      %v6079 = vpop.f32.mrb[0].mxu0
      %6080 = vmatprep.mubr.f32.mxu0 0.0
      %v6081 = vand.u32 %v326, 4294901760
      %6082 = vmatmul.mubr.f32.gmra.mrb[0].mxu0 %v6081
      %v6083 = vpop.f32.mrb[0].mxu0
      %v6084 = vadd.f32 %v5789, %v6083
      %v6085 = vpop.f32.mrb[0].mxu0
      %6086 = vmatprep.mubr.f32.mxu0 0.0
      %v6087 = vand.u32 %v329, 4294901760
      %6088 = vmatmul.mubr.f32.gmra.mrb[0].mxu0 %v6087
      %v6089 = vpop.f32.mrb[0].mxu0
      %v6090 = vadd.f32 %v5799, %v6089
      %v6091 = vpop.f32.mrb[0].mxu0
      %6092 = vmatprep.mubr.f32.mxu0 0.0
      %v6093 = vand.u32 %v332, 4294901760
      %6094 = vmatmul.mubr.f32.gmra.mrb[0].mxu0 %v6093
      %v6095 = vpop.f32.mrb[0].mxu0
      %v6096 = vadd.f32 %v5809, %v6095
      %v6097 = vpop.f32.mrb[0].mxu0
      %6098 = vmatprep.mubr.f32.mxu0 0.0
      %v6099 = vand.u32 %v335, 4294901760
      %6100 = vmatmul.mubr.f32.gmra.mrb[0].mxu0 %v6099
      %v6101 = vpop.f32.mrb[0].mxu0
      %v6102 = vadd.f32 %v5819, %v6101
      %v6103 = vpop.f32.mrb[0].mxu0
      %6104 = vmatprep.mubr.f32.mxu0 0.0
      %v6105 = vand.u32 %v338, 4294901760
      %6106 = vmatmul.mubr.f32.gmra.mrb[0].mxu0 %v6105
      %v6107 = vpop.f32.mrb[0].mxu0
      %v6108 = vadd.f32 %v5829, %v6107
      %v6109 = vpop.f32.mrb[0].mxu0
      %6110 = vmatprep.mubr.f32.mxu0 0.0
      %v6111 = vand.u32 %v341, 4294901760
      %6112 = vmatmul.mubr.f32.gmra.mrb[0].mxu0 %v6111
      %v6113 = vpop.f32.mrb[0].mxu0
      %v6114 = vadd.f32 %v5839, %v6113
      %v6115 = vpop.f32.mrb[0].mxu0
      %6116 = vmatprep.mubr.f32.mxu0 0.0
      %v6117 = vand.u32 %v344, 4294901760
      %6118 = vmatmul.mubr.f32.gmra.mrb[0].mxu0 %v6117
      %v6119 = vpop.f32.mrb[0].mxu0
      %v6120 = vadd.f32 %v5849, %v6119
      %v6121 = vpop.f32.mrb[0].mxu0
      %6122 = vmatprep.mubr.f32.mxu0 0.0
      %v6123 = vand.u32 %v3772, 4294901760
      %6124 = vmatmul.mubr.f32.gmra.mrb[0].mxu0 %v6123
      %v6125 = vpop.f32.mrb[0].mxu0
      %v6126 = vadd.f32 %v5859, %v6125
      %v6127 = vpop.f32.mrb[0].mxu0
      %6128 = vmatprep.mubr.f32.mxu0 0.0
      %v6129 = vand.u32 %v3775, 4294901760
      %6130 = vmatmul.mubr.f32.gmra.mrb[0].mxu0 %v6129
      %v6131 = vpop.f32.mrb[0].mxu0
      %v6132 = vadd.f32 %v5869, %v6131
      %v6133 = vpop.f32.mrb[0].mxu0
      %6134 = vmatprep.mubr.f32.mxu0 0.0
      %v6135 = vand.u32 %v5517, 4294901760
      %6136 = vmatmul.mubr.f32.gmra.mrb[0].mxu0 %v6135
      %v6137 = vpop.f32.mrb[0].mxu0
      %v6138 = vadd.f32 %v5879, %v6137
      %v6139 = vpop.f32.mrb[0].mxu0
      %6140 = vmatprep.mubr.f32.mxu0 0.0
      %v6141 = vand.u32 %v5520, 4294901760
      %6142 = vmatmul.mubr.f32.gmra.mrb[0].mxu0 %v6141
      %v6143 = vpop.f32.mrb[0].mxu0
      %v6144 = vadd.f32 %v5889, %v6143
      %v6145 = vpop.f32.mrb[0].mxu0
      %6146 = vdwg.mxu0
      %6147 = vmatprep.subr.mxu0 0.0
      %v6148 = vand.u32 %v251, 4294901760
      %v6149 = vsub.f32 %v251, %v6148
      %6150 = vmatpush1.msra.mxu0 %v6149
      %6151 = vmatprep.subr.mxu0 0.0
      %v6152 = vand.u32 %v5523, 4294901760
      %v6153 = vsub.f32 %v5523, %v6152
      %6154 = vmatpush1.msra.mxu0 %v6153
      %6155 = vmatprep.subr.mxu0 0.0
      %6156 = vmatpush1.msra.mxu0 0.0
      %6157 = vmatprep.subr.mxu0 0.0
      %6158 = vmatpush1.msra.mxu0 0.0
      %6159 = vmatprep.subr.mxu0 0.0
      %6160 = vmatpush1.msra.mxu0 0.0
      %6161 = vmatprep.subr.mxu0 0.0
      %6162 = vmatpush1.msra.mxu0 0.0
      %6163 = vmatprep.subr.mxu0 0.0
      %6164 = vmatpush1.msra.mxu0 0.0
      %6165 = vmatprep.subr.mxu0 0.0
      %6166 = vmatpush1.msra.mxu0 0.0
      %6167 = vmatprep.subr.mxu0 0.0
      %6168 = vmatpush1.msra.mxu0 0.0
      %6169 = vmatprep.subr.mxu0 0.0
      %6170 = vmatpush1.msra.mxu0 0.0
      %6171 = vmatprep.subr.mxu0 0.0
      %6172 = vmatpush1.msra.mxu0 0.0
      %6173 = vmatprep.subr.mxu0 0.0
      %6174 = vmatpush1.msra.mxu0 0.0
      %6175 = vmatprep.subr.mxu0 0.0
      %6176 = vmatpush1.msra.mxu0 0.0
      %6177 = vmatprep.subr.mxu0 0.0
      %6178 = vmatpush1.msra.mxu0 0.0
      %6179 = vmatprep.subr.mxu0 0.0
      %6180 = vmatpush1.msra.mxu0 0.0
      %6181 = vmatprep.subr.mxu0 0.0
      %6182 = vmatpush1.msra.mxu0 0.0
      %6183 = vmatprep.subr.mxu0 0.0
      %6184 = vmatpush1.msra.mxu0 0.0
      %6185 = vmatprep.subr.mxu0 0.0
      %6186 = vmatpush1.msra.mxu0 0.0
      %6187 = vmatprep.subr.mxu0 0.0
      %6188 = vmatpush1.msra.mxu0 0.0
      %6189 = vmatprep.subr.mxu0 0.0
      %6190 = vmatpush1.msra.mxu0 0.0
      %6191 = vmatprep.subr.mxu0 0.0
      %6192 = vmatpush1.msra.mxu0 0.0
      %6193 = vmatprep.subr.mxu0 0.0
      %6194 = vmatpush1.msra.mxu0 0.0
      %6195 = vmatprep.subr.mxu0 0.0
      %6196 = vmatpush1.msra.mxu0 0.0
      %6197 = vmatprep.subr.mxu0 0.0
      %6198 = vmatpush1.msra.mxu0 0.0
      %6199 = vmatprep.subr.mxu0 0.0
      %6200 = vmatpush1.msra.mxu0 0.0
      %6201 = vmatprep.subr.mxu0 0.0
      %6202 = vmatpush1.msra.mxu0 0.0
      %6203 = vmatprep.subr.mxu0 0.0
      %6204 = vmatpush1.msra.mxu0 0.0
      %6205 = vmatprep.subr.mxu0 0.0
      %6206 = vmatpush1.msra.mxu0 0.0
      %6207 = vmatprep.subr.mxu0 0.0
      %6208 = vmatpush1.msra.mxu0 0.0
      %6209 = vmatprep.subr.mxu0 0.0
      %6210 = vmatpush1.msra.mxu0 0.0
      %6211 = vmatprep.subr.mxu0 0.0
      %6212 = vmatpush1.msra.mxu0 0.0
      %6213 = vmatprep.subr.mxu0 0.0
      %6214 = vmatpush1.msra.mxu0 0.0
      %6215 = vmatprep.mubr.f32.mxu0 0.0
      %v6216 = vand.u32 %v269, 4294901760
      %v6217 = vsub.f32 %v269, %v6216
      %6218 = vmatmul.mubr.f32.gmra.mrb[0].mxu0 %v6217
      %v6219 = vpop.f32.mrb[0].mxu0
      %v6220 = vadd.f32 %v5970, %v6219
      %v6221 = vpop.f32.mrb[0].mxu0
      %6222 = vmatprep.mubr.f32.mxu0 0.0
      %v6223 = vand.u32 %v272, 4294901760
      %v6224 = vsub.f32 %v272, %v6223
      %6225 = vmatmul.mubr.f32.gmra.mrb[0].mxu0 %v6224
      %v6226 = vpop.f32.mrb[0].mxu0
      %v6227 = vadd.f32 %v5976, %v6226
      %v6228 = vpop.f32.mrb[0].mxu0
      %6229 = vmatprep.mubr.f32.mxu0 0.0
      %v6230 = vand.u32 %v275, 4294901760
      %v6231 = vsub.f32 %v275, %v6230
      %6232 = vmatmul.mubr.f32.gmra.mrb[0].mxu0 %v6231
      %v6233 = vpop.f32.mrb[0].mxu0
      %v6234 = vadd.f32 %v5982, %v6233
      %v6235 = vpop.f32.mrb[0].mxu0
      %6236 = vmatprep.mubr.f32.mxu0 0.0
      %v6237 = vand.u32 %v278, 4294901760
      %v6238 = vsub.f32 %v278, %v6237
      %6239 = vmatmul.mubr.f32.gmra.mrb[0].mxu0 %v6238
      %v6240 = vpop.f32.mrb[0].mxu0
      %v6241 = vadd.f32 %v5988, %v6240
      %v6242 = vpop.f32.mrb[0].mxu0
      %6243 = vmatprep.mubr.f32.mxu0 0.0
      %v6244 = vand.u32 %v281, 4294901760
      %v6245 = vsub.f32 %v281, %v6244
      %6246 = vmatmul.mubr.f32.gmra.mrb[0].mxu0 %v6245
      %v6247 = vpop.f32.mrb[0].mxu0
      %v6248 = vadd.f32 %v5994, %v6247
      %v6249 = vpop.f32.mrb[0].mxu0
      %6250 = vmatprep.mubr.f32.mxu0 0.0
      %v6251 = vand.u32 %v284, 4294901760
      %v6252 = vsub.f32 %v284, %v6251
      %6253 = vmatmul.mubr.f32.gmra.mrb[0].mxu0 %v6252
      %v6254 = vpop.f32.mrb[0].mxu0
      %v6255 = vadd.f32 %v6000, %v6254
      %v6256 = vpop.f32.mrb[0].mxu0
      %6257 = vmatprep.mubr.f32.mxu0 0.0
      %v6258 = vand.u32 %v287, 4294901760
      %v6259 = vsub.f32 %v287, %v6258
      %6260 = vmatmul.mubr.f32.gmra.mrb[0].mxu0 %v6259
      %v6261 = vpop.f32.mrb[0].mxu0
      %v6262 = vadd.f32 %v6006, %v6261
      %v6263 = vpop.f32.mrb[0].mxu0
      %6264 = vmatprep.mubr.f32.mxu0 0.0
      %v6265 = vand.u32 %v290, 4294901760
      %v6266 = vsub.f32 %v290, %v6265
      %6267 = vmatmul.mubr.f32.gmra.mrb[0].mxu0 %v6266
      %v6268 = vpop.f32.mrb[0].mxu0
      %v6269 = vadd.f32 %v6012, %v6268
      %v6270 = vpop.f32.mrb[0].mxu0
      %6271 = vmatprep.mubr.f32.mxu0 0.0
      %v6272 = vand.u32 %v293, 4294901760
      %v6273 = vsub.f32 %v293, %v6272
      %6274 = vmatmul.mubr.f32.gmra.mrb[0].mxu0 %v6273
      %v6275 = vpop.f32.mrb[0].mxu0
      %v6276 = vadd.f32 %v6018, %v6275
      %v6277 = vpop.f32.mrb[0].mxu0
      %6278 = vmatprep.mubr.f32.mxu0 0.0
      %v6279 = vand.u32 %v296, 4294901760
      %v6280 = vsub.f32 %v296, %v6279
      %6281 = vmatmul.mubr.f32.gmra.mrb[0].mxu0 %v6280
      %v6282 = vpop.f32.mrb[0].mxu0
      %v6283 = vadd.f32 %v6024, %v6282
      %v6284 = vpop.f32.mrb[0].mxu0
      %6285 = vmatprep.mubr.f32.mxu0 0.0
      %v6286 = vand.u32 %v299, 4294901760
      %v6287 = vsub.f32 %v299, %v6286
      %6288 = vmatmul.mubr.f32.gmra.mrb[0].mxu0 %v6287
      %v6289 = vpop.f32.mrb[0].mxu0
      %v6290 = vadd.f32 %v6030, %v6289
      %v6291 = vpop.f32.mrb[0].mxu0
      %6292 = vmatprep.mubr.f32.mxu0 0.0
      %v6293 = vand.u32 %v302, 4294901760
      %v6294 = vsub.f32 %v302, %v6293
      %6295 = vmatmul.mubr.f32.gmra.mrb[0].mxu0 %v6294
      %v6296 = vpop.f32.mrb[0].mxu0
      %v6297 = vadd.f32 %v6036, %v6296
      %v6298 = vpop.f32.mrb[0].mxu0
      %6299 = vmatprep.mubr.f32.mxu0 0.0
      %v6300 = vand.u32 %v305, 4294901760
      %v6301 = vsub.f32 %v305, %v6300
      %6302 = vmatmul.mubr.f32.gmra.mrb[0].mxu0 %v6301
      %v6303 = vpop.f32.mrb[0].mxu0
      %v6304 = vadd.f32 %v6042, %v6303
      %v6305 = vpop.f32.mrb[0].mxu0
      %6306 = vmatprep.mubr.f32.mxu0 0.0
      %v6307 = vand.u32 %v308, 4294901760
      %v6308 = vsub.f32 %v308, %v6307
      %6309 = vmatmul.mubr.f32.gmra.mrb[0].mxu0 %v6308
      %v6310 = vpop.f32.mrb[0].mxu0
      %v6311 = vadd.f32 %v6048, %v6310
      %v6312 = vpop.f32.mrb[0].mxu0
      %6313 = vmatprep.mubr.f32.mxu0 0.0
      %v6314 = vand.u32 %v311, 4294901760
      %v6315 = vsub.f32 %v311, %v6314
      %6316 = vmatmul.mubr.f32.gmra.mrb[0].mxu0 %v6315
      %v6317 = vpop.f32.mrb[0].mxu0
      %v6318 = vadd.f32 %v6054, %v6317
      %v6319 = vpop.f32.mrb[0].mxu0
      %6320 = vmatprep.mubr.f32.mxu0 0.0
      %v6321 = vand.u32 %v314, 4294901760
      %v6322 = vsub.f32 %v314, %v6321
      %6323 = vmatmul.mubr.f32.gmra.mrb[0].mxu0 %v6322
      %v6324 = vpop.f32.mrb[0].mxu0
      %v6325 = vadd.f32 %v6060, %v6324
      %v6326 = vpop.f32.mrb[0].mxu0
      %6327 = vmatprep.mubr.f32.mxu0 0.0
      %v6328 = vand.u32 %v317, 4294901760
      %v6329 = vsub.f32 %v317, %v6328
      %6330 = vmatmul.mubr.f32.gmra.mrb[0].mxu0 %v6329
      %v6331 = vpop.f32.mrb[0].mxu0
      %v6332 = vadd.f32 %v6066, %v6331
      %v6333 = vpop.f32.mrb[0].mxu0
      %6334 = vmatprep.mubr.f32.mxu0 0.0
      %v6335 = vand.u32 %v320, 4294901760
      %v6336 = vsub.f32 %v320, %v6335
      %6337 = vmatmul.mubr.f32.gmra.mrb[0].mxu0 %v6336
      %v6338 = vpop.f32.mrb[0].mxu0
      %v6339 = vadd.f32 %v6072, %v6338
      %v6340 = vpop.f32.mrb[0].mxu0
      %6341 = vmatprep.mubr.f32.mxu0 0.0
      %v6342 = vand.u32 %v323, 4294901760
      %v6343 = vsub.f32 %v323, %v6342
      %6344 = vmatmul.mubr.f32.gmra.mrb[0].mxu0 %v6343
      %v6345 = vpop.f32.mrb[0].mxu0
      %v6346 = vadd.f32 %v6078, %v6345
      %v6347 = vpop.f32.mrb[0].mxu0
      %6348 = vmatprep.mubr.f32.mxu0 0.0
      %v6349 = vand.u32 %v326, 4294901760
      %v6350 = vsub.f32 %v326, %v6349
      %6351 = vmatmul.mubr.f32.gmra.mrb[0].mxu0 %v6350
      %v6352 = vpop.f32.mrb[0].mxu0
      %v6353 = vadd.f32 %v6084, %v6352
      %v6354 = vpop.f32.mrb[0].mxu0
      %6355 = vmatprep.mubr.f32.mxu0 0.0
      %v6356 = vand.u32 %v329, 4294901760
      %v6357 = vsub.f32 %v329, %v6356
      %6358 = vmatmul.mubr.f32.gmra.mrb[0].mxu0 %v6357
      %v6359 = vpop.f32.mrb[0].mxu0
      %v6360 = vadd.f32 %v6090, %v6359
      %v6361 = vpop.f32.mrb[0].mxu0
      %6362 = vmatprep.mubr.f32.mxu0 0.0
      %v6363 = vand.u32 %v332, 4294901760
      %v6364 = vsub.f32 %v332, %v6363
      %6365 = vmatmul.mubr.f32.gmra.mrb[0].mxu0 %v6364
      %v6366 = vpop.f32.mrb[0].mxu0
      %v6367 = vadd.f32 %v6096, %v6366
      %v6368 = vpop.f32.mrb[0].mxu0
      %6369 = vmatprep.mubr.f32.mxu0 0.0
      %v6370 = vand.u32 %v335, 4294901760
      %v6371 = vsub.f32 %v335, %v6370
      %6372 = vmatmul.mubr.f32.gmra.mrb[0].mxu0 %v6371
      %v6373 = vpop.f32.mrb[0].mxu0
      %v6374 = vadd.f32 %v6102, %v6373
      %v6375 = vpop.f32.mrb[0].mxu0
      %6376 = vmatprep.mubr.f32.mxu0 0.0
      %v6377 = vand.u32 %v338, 4294901760
      %v6378 = vsub.f32 %v338, %v6377
      %6379 = vmatmul.mubr.f32.gmra.mrb[0].mxu0 %v6378
      %v6380 = vpop.f32.mrb[0].mxu0
      %v6381 = vadd.f32 %v6108, %v6380
      %v6382 = vpop.f32.mrb[0].mxu0
      %6383 = vmatprep.mubr.f32.mxu0 0.0
      %v6384 = vand.u32 %v341, 4294901760
      %v6385 = vsub.f32 %v341, %v6384
      %6386 = vmatmul.mubr.f32.gmra.mrb[0].mxu0 %v6385
      %v6387 = vpop.f32.mrb[0].mxu0
      %v6388 = vadd.f32 %v6114, %v6387
      %v6389 = vpop.f32.mrb[0].mxu0
      %6390 = vmatprep.mubr.f32.mxu0 0.0
      %v6391 = vand.u32 %v344, 4294901760
      %v6392 = vsub.f32 %v344, %v6391
      %6393 = vmatmul.mubr.f32.gmra.mrb[0].mxu0 %v6392
      %v6394 = vpop.f32.mrb[0].mxu0
      %v6395 = vadd.f32 %v6120, %v6394
      %v6396 = vpop.f32.mrb[0].mxu0
      %6397 = vmatprep.mubr.f32.mxu0 0.0
      %v6398 = vand.u32 %v3772, 4294901760
      %v6399 = vsub.f32 %v3772, %v6398
      %6400 = vmatmul.mubr.f32.gmra.mrb[0].mxu0 %v6399
      %v6401 = vpop.f32.mrb[0].mxu0
      %v6402 = vadd.f32 %v6126, %v6401
      %v6403 = vpop.f32.mrb[0].mxu0
      %6404 = vmatprep.mubr.f32.mxu0 0.0
      %v6405 = vand.u32 %v3775, 4294901760
      %v6406 = vsub.f32 %v3775, %v6405
      %6407 = vmatmul.mubr.f32.gmra.mrb[0].mxu0 %v6406
      %v6408 = vpop.f32.mrb[0].mxu0
      %v6409 = vadd.f32 %v6132, %v6408
      %v6410 = vpop.f32.mrb[0].mxu0
      %6411 = vmatprep.mubr.f32.mxu0 0.0
      %v6412 = vand.u32 %v5517, 4294901760
      %v6413 = vsub.f32 %v5517, %v6412
      %6414 = vmatmul.mubr.f32.gmra.mrb[0].mxu0 %v6413
      %v6415 = vpop.f32.mrb[0].mxu0
      %v6416 = vadd.f32 %v6138, %v6415
      %v6417 = vpop.f32.mrb[0].mxu0
      %6418 = vmatprep.mubr.f32.mxu0 0.0
      %v6419 = vand.u32 %v5520, 4294901760
      %v6420 = vsub.f32 %v5520, %v6419
      %6421 = vmatmul.mubr.f32.gmra.mrb[0].mxu0 %v6420
      %v6422 = vpop.f32.mrb[0].mxu0
      %v6423 = vadd.f32 %v6144, %v6422
      %v6424 = vpop.f32.mrb[0].mxu0
      %6425 = vdwg.mxu0
      %6426 = vmatprep.subr.mxu0 0.0
      %v6427 = vand.u32 %v251, 4294901760
      %6428 = vmatpush1.msra.mxu0 %v6427
      %6429 = vmatprep.subr.mxu0 0.0
      %v6430 = vand.u32 %v5523, 4294901760
      %6431 = vmatpush1.msra.mxu0 %v6430
      %6432 = vmatprep.subr.mxu0 0.0
      %6433 = vmatpush1.msra.mxu0 0.0
      %6434 = vmatprep.subr.mxu0 0.0
      %6435 = vmatpush1.msra.mxu0 0.0
      %6436 = vmatprep.subr.mxu0 0.0
      %6437 = vmatpush1.msra.mxu0 0.0
      %6438 = vmatprep.subr.mxu0 0.0
      %6439 = vmatpush1.msra.mxu0 0.0
      %6440 = vmatprep.subr.mxu0 0.0
      %6441 = vmatpush1.msra.mxu0 0.0
      %6442 = vmatprep.subr.mxu0 0.0
      %6443 = vmatpush1.msra.mxu0 0.0
      %6444 = vmatprep.subr.mxu0 0.0
      %6445 = vmatpush1.msra.mxu0 0.0
      %6446 = vmatprep.subr.mxu0 0.0
      %6447 = vmatpush1.msra.mxu0 0.0
      %6448 = vmatprep.subr.mxu0 0.0
      %6449 = vmatpush1.msra.mxu0 0.0
      %6450 = vmatprep.subr.mxu0 0.0
      %6451 = vmatpush1.msra.mxu0 0.0
      %6452 = vmatprep.subr.mxu0 0.0
      %6453 = vmatpush1.msra.mxu0 0.0
      %6454 = vmatprep.subr.mxu0 0.0
      %6455 = vmatpush1.msra.mxu0 0.0
      %6456 = vmatprep.subr.mxu0 0.0
      %6457 = vmatpush1.msra.mxu0 0.0
      %6458 = vmatprep.subr.mxu0 0.0
      %6459 = vmatpush1.msra.mxu0 0.0
      %6460 = vmatprep.subr.mxu0 0.0
      %6461 = vmatpush1.msra.mxu0 0.0
      %6462 = vmatprep.subr.mxu0 0.0
      %6463 = vmatpush1.msra.mxu0 0.0
      %6464 = vmatprep.subr.mxu0 0.0
      %6465 = vmatpush1.msra.mxu0 0.0
      %6466 = vmatprep.subr.mxu0 0.0
      %6467 = vmatpush1.msra.mxu0 0.0
      %6468 = vmatprep.subr.mxu0 0.0
      %6469 = vmatpush1.msra.mxu0 0.0
      %6470 = vmatprep.subr.mxu0 0.0
      %6471 = vmatpush1.msra.mxu0 0.0
      %6472 = vmatprep.subr.mxu0 0.0
      %6473 = vmatpush1.msra.mxu0 0.0
      %6474 = vmatprep.subr.mxu0 0.0
      %6475 = vmatpush1.msra.mxu0 0.0
      %6476 = vmatprep.subr.mxu0 0.0
      %6477 = vmatpush1.msra.mxu0 0.0
      %6478 = vmatprep.subr.mxu0 0.0
      %6479 = vmatpush1.msra.mxu0 0.0
      %6480 = vmatprep.subr.mxu0 0.0
      %6481 = vmatpush1.msra.mxu0 0.0
      %6482 = vmatprep.subr.mxu0 0.0
      %6483 = vmatpush1.msra.mxu0 0.0
      %6484 = vmatprep.subr.mxu0 0.0
      %6485 = vmatpush1.msra.mxu0 0.0
      %6486 = vmatprep.subr.mxu0 0.0
      %6487 = vmatpush1.msra.mxu0 0.0
      %6488 = vmatprep.subr.mxu0 0.0
      %6489 = vmatpush1.msra.mxu0 0.0
      %6490 = vmatprep.subr.mxu0 0.0
      %6491 = vmatpush1.msra.mxu0 0.0
      %6492 = vmatprep.mubr.f32.mxu0 0.0
      %v6493 = vand.u32 %v269, 4294901760
      %v6494 = vsub.f32 %v269, %v6493
      %v6495 = vand.u32 %v6494, 4294901760
      %6496 = vmatmul.mubr.f32.gmra.mrb[0].mxu0 %v6495
      %v6497 = vpop.f32.mrb[0].mxu0
      %v6498 = vadd.f32 %v6220, %v6497
      %v6499 = vpop.f32.mrb[0].mxu0
      %6500 = vmatprep.mubr.f32.mxu0 0.0
      %v6501 = vand.u32 %v272, 4294901760
      %v6502 = vsub.f32 %v272, %v6501
      %v6503 = vand.u32 %v6502, 4294901760
      %6504 = vmatmul.mubr.f32.gmra.mrb[0].mxu0 %v6503
      %v6505 = vpop.f32.mrb[0].mxu0
      %v6506 = vadd.f32 %v6227, %v6505
      %v6507 = vpop.f32.mrb[0].mxu0
      %6508 = vmatprep.mubr.f32.mxu0 0.0
      %v6509 = vand.u32 %v275, 4294901760
      %v6510 = vsub.f32 %v275, %v6509
      %v6511 = vand.u32 %v6510, 4294901760
      %6512 = vmatmul.mubr.f32.gmra.mrb[0].mxu0 %v6511
      %v6513 = vpop.f32.mrb[0].mxu0
      %v6514 = vadd.f32 %v6234, %v6513
      %v6515 = vpop.f32.mrb[0].mxu0
      %6516 = vmatprep.mubr.f32.mxu0 0.0
      %v6517 = vand.u32 %v278, 4294901760
      %v6518 = vsub.f32 %v278, %v6517
      %v6519 = vand.u32 %v6518, 4294901760
      %6520 = vmatmul.mubr.f32.gmra.mrb[0].mxu0 %v6519
      %v6521 = vpop.f32.mrb[0].mxu0
      %v6522 = vadd.f32 %v6241, %v6521
      %v6523 = vpop.f32.mrb[0].mxu0
      %6524 = vmatprep.mubr.f32.mxu0 0.0
      %v6525 = vand.u32 %v281, 4294901760
      %v6526 = vsub.f32 %v281, %v6525
      %v6527 = vand.u32 %v6526, 4294901760
      %6528 = vmatmul.mubr.f32.gmra.mrb[0].mxu0 %v6527
      %v6529 = vpop.f32.mrb[0].mxu0
      %v6530 = vadd.f32 %v6248, %v6529
      %v6531 = vpop.f32.mrb[0].mxu0
      %6532 = vmatprep.mubr.f32.mxu0 0.0
      %v6533 = vand.u32 %v284, 4294901760
      %v6534 = vsub.f32 %v284, %v6533
      %v6535 = vand.u32 %v6534, 4294901760
      %6536 = vmatmul.mubr.f32.gmra.mrb[0].mxu0 %v6535
      %v6537 = vpop.f32.mrb[0].mxu0
      %v6538 = vadd.f32 %v6255, %v6537
      %v6539 = vpop.f32.mrb[0].mxu0
      %6540 = vmatprep.mubr.f32.mxu0 0.0
      %v6541 = vand.u32 %v287, 4294901760
      %v6542 = vsub.f32 %v287, %v6541
      %v6543 = vand.u32 %v6542, 4294901760
      %6544 = vmatmul.mubr.f32.gmra.mrb[0].mxu0 %v6543
      %v6545 = vpop.f32.mrb[0].mxu0
      %v6546 = vadd.f32 %v6262, %v6545
      %v6547 = vpop.f32.mrb[0].mxu0
      %6548 = vmatprep.mubr.f32.mxu0 0.0
      %v6549 = vand.u32 %v290, 4294901760
      %v6550 = vsub.f32 %v290, %v6549
      %v6551 = vand.u32 %v6550, 4294901760
      %6552 = vmatmul.mubr.f32.gmra.mrb[0].mxu0 %v6551
      %v6553 = vpop.f32.mrb[0].mxu0
      %v6554 = vadd.f32 %v6269, %v6553
      %v6555 = vpop.f32.mrb[0].mxu0
      %6556 = vmatprep.mubr.f32.mxu0 0.0
      %v6557 = vand.u32 %v293, 4294901760
      %v6558 = vsub.f32 %v293, %v6557
      %v6559 = vand.u32 %v6558, 4294901760
      %6560 = vmatmul.mubr.f32.gmra.mrb[0].mxu0 %v6559
      %v6561 = vpop.f32.mrb[0].mxu0
      %v6562 = vadd.f32 %v6276, %v6561
      %v6563 = vpop.f32.mrb[0].mxu0
      %6564 = vmatprep.mubr.f32.mxu0 0.0
      %v6565 = vand.u32 %v296, 4294901760
      %v6566 = vsub.f32 %v296, %v6565
      %v6567 = vand.u32 %v6566, 4294901760
      %6568 = vmatmul.mubr.f32.gmra.mrb[0].mxu0 %v6567
      %v6569 = vpop.f32.mrb[0].mxu0
      %v6570 = vadd.f32 %v6283, %v6569
      %v6571 = vpop.f32.mrb[0].mxu0
      %6572 = vmatprep.mubr.f32.mxu0 0.0
      %v6573 = vand.u32 %v299, 4294901760
      %v6574 = vsub.f32 %v299, %v6573
      %v6575 = vand.u32 %v6574, 4294901760
      %6576 = vmatmul.mubr.f32.gmra.mrb[0].mxu0 %v6575
      %v6577 = vpop.f32.mrb[0].mxu0
      %v6578 = vadd.f32 %v6290, %v6577
      %v6579 = vpop.f32.mrb[0].mxu0
      %6580 = vmatprep.mubr.f32.mxu0 0.0
      %v6581 = vand.u32 %v302, 4294901760
      %v6582 = vsub.f32 %v302, %v6581
      %v6583 = vand.u32 %v6582, 4294901760
      %6584 = vmatmul.mubr.f32.gmra.mrb[0].mxu0 %v6583
      %v6585 = vpop.f32.mrb[0].mxu0
      %v6586 = vadd.f32 %v6297, %v6585
      %v6587 = vpop.f32.mrb[0].mxu0
      %6588 = vmatprep.mubr.f32.mxu0 0.0
      %v6589 = vand.u32 %v305, 4294901760
      %v6590 = vsub.f32 %v305, %v6589
      %v6591 = vand.u32 %v6590, 4294901760
      %6592 = vmatmul.mubr.f32.gmra.mrb[0].mxu0 %v6591
      %v6593 = vpop.f32.mrb[0].mxu0
      %v6594 = vadd.f32 %v6304, %v6593
      %v6595 = vpop.f32.mrb[0].mxu0
      %6596 = vmatprep.mubr.f32.mxu0 0.0
      %v6597 = vand.u32 %v308, 4294901760
      %v6598 = vsub.f32 %v308, %v6597
      %v6599 = vand.u32 %v6598, 4294901760
      %6600 = vmatmul.mubr.f32.gmra.mrb[0].mxu0 %v6599
      %v6601 = vpop.f32.mrb[0].mxu0
      %v6602 = vadd.f32 %v6311, %v6601
      %v6603 = vpop.f32.mrb[0].mxu0
      %6604 = vmatprep.mubr.f32.mxu0 0.0
      %v6605 = vand.u32 %v311, 4294901760
      %v6606 = vsub.f32 %v311, %v6605
      %v6607 = vand.u32 %v6606, 4294901760
      %6608 = vmatmul.mubr.f32.gmra.mrb[0].mxu0 %v6607
      %v6609 = vpop.f32.mrb[0].mxu0
      %v6610 = vadd.f32 %v6318, %v6609
      %v6611 = vpop.f32.mrb[0].mxu0
      %6612 = vmatprep.mubr.f32.mxu0 0.0
      %v6613 = vand.u32 %v314, 4294901760
      %v6614 = vsub.f32 %v314, %v6613
      %v6615 = vand.u32 %v6614, 4294901760
      %6616 = vmatmul.mubr.f32.gmra.mrb[0].mxu0 %v6615
      %v6617 = vpop.f32.mrb[0].mxu0
      %v6618 = vadd.f32 %v6325, %v6617
      %v6619 = vpop.f32.mrb[0].mxu0
      %6620 = vmatprep.mubr.f32.mxu0 0.0
      %v6621 = vand.u32 %v317, 4294901760
      %v6622 = vsub.f32 %v317, %v6621
      %v6623 = vand.u32 %v6622, 4294901760
      %6624 = vmatmul.mubr.f32.gmra.mrb[0].mxu0 %v6623
      %v6625 = vpop.f32.mrb[0].mxu0
      %v6626 = vadd.f32 %v6332, %v6625
      %v6627 = vpop.f32.mrb[0].mxu0
      %6628 = vmatprep.mubr.f32.mxu0 0.0
      %v6629 = vand.u32 %v320, 4294901760
      %v6630 = vsub.f32 %v320, %v6629
      %v6631 = vand.u32 %v6630, 4294901760
      %6632 = vmatmul.mubr.f32.gmra.mrb[0].mxu0 %v6631
      %v6633 = vpop.f32.mrb[0].mxu0
      %v6634 = vadd.f32 %v6339, %v6633
      %v6635 = vpop.f32.mrb[0].mxu0
      %6636 = vmatprep.mubr.f32.mxu0 0.0
      %v6637 = vand.u32 %v323, 4294901760
      %v6638 = vsub.f32 %v323, %v6637
      %v6639 = vand.u32 %v6638, 4294901760
      %6640 = vmatmul.mubr.f32.gmra.mrb[0].mxu0 %v6639
      %v6641 = vpop.f32.mrb[0].mxu0
      %v6642 = vadd.f32 %v6346, %v6641
      %v6643 = vpop.f32.mrb[0].mxu0
      %6644 = vmatprep.mubr.f32.mxu0 0.0
      %v6645 = vand.u32 %v326, 4294901760
      %v6646 = vsub.f32 %v326, %v6645
      %v6647 = vand.u32 %v6646, 4294901760
      %6648 = vmatmul.mubr.f32.gmra.mrb[0].mxu0 %v6647
      %v6649 = vpop.f32.mrb[0].mxu0
      %v6650 = vadd.f32 %v6353, %v6649
      %v6651 = vpop.f32.mrb[0].mxu0
      %6652 = vmatprep.mubr.f32.mxu0 0.0
      %v6653 = vand.u32 %v329, 4294901760
      %v6654 = vsub.f32 %v329, %v6653
      %v6655 = vand.u32 %v6654, 4294901760
      %6656 = vmatmul.mubr.f32.gmra.mrb[0].mxu0 %v6655
      %v6657 = vpop.f32.mrb[0].mxu0
      %v6658 = vadd.f32 %v6360, %v6657
      %v6659 = vpop.f32.mrb[0].mxu0
      %6660 = vmatprep.mubr.f32.mxu0 0.0
      %v6661 = vand.u32 %v332, 4294901760
      %v6662 = vsub.f32 %v332, %v6661
      %v6663 = vand.u32 %v6662, 4294901760
      %6664 = vmatmul.mubr.f32.gmra.mrb[0].mxu0 %v6663
      %v6665 = vpop.f32.mrb[0].mxu0
      %v6666 = vadd.f32 %v6367, %v6665
      %v6667 = vpop.f32.mrb[0].mxu0
      %6668 = vmatprep.mubr.f32.mxu0 0.0
      %v6669 = vand.u32 %v335, 4294901760
      %v6670 = vsub.f32 %v335, %v6669
      %v6671 = vand.u32 %v6670, 4294901760
      %6672 = vmatmul.mubr.f32.gmra.mrb[0].mxu0 %v6671
      %v6673 = vpop.f32.mrb[0].mxu0
      %v6674 = vadd.f32 %v6374, %v6673
      %v6675 = vpop.f32.mrb[0].mxu0
      %6676 = vmatprep.mubr.f32.mxu0 0.0
      %v6677 = vand.u32 %v338, 4294901760
      %v6678 = vsub.f32 %v338, %v6677
      %v6679 = vand.u32 %v6678, 4294901760
      %6680 = vmatmul.mubr.f32.gmra.mrb[0].mxu0 %v6679
      %v6681 = vpop.f32.mrb[0].mxu0
      %v6682 = vadd.f32 %v6381, %v6681
      %v6683 = vpop.f32.mrb[0].mxu0
      %6684 = vmatprep.mubr.f32.mxu0 0.0
      %v6685 = vand.u32 %v341, 4294901760
      %v6686 = vsub.f32 %v341, %v6685
      %v6687 = vand.u32 %v6686, 4294901760
      %6688 = vmatmul.mubr.f32.gmra.mrb[0].mxu0 %v6687
      %v6689 = vpop.f32.mrb[0].mxu0
      %v6690 = vadd.f32 %v6388, %v6689
      %v6691 = vpop.f32.mrb[0].mxu0
      %6692 = vmatprep.mubr.f32.mxu0 0.0
      %v6693 = vand.u32 %v344, 4294901760
      %v6694 = vsub.f32 %v344, %v6693
      %v6695 = vand.u32 %v6694, 4294901760
      %6696 = vmatmul.mubr.f32.gmra.mrb[0].mxu0 %v6695
      %v6697 = vpop.f32.mrb[0].mxu0
      %v6698 = vadd.f32 %v6395, %v6697
      %v6699 = vpop.f32.mrb[0].mxu0
      %6700 = vmatprep.mubr.f32.mxu0 0.0
      %v6701 = vand.u32 %v3772, 4294901760
      %v6702 = vsub.f32 %v3772, %v6701
      %v6703 = vand.u32 %v6702, 4294901760
      %6704 = vmatmul.mubr.f32.gmra.mrb[0].mxu0 %v6703
      %v6705 = vpop.f32.mrb[0].mxu0
      %v6706 = vadd.f32 %v6402, %v6705
      %v6707 = vpop.f32.mrb[0].mxu0
      %6708 = vmatprep.mubr.f32.mxu0 0.0
      %v6709 = vand.u32 %v3775, 4294901760
      %v6710 = vsub.f32 %v3775, %v6709
      %v6711 = vand.u32 %v6710, 4294901760
      %6712 = vmatmul.mubr.f32.gmra.mrb[0].mxu0 %v6711
      %v6713 = vpop.f32.mrb[0].mxu0
      %v6714 = vadd.f32 %v6409, %v6713
      %v6715 = vpop.f32.mrb[0].mxu0
      %6716 = vmatprep.mubr.f32.mxu0 0.0
      %v6717 = vand.u32 %v5517, 4294901760
      %v6718 = vsub.f32 %v5517, %v6717
      %v6719 = vand.u32 %v6718, 4294901760
      %6720 = vmatmul.mubr.f32.gmra.mrb[0].mxu0 %v6719
      %v6721 = vpop.f32.mrb[0].mxu0
      %v6722 = vadd.f32 %v6416, %v6721
      %v6723 = vpop.f32.mrb[0].mxu0
      %6724 = vmatprep.mubr.f32.mxu0 0.0
      %v6725 = vand.u32 %v5520, 4294901760
      %v6726 = vsub.f32 %v5520, %v6725
      %v6727 = vand.u32 %v6726, 4294901760
      %6728 = vmatmul.mubr.f32.gmra.mrb[0].mxu0 %v6727
      %v6729 = vpop.f32.mrb[0].mxu0
      %v6730 = vadd.f32 %v6423, %v6729
      %v6731 = vpop.f32.mrb[0].mxu0
      %6732 = vdwg.mxu0
      %6733 = vmatprep.subr.mxu0 0.0
      %v6734 = vand.u32 %v251, 4294901760
      %v6735 = vsub.f32 %v251, %v6734
      %v6736 = vand.u32 %v6735, 4294901760
      %6737 = vmatpush1.msra.mxu0 %v6736
      %6738 = vmatprep.subr.mxu0 0.0
      %v6739 = vand.u32 %v5523, 4294901760
      %v6740 = vsub.f32 %v5523, %v6739
      %v6741 = vand.u32 %v6740, 4294901760
      %6742 = vmatpush1.msra.mxu0 %v6741
      %6743 = vmatprep.subr.mxu0 0.0
      %6744 = vmatpush1.msra.mxu0 0.0
      %6745 = vmatprep.subr.mxu0 0.0
      %6746 = vmatpush1.msra.mxu0 0.0
      %6747 = vmatprep.subr.mxu0 0.0
      %6748 = vmatpush1.msra.mxu0 0.0
      %6749 = vmatprep.subr.mxu0 0.0
      %6750 = vmatpush1.msra.mxu0 0.0
      %6751 = vmatprep.subr.mxu0 0.0
      %6752 = vmatpush1.msra.mxu0 0.0
      %6753 = vmatprep.subr.mxu0 0.0
      %6754 = vmatpush1.msra.mxu0 0.0
      %6755 = vmatprep.subr.mxu0 0.0
      %6756 = vmatpush1.msra.mxu0 0.0
      %6757 = vmatprep.subr.mxu0 0.0
      %6758 = vmatpush1.msra.mxu0 0.0
      %6759 = vmatprep.subr.mxu0 0.0
      %6760 = vmatpush1.msra.mxu0 0.0
      %6761 = vmatprep.subr.mxu0 0.0
      %6762 = vmatpush1.msra.mxu0 0.0
      %6763 = vmatprep.subr.mxu0 0.0
      %6764 = vmatpush1.msra.mxu0 0.0
      %6765 = vmatprep.subr.mxu0 0.0
      %6766 = vmatpush1.msra.mxu0 0.0
      %6767 = vmatprep.subr.mxu0 0.0
      %6768 = vmatpush1.msra.mxu0 0.0
      %6769 = vmatprep.subr.mxu0 0.0
      %6770 = vmatpush1.msra.mxu0 0.0
      %6771 = vmatprep.subr.mxu0 0.0
      %6772 = vmatpush1.msra.mxu0 0.0
      %6773 = vmatprep.subr.mxu0 0.0
      %6774 = vmatpush1.msra.mxu0 0.0
      %6775 = vmatprep.subr.mxu0 0.0
      %6776 = vmatpush1.msra.mxu0 0.0
      %6777 = vmatprep.subr.mxu0 0.0
      %6778 = vmatpush1.msra.mxu0 0.0
      %6779 = vmatprep.subr.mxu0 0.0
      %6780 = vmatpush1.msra.mxu0 0.0
      %6781 = vmatprep.subr.mxu0 0.0
      %6782 = vmatpush1.msra.mxu0 0.0
      %6783 = vmatprep.subr.mxu0 0.0
      %6784 = vmatpush1.msra.mxu0 0.0
      %6785 = vmatprep.subr.mxu0 0.0
      %6786 = vmatpush1.msra.mxu0 0.0
      %6787 = vmatprep.subr.mxu0 0.0
      %6788 = vmatpush1.msra.mxu0 0.0
      %6789 = vmatprep.subr.mxu0 0.0
      %6790 = vmatpush1.msra.mxu0 0.0
      %6791 = vmatprep.subr.mxu0 0.0
      %6792 = vmatpush1.msra.mxu0 0.0
      %6793 = vmatprep.subr.mxu0 0.0
      %6794 = vmatpush1.msra.mxu0 0.0
      %6795 = vmatprep.subr.mxu0 0.0
      %6796 = vmatpush1.msra.mxu0 0.0
      %6797 = vmatprep.subr.mxu0 0.0
      %6798 = vmatpush1.msra.mxu0 0.0
      %6799 = vmatprep.subr.mxu0 0.0
      %6800 = vmatpush1.msra.mxu0 0.0
      %6801 = vmatprep.subr.mxu0 0.0
      %6802 = vmatpush1.msra.mxu0 0.0
      %6803 = vmatprep.mubr.f32.mxu0 0.0
      %v6804 = vand.u32 %v269, 4294901760
      %6805 = vmatmul.mubr.f32.gmra.mrb[0].mxu0 %v6804
      %v6806 = vpop.f32.mrb[0].mxu0
      %v6807 = vadd.f32 %v6498, %v6806
      %v6808 = vpop.f32.mrb[0].mxu0
      %6809 = vmatprep.mubr.f32.mxu0 0.0
      %v6810 = vand.u32 %v272, 4294901760
      %6811 = vmatmul.mubr.f32.gmra.mrb[0].mxu0 %v6810
      %v6812 = vpop.f32.mrb[0].mxu0
      %v6813 = vadd.f32 %v6506, %v6812
      %v6814 = vpop.f32.mrb[0].mxu0
      %6815 = vmatprep.mubr.f32.mxu0 0.0
      %v6816 = vand.u32 %v275, 4294901760
      %6817 = vmatmul.mubr.f32.gmra.mrb[0].mxu0 %v6816
      %v6818 = vpop.f32.mrb[0].mxu0
      %v6819 = vadd.f32 %v6514, %v6818
      %v6820 = vpop.f32.mrb[0].mxu0
      %6821 = vmatprep.mubr.f32.mxu0 0.0
      %v6822 = vand.u32 %v278, 4294901760
      %6823 = vmatmul.mubr.f32.gmra.mrb[0].mxu0 %v6822
      %v6824 = vpop.f32.mrb[0].mxu0
      %v6825 = vadd.f32 %v6522, %v6824
      %v6826 = vpop.f32.mrb[0].mxu0
      %6827 = vmatprep.mubr.f32.mxu0 0.0
      %v6828 = vand.u32 %v281, 4294901760
      %6829 = vmatmul.mubr.f32.gmra.mrb[0].mxu0 %v6828
      %v6830 = vpop.f32.mrb[0].mxu0
      %v6831 = vadd.f32 %v6530, %v6830
      %v6832 = vpop.f32.mrb[0].mxu0
      %6833 = vmatprep.mubr.f32.mxu0 0.0
      %v6834 = vand.u32 %v284, 4294901760
      %6835 = vmatmul.mubr.f32.gmra.mrb[0].mxu0 %v6834
      %v6836 = vpop.f32.mrb[0].mxu0
      %v6837 = vadd.f32 %v6538, %v6836
      %v6838 = vpop.f32.mrb[0].mxu0
      %6839 = vmatprep.mubr.f32.mxu0 0.0
      %v6840 = vand.u32 %v287, 4294901760
      %6841 = vmatmul.mubr.f32.gmra.mrb[0].mxu0 %v6840
      %v6842 = vpop.f32.mrb[0].mxu0
      %v6843 = vadd.f32 %v6546, %v6842
      %v6844 = vpop.f32.mrb[0].mxu0
      %6845 = vmatprep.mubr.f32.mxu0 0.0
      %v6846 = vand.u32 %v290, 4294901760
      %6847 = vmatmul.mubr.f32.gmra.mrb[0].mxu0 %v6846
      %v6848 = vpop.f32.mrb[0].mxu0
      %v6849 = vadd.f32 %v6554, %v6848
      %v6850 = vpop.f32.mrb[0].mxu0
      %6851 = vmatprep.mubr.f32.mxu0 0.0
      %v6852 = vand.u32 %v293, 4294901760
      %6853 = vmatmul.mubr.f32.gmra.mrb[0].mxu0 %v6852
      %v6854 = vpop.f32.mrb[0].mxu0
      %v6855 = vadd.f32 %v6562, %v6854
      %v6856 = vpop.f32.mrb[0].mxu0
      %6857 = vmatprep.mubr.f32.mxu0 0.0
      %v6858 = vand.u32 %v296, 4294901760
      %6859 = vmatmul.mubr.f32.gmra.mrb[0].mxu0 %v6858
      %v6860 = vpop.f32.mrb[0].mxu0
      %v6861 = vadd.f32 %v6570, %v6860
      %v6862 = vpop.f32.mrb[0].mxu0
      %6863 = vmatprep.mubr.f32.mxu0 0.0
      %v6864 = vand.u32 %v299, 4294901760
      %6865 = vmatmul.mubr.f32.gmra.mrb[0].mxu0 %v6864
      %v6866 = vpop.f32.mrb[0].mxu0
      %v6867 = vadd.f32 %v6578, %v6866
      %v6868 = vpop.f32.mrb[0].mxu0
      %6869 = vmatprep.mubr.f32.mxu0 0.0
      %v6870 = vand.u32 %v302, 4294901760
      %6871 = vmatmul.mubr.f32.gmra.mrb[0].mxu0 %v6870
      %v6872 = vpop.f32.mrb[0].mxu0
      %v6873 = vadd.f32 %v6586, %v6872
      %v6874 = vpop.f32.mrb[0].mxu0
      %6875 = vmatprep.mubr.f32.mxu0 0.0
      %v6876 = vand.u32 %v305, 4294901760
      %6877 = vmatmul.mubr.f32.gmra.mrb[0].mxu0 %v6876
      %v6878 = vpop.f32.mrb[0].mxu0
      %v6879 = vadd.f32 %v6594, %v6878
      %v6880 = vpop.f32.mrb[0].mxu0
      %6881 = vmatprep.mubr.f32.mxu0 0.0
      %v6882 = vand.u32 %v308, 4294901760
      %6883 = vmatmul.mubr.f32.gmra.mrb[0].mxu0 %v6882
      %v6884 = vpop.f32.mrb[0].mxu0
      %v6885 = vadd.f32 %v6602, %v6884
      %v6886 = vpop.f32.mrb[0].mxu0
      %6887 = vmatprep.mubr.f32.mxu0 0.0
      %v6888 = vand.u32 %v311, 4294901760
      %6889 = vmatmul.mubr.f32.gmra.mrb[0].mxu0 %v6888
      %v6890 = vpop.f32.mrb[0].mxu0
      %v6891 = vadd.f32 %v6610, %v6890
      %v6892 = vpop.f32.mrb[0].mxu0
      %6893 = vmatprep.mubr.f32.mxu0 0.0
      %v6894 = vand.u32 %v314, 4294901760
      %6895 = vmatmul.mubr.f32.gmra.mrb[0].mxu0 %v6894
      %v6896 = vpop.f32.mrb[0].mxu0
      %v6897 = vadd.f32 %v6618, %v6896
      %v6898 = vpop.f32.mrb[0].mxu0
      %6899 = vmatprep.mubr.f32.mxu0 0.0
      %v6900 = vand.u32 %v317, 4294901760
      %6901 = vmatmul.mubr.f32.gmra.mrb[0].mxu0 %v6900
      %v6902 = vpop.f32.mrb[0].mxu0
      %v6903 = vadd.f32 %v6626, %v6902
      %v6904 = vpop.f32.mrb[0].mxu0
      %6905 = vmatprep.mubr.f32.mxu0 0.0
      %v6906 = vand.u32 %v320, 4294901760
      %6907 = vmatmul.mubr.f32.gmra.mrb[0].mxu0 %v6906
      %v6908 = vpop.f32.mrb[0].mxu0
      %v6909 = vadd.f32 %v6634, %v6908
      %v6910 = vpop.f32.mrb[0].mxu0
      %6911 = vmatprep.mubr.f32.mxu0 0.0
      %v6912 = vand.u32 %v323, 4294901760
      %6913 = vmatmul.mubr.f32.gmra.mrb[0].mxu0 %v6912
      %v6914 = vpop.f32.mrb[0].mxu0
      %v6915 = vadd.f32 %v6642, %v6914
      %v6916 = vpop.f32.mrb[0].mxu0
      %6917 = vmatprep.mubr.f32.mxu0 0.0
      %v6918 = vand.u32 %v326, 4294901760
      %6919 = vmatmul.mubr.f32.gmra.mrb[0].mxu0 %v6918
      %v6920 = vpop.f32.mrb[0].mxu0
      %v6921 = vadd.f32 %v6650, %v6920
      %v6922 = vpop.f32.mrb[0].mxu0
      %6923 = vmatprep.mubr.f32.mxu0 0.0
      %v6924 = vand.u32 %v329, 4294901760
      %6925 = vmatmul.mubr.f32.gmra.mrb[0].mxu0 %v6924
      %v6926 = vpop.f32.mrb[0].mxu0
      %v6927 = vadd.f32 %v6658, %v6926
      %v6928 = vpop.f32.mrb[0].mxu0
      %6929 = vmatprep.mubr.f32.mxu0 0.0
      %v6930 = vand.u32 %v332, 4294901760
      %6931 = vmatmul.mubr.f32.gmra.mrb[0].mxu0 %v6930
      %v6932 = vpop.f32.mrb[0].mxu0
      %v6933 = vadd.f32 %v6666, %v6932
      %v6934 = vpop.f32.mrb[0].mxu0
      %6935 = vmatprep.mubr.f32.mxu0 0.0
      %v6936 = vand.u32 %v335, 4294901760
      %6937 = vmatmul.mubr.f32.gmra.mrb[0].mxu0 %v6936
      %v6938 = vpop.f32.mrb[0].mxu0
      %v6939 = vadd.f32 %v6674, %v6938
      %v6940 = vpop.f32.mrb[0].mxu0
      %6941 = vmatprep.mubr.f32.mxu0 0.0
      %v6942 = vand.u32 %v338, 4294901760
      %6943 = vmatmul.mubr.f32.gmra.mrb[0].mxu0 %v6942
      %v6944 = vpop.f32.mrb[0].mxu0
      %v6945 = vadd.f32 %v6682, %v6944
      %v6946 = vpop.f32.mrb[0].mxu0
      %6947 = vmatprep.mubr.f32.mxu0 0.0
      %v6948 = vand.u32 %v341, 4294901760
      %6949 = vmatmul.mubr.f32.gmra.mrb[0].mxu0 %v6948
      %v6950 = vpop.f32.mrb[0].mxu0
      %v6951 = vadd.f32 %v6690, %v6950
      %v6952 = vpop.f32.mrb[0].mxu0
      %6953 = vmatprep.mubr.f32.mxu0 0.0
      %v6954 = vand.u32 %v344, 4294901760
      %6955 = vmatmul.mubr.f32.gmra.mrb[0].mxu0 %v6954
      %v6956 = vpop.f32.mrb[0].mxu0
      %v6957 = vadd.f32 %v6698, %v6956
      %v6958 = vpop.f32.mrb[0].mxu0
      %6959 = vmatprep.mubr.f32.mxu0 0.0
      %v6960 = vand.u32 %v3772, 4294901760
      %6961 = vmatmul.mubr.f32.gmra.mrb[0].mxu0 %v6960
      %v6962 = vpop.f32.mrb[0].mxu0
      %v6963 = vadd.f32 %v6706, %v6962
      %v6964 = vpop.f32.mrb[0].mxu0
      %6965 = vmatprep.mubr.f32.mxu0 0.0
      %v6966 = vand.u32 %v3775, 4294901760
      %6967 = vmatmul.mubr.f32.gmra.mrb[0].mxu0 %v6966
      %v6968 = vpop.f32.mrb[0].mxu0
      %v6969 = vadd.f32 %v6714, %v6968
      %v6970 = vpop.f32.mrb[0].mxu0
      %6971 = vmatprep.mubr.f32.mxu0 0.0
      %v6972 = vand.u32 %v5517, 4294901760
      %6973 = vmatmul.mubr.f32.gmra.mrb[0].mxu0 %v6972
      %v6974 = vpop.f32.mrb[0].mxu0
      %v6975 = vadd.f32 %v6722, %v6974
      %v6976 = vpop.f32.mrb[0].mxu0
      %6977 = vmatprep.mubr.f32.mxu0 0.0
      %v6978 = vand.u32 %v5520, 4294901760
      %6979 = vmatmul.mubr.f32.gmra.mrb[0].mxu0 %v6978
      %v6980 = vpop.f32.mrb[0].mxu0
      %v6981 = vadd.f32 %v6730, %v6980
      %v6982 = vpop.f32.mrb[0].mxu0
      %6983 = vdwg.mxu0
      %6984 = vmatprep.subr.mxu0 0.0
      %v6985 = vand.u32 %v251, 4294901760
      %6986 = vmatpush1.msra.mxu0 %v6985
      %6987 = vmatprep.subr.mxu0 0.0
      %v6988 = vand.u32 %v5523, 4294901760
      %6989 = vmatpush1.msra.mxu0 %v6988
      %6990 = vmatprep.subr.mxu0 0.0
      %6991 = vmatpush1.msra.mxu0 0.0
      %6992 = vmatprep.subr.mxu0 0.0
      %6993 = vmatpush1.msra.mxu0 0.0
      %6994 = vmatprep.subr.mxu0 0.0
      %6995 = vmatpush1.msra.mxu0 0.0
      %6996 = vmatprep.subr.mxu0 0.0
      %6997 = vmatpush1.msra.mxu0 0.0
      %6998 = vmatprep.subr.mxu0 0.0
      %6999 = vmatpush1.msra.mxu0 0.0
      %7000 = vmatprep.subr.mxu0 0.0
      %7001 = vmatpush1.msra.mxu0 0.0
      %7002 = vmatprep.subr.mxu0 0.0
      %7003 = vmatpush1.msra.mxu0 0.0
      %7004 = vmatprep.subr.mxu0 0.0
      %7005 = vmatpush1.msra.mxu0 0.0
      %7006 = vmatprep.subr.mxu0 0.0
      %7007 = vmatpush1.msra.mxu0 0.0
      %7008 = vmatprep.subr.mxu0 0.0
      %7009 = vmatpush1.msra.mxu0 0.0
      %7010 = vmatprep.subr.mxu0 0.0
      %7011 = vmatpush1.msra.mxu0 0.0
      %7012 = vmatprep.subr.mxu0 0.0
      %7013 = vmatpush1.msra.mxu0 0.0
      %7014 = vmatprep.subr.mxu0 0.0
      %7015 = vmatpush1.msra.mxu0 0.0
      %7016 = vmatprep.subr.mxu0 0.0
      %7017 = vmatpush1.msra.mxu0 0.0
      %7018 = vmatprep.subr.mxu0 0.0
      %7019 = vmatpush1.msra.mxu0 0.0
      %7020 = vmatprep.subr.mxu0 0.0
      %7021 = vmatpush1.msra.mxu0 0.0
      %7022 = vmatprep.subr.mxu0 0.0
      %7023 = vmatpush1.msra.mxu0 0.0
      %7024 = vmatprep.subr.mxu0 0.0
      %7025 = vmatpush1.msra.mxu0 0.0
      %7026 = vmatprep.subr.mxu0 0.0
      %7027 = vmatpush1.msra.mxu0 0.0
      %7028 = vmatprep.subr.mxu0 0.0
      %7029 = vmatpush1.msra.mxu0 0.0
      %7030 = vmatprep.subr.mxu0 0.0
      %7031 = vmatpush1.msra.mxu0 0.0
      %7032 = vmatprep.subr.mxu0 0.0
      %7033 = vmatpush1.msra.mxu0 0.0
      %7034 = vmatprep.subr.mxu0 0.0
      %7035 = vmatpush1.msra.mxu0 0.0
      %7036 = vmatprep.subr.mxu0 0.0
      %7037 = vmatpush1.msra.mxu0 0.0
      %7038 = vmatprep.subr.mxu0 0.0
      %7039 = vmatpush1.msra.mxu0 0.0
      %7040 = vmatprep.subr.mxu0 0.0
      %7041 = vmatpush1.msra.mxu0 0.0
      %7042 = vmatprep.subr.mxu0 0.0
      %7043 = vmatpush1.msra.mxu0 0.0
      %7044 = vmatprep.subr.mxu0 0.0
      %7045 = vmatpush1.msra.mxu0 0.0
      %7046 = vmatprep.subr.mxu0 0.0
      %7047 = vmatpush1.msra.mxu0 0.0
      %7048 = vmatprep.subr.mxu0 0.0
      %7049 = vmatpush1.msra.mxu0 0.0
      %7050 = vmatprep.mubr.f32.mxu0 0.0
      %v7051 = vand.u32 %v269, 4294901760
      %7052 = vmatmul.mubr.f32.gmra.mrb[0].mxu0 %v7051
      %v7053 = vpop.f32.mrb[0].mxu0
      %v7054 = vadd.f32 %v6807, %v7053
      %v7055 = vpop.f32.mrb[0].mxu0
      %7056 = vmatprep.mubr.f32.mxu0 0.0
      %v7057 = vand.u32 %v272, 4294901760
      %7058 = vmatmul.mubr.f32.gmra.mrb[0].mxu0 %v7057
      %v7059 = vpop.f32.mrb[0].mxu0
      %v7060 = vadd.f32 %v6813, %v7059
      %v7061 = vpop.f32.mrb[0].mxu0
      %7062 = vmatprep.mubr.f32.mxu0 0.0
      %v7063 = vand.u32 %v275, 4294901760
      %7064 = vmatmul.mubr.f32.gmra.mrb[0].mxu0 %v7063
      %v7065 = vpop.f32.mrb[0].mxu0
      %v7066 = vadd.f32 %v6819, %v7065
      %v7067 = vpop.f32.mrb[0].mxu0
      %7068 = vmatprep.mubr.f32.mxu0 0.0
      %v7069 = vand.u32 %v278, 4294901760
      %7070 = vmatmul.mubr.f32.gmra.mrb[0].mxu0 %v7069
      %v7071 = vpop.f32.mrb[0].mxu0
      %v7072 = vadd.f32 %v6825, %v7071
      %v7073 = vpop.f32.mrb[0].mxu0
      %7074 = vmatprep.mubr.f32.mxu0 0.0
      %v7075 = vand.u32 %v281, 4294901760
      %7076 = vmatmul.mubr.f32.gmra.mrb[0].mxu0 %v7075
      %v7077 = vpop.f32.mrb[0].mxu0
      %v7078 = vadd.f32 %v6831, %v7077
      %v7079 = vpop.f32.mrb[0].mxu0
      %7080 = vmatprep.mubr.f32.mxu0 0.0
      %v7081 = vand.u32 %v284, 4294901760
      %7082 = vmatmul.mubr.f32.gmra.mrb[0].mxu0 %v7081
      %v7083 = vpop.f32.mrb[0].mxu0
      %v7084 = vadd.f32 %v6837, %v7083
      %v7085 = vpop.f32.mrb[0].mxu0
      %7086 = vmatprep.mubr.f32.mxu0 0.0
      %v7087 = vand.u32 %v287, 4294901760
      %7088 = vmatmul.mubr.f32.gmra.mrb[0].mxu0 %v7087
      %v7089 = vpop.f32.mrb[0].mxu0
      %v7090 = vadd.f32 %v6843, %v7089
      %v7091 = vpop.f32.mrb[0].mxu0
      %7092 = vmatprep.mubr.f32.mxu0 0.0
      %v7093 = vand.u32 %v290, 4294901760
      %7094 = vmatmul.mubr.f32.gmra.mrb[0].mxu0 %v7093
      %v7095 = vpop.f32.mrb[0].mxu0
      %v7096 = vadd.f32 %v6849, %v7095
      %v7097 = vpop.f32.mrb[0].mxu0
      %7098 = vmatprep.mubr.f32.mxu0 0.0
      %v7099 = vand.u32 %v293, 4294901760
      %7100 = vmatmul.mubr.f32.gmra.mrb[0].mxu0 %v7099
      %v7101 = vpop.f32.mrb[0].mxu0
      %v7102 = vadd.f32 %v6855, %v7101
      %v7103 = vpop.f32.mrb[0].mxu0
      %7104 = vmatprep.mubr.f32.mxu0 0.0
      %v7105 = vand.u32 %v296, 4294901760
      %7106 = vmatmul.mubr.f32.gmra.mrb[0].mxu0 %v7105
      %v7107 = vpop.f32.mrb[0].mxu0
      %v7108 = vadd.f32 %v6861, %v7107
      %v7109 = vpop.f32.mrb[0].mxu0
      %7110 = vmatprep.mubr.f32.mxu0 0.0
      %v7111 = vand.u32 %v299, 4294901760
      %7112 = vmatmul.mubr.f32.gmra.mrb[0].mxu0 %v7111
      %v7113 = vpop.f32.mrb[0].mxu0
      %v7114 = vadd.f32 %v6867, %v7113
      %v7115 = vpop.f32.mrb[0].mxu0
      %7116 = vmatprep.mubr.f32.mxu0 0.0
      %v7117 = vand.u32 %v302, 4294901760
      %7118 = vmatmul.mubr.f32.gmra.mrb[0].mxu0 %v7117
      %v7119 = vpop.f32.mrb[0].mxu0
      %v7120 = vadd.f32 %v6873, %v7119
      %v7121 = vpop.f32.mrb[0].mxu0
      %7122 = vmatprep.mubr.f32.mxu0 0.0
      %v7123 = vand.u32 %v305, 4294901760
      %7124 = vmatmul.mubr.f32.gmra.mrb[0].mxu0 %v7123
      %v7125 = vpop.f32.mrb[0].mxu0
      %v7126 = vadd.f32 %v6879, %v7125
      %v7127 = vpop.f32.mrb[0].mxu0
      %7128 = vmatprep.mubr.f32.mxu0 0.0
      %v7129 = vand.u32 %v308, 4294901760
      %7130 = vmatmul.mubr.f32.gmra.mrb[0].mxu0 %v7129
      %v7131 = vpop.f32.mrb[0].mxu0
      %v7132 = vadd.f32 %v6885, %v7131
      %v7133 = vpop.f32.mrb[0].mxu0
      %7134 = vmatprep.mubr.f32.mxu0 0.0
      %v7135 = vand.u32 %v311, 4294901760
      %7136 = vmatmul.mubr.f32.gmra.mrb[0].mxu0 %v7135
      %v7137 = vpop.f32.mrb[0].mxu0
      %v7138 = vadd.f32 %v6891, %v7137
      %v7139 = vpop.f32.mrb[0].mxu0
      %7140 = vmatprep.mubr.f32.mxu0 0.0
      %v7141 = vand.u32 %v314, 4294901760
      %7142 = vmatmul.mubr.f32.gmra.mrb[0].mxu0 %v7141
      %v7143 = vpop.f32.mrb[0].mxu0
      %v7144 = vadd.f32 %v6897, %v7143
      %v7145 = vpop.f32.mrb[0].mxu0
      %7146 = vmatprep.mubr.f32.mxu0 0.0
      %v7147 = vand.u32 %v317, 4294901760
      %7148 = vmatmul.mubr.f32.gmra.mrb[0].mxu0 %v7147
      %v7149 = vpop.f32.mrb[0].mxu0
      %v7150 = vadd.f32 %v6903, %v7149
      %v7151 = vpop.f32.mrb[0].mxu0
      %7152 = vmatprep.mubr.f32.mxu0 0.0
      %v7153 = vand.u32 %v320, 4294901760
      %7154 = vmatmul.mubr.f32.gmra.mrb[0].mxu0 %v7153
      %v7155 = vpop.f32.mrb[0].mxu0
      %v7156 = vadd.f32 %v6909, %v7155
      %v7157 = vpop.f32.mrb[0].mxu0
      %7158 = vmatprep.mubr.f32.mxu0 0.0
      %v7159 = vand.u32 %v323, 4294901760
      %7160 = vmatmul.mubr.f32.gmra.mrb[0].mxu0 %v7159
      %v7161 = vpop.f32.mrb[0].mxu0
      %v7162 = vadd.f32 %v6915, %v7161
      %v7163 = vpop.f32.mrb[0].mxu0
      %7164 = vmatprep.mubr.f32.mxu0 0.0
      %v7165 = vand.u32 %v326, 4294901760
      %7166 = vmatmul.mubr.f32.gmra.mrb[0].mxu0 %v7165
      %v7167 = vpop.f32.mrb[0].mxu0
      %v7168 = vadd.f32 %v6921, %v7167
      %v7169 = vpop.f32.mrb[0].mxu0
      %7170 = vmatprep.mubr.f32.mxu0 0.0
      %v7171 = vand.u32 %v329, 4294901760
      %7172 = vmatmul.mubr.f32.gmra.mrb[0].mxu0 %v7171
      %v7173 = vpop.f32.mrb[0].mxu0
      %v7174 = vadd.f32 %v6927, %v7173
      %v7175 = vpop.f32.mrb[0].mxu0
      %7176 = vmatprep.mubr.f32.mxu0 0.0
      %v7177 = vand.u32 %v332, 4294901760
      %7178 = vmatmul.mubr.f32.gmra.mrb[0].mxu0 %v7177
      %v7179 = vpop.f32.mrb[0].mxu0
      %v7180 = vadd.f32 %v6933, %v7179
      %v7181 = vpop.f32.mrb[0].mxu0
      %7182 = vmatprep.mubr.f32.mxu0 0.0
      %v7183 = vand.u32 %v335, 4294901760
      %7184 = vmatmul.mubr.f32.gmra.mrb[0].mxu0 %v7183
      %v7185 = vpop.f32.mrb[0].mxu0
      %v7186 = vadd.f32 %v6939, %v7185
      %v7187 = vpop.f32.mrb[0].mxu0
      %7188 = vmatprep.mubr.f32.mxu0 0.0
      %v7189 = vand.u32 %v338, 4294901760
      %7190 = vmatmul.mubr.f32.gmra.mrb[0].mxu0 %v7189
      %v7191 = vpop.f32.mrb[0].mxu0
      %v7192 = vadd.f32 %v6945, %v7191
      %v7193 = vpop.f32.mrb[0].mxu0
      %7194 = vmatprep.mubr.f32.mxu0 0.0
      %v7195 = vand.u32 %v341, 4294901760
      %7196 = vmatmul.mubr.f32.gmra.mrb[0].mxu0 %v7195
      %v7197 = vpop.f32.mrb[0].mxu0
      %v7198 = vadd.f32 %v6951, %v7197
      %v7199 = vpop.f32.mrb[0].mxu0
      %7200 = vmatprep.mubr.f32.mxu0 0.0
      %v7201 = vand.u32 %v344, 4294901760
      %7202 = vmatmul.mubr.f32.gmra.mrb[0].mxu0 %v7201
      %v7203 = vpop.f32.mrb[0].mxu0
      %v7204 = vadd.f32 %v6957, %v7203
      %v7205 = vpop.f32.mrb[0].mxu0
      %7206 = vmatprep.mubr.f32.mxu0 0.0
      %v7207 = vand.u32 %v3772, 4294901760
      %7208 = vmatmul.mubr.f32.gmra.mrb[0].mxu0 %v7207
      %v7209 = vpop.f32.mrb[0].mxu0
      %v7210 = vadd.f32 %v6963, %v7209
      %v7211 = vpop.f32.mrb[0].mxu0
      %7212 = vmatprep.mubr.f32.mxu0 0.0
      %v7213 = vand.u32 %v3775, 4294901760
      %7214 = vmatmul.mubr.f32.gmra.mrb[0].mxu0 %v7213
      %v7215 = vpop.f32.mrb[0].mxu0
      %v7216 = vadd.f32 %v6969, %v7215
      %v7217 = vpop.f32.mrb[0].mxu0
      %7218 = vmatprep.mubr.f32.mxu0 0.0
      %v7219 = vand.u32 %v5517, 4294901760
      %7220 = vmatmul.mubr.f32.gmra.mrb[0].mxu0 %v7219
      %v7221 = vpop.f32.mrb[0].mxu0
      %v7222 = vadd.f32 %v6975, %v7221
      %v7223 = vpop.f32.mrb[0].mxu0
      %7224 = vmatprep.mubr.f32.mxu0 0.0
      %v7225 = vand.u32 %v5520, 4294901760
      %7226 = vmatmul.mubr.f32.gmra.mrb[0].mxu0 %v7225
      %v7227 = vpop.f32.mrb[0].mxu0
      %v7228 = vadd.f32 %v6981, %v7227
      %v7229 = vpop.f32.mrb[0].mxu0
      %7230 = vdwg.mxu0
      %v7231 = vadd.f32 %v5486, %v7054
      %v7232 = vadd.f32 %v5487, %v7060
      %v7233 = vadd.f32 %v5488, %v7066
      %v7234 = vadd.f32 %v5489, %v7072
      %v7235 = vadd.f32 %v5490, %v7078
      %v7236 = vadd.f32 %v5491, %v7084
      %v7237 = vadd.f32 %v5492, %v7090
      %v7238 = vadd.f32 %v5493, %v7096
      %v7239 = vadd.f32 %v5494, %v7102
      %v7240 = vadd.f32 %v5495, %v7108
      %v7241 = vadd.f32 %v5496, %v7114
      %v7242 = vadd.f32 %v5497, %v7120
      %v7243 = vadd.f32 %v5498, %v7126
      %v7244 = vadd.f32 %v5499, %v7132
      %v7245 = vadd.f32 %v5500, %v7138
      %v7246 = vadd.f32 %v5501, %v7144
      %v7247 = vadd.f32 %v5502, %v7150
      %v7248 = vadd.f32 %v5503, %v7156
      %v7249 = vadd.f32 %v5504, %v7162
      %v7250 = vadd.f32 %v5505, %v7168
      %v7251 = vadd.f32 %v5506, %v7174
      %v7252 = vadd.f32 %v5507, %v7180
      %v7253 = vadd.f32 %v5508, %v7186
      %v7254 = vadd.f32 %v5509, %v7192
      %v7255 = vadd.f32 %v5510, %v7198
      %v7256 = vadd.f32 %v5511, %v7204
      %v7257 = vadd.f32 %v5512, %v7210
      %v7258 = vadd.f32 %v5513, %v7216
      %v7259 = vadd.f32 %v5514, %v7222
      %v7260 = vadd.f32 %v5515, %v7228
      %v7262 = vsel %vm255, %v243, 0
      %v7265 = vsel %vm255, %v244, 0
      %v7268 = vsel %vm346, %v254, 0
      %7270 = vmatprep.subr.mxu0 0.0
      %v7271 = vand.u32 %v253, 4294901760
      %7272 = vmatpush1.msra.mxu0 %v7271
      %7273 = vmatprep.subr.mxu0 0.0
      %v7274 = vand.u32 %v7268, 4294901760
      %7275 = vmatpush1.msra.mxu0 %v7274
      %7276 = vmatprep.subr.mxu0 0.0
      %7277 = vmatpush1.msra.mxu0 0.0
      %7278 = vmatprep.subr.mxu0 0.0
      %7279 = vmatpush1.msra.mxu0 0.0
      %7280 = vmatprep.subr.mxu0 0.0
      %7281 = vmatpush1.msra.mxu0 0.0
      %7282 = vmatprep.subr.mxu0 0.0
      %7283 = vmatpush1.msra.mxu0 0.0
      %7284 = vmatprep.subr.mxu0 0.0
      %7285 = vmatpush1.msra.mxu0 0.0
      %7286 = vmatprep.subr.mxu0 0.0
      %7287 = vmatpush1.msra.mxu0 0.0
      %7288 = vmatprep.subr.mxu0 0.0
      %7289 = vmatpush1.msra.mxu0 0.0
      %7290 = vmatprep.subr.mxu0 0.0
      %7291 = vmatpush1.msra.mxu0 0.0
      %7292 = vmatprep.subr.mxu0 0.0
      %7293 = vmatpush1.msra.mxu0 0.0
      %7294 = vmatprep.subr.mxu0 0.0
      %7295 = vmatpush1.msra.mxu0 0.0
      %7296 = vmatprep.subr.mxu0 0.0
      %7297 = vmatpush1.msra.mxu0 0.0
      %7298 = vmatprep.subr.mxu0 0.0
      %7299 = vmatpush1.msra.mxu0 0.0
      %7300 = vmatprep.subr.mxu0 0.0
      %7301 = vmatpush1.msra.mxu0 0.0
      %7302 = vmatprep.subr.mxu0 0.0
      %7303 = vmatpush1.msra.mxu0 0.0
      %7304 = vmatprep.subr.mxu0 0.0
      %7305 = vmatpush1.msra.mxu0 0.0
      %7306 = vmatprep.subr.mxu0 0.0
      %7307 = vmatpush1.msra.mxu0 0.0
      %7308 = vmatprep.subr.mxu0 0.0
      %7309 = vmatpush1.msra.mxu0 0.0
      %7310 = vmatprep.subr.mxu0 0.0
      %7311 = vmatpush1.msra.mxu0 0.0
      %7312 = vmatprep.subr.mxu0 0.0
      %7313 = vmatpush1.msra.mxu0 0.0
      %7314 = vmatprep.subr.mxu0 0.0
      %7315 = vmatpush1.msra.mxu0 0.0
      %7316 = vmatprep.subr.mxu0 0.0
      %7317 = vmatpush1.msra.mxu0 0.0
      %7318 = vmatprep.subr.mxu0 0.0
      %7319 = vmatpush1.msra.mxu0 0.0
      %7320 = vmatprep.subr.mxu0 0.0
      %7321 = vmatpush1.msra.mxu0 0.0
      %7322 = vmatprep.subr.mxu0 0.0
      %7323 = vmatpush1.msra.mxu0 0.0
      %7324 = vmatprep.subr.mxu0 0.0
      %7325 = vmatpush1.msra.mxu0 0.0
      %7326 = vmatprep.subr.mxu0 0.0
      %7327 = vmatpush1.msra.mxu0 0.0
      %7328 = vmatprep.subr.mxu0 0.0
      %7329 = vmatpush1.msra.mxu0 0.0
      %7330 = vmatprep.subr.mxu0 0.0
      %7331 = vmatpush1.msra.mxu0 0.0
      %7332 = vmatprep.subr.mxu0 0.0
      %7333 = vmatpush1.msra.mxu0 0.0
      %7334 = vmatprep.subr.mxu0 0.0
      %7335 = vmatpush1.msra.mxu0 0.0
      %7336 = vmatprep.mubr.f32.mxu0 0.0
      %v7337 = vand.u32 %v275, 4294901760
      %v7338 = vsub.f32 %v275, %v7337
      %v7339 = vand.u32 %v7338, 4294901760
      %v7340 = vsub.f32 %v7338, %v7339
      %v7341 = vand.u32 %v7340, 4294901760
      %7342 = vmatmul.mubr.f32.gmra.mrb[0].mxu0 %v7341
      %v7343 = vpop.f32.mrb[0].mxu0
      %v7344 = vadd.f32 0.0, %v7343
      %v7345 = vpop.f32.mrb[0].mxu0
      %7346 = vmatprep.mubr.f32.mxu0 0.0
      %v7347 = vand.u32 %v278, 4294901760
      %v7348 = vsub.f32 %v278, %v7347
      %v7349 = vand.u32 %v7348, 4294901760
      %v7350 = vsub.f32 %v7348, %v7349
      %v7351 = vand.u32 %v7350, 4294901760
      %7352 = vmatmul.mubr.f32.gmra.mrb[0].mxu0 %v7351
      %v7353 = vpop.f32.mrb[0].mxu0
      %v7354 = vadd.f32 0.0, %v7353
      %v7355 = vpop.f32.mrb[0].mxu0
      %7356 = vmatprep.mubr.f32.mxu0 0.0
      %v7357 = vand.u32 %v281, 4294901760
      %v7358 = vsub.f32 %v281, %v7357
      %v7359 = vand.u32 %v7358, 4294901760
      %v7360 = vsub.f32 %v7358, %v7359
      %v7361 = vand.u32 %v7360, 4294901760
      %7362 = vmatmul.mubr.f32.gmra.mrb[0].mxu0 %v7361
      %v7363 = vpop.f32.mrb[0].mxu0
      %v7364 = vadd.f32 0.0, %v7363
      %v7365 = vpop.f32.mrb[0].mxu0
      %7366 = vmatprep.mubr.f32.mxu0 0.0
      %v7367 = vand.u32 %v284, 4294901760
      %v7368 = vsub.f32 %v284, %v7367
      %v7369 = vand.u32 %v7368, 4294901760
      %v7370 = vsub.f32 %v7368, %v7369
      %v7371 = vand.u32 %v7370, 4294901760
      %7372 = vmatmul.mubr.f32.gmra.mrb[0].mxu0 %v7371
      %v7373 = vpop.f32.mrb[0].mxu0
      %v7374 = vadd.f32 0.0, %v7373
      %v7375 = vpop.f32.mrb[0].mxu0
      %7376 = vmatprep.mubr.f32.mxu0 0.0
      %v7377 = vand.u32 %v287, 4294901760
      %v7378 = vsub.f32 %v287, %v7377
      %v7379 = vand.u32 %v7378, 4294901760
      %v7380 = vsub.f32 %v7378, %v7379
      %v7381 = vand.u32 %v7380, 4294901760
      %7382 = vmatmul.mubr.f32.gmra.mrb[0].mxu0 %v7381
      %v7383 = vpop.f32.mrb[0].mxu0
      %v7384 = vadd.f32 0.0, %v7383
      %v7385 = vpop.f32.mrb[0].mxu0
      %7386 = vmatprep.mubr.f32.mxu0 0.0
      %v7387 = vand.u32 %v290, 4294901760
      %v7388 = vsub.f32 %v290, %v7387
      %v7389 = vand.u32 %v7388, 4294901760
      %v7390 = vsub.f32 %v7388, %v7389
      %v7391 = vand.u32 %v7390, 4294901760
      %7392 = vmatmul.mubr.f32.gmra.mrb[0].mxu0 %v7391
      %v7393 = vpop.f32.mrb[0].mxu0
      %v7394 = vadd.f32 0.0, %v7393
      %v7395 = vpop.f32.mrb[0].mxu0
      %7396 = vmatprep.mubr.f32.mxu0 0.0
      %v7397 = vand.u32 %v293, 4294901760
      %v7398 = vsub.f32 %v293, %v7397
      %v7399 = vand.u32 %v7398, 4294901760
      %v7400 = vsub.f32 %v7398, %v7399
      %v7401 = vand.u32 %v7400, 4294901760
      %7402 = vmatmul.mubr.f32.gmra.mrb[0].mxu0 %v7401
      %v7403 = vpop.f32.mrb[0].mxu0
      %v7404 = vadd.f32 0.0, %v7403
      %v7405 = vpop.f32.mrb[0].mxu0
      %7406 = vmatprep.mubr.f32.mxu0 0.0
      %v7407 = vand.u32 %v296, 4294901760
      %v7408 = vsub.f32 %v296, %v7407
      %v7409 = vand.u32 %v7408, 4294901760
      %v7410 = vsub.f32 %v7408, %v7409
      %v7411 = vand.u32 %v7410, 4294901760
      %7412 = vmatmul.mubr.f32.gmra.mrb[0].mxu0 %v7411
      %v7413 = vpop.f32.mrb[0].mxu0
      %v7414 = vadd.f32 0.0, %v7413
      %v7415 = vpop.f32.mrb[0].mxu0
      %7416 = vmatprep.mubr.f32.mxu0 0.0
      %v7417 = vand.u32 %v299, 4294901760
      %v7418 = vsub.f32 %v299, %v7417
      %v7419 = vand.u32 %v7418, 4294901760
      %v7420 = vsub.f32 %v7418, %v7419
      %v7421 = vand.u32 %v7420, 4294901760
      %7422 = vmatmul.mubr.f32.gmra.mrb[0].mxu0 %v7421
      %v7423 = vpop.f32.mrb[0].mxu0
      %v7424 = vadd.f32 0.0, %v7423
      %v7425 = vpop.f32.mrb[0].mxu0
      %7426 = vmatprep.mubr.f32.mxu0 0.0
      %v7427 = vand.u32 %v302, 4294901760
      %v7428 = vsub.f32 %v302, %v7427
      %v7429 = vand.u32 %v7428, 4294901760
      %v7430 = vsub.f32 %v7428, %v7429
      %v7431 = vand.u32 %v7430, 4294901760
      %7432 = vmatmul.mubr.f32.gmra.mrb[0].mxu0 %v7431
      %v7433 = vpop.f32.mrb[0].mxu0
      %v7434 = vadd.f32 0.0, %v7433
      %v7435 = vpop.f32.mrb[0].mxu0
      %7436 = vmatprep.mubr.f32.mxu0 0.0
      %v7437 = vand.u32 %v305, 4294901760
      %v7438 = vsub.f32 %v305, %v7437
      %v7439 = vand.u32 %v7438, 4294901760
      %v7440 = vsub.f32 %v7438, %v7439
      %v7441 = vand.u32 %v7440, 4294901760
      %7442 = vmatmul.mubr.f32.gmra.mrb[0].mxu0 %v7441
      %v7443 = vpop.f32.mrb[0].mxu0
      %v7444 = vadd.f32 0.0, %v7443
      %v7445 = vpop.f32.mrb[0].mxu0
      %7446 = vmatprep.mubr.f32.mxu0 0.0
      %v7447 = vand.u32 %v308, 4294901760
      %v7448 = vsub.f32 %v308, %v7447
      %v7449 = vand.u32 %v7448, 4294901760
      %v7450 = vsub.f32 %v7448, %v7449
      %v7451 = vand.u32 %v7450, 4294901760
      %7452 = vmatmul.mubr.f32.gmra.mrb[0].mxu0 %v7451
      %v7453 = vpop.f32.mrb[0].mxu0
      %v7454 = vadd.f32 0.0, %v7453
      %v7455 = vpop.f32.mrb[0].mxu0
      %7456 = vmatprep.mubr.f32.mxu0 0.0
      %v7457 = vand.u32 %v311, 4294901760
      %v7458 = vsub.f32 %v311, %v7457
      %v7459 = vand.u32 %v7458, 4294901760
      %v7460 = vsub.f32 %v7458, %v7459
      %v7461 = vand.u32 %v7460, 4294901760
      %7462 = vmatmul.mubr.f32.gmra.mrb[0].mxu0 %v7461
      %v7463 = vpop.f32.mrb[0].mxu0
      %v7464 = vadd.f32 0.0, %v7463
      %v7465 = vpop.f32.mrb[0].mxu0
      %7466 = vmatprep.mubr.f32.mxu0 0.0
      %v7467 = vand.u32 %v314, 4294901760
      %v7468 = vsub.f32 %v314, %v7467
      %v7469 = vand.u32 %v7468, 4294901760
      %v7470 = vsub.f32 %v7468, %v7469
      %v7471 = vand.u32 %v7470, 4294901760
      %7472 = vmatmul.mubr.f32.gmra.mrb[0].mxu0 %v7471
      %v7473 = vpop.f32.mrb[0].mxu0
      %v7474 = vadd.f32 0.0, %v7473
      %v7475 = vpop.f32.mrb[0].mxu0
      %7476 = vmatprep.mubr.f32.mxu0 0.0
      %v7477 = vand.u32 %v317, 4294901760
      %v7478 = vsub.f32 %v317, %v7477
      %v7479 = vand.u32 %v7478, 4294901760
      %v7480 = vsub.f32 %v7478, %v7479
      %v7481 = vand.u32 %v7480, 4294901760
      %7482 = vmatmul.mubr.f32.gmra.mrb[0].mxu0 %v7481
      %v7483 = vpop.f32.mrb[0].mxu0
      %v7484 = vadd.f32 0.0, %v7483
      %v7485 = vpop.f32.mrb[0].mxu0
      %7486 = vmatprep.mubr.f32.mxu0 0.0
      %v7487 = vand.u32 %v320, 4294901760
      %v7488 = vsub.f32 %v320, %v7487
      %v7489 = vand.u32 %v7488, 4294901760
      %v7490 = vsub.f32 %v7488, %v7489
      %v7491 = vand.u32 %v7490, 4294901760
      %7492 = vmatmul.mubr.f32.gmra.mrb[0].mxu0 %v7491
      %v7493 = vpop.f32.mrb[0].mxu0
      %v7494 = vadd.f32 0.0, %v7493
      %v7495 = vpop.f32.mrb[0].mxu0
      %7496 = vmatprep.mubr.f32.mxu0 0.0
      %v7497 = vand.u32 %v323, 4294901760
      %v7498 = vsub.f32 %v323, %v7497
      %v7499 = vand.u32 %v7498, 4294901760
      %v7500 = vsub.f32 %v7498, %v7499
      %v7501 = vand.u32 %v7500, 4294901760
      %7502 = vmatmul.mubr.f32.gmra.mrb[0].mxu0 %v7501
      %v7503 = vpop.f32.mrb[0].mxu0
      %v7504 = vadd.f32 0.0, %v7503
      %v7505 = vpop.f32.mrb[0].mxu0
      %7506 = vmatprep.mubr.f32.mxu0 0.0
      %v7507 = vand.u32 %v326, 4294901760
      %v7508 = vsub.f32 %v326, %v7507
      %v7509 = vand.u32 %v7508, 4294901760
      %v7510 = vsub.f32 %v7508, %v7509
      %v7511 = vand.u32 %v7510, 4294901760
      %7512 = vmatmul.mubr.f32.gmra.mrb[0].mxu0 %v7511
      %v7513 = vpop.f32.mrb[0].mxu0
      %v7514 = vadd.f32 0.0, %v7513
      %v7515 = vpop.f32.mrb[0].mxu0
      %7516 = vmatprep.mubr.f32.mxu0 0.0
      %v7517 = vand.u32 %v329, 4294901760
      %v7518 = vsub.f32 %v329, %v7517
      %v7519 = vand.u32 %v7518, 4294901760
      %v7520 = vsub.f32 %v7518, %v7519
      %v7521 = vand.u32 %v7520, 4294901760
      %7522 = vmatmul.mubr.f32.gmra.mrb[0].mxu0 %v7521
      %v7523 = vpop.f32.mrb[0].mxu0
      %v7524 = vadd.f32 0.0, %v7523
      %v7525 = vpop.f32.mrb[0].mxu0
      %7526 = vmatprep.mubr.f32.mxu0 0.0
      %v7527 = vand.u32 %v332, 4294901760
      %v7528 = vsub.f32 %v332, %v7527
      %v7529 = vand.u32 %v7528, 4294901760
      %v7530 = vsub.f32 %v7528, %v7529
      %v7531 = vand.u32 %v7530, 4294901760
      %7532 = vmatmul.mubr.f32.gmra.mrb[0].mxu0 %v7531
      %v7533 = vpop.f32.mrb[0].mxu0
      %v7534 = vadd.f32 0.0, %v7533
      %v7535 = vpop.f32.mrb[0].mxu0
      %7536 = vmatprep.mubr.f32.mxu0 0.0
      %v7537 = vand.u32 %v335, 4294901760
      %v7538 = vsub.f32 %v335, %v7537
      %v7539 = vand.u32 %v7538, 4294901760
      %v7540 = vsub.f32 %v7538, %v7539
      %v7541 = vand.u32 %v7540, 4294901760
      %7542 = vmatmul.mubr.f32.gmra.mrb[0].mxu0 %v7541
      %v7543 = vpop.f32.mrb[0].mxu0
      %v7544 = vadd.f32 0.0, %v7543
      %v7545 = vpop.f32.mrb[0].mxu0
      %7546 = vmatprep.mubr.f32.mxu0 0.0
      %v7547 = vand.u32 %v338, 4294901760
      %v7548 = vsub.f32 %v338, %v7547
      %v7549 = vand.u32 %v7548, 4294901760
      %v7550 = vsub.f32 %v7548, %v7549
      %v7551 = vand.u32 %v7550, 4294901760
      %7552 = vmatmul.mubr.f32.gmra.mrb[0].mxu0 %v7551
      %v7553 = vpop.f32.mrb[0].mxu0
      %v7554 = vadd.f32 0.0, %v7553
      %v7555 = vpop.f32.mrb[0].mxu0
      %7556 = vmatprep.mubr.f32.mxu0 0.0
      %v7557 = vand.u32 %v341, 4294901760
      %v7558 = vsub.f32 %v341, %v7557
      %v7559 = vand.u32 %v7558, 4294901760
      %v7560 = vsub.f32 %v7558, %v7559
      %v7561 = vand.u32 %v7560, 4294901760
      %7562 = vmatmul.mubr.f32.gmra.mrb[0].mxu0 %v7561
      %v7563 = vpop.f32.mrb[0].mxu0
      %v7564 = vadd.f32 0.0, %v7563
      %v7565 = vpop.f32.mrb[0].mxu0
      %7566 = vmatprep.mubr.f32.mxu0 0.0
      %v7567 = vand.u32 %v344, 4294901760
      %v7568 = vsub.f32 %v344, %v7567
      %v7569 = vand.u32 %v7568, 4294901760
      %v7570 = vsub.f32 %v7568, %v7569
      %v7571 = vand.u32 %v7570, 4294901760
      %7572 = vmatmul.mubr.f32.gmra.mrb[0].mxu0 %v7571
      %v7573 = vpop.f32.mrb[0].mxu0
      %v7574 = vadd.f32 0.0, %v7573
      %v7575 = vpop.f32.mrb[0].mxu0
      %7576 = vmatprep.mubr.f32.mxu0 0.0
      %v7577 = vand.u32 %v3772, 4294901760
      %v7578 = vsub.f32 %v3772, %v7577
      %v7579 = vand.u32 %v7578, 4294901760
      %v7580 = vsub.f32 %v7578, %v7579
      %v7581 = vand.u32 %v7580, 4294901760
      %7582 = vmatmul.mubr.f32.gmra.mrb[0].mxu0 %v7581
      %v7583 = vpop.f32.mrb[0].mxu0
      %v7584 = vadd.f32 0.0, %v7583
      %v7585 = vpop.f32.mrb[0].mxu0
      %7586 = vmatprep.mubr.f32.mxu0 0.0
      %v7587 = vand.u32 %v3775, 4294901760
      %v7588 = vsub.f32 %v3775, %v7587
      %v7589 = vand.u32 %v7588, 4294901760
      %v7590 = vsub.f32 %v7588, %v7589
      %v7591 = vand.u32 %v7590, 4294901760
      %7592 = vmatmul.mubr.f32.gmra.mrb[0].mxu0 %v7591
      %v7593 = vpop.f32.mrb[0].mxu0
      %v7594 = vadd.f32 0.0, %v7593
      %v7595 = vpop.f32.mrb[0].mxu0
      %7596 = vmatprep.mubr.f32.mxu0 0.0
      %v7597 = vand.u32 %v5517, 4294901760
      %v7598 = vsub.f32 %v5517, %v7597
      %v7599 = vand.u32 %v7598, 4294901760
      %v7600 = vsub.f32 %v7598, %v7599
      %v7601 = vand.u32 %v7600, 4294901760
      %7602 = vmatmul.mubr.f32.gmra.mrb[0].mxu0 %v7601
      %v7603 = vpop.f32.mrb[0].mxu0
      %v7604 = vadd.f32 0.0, %v7603
      %v7605 = vpop.f32.mrb[0].mxu0
      %7606 = vmatprep.mubr.f32.mxu0 0.0
      %v7607 = vand.u32 %v5520, 4294901760
      %v7608 = vsub.f32 %v5520, %v7607
      %v7609 = vand.u32 %v7608, 4294901760
      %v7610 = vsub.f32 %v7608, %v7609
      %v7611 = vand.u32 %v7610, 4294901760
      %7612 = vmatmul.mubr.f32.gmra.mrb[0].mxu0 %v7611
      %v7613 = vpop.f32.mrb[0].mxu0
      %v7614 = vadd.f32 0.0, %v7613
      %v7615 = vpop.f32.mrb[0].mxu0
      %7616 = vmatprep.mubr.f32.mxu0 0.0
      %v7617 = vand.u32 %v7262, 4294901760
      %v7618 = vsub.f32 %v7262, %v7617
      %v7619 = vand.u32 %v7618, 4294901760
      %v7620 = vsub.f32 %v7618, %v7619
      %v7621 = vand.u32 %v7620, 4294901760
      %7622 = vmatmul.mubr.f32.gmra.mrb[0].mxu0 %v7621
      %v7623 = vpop.f32.mrb[0].mxu0
      %v7624 = vadd.f32 0.0, %v7623
      %v7625 = vpop.f32.mrb[0].mxu0
      %7626 = vmatprep.mubr.f32.mxu0 0.0
      %v7627 = vand.u32 %v7265, 4294901760
      %v7628 = vsub.f32 %v7265, %v7627
      %v7629 = vand.u32 %v7628, 4294901760
      %v7630 = vsub.f32 %v7628, %v7629
      %v7631 = vand.u32 %v7630, 4294901760
      %7632 = vmatmul.mubr.f32.gmra.mrb[0].mxu0 %v7631
      %v7633 = vpop.f32.mrb[0].mxu0
      %v7634 = vadd.f32 0.0, %v7633
      %v7635 = vpop.f32.mrb[0].mxu0
      %7636 = vdwg.mxu0
      %7637 = vmatprep.subr.mxu0 0.0
      %v7638 = vand.u32 %v253, 4294901760
      %v7639 = vsub.f32 %v253, %v7638
      %v7640 = vand.u32 %v7639, 4294901760
      %v7641 = vsub.f32 %v7639, %v7640
      %v7642 = vand.u32 %v7641, 4294901760
      %7643 = vmatpush1.msra.mxu0 %v7642
      %7644 = vmatprep.subr.mxu0 0.0
      %v7645 = vand.u32 %v7268, 4294901760
      %v7646 = vsub.f32 %v7268, %v7645
      %v7647 = vand.u32 %v7646, 4294901760
      %v7648 = vsub.f32 %v7646, %v7647
      %v7649 = vand.u32 %v7648, 4294901760
      %7650 = vmatpush1.msra.mxu0 %v7649
      %7651 = vmatprep.subr.mxu0 0.0
      %7652 = vmatpush1.msra.mxu0 0.0
      %7653 = vmatprep.subr.mxu0 0.0
      %7654 = vmatpush1.msra.mxu0 0.0
      %7655 = vmatprep.subr.mxu0 0.0
      %7656 = vmatpush1.msra.mxu0 0.0
      %7657 = vmatprep.subr.mxu0 0.0
      %7658 = vmatpush1.msra.mxu0 0.0
      %7659 = vmatprep.subr.mxu0 0.0
      %7660 = vmatpush1.msra.mxu0 0.0
      %7661 = vmatprep.subr.mxu0 0.0
      %7662 = vmatpush1.msra.mxu0 0.0
      %7663 = vmatprep.subr.mxu0 0.0
      %7664 = vmatpush1.msra.mxu0 0.0
      %7665 = vmatprep.subr.mxu0 0.0
      %7666 = vmatpush1.msra.mxu0 0.0
      %7667 = vmatprep.subr.mxu0 0.0
      %7668 = vmatpush1.msra.mxu0 0.0
      %7669 = vmatprep.subr.mxu0 0.0
      %7670 = vmatpush1.msra.mxu0 0.0
      %7671 = vmatprep.subr.mxu0 0.0
      %7672 = vmatpush1.msra.mxu0 0.0
      %7673 = vmatprep.subr.mxu0 0.0
      %7674 = vmatpush1.msra.mxu0 0.0
      %7675 = vmatprep.subr.mxu0 0.0
      %7676 = vmatpush1.msra.mxu0 0.0
      %7677 = vmatprep.subr.mxu0 0.0
      %7678 = vmatpush1.msra.mxu0 0.0
      %7679 = vmatprep.subr.mxu0 0.0
      %7680 = vmatpush1.msra.mxu0 0.0
      %7681 = vmatprep.subr.mxu0 0.0
      %7682 = vmatpush1.msra.mxu0 0.0
      %7683 = vmatprep.subr.mxu0 0.0
      %7684 = vmatpush1.msra.mxu0 0.0
      %7685 = vmatprep.subr.mxu0 0.0
      %7686 = vmatpush1.msra.mxu0 0.0
      %7687 = vmatprep.subr.mxu0 0.0
      %7688 = vmatpush1.msra.mxu0 0.0
      %7689 = vmatprep.subr.mxu0 0.0
      %7690 = vmatpush1.msra.mxu0 0.0
      %7691 = vmatprep.subr.mxu0 0.0
      %7692 = vmatpush1.msra.mxu0 0.0
      %7693 = vmatprep.subr.mxu0 0.0
      %7694 = vmatpush1.msra.mxu0 0.0
      %7695 = vmatprep.subr.mxu0 0.0
      %7696 = vmatpush1.msra.mxu0 0.0
      %7697 = vmatprep.subr.mxu0 0.0
      %7698 = vmatpush1.msra.mxu0 0.0
      %7699 = vmatprep.subr.mxu0 0.0
      %7700 = vmatpush1.msra.mxu0 0.0
      %7701 = vmatprep.subr.mxu0 0.0
      %7702 = vmatpush1.msra.mxu0 0.0
      %7703 = vmatprep.subr.mxu0 0.0
      %7704 = vmatpush1.msra.mxu0 0.0
      %7705 = vmatprep.subr.mxu0 0.0
      %7706 = vmatpush1.msra.mxu0 0.0
      %7707 = vmatprep.subr.mxu0 0.0
      %7708 = vmatpush1.msra.mxu0 0.0
      %7709 = vmatprep.subr.mxu0 0.0
      %7710 = vmatpush1.msra.mxu0 0.0
      %7711 = vmatprep.mubr.f32.mxu0 0.0
      %v7712 = vand.u32 %v275, 4294901760
      %7713 = vmatmul.mubr.f32.gmra.mrb[0].mxu0 %v7712
      %v7714 = vpop.f32.mrb[0].mxu0
      %v7715 = vadd.f32 %v7344, %v7714
      %v7716 = vpop.f32.mrb[0].mxu0
      %7717 = vmatprep.mubr.f32.mxu0 0.0
      %v7718 = vand.u32 %v278, 4294901760
      %7719 = vmatmul.mubr.f32.gmra.mrb[0].mxu0 %v7718
      %v7720 = vpop.f32.mrb[0].mxu0
      %v7721 = vadd.f32 %v7354, %v7720
      %v7722 = vpop.f32.mrb[0].mxu0
      %7723 = vmatprep.mubr.f32.mxu0 0.0
      %v7724 = vand.u32 %v281, 4294901760
      %7725 = vmatmul.mubr.f32.gmra.mrb[0].mxu0 %v7724
      %v7726 = vpop.f32.mrb[0].mxu0
      %v7727 = vadd.f32 %v7364, %v7726
      %v7728 = vpop.f32.mrb[0].mxu0
      %7729 = vmatprep.mubr.f32.mxu0 0.0
      %v7730 = vand.u32 %v284, 4294901760
      %7731 = vmatmul.mubr.f32.gmra.mrb[0].mxu0 %v7730
      %v7732 = vpop.f32.mrb[0].mxu0
      %v7733 = vadd.f32 %v7374, %v7732
      %v7734 = vpop.f32.mrb[0].mxu0
      %7735 = vmatprep.mubr.f32.mxu0 0.0
      %v7736 = vand.u32 %v287, 4294901760
      %7737 = vmatmul.mubr.f32.gmra.mrb[0].mxu0 %v7736
      %v7738 = vpop.f32.mrb[0].mxu0
      %v7739 = vadd.f32 %v7384, %v7738
      %v7740 = vpop.f32.mrb[0].mxu0
      %7741 = vmatprep.mubr.f32.mxu0 0.0
      %v7742 = vand.u32 %v290, 4294901760
      %7743 = vmatmul.mubr.f32.gmra.mrb[0].mxu0 %v7742
      %v7744 = vpop.f32.mrb[0].mxu0
      %v7745 = vadd.f32 %v7394, %v7744
      %v7746 = vpop.f32.mrb[0].mxu0
      %7747 = vmatprep.mubr.f32.mxu0 0.0
      %v7748 = vand.u32 %v293, 4294901760
      %7749 = vmatmul.mubr.f32.gmra.mrb[0].mxu0 %v7748
      %v7750 = vpop.f32.mrb[0].mxu0
      %v7751 = vadd.f32 %v7404, %v7750
      %v7752 = vpop.f32.mrb[0].mxu0
      %7753 = vmatprep.mubr.f32.mxu0 0.0
      %v7754 = vand.u32 %v296, 4294901760
      %7755 = vmatmul.mubr.f32.gmra.mrb[0].mxu0 %v7754
      %v7756 = vpop.f32.mrb[0].mxu0
      %v7757 = vadd.f32 %v7414, %v7756
      %v7758 = vpop.f32.mrb[0].mxu0
      %7759 = vmatprep.mubr.f32.mxu0 0.0
      %v7760 = vand.u32 %v299, 4294901760
      %7761 = vmatmul.mubr.f32.gmra.mrb[0].mxu0 %v7760
      %v7762 = vpop.f32.mrb[0].mxu0
      %v7763 = vadd.f32 %v7424, %v7762
      %v7764 = vpop.f32.mrb[0].mxu0
      %7765 = vmatprep.mubr.f32.mxu0 0.0
      %v7766 = vand.u32 %v302, 4294901760
      %7767 = vmatmul.mubr.f32.gmra.mrb[0].mxu0 %v7766
      %v7768 = vpop.f32.mrb[0].mxu0
      %v7769 = vadd.f32 %v7434, %v7768
      %v7770 = vpop.f32.mrb[0].mxu0
      %7771 = vmatprep.mubr.f32.mxu0 0.0
      %v7772 = vand.u32 %v305, 4294901760
      %7773 = vmatmul.mubr.f32.gmra.mrb[0].mxu0 %v7772
      %v7774 = vpop.f32.mrb[0].mxu0
      %v7775 = vadd.f32 %v7444, %v7774
      %v7776 = vpop.f32.mrb[0].mxu0
      %7777 = vmatprep.mubr.f32.mxu0 0.0
      %v7778 = vand.u32 %v308, 4294901760
      %7779 = vmatmul.mubr.f32.gmra.mrb[0].mxu0 %v7778
      %v7780 = vpop.f32.mrb[0].mxu0
      %v7781 = vadd.f32 %v7454, %v7780
      %v7782 = vpop.f32.mrb[0].mxu0
      %7783 = vmatprep.mubr.f32.mxu0 0.0
      %v7784 = vand.u32 %v311, 4294901760
      %7785 = vmatmul.mubr.f32.gmra.mrb[0].mxu0 %v7784
      %v7786 = vpop.f32.mrb[0].mxu0
      %v7787 = vadd.f32 %v7464, %v7786
      %v7788 = vpop.f32.mrb[0].mxu0
      %7789 = vmatprep.mubr.f32.mxu0 0.0
      %v7790 = vand.u32 %v314, 4294901760
      %7791 = vmatmul.mubr.f32.gmra.mrb[0].mxu0 %v7790
      %v7792 = vpop.f32.mrb[0].mxu0
      %v7793 = vadd.f32 %v7474, %v7792
      %v7794 = vpop.f32.mrb[0].mxu0
      %7795 = vmatprep.mubr.f32.mxu0 0.0
      %v7796 = vand.u32 %v317, 4294901760
      %7797 = vmatmul.mubr.f32.gmra.mrb[0].mxu0 %v7796
      %v7798 = vpop.f32.mrb[0].mxu0
      %v7799 = vadd.f32 %v7484, %v7798
      %v7800 = vpop.f32.mrb[0].mxu0
      %7801 = vmatprep.mubr.f32.mxu0 0.0
      %v7802 = vand.u32 %v320, 4294901760
      %7803 = vmatmul.mubr.f32.gmra.mrb[0].mxu0 %v7802
      %v7804 = vpop.f32.mrb[0].mxu0
      %v7805 = vadd.f32 %v7494, %v7804
      %v7806 = vpop.f32.mrb[0].mxu0
      %7807 = vmatprep.mubr.f32.mxu0 0.0
      %v7808 = vand.u32 %v323, 4294901760
      %7809 = vmatmul.mubr.f32.gmra.mrb[0].mxu0 %v7808
      %v7810 = vpop.f32.mrb[0].mxu0
      %v7811 = vadd.f32 %v7504, %v7810
      %v7812 = vpop.f32.mrb[0].mxu0
      %7813 = vmatprep.mubr.f32.mxu0 0.0
      %v7814 = vand.u32 %v326, 4294901760
      %7815 = vmatmul.mubr.f32.gmra.mrb[0].mxu0 %v7814
      %v7816 = vpop.f32.mrb[0].mxu0
      %v7817 = vadd.f32 %v7514, %v7816
      %v7818 = vpop.f32.mrb[0].mxu0
      %7819 = vmatprep.mubr.f32.mxu0 0.0
      %v7820 = vand.u32 %v329, 4294901760
      %7821 = vmatmul.mubr.f32.gmra.mrb[0].mxu0 %v7820
      %v7822 = vpop.f32.mrb[0].mxu0
      %v7823 = vadd.f32 %v7524, %v7822
      %v7824 = vpop.f32.mrb[0].mxu0
      %7825 = vmatprep.mubr.f32.mxu0 0.0
      %v7826 = vand.u32 %v332, 4294901760
      %7827 = vmatmul.mubr.f32.gmra.mrb[0].mxu0 %v7826
      %v7828 = vpop.f32.mrb[0].mxu0
      %v7829 = vadd.f32 %v7534, %v7828
      %v7830 = vpop.f32.mrb[0].mxu0
      %7831 = vmatprep.mubr.f32.mxu0 0.0
      %v7832 = vand.u32 %v335, 4294901760
      %7833 = vmatmul.mubr.f32.gmra.mrb[0].mxu0 %v7832
      %v7834 = vpop.f32.mrb[0].mxu0
      %v7835 = vadd.f32 %v7544, %v7834
      %v7836 = vpop.f32.mrb[0].mxu0
      %7837 = vmatprep.mubr.f32.mxu0 0.0
      %v7838 = vand.u32 %v338, 4294901760
      %7839 = vmatmul.mubr.f32.gmra.mrb[0].mxu0 %v7838
      %v7840 = vpop.f32.mrb[0].mxu0
      %v7841 = vadd.f32 %v7554, %v7840
      %v7842 = vpop.f32.mrb[0].mxu0
      %7843 = vmatprep.mubr.f32.mxu0 0.0
      %v7844 = vand.u32 %v341, 4294901760
      %7845 = vmatmul.mubr.f32.gmra.mrb[0].mxu0 %v7844
      %v7846 = vpop.f32.mrb[0].mxu0
      %v7847 = vadd.f32 %v7564, %v7846
      %v7848 = vpop.f32.mrb[0].mxu0
      %7849 = vmatprep.mubr.f32.mxu0 0.0
      %v7850 = vand.u32 %v344, 4294901760
      %7851 = vmatmul.mubr.f32.gmra.mrb[0].mxu0 %v7850
      %v7852 = vpop.f32.mrb[0].mxu0
      %v7853 = vadd.f32 %v7574, %v7852
      %v7854 = vpop.f32.mrb[0].mxu0
      %7855 = vmatprep.mubr.f32.mxu0 0.0
      %v7856 = vand.u32 %v3772, 4294901760
      %7857 = vmatmul.mubr.f32.gmra.mrb[0].mxu0 %v7856
      %v7858 = vpop.f32.mrb[0].mxu0
      %v7859 = vadd.f32 %v7584, %v7858
      %v7860 = vpop.f32.mrb[0].mxu0
      %7861 = vmatprep.mubr.f32.mxu0 0.0
      %v7862 = vand.u32 %v3775, 4294901760
      %7863 = vmatmul.mubr.f32.gmra.mrb[0].mxu0 %v7862
      %v7864 = vpop.f32.mrb[0].mxu0
      %v7865 = vadd.f32 %v7594, %v7864
      %v7866 = vpop.f32.mrb[0].mxu0
      %7867 = vmatprep.mubr.f32.mxu0 0.0
      %v7868 = vand.u32 %v5517, 4294901760
      %7869 = vmatmul.mubr.f32.gmra.mrb[0].mxu0 %v7868
      %v7870 = vpop.f32.mrb[0].mxu0
      %v7871 = vadd.f32 %v7604, %v7870
      %v7872 = vpop.f32.mrb[0].mxu0
      %7873 = vmatprep.mubr.f32.mxu0 0.0
      %v7874 = vand.u32 %v5520, 4294901760
      %7875 = vmatmul.mubr.f32.gmra.mrb[0].mxu0 %v7874
      %v7876 = vpop.f32.mrb[0].mxu0
      %v7877 = vadd.f32 %v7614, %v7876
      %v7878 = vpop.f32.mrb[0].mxu0
      %7879 = vmatprep.mubr.f32.mxu0 0.0
      %v7880 = vand.u32 %v7262, 4294901760
      %7881 = vmatmul.mubr.f32.gmra.mrb[0].mxu0 %v7880
      %v7882 = vpop.f32.mrb[0].mxu0
      %v7883 = vadd.f32 %v7624, %v7882
      %v7884 = vpop.f32.mrb[0].mxu0
      %7885 = vmatprep.mubr.f32.mxu0 0.0
      %v7886 = vand.u32 %v7265, 4294901760
      %7887 = vmatmul.mubr.f32.gmra.mrb[0].mxu0 %v7886
      %v7888 = vpop.f32.mrb[0].mxu0
      %v7889 = vadd.f32 %v7634, %v7888
      %v7890 = vpop.f32.mrb[0].mxu0
      %7891 = vdwg.mxu0
      %7892 = vmatprep.subr.mxu0 0.0
      %v7893 = vand.u32 %v253, 4294901760
      %v7894 = vsub.f32 %v253, %v7893
      %7895 = vmatpush1.msra.mxu0 %v7894
      %7896 = vmatprep.subr.mxu0 0.0
      %v7897 = vand.u32 %v7268, 4294901760
      %v7898 = vsub.f32 %v7268, %v7897
      %7899 = vmatpush1.msra.mxu0 %v7898
      %7900 = vmatprep.subr.mxu0 0.0
      %7901 = vmatpush1.msra.mxu0 0.0
      %7902 = vmatprep.subr.mxu0 0.0
      %7903 = vmatpush1.msra.mxu0 0.0
      %7904 = vmatprep.subr.mxu0 0.0
      %7905 = vmatpush1.msra.mxu0 0.0
      %7906 = vmatprep.subr.mxu0 0.0
      %7907 = vmatpush1.msra.mxu0 0.0
      %7908 = vmatprep.subr.mxu0 0.0
      %7909 = vmatpush1.msra.mxu0 0.0
      %7910 = vmatprep.subr.mxu0 0.0
      %7911 = vmatpush1.msra.mxu0 0.0
      %7912 = vmatprep.subr.mxu0 0.0
      %7913 = vmatpush1.msra.mxu0 0.0
      %7914 = vmatprep.subr.mxu0 0.0
      %7915 = vmatpush1.msra.mxu0 0.0
      %7916 = vmatprep.subr.mxu0 0.0
      %7917 = vmatpush1.msra.mxu0 0.0
      %7918 = vmatprep.subr.mxu0 0.0
      %7919 = vmatpush1.msra.mxu0 0.0
      %7920 = vmatprep.subr.mxu0 0.0
      %7921 = vmatpush1.msra.mxu0 0.0
      %7922 = vmatprep.subr.mxu0 0.0
      %7923 = vmatpush1.msra.mxu0 0.0
      %7924 = vmatprep.subr.mxu0 0.0
      %7925 = vmatpush1.msra.mxu0 0.0
      %7926 = vmatprep.subr.mxu0 0.0
      %7927 = vmatpush1.msra.mxu0 0.0
      %7928 = vmatprep.subr.mxu0 0.0
      %7929 = vmatpush1.msra.mxu0 0.0
      %7930 = vmatprep.subr.mxu0 0.0
      %7931 = vmatpush1.msra.mxu0 0.0
      %7932 = vmatprep.subr.mxu0 0.0
      %7933 = vmatpush1.msra.mxu0 0.0
      %7934 = vmatprep.subr.mxu0 0.0
      %7935 = vmatpush1.msra.mxu0 0.0
      %7936 = vmatprep.subr.mxu0 0.0
      %7937 = vmatpush1.msra.mxu0 0.0
      %7938 = vmatprep.subr.mxu0 0.0
      %7939 = vmatpush1.msra.mxu0 0.0
      %7940 = vmatprep.subr.mxu0 0.0
      %7941 = vmatpush1.msra.mxu0 0.0
      %7942 = vmatprep.subr.mxu0 0.0
      %7943 = vmatpush1.msra.mxu0 0.0
      %7944 = vmatprep.subr.mxu0 0.0
      %7945 = vmatpush1.msra.mxu0 0.0
      %7946 = vmatprep.subr.mxu0 0.0
      %7947 = vmatpush1.msra.mxu0 0.0
      %7948 = vmatprep.subr.mxu0 0.0
      %7949 = vmatpush1.msra.mxu0 0.0
      %7950 = vmatprep.subr.mxu0 0.0
      %7951 = vmatpush1.msra.mxu0 0.0
      %7952 = vmatprep.subr.mxu0 0.0
      %7953 = vmatpush1.msra.mxu0 0.0
      %7954 = vmatprep.subr.mxu0 0.0
      %7955 = vmatpush1.msra.mxu0 0.0
      %7956 = vmatprep.subr.mxu0 0.0
      %7957 = vmatpush1.msra.mxu0 0.0
      %7958 = vmatprep.subr.mxu0 0.0
      %7959 = vmatpush1.msra.mxu0 0.0
      %7960 = vmatprep.mubr.f32.mxu0 0.0
      %v7961 = vand.u32 %v275, 4294901760
      %v7962 = vsub.f32 %v275, %v7961
      %7963 = vmatmul.mubr.f32.gmra.mrb[0].mxu0 %v7962
      %v7964 = vpop.f32.mrb[0].mxu0
      %v7965 = vadd.f32 %v7715, %v7964
      %v7966 = vpop.f32.mrb[0].mxu0
      %7967 = vmatprep.mubr.f32.mxu0 0.0
      %v7968 = vand.u32 %v278, 4294901760
      %v7969 = vsub.f32 %v278, %v7968
      %7970 = vmatmul.mubr.f32.gmra.mrb[0].mxu0 %v7969
      %v7971 = vpop.f32.mrb[0].mxu0
      %v7972 = vadd.f32 %v7721, %v7971
      %v7973 = vpop.f32.mrb[0].mxu0
      %7974 = vmatprep.mubr.f32.mxu0 0.0
      %v7975 = vand.u32 %v281, 4294901760
      %v7976 = vsub.f32 %v281, %v7975
      %7977 = vmatmul.mubr.f32.gmra.mrb[0].mxu0 %v7976
      %v7978 = vpop.f32.mrb[0].mxu0
      %v7979 = vadd.f32 %v7727, %v7978
      %v7980 = vpop.f32.mrb[0].mxu0
      %7981 = vmatprep.mubr.f32.mxu0 0.0
      %v7982 = vand.u32 %v284, 4294901760
      %v7983 = vsub.f32 %v284, %v7982
      %7984 = vmatmul.mubr.f32.gmra.mrb[0].mxu0 %v7983
      %v7985 = vpop.f32.mrb[0].mxu0
      %v7986 = vadd.f32 %v7733, %v7985
      %v7987 = vpop.f32.mrb[0].mxu0
      %7988 = vmatprep.mubr.f32.mxu0 0.0
      %v7989 = vand.u32 %v287, 4294901760
      %v7990 = vsub.f32 %v287, %v7989
      %7991 = vmatmul.mubr.f32.gmra.mrb[0].mxu0 %v7990
      %v7992 = vpop.f32.mrb[0].mxu0
      %v7993 = vadd.f32 %v7739, %v7992
      %v7994 = vpop.f32.mrb[0].mxu0
      %7995 = vmatprep.mubr.f32.mxu0 0.0
      %v7996 = vand.u32 %v290, 4294901760
      %v7997 = vsub.f32 %v290, %v7996
      %7998 = vmatmul.mubr.f32.gmra.mrb[0].mxu0 %v7997
      %v7999 = vpop.f32.mrb[0].mxu0
      %v8000 = vadd.f32 %v7745, %v7999
      %v8001 = vpop.f32.mrb[0].mxu0
      %8002 = vmatprep.mubr.f32.mxu0 0.0
      %v8003 = vand.u32 %v293, 4294901760
      %v8004 = vsub.f32 %v293, %v8003
      %8005 = vmatmul.mubr.f32.gmra.mrb[0].mxu0 %v8004
      %v8006 = vpop.f32.mrb[0].mxu0
      %v8007 = vadd.f32 %v7751, %v8006
      %v8008 = vpop.f32.mrb[0].mxu0
      %8009 = vmatprep.mubr.f32.mxu0 0.0
      %v8010 = vand.u32 %v296, 4294901760
      %v8011 = vsub.f32 %v296, %v8010
      %8012 = vmatmul.mubr.f32.gmra.mrb[0].mxu0 %v8011
      %v8013 = vpop.f32.mrb[0].mxu0
      %v8014 = vadd.f32 %v7757, %v8013
      %v8015 = vpop.f32.mrb[0].mxu0
      %8016 = vmatprep.mubr.f32.mxu0 0.0
      %v8017 = vand.u32 %v299, 4294901760
      %v8018 = vsub.f32 %v299, %v8017
      %8019 = vmatmul.mubr.f32.gmra.mrb[0].mxu0 %v8018
      %v8020 = vpop.f32.mrb[0].mxu0
      %v8021 = vadd.f32 %v7763, %v8020
      %v8022 = vpop.f32.mrb[0].mxu0
      %8023 = vmatprep.mubr.f32.mxu0 0.0
      %v8024 = vand.u32 %v302, 4294901760
      %v8025 = vsub.f32 %v302, %v8024
      %8026 = vmatmul.mubr.f32.gmra.mrb[0].mxu0 %v8025
      %v8027 = vpop.f32.mrb[0].mxu0
      %v8028 = vadd.f32 %v7769, %v8027
      %v8029 = vpop.f32.mrb[0].mxu0
      %8030 = vmatprep.mubr.f32.mxu0 0.0
      %v8031 = vand.u32 %v305, 4294901760
      %v8032 = vsub.f32 %v305, %v8031
      %8033 = vmatmul.mubr.f32.gmra.mrb[0].mxu0 %v8032
      %v8034 = vpop.f32.mrb[0].mxu0
      %v8035 = vadd.f32 %v7775, %v8034
      %v8036 = vpop.f32.mrb[0].mxu0
      %8037 = vmatprep.mubr.f32.mxu0 0.0
      %v8038 = vand.u32 %v308, 4294901760
      %v8039 = vsub.f32 %v308, %v8038
      %8040 = vmatmul.mubr.f32.gmra.mrb[0].mxu0 %v8039
      %v8041 = vpop.f32.mrb[0].mxu0
      %v8042 = vadd.f32 %v7781, %v8041
      %v8043 = vpop.f32.mrb[0].mxu0
      %8044 = vmatprep.mubr.f32.mxu0 0.0
      %v8045 = vand.u32 %v311, 4294901760
      %v8046 = vsub.f32 %v311, %v8045
      %8047 = vmatmul.mubr.f32.gmra.mrb[0].mxu0 %v8046
      %v8048 = vpop.f32.mrb[0].mxu0
      %v8049 = vadd.f32 %v7787, %v8048
      %v8050 = vpop.f32.mrb[0].mxu0
      %8051 = vmatprep.mubr.f32.mxu0 0.0
      %v8052 = vand.u32 %v314, 4294901760
      %v8053 = vsub.f32 %v314, %v8052
      %8054 = vmatmul.mubr.f32.gmra.mrb[0].mxu0 %v8053
      %v8055 = vpop.f32.mrb[0].mxu0
      %v8056 = vadd.f32 %v7793, %v8055
      %v8057 = vpop.f32.mrb[0].mxu0
      %8058 = vmatprep.mubr.f32.mxu0 0.0
      %v8059 = vand.u32 %v317, 4294901760
      %v8060 = vsub.f32 %v317, %v8059
      %8061 = vmatmul.mubr.f32.gmra.mrb[0].mxu0 %v8060
      %v8062 = vpop.f32.mrb[0].mxu0
      %v8063 = vadd.f32 %v7799, %v8062
      %v8064 = vpop.f32.mrb[0].mxu0
      %8065 = vmatprep.mubr.f32.mxu0 0.0
      %v8066 = vand.u32 %v320, 4294901760
      %v8067 = vsub.f32 %v320, %v8066
      %8068 = vmatmul.mubr.f32.gmra.mrb[0].mxu0 %v8067
      %v8069 = vpop.f32.mrb[0].mxu0
      %v8070 = vadd.f32 %v7805, %v8069
      %v8071 = vpop.f32.mrb[0].mxu0
      %8072 = vmatprep.mubr.f32.mxu0 0.0
      %v8073 = vand.u32 %v323, 4294901760
      %v8074 = vsub.f32 %v323, %v8073
      %8075 = vmatmul.mubr.f32.gmra.mrb[0].mxu0 %v8074
      %v8076 = vpop.f32.mrb[0].mxu0
      %v8077 = vadd.f32 %v7811, %v8076
      %v8078 = vpop.f32.mrb[0].mxu0
      %8079 = vmatprep.mubr.f32.mxu0 0.0
      %v8080 = vand.u32 %v326, 4294901760
      %v8081 = vsub.f32 %v326, %v8080
      %8082 = vmatmul.mubr.f32.gmra.mrb[0].mxu0 %v8081
      %v8083 = vpop.f32.mrb[0].mxu0
      %v8084 = vadd.f32 %v7817, %v8083
      %v8085 = vpop.f32.mrb[0].mxu0
      %8086 = vmatprep.mubr.f32.mxu0 0.0
      %v8087 = vand.u32 %v329, 4294901760
      %v8088 = vsub.f32 %v329, %v8087
      %8089 = vmatmul.mubr.f32.gmra.mrb[0].mxu0 %v8088
      %v8090 = vpop.f32.mrb[0].mxu0
      %v8091 = vadd.f32 %v7823, %v8090
      %v8092 = vpop.f32.mrb[0].mxu0
      %8093 = vmatprep.mubr.f32.mxu0 0.0
      %v8094 = vand.u32 %v332, 4294901760
      %v8095 = vsub.f32 %v332, %v8094
      %8096 = vmatmul.mubr.f32.gmra.mrb[0].mxu0 %v8095
      %v8097 = vpop.f32.mrb[0].mxu0
      %v8098 = vadd.f32 %v7829, %v8097
      %v8099 = vpop.f32.mrb[0].mxu0
      %8100 = vmatprep.mubr.f32.mxu0 0.0
      %v8101 = vand.u32 %v335, 4294901760
      %v8102 = vsub.f32 %v335, %v8101
      %8103 = vmatmul.mubr.f32.gmra.mrb[0].mxu0 %v8102
      %v8104 = vpop.f32.mrb[0].mxu0
      %v8105 = vadd.f32 %v7835, %v8104
      %v8106 = vpop.f32.mrb[0].mxu0
      %8107 = vmatprep.mubr.f32.mxu0 0.0
      %v8108 = vand.u32 %v338, 4294901760
      %v8109 = vsub.f32 %v338, %v8108
      %8110 = vmatmul.mubr.f32.gmra.mrb[0].mxu0 %v8109
      %v8111 = vpop.f32.mrb[0].mxu0
      %v8112 = vadd.f32 %v7841, %v8111
      %v8113 = vpop.f32.mrb[0].mxu0
      %8114 = vmatprep.mubr.f32.mxu0 0.0
      %v8115 = vand.u32 %v341, 4294901760
      %v8116 = vsub.f32 %v341, %v8115
      %8117 = vmatmul.mubr.f32.gmra.mrb[0].mxu0 %v8116
      %v8118 = vpop.f32.mrb[0].mxu0
      %v8119 = vadd.f32 %v7847, %v8118
      %v8120 = vpop.f32.mrb[0].mxu0
      %8121 = vmatprep.mubr.f32.mxu0 0.0
      %v8122 = vand.u32 %v344, 4294901760
      %v8123 = vsub.f32 %v344, %v8122
      %8124 = vmatmul.mubr.f32.gmra.mrb[0].mxu0 %v8123
      %v8125 = vpop.f32.mrb[0].mxu0
      %v8126 = vadd.f32 %v7853, %v8125
      %v8127 = vpop.f32.mrb[0].mxu0
      %8128 = vmatprep.mubr.f32.mxu0 0.0
      %v8129 = vand.u32 %v3772, 4294901760
      %v8130 = vsub.f32 %v3772, %v8129
      %8131 = vmatmul.mubr.f32.gmra.mrb[0].mxu0 %v8130
      %v8132 = vpop.f32.mrb[0].mxu0
      %v8133 = vadd.f32 %v7859, %v8132
      %v8134 = vpop.f32.mrb[0].mxu0
      %8135 = vmatprep.mubr.f32.mxu0 0.0
      %v8136 = vand.u32 %v3775, 4294901760
      %v8137 = vsub.f32 %v3775, %v8136
      %8138 = vmatmul.mubr.f32.gmra.mrb[0].mxu0 %v8137
      %v8139 = vpop.f32.mrb[0].mxu0
      %v8140 = vadd.f32 %v7865, %v8139
      %v8141 = vpop.f32.mrb[0].mxu0
      %8142 = vmatprep.mubr.f32.mxu0 0.0
      %v8143 = vand.u32 %v5517, 4294901760
      %v8144 = vsub.f32 %v5517, %v8143
      %8145 = vmatmul.mubr.f32.gmra.mrb[0].mxu0 %v8144
      %v8146 = vpop.f32.mrb[0].mxu0
      %v8147 = vadd.f32 %v7871, %v8146
      %v8148 = vpop.f32.mrb[0].mxu0
      %8149 = vmatprep.mubr.f32.mxu0 0.0
      %v8150 = vand.u32 %v5520, 4294901760
      %v8151 = vsub.f32 %v5520, %v8150
      %8152 = vmatmul.mubr.f32.gmra.mrb[0].mxu0 %v8151
      %v8153 = vpop.f32.mrb[0].mxu0
      %v8154 = vadd.f32 %v7877, %v8153
      %v8155 = vpop.f32.mrb[0].mxu0
      %8156 = vmatprep.mubr.f32.mxu0 0.0
      %v8157 = vand.u32 %v7262, 4294901760
      %v8158 = vsub.f32 %v7262, %v8157
      %8159 = vmatmul.mubr.f32.gmra.mrb[0].mxu0 %v8158
      %v8160 = vpop.f32.mrb[0].mxu0
      %v8161 = vadd.f32 %v7883, %v8160
      %v8162 = vpop.f32.mrb[0].mxu0
      %8163 = vmatprep.mubr.f32.mxu0 0.0
      %v8164 = vand.u32 %v7265, 4294901760
      %v8165 = vsub.f32 %v7265, %v8164
      %8166 = vmatmul.mubr.f32.gmra.mrb[0].mxu0 %v8165
      %v8167 = vpop.f32.mrb[0].mxu0
      %v8168 = vadd.f32 %v7889, %v8167
      %v8169 = vpop.f32.mrb[0].mxu0
      %8170 = vdwg.mxu0
      %8171 = vmatprep.subr.mxu0 0.0
      %v8172 = vand.u32 %v253, 4294901760
      %8173 = vmatpush1.msra.mxu0 %v8172
      %8174 = vmatprep.subr.mxu0 0.0
      %v8175 = vand.u32 %v7268, 4294901760
      %8176 = vmatpush1.msra.mxu0 %v8175
      %8177 = vmatprep.subr.mxu0 0.0
      %8178 = vmatpush1.msra.mxu0 0.0
      %8179 = vmatprep.subr.mxu0 0.0
      %8180 = vmatpush1.msra.mxu0 0.0
      %8181 = vmatprep.subr.mxu0 0.0
      %8182 = vmatpush1.msra.mxu0 0.0
      %8183 = vmatprep.subr.mxu0 0.0
      %8184 = vmatpush1.msra.mxu0 0.0
      %8185 = vmatprep.subr.mxu0 0.0
      %8186 = vmatpush1.msra.mxu0 0.0
      %8187 = vmatprep.subr.mxu0 0.0
      %8188 = vmatpush1.msra.mxu0 0.0
      %8189 = vmatprep.subr.mxu0 0.0
      %8190 = vmatpush1.msra.mxu0 0.0
      %8191 = vmatprep.subr.mxu0 0.0
      %8192 = vmatpush1.msra.mxu0 0.0
      %8193 = vmatprep.subr.mxu0 0.0
      %8194 = vmatpush1.msra.mxu0 0.0
      %8195 = vmatprep.subr.mxu0 0.0
      %8196 = vmatpush1.msra.mxu0 0.0
      %8197 = vmatprep.subr.mxu0 0.0
      %8198 = vmatpush1.msra.mxu0 0.0
      %8199 = vmatprep.subr.mxu0 0.0
      %8200 = vmatpush1.msra.mxu0 0.0
      %8201 = vmatprep.subr.mxu0 0.0
      %8202 = vmatpush1.msra.mxu0 0.0
      %8203 = vmatprep.subr.mxu0 0.0
      %8204 = vmatpush1.msra.mxu0 0.0
      %8205 = vmatprep.subr.mxu0 0.0
      %8206 = vmatpush1.msra.mxu0 0.0
      %8207 = vmatprep.subr.mxu0 0.0
      %8208 = vmatpush1.msra.mxu0 0.0
      %8209 = vmatprep.subr.mxu0 0.0
      %8210 = vmatpush1.msra.mxu0 0.0
      %8211 = vmatprep.subr.mxu0 0.0
      %8212 = vmatpush1.msra.mxu0 0.0
      %8213 = vmatprep.subr.mxu0 0.0
      %8214 = vmatpush1.msra.mxu0 0.0
      %8215 = vmatprep.subr.mxu0 0.0
      %8216 = vmatpush1.msra.mxu0 0.0
      %8217 = vmatprep.subr.mxu0 0.0
      %8218 = vmatpush1.msra.mxu0 0.0
      %8219 = vmatprep.subr.mxu0 0.0
      %8220 = vmatpush1.msra.mxu0 0.0
      %8221 = vmatprep.subr.mxu0 0.0
      %8222 = vmatpush1.msra.mxu0 0.0
      %8223 = vmatprep.subr.mxu0 0.0
      %8224 = vmatpush1.msra.mxu0 0.0
      %8225 = vmatprep.subr.mxu0 0.0
      %8226 = vmatpush1.msra.mxu0 0.0
      %8227 = vmatprep.subr.mxu0 0.0
      %8228 = vmatpush1.msra.mxu0 0.0
      %8229 = vmatprep.subr.mxu0 0.0
      %8230 = vmatpush1.msra.mxu0 0.0
      %8231 = vmatprep.subr.mxu0 0.0
      %8232 = vmatpush1.msra.mxu0 0.0
      %8233 = vmatprep.subr.mxu0 0.0
      %8234 = vmatpush1.msra.mxu0 0.0
      %8235 = vmatprep.subr.mxu0 0.0
      %8236 = vmatpush1.msra.mxu0 0.0
      %8237 = vmatprep.mubr.f32.mxu0 0.0
      %v8238 = vand.u32 %v275, 4294901760
      %v8239 = vsub.f32 %v275, %v8238
      %v8240 = vand.u32 %v8239, 4294901760
      %8241 = vmatmul.mubr.f32.gmra.mrb[0].mxu0 %v8240
      %v8242 = vpop.f32.mrb[0].mxu0
      %v8243 = vadd.f32 %v7965, %v8242
      %v8244 = vpop.f32.mrb[0].mxu0
      %8245 = vmatprep.mubr.f32.mxu0 0.0
      %v8246 = vand.u32 %v278, 4294901760
      %v8247 = vsub.f32 %v278, %v8246
      %v8248 = vand.u32 %v8247, 4294901760
      %8249 = vmatmul.mubr.f32.gmra.mrb[0].mxu0 %v8248
      %v8250 = vpop.f32.mrb[0].mxu0
      %v8251 = vadd.f32 %v7972, %v8250
      %v8252 = vpop.f32.mrb[0].mxu0
      %8253 = vmatprep.mubr.f32.mxu0 0.0
      %v8254 = vand.u32 %v281, 4294901760
      %v8255 = vsub.f32 %v281, %v8254
      %v8256 = vand.u32 %v8255, 4294901760
      %8257 = vmatmul.mubr.f32.gmra.mrb[0].mxu0 %v8256
      %v8258 = vpop.f32.mrb[0].mxu0
      %v8259 = vadd.f32 %v7979, %v8258
      %v8260 = vpop.f32.mrb[0].mxu0
      %8261 = vmatprep.mubr.f32.mxu0 0.0
      %v8262 = vand.u32 %v284, 4294901760
      %v8263 = vsub.f32 %v284, %v8262
      %v8264 = vand.u32 %v8263, 4294901760
      %8265 = vmatmul.mubr.f32.gmra.mrb[0].mxu0 %v8264
      %v8266 = vpop.f32.mrb[0].mxu0
      %v8267 = vadd.f32 %v7986, %v8266
      %v8268 = vpop.f32.mrb[0].mxu0
      %8269 = vmatprep.mubr.f32.mxu0 0.0
      %v8270 = vand.u32 %v287, 4294901760
      %v8271 = vsub.f32 %v287, %v8270
      %v8272 = vand.u32 %v8271, 4294901760
      %8273 = vmatmul.mubr.f32.gmra.mrb[0].mxu0 %v8272
      %v8274 = vpop.f32.mrb[0].mxu0
      %v8275 = vadd.f32 %v7993, %v8274
      %v8276 = vpop.f32.mrb[0].mxu0
      %8277 = vmatprep.mubr.f32.mxu0 0.0
      %v8278 = vand.u32 %v290, 4294901760
      %v8279 = vsub.f32 %v290, %v8278
      %v8280 = vand.u32 %v8279, 4294901760
      %8281 = vmatmul.mubr.f32.gmra.mrb[0].mxu0 %v8280
      %v8282 = vpop.f32.mrb[0].mxu0
      %v8283 = vadd.f32 %v8000, %v8282
      %v8284 = vpop.f32.mrb[0].mxu0
      %8285 = vmatprep.mubr.f32.mxu0 0.0
      %v8286 = vand.u32 %v293, 4294901760
      %v8287 = vsub.f32 %v293, %v8286
      %v8288 = vand.u32 %v8287, 4294901760
      %8289 = vmatmul.mubr.f32.gmra.mrb[0].mxu0 %v8288
      %v8290 = vpop.f32.mrb[0].mxu0
      %v8291 = vadd.f32 %v8007, %v8290
      %v8292 = vpop.f32.mrb[0].mxu0
      %8293 = vmatprep.mubr.f32.mxu0 0.0
      %v8294 = vand.u32 %v296, 4294901760
      %v8295 = vsub.f32 %v296, %v8294
      %v8296 = vand.u32 %v8295, 4294901760
      %8297 = vmatmul.mubr.f32.gmra.mrb[0].mxu0 %v8296
      %v8298 = vpop.f32.mrb[0].mxu0
      %v8299 = vadd.f32 %v8014, %v8298
      %v8300 = vpop.f32.mrb[0].mxu0
      %8301 = vmatprep.mubr.f32.mxu0 0.0
      %v8302 = vand.u32 %v299, 4294901760
      %v8303 = vsub.f32 %v299, %v8302
      %v8304 = vand.u32 %v8303, 4294901760
      %8305 = vmatmul.mubr.f32.gmra.mrb[0].mxu0 %v8304
      %v8306 = vpop.f32.mrb[0].mxu0
      %v8307 = vadd.f32 %v8021, %v8306
      %v8308 = vpop.f32.mrb[0].mxu0
      %8309 = vmatprep.mubr.f32.mxu0 0.0
      %v8310 = vand.u32 %v302, 4294901760
      %v8311 = vsub.f32 %v302, %v8310
      %v8312 = vand.u32 %v8311, 4294901760
      %8313 = vmatmul.mubr.f32.gmra.mrb[0].mxu0 %v8312
      %v8314 = vpop.f32.mrb[0].mxu0
      %v8315 = vadd.f32 %v8028, %v8314
      %v8316 = vpop.f32.mrb[0].mxu0
      %8317 = vmatprep.mubr.f32.mxu0 0.0
      %v8318 = vand.u32 %v305, 4294901760
      %v8319 = vsub.f32 %v305, %v8318
      %v8320 = vand.u32 %v8319, 4294901760
      %8321 = vmatmul.mubr.f32.gmra.mrb[0].mxu0 %v8320
      %v8322 = vpop.f32.mrb[0].mxu0
      %v8323 = vadd.f32 %v8035, %v8322
      %v8324 = vpop.f32.mrb[0].mxu0
      %8325 = vmatprep.mubr.f32.mxu0 0.0
      %v8326 = vand.u32 %v308, 4294901760
      %v8327 = vsub.f32 %v308, %v8326
      %v8328 = vand.u32 %v8327, 4294901760
      %8329 = vmatmul.mubr.f32.gmra.mrb[0].mxu0 %v8328
      %v8330 = vpop.f32.mrb[0].mxu0
      %v8331 = vadd.f32 %v8042, %v8330
      %v8332 = vpop.f32.mrb[0].mxu0
      %8333 = vmatprep.mubr.f32.mxu0 0.0
      %v8334 = vand.u32 %v311, 4294901760
      %v8335 = vsub.f32 %v311, %v8334
      %v8336 = vand.u32 %v8335, 4294901760
      %8337 = vmatmul.mubr.f32.gmra.mrb[0].mxu0 %v8336
      %v8338 = vpop.f32.mrb[0].mxu0
      %v8339 = vadd.f32 %v8049, %v8338
      %v8340 = vpop.f32.mrb[0].mxu0
      %8341 = vmatprep.mubr.f32.mxu0 0.0
      %v8342 = vand.u32 %v314, 4294901760
      %v8343 = vsub.f32 %v314, %v8342
      %v8344 = vand.u32 %v8343, 4294901760
      %8345 = vmatmul.mubr.f32.gmra.mrb[0].mxu0 %v8344
      %v8346 = vpop.f32.mrb[0].mxu0
      %v8347 = vadd.f32 %v8056, %v8346
      %v8348 = vpop.f32.mrb[0].mxu0
      %8349 = vmatprep.mubr.f32.mxu0 0.0
      %v8350 = vand.u32 %v317, 4294901760
      %v8351 = vsub.f32 %v317, %v8350
      %v8352 = vand.u32 %v8351, 4294901760
      %8353 = vmatmul.mubr.f32.gmra.mrb[0].mxu0 %v8352
      %v8354 = vpop.f32.mrb[0].mxu0
      %v8355 = vadd.f32 %v8063, %v8354
      %v8356 = vpop.f32.mrb[0].mxu0
      %8357 = vmatprep.mubr.f32.mxu0 0.0
      %v8358 = vand.u32 %v320, 4294901760
      %v8359 = vsub.f32 %v320, %v8358
      %v8360 = vand.u32 %v8359, 4294901760
      %8361 = vmatmul.mubr.f32.gmra.mrb[0].mxu0 %v8360
      %v8362 = vpop.f32.mrb[0].mxu0
      %v8363 = vadd.f32 %v8070, %v8362
      %v8364 = vpop.f32.mrb[0].mxu0
      %8365 = vmatprep.mubr.f32.mxu0 0.0
      %v8366 = vand.u32 %v323, 4294901760
      %v8367 = vsub.f32 %v323, %v8366
      %v8368 = vand.u32 %v8367, 4294901760
      %8369 = vmatmul.mubr.f32.gmra.mrb[0].mxu0 %v8368
      %v8370 = vpop.f32.mrb[0].mxu0
      %v8371 = vadd.f32 %v8077, %v8370
      %v8372 = vpop.f32.mrb[0].mxu0
      %8373 = vmatprep.mubr.f32.mxu0 0.0
      %v8374 = vand.u32 %v326, 4294901760
      %v8375 = vsub.f32 %v326, %v8374
      %v8376 = vand.u32 %v8375, 4294901760
      %8377 = vmatmul.mubr.f32.gmra.mrb[0].mxu0 %v8376
      %v8378 = vpop.f32.mrb[0].mxu0
      %v8379 = vadd.f32 %v8084, %v8378
      %v8380 = vpop.f32.mrb[0].mxu0
      %8381 = vmatprep.mubr.f32.mxu0 0.0
      %v8382 = vand.u32 %v329, 4294901760
      %v8383 = vsub.f32 %v329, %v8382
      %v8384 = vand.u32 %v8383, 4294901760
      %8385 = vmatmul.mubr.f32.gmra.mrb[0].mxu0 %v8384
      %v8386 = vpop.f32.mrb[0].mxu0
      %v8387 = vadd.f32 %v8091, %v8386
      %v8388 = vpop.f32.mrb[0].mxu0
      %8389 = vmatprep.mubr.f32.mxu0 0.0
      %v8390 = vand.u32 %v332, 4294901760
      %v8391 = vsub.f32 %v332, %v8390
      %v8392 = vand.u32 %v8391, 4294901760
      %8393 = vmatmul.mubr.f32.gmra.mrb[0].mxu0 %v8392
      %v8394 = vpop.f32.mrb[0].mxu0
      %v8395 = vadd.f32 %v8098, %v8394
      %v8396 = vpop.f32.mrb[0].mxu0
      %8397 = vmatprep.mubr.f32.mxu0 0.0
      %v8398 = vand.u32 %v335, 4294901760
      %v8399 = vsub.f32 %v335, %v8398
      %v8400 = vand.u32 %v8399, 4294901760
      %8401 = vmatmul.mubr.f32.gmra.mrb[0].mxu0 %v8400
      %v8402 = vpop.f32.mrb[0].mxu0
      %v8403 = vadd.f32 %v8105, %v8402
      %v8404 = vpop.f32.mrb[0].mxu0
      %8405 = vmatprep.mubr.f32.mxu0 0.0
      %v8406 = vand.u32 %v338, 4294901760
      %v8407 = vsub.f32 %v338, %v8406
      %v8408 = vand.u32 %v8407, 4294901760
      %8409 = vmatmul.mubr.f32.gmra.mrb[0].mxu0 %v8408
      %v8410 = vpop.f32.mrb[0].mxu0
      %v8411 = vadd.f32 %v8112, %v8410
      %v8412 = vpop.f32.mrb[0].mxu0
      %8413 = vmatprep.mubr.f32.mxu0 0.0
      %v8414 = vand.u32 %v341, 4294901760
      %v8415 = vsub.f32 %v341, %v8414
      %v8416 = vand.u32 %v8415, 4294901760
      %8417 = vmatmul.mubr.f32.gmra.mrb[0].mxu0 %v8416
      %v8418 = vpop.f32.mrb[0].mxu0
      %v8419 = vadd.f32 %v8119, %v8418
      %v8420 = vpop.f32.mrb[0].mxu0
      %8421 = vmatprep.mubr.f32.mxu0 0.0
      %v8422 = vand.u32 %v344, 4294901760
      %v8423 = vsub.f32 %v344, %v8422
      %v8424 = vand.u32 %v8423, 4294901760
      %8425 = vmatmul.mubr.f32.gmra.mrb[0].mxu0 %v8424
      %v8426 = vpop.f32.mrb[0].mxu0
      %v8427 = vadd.f32 %v8126, %v8426
      %v8428 = vpop.f32.mrb[0].mxu0
      %8429 = vmatprep.mubr.f32.mxu0 0.0
      %v8430 = vand.u32 %v3772, 4294901760
      %v8431 = vsub.f32 %v3772, %v8430
      %v8432 = vand.u32 %v8431, 4294901760
      %8433 = vmatmul.mubr.f32.gmra.mrb[0].mxu0 %v8432
      %v8434 = vpop.f32.mrb[0].mxu0
      %v8435 = vadd.f32 %v8133, %v8434
      %v8436 = vpop.f32.mrb[0].mxu0
      %8437 = vmatprep.mubr.f32.mxu0 0.0
      %v8438 = vand.u32 %v3775, 4294901760
      %v8439 = vsub.f32 %v3775, %v8438
      %v8440 = vand.u32 %v8439, 4294901760
      %8441 = vmatmul.mubr.f32.gmra.mrb[0].mxu0 %v8440
      %v8442 = vpop.f32.mrb[0].mxu0
      %v8443 = vadd.f32 %v8140, %v8442
      %v8444 = vpop.f32.mrb[0].mxu0
      %8445 = vmatprep.mubr.f32.mxu0 0.0
      %v8446 = vand.u32 %v5517, 4294901760
      %v8447 = vsub.f32 %v5517, %v8446
      %v8448 = vand.u32 %v8447, 4294901760
      %8449 = vmatmul.mubr.f32.gmra.mrb[0].mxu0 %v8448
      %v8450 = vpop.f32.mrb[0].mxu0
      %v8451 = vadd.f32 %v8147, %v8450
      %v8452 = vpop.f32.mrb[0].mxu0
      %8453 = vmatprep.mubr.f32.mxu0 0.0
      %v8454 = vand.u32 %v5520, 4294901760
      %v8455 = vsub.f32 %v5520, %v8454
      %v8456 = vand.u32 %v8455, 4294901760
      %8457 = vmatmul.mubr.f32.gmra.mrb[0].mxu0 %v8456
      %v8458 = vpop.f32.mrb[0].mxu0
      %v8459 = vadd.f32 %v8154, %v8458
      %v8460 = vpop.f32.mrb[0].mxu0
      %8461 = vmatprep.mubr.f32.mxu0 0.0
      %v8462 = vand.u32 %v7262, 4294901760
      %v8463 = vsub.f32 %v7262, %v8462
      %v8464 = vand.u32 %v8463, 4294901760
      %8465 = vmatmul.mubr.f32.gmra.mrb[0].mxu0 %v8464
      %v8466 = vpop.f32.mrb[0].mxu0
      %v8467 = vadd.f32 %v8161, %v8466
      %v8468 = vpop.f32.mrb[0].mxu0
      %8469 = vmatprep.mubr.f32.mxu0 0.0
      %v8470 = vand.u32 %v7265, 4294901760
      %v8471 = vsub.f32 %v7265, %v8470
      %v8472 = vand.u32 %v8471, 4294901760
      %8473 = vmatmul.mubr.f32.gmra.mrb[0].mxu0 %v8472
      %v8474 = vpop.f32.mrb[0].mxu0
      %v8475 = vadd.f32 %v8168, %v8474
      %v8476 = vpop.f32.mrb[0].mxu0
      %8477 = vdwg.mxu0
      %8478 = vmatprep.subr.mxu0 0.0
      %v8479 = vand.u32 %v253, 4294901760
      %v8480 = vsub.f32 %v253, %v8479
      %v8481 = vand.u32 %v8480, 4294901760
      %8482 = vmatpush1.msra.mxu0 %v8481
      %8483 = vmatprep.subr.mxu0 0.0
      %v8484 = vand.u32 %v7268, 4294901760
      %v8485 = vsub.f32 %v7268, %v8484
      %v8486 = vand.u32 %v8485, 4294901760
      %8487 = vmatpush1.msra.mxu0 %v8486
      %8488 = vmatprep.subr.mxu0 0.0
      %8489 = vmatpush1.msra.mxu0 0.0
      %8490 = vmatprep.subr.mxu0 0.0
      %8491 = vmatpush1.msra.mxu0 0.0
      %8492 = vmatprep.subr.mxu0 0.0
      %8493 = vmatpush1.msra.mxu0 0.0
      %8494 = vmatprep.subr.mxu0 0.0
      %8495 = vmatpush1.msra.mxu0 0.0
      %8496 = vmatprep.subr.mxu0 0.0
      %8497 = vmatpush1.msra.mxu0 0.0
      %8498 = vmatprep.subr.mxu0 0.0
      %8499 = vmatpush1.msra.mxu0 0.0
      %8500 = vmatprep.subr.mxu0 0.0
      %8501 = vmatpush1.msra.mxu0 0.0
      %8502 = vmatprep.subr.mxu0 0.0
      %8503 = vmatpush1.msra.mxu0 0.0
      %8504 = vmatprep.subr.mxu0 0.0
      %8505 = vmatpush1.msra.mxu0 0.0
      %8506 = vmatprep.subr.mxu0 0.0
      %8507 = vmatpush1.msra.mxu0 0.0
      %8508 = vmatprep.subr.mxu0 0.0
      %8509 = vmatpush1.msra.mxu0 0.0
      %8510 = vmatprep.subr.mxu0 0.0
      %8511 = vmatpush1.msra.mxu0 0.0
      %8512 = vmatprep.subr.mxu0 0.0
      %8513 = vmatpush1.msra.mxu0 0.0
      %8514 = vmatprep.subr.mxu0 0.0
      %8515 = vmatpush1.msra.mxu0 0.0
      %8516 = vmatprep.subr.mxu0 0.0
      %8517 = vmatpush1.msra.mxu0 0.0
      %8518 = vmatprep.subr.mxu0 0.0
      %8519 = vmatpush1.msra.mxu0 0.0
      %8520 = vmatprep.subr.mxu0 0.0
      %8521 = vmatpush1.msra.mxu0 0.0
      %8522 = vmatprep.subr.mxu0 0.0
      %8523 = vmatpush1.msra.mxu0 0.0
      %8524 = vmatprep.subr.mxu0 0.0
      %8525 = vmatpush1.msra.mxu0 0.0
      %8526 = vmatprep.subr.mxu0 0.0
      %8527 = vmatpush1.msra.mxu0 0.0
      %8528 = vmatprep.subr.mxu0 0.0
      %8529 = vmatpush1.msra.mxu0 0.0
      %8530 = vmatprep.subr.mxu0 0.0
      %8531 = vmatpush1.msra.mxu0 0.0
      %8532 = vmatprep.subr.mxu0 0.0
      %8533 = vmatpush1.msra.mxu0 0.0
      %8534 = vmatprep.subr.mxu0 0.0
      %8535 = vmatpush1.msra.mxu0 0.0
      %8536 = vmatprep.subr.mxu0 0.0
      %8537 = vmatpush1.msra.mxu0 0.0
      %8538 = vmatprep.subr.mxu0 0.0
      %8539 = vmatpush1.msra.mxu0 0.0
      %8540 = vmatprep.subr.mxu0 0.0
      %8541 = vmatpush1.msra.mxu0 0.0
      %8542 = vmatprep.subr.mxu0 0.0
      %8543 = vmatpush1.msra.mxu0 0.0
      %8544 = vmatprep.subr.mxu0 0.0
      %8545 = vmatpush1.msra.mxu0 0.0
      %8546 = vmatprep.subr.mxu0 0.0
      %8547 = vmatpush1.msra.mxu0 0.0
      %8548 = vmatprep.mubr.f32.mxu0 0.0
      %v8549 = vand.u32 %v275, 4294901760
      %8550 = vmatmul.mubr.f32.gmra.mrb[0].mxu0 %v8549
      %v8551 = vpop.f32.mrb[0].mxu0
      %v8552 = vadd.f32 %v8243, %v8551
      %v8553 = vpop.f32.mrb[0].mxu0
      %8554 = vmatprep.mubr.f32.mxu0 0.0
      %v8555 = vand.u32 %v278, 4294901760
      %8556 = vmatmul.mubr.f32.gmra.mrb[0].mxu0 %v8555
      %v8557 = vpop.f32.mrb[0].mxu0
      %v8558 = vadd.f32 %v8251, %v8557
      %v8559 = vpop.f32.mrb[0].mxu0
      %8560 = vmatprep.mubr.f32.mxu0 0.0
      %v8561 = vand.u32 %v281, 4294901760
      %8562 = vmatmul.mubr.f32.gmra.mrb[0].mxu0 %v8561
      %v8563 = vpop.f32.mrb[0].mxu0
      %v8564 = vadd.f32 %v8259, %v8563
      %v8565 = vpop.f32.mrb[0].mxu0
      %8566 = vmatprep.mubr.f32.mxu0 0.0
      %v8567 = vand.u32 %v284, 4294901760
      %8568 = vmatmul.mubr.f32.gmra.mrb[0].mxu0 %v8567
      %v8569 = vpop.f32.mrb[0].mxu0
      %v8570 = vadd.f32 %v8267, %v8569
      %v8571 = vpop.f32.mrb[0].mxu0
      %8572 = vmatprep.mubr.f32.mxu0 0.0
      %v8573 = vand.u32 %v287, 4294901760
      %8574 = vmatmul.mubr.f32.gmra.mrb[0].mxu0 %v8573
      %v8575 = vpop.f32.mrb[0].mxu0
      %v8576 = vadd.f32 %v8275, %v8575
      %v8577 = vpop.f32.mrb[0].mxu0
      %8578 = vmatprep.mubr.f32.mxu0 0.0
      %v8579 = vand.u32 %v290, 4294901760
      %8580 = vmatmul.mubr.f32.gmra.mrb[0].mxu0 %v8579
      %v8581 = vpop.f32.mrb[0].mxu0
      %v8582 = vadd.f32 %v8283, %v8581
      %v8583 = vpop.f32.mrb[0].mxu0
      %8584 = vmatprep.mubr.f32.mxu0 0.0
      %v8585 = vand.u32 %v293, 4294901760
      %8586 = vmatmul.mubr.f32.gmra.mrb[0].mxu0 %v8585
      %v8587 = vpop.f32.mrb[0].mxu0
      %v8588 = vadd.f32 %v8291, %v8587
      %v8589 = vpop.f32.mrb[0].mxu0
      %8590 = vmatprep.mubr.f32.mxu0 0.0
      %v8591 = vand.u32 %v296, 4294901760
      %8592 = vmatmul.mubr.f32.gmra.mrb[0].mxu0 %v8591
      %v8593 = vpop.f32.mrb[0].mxu0
      %v8594 = vadd.f32 %v8299, %v8593
      %v8595 = vpop.f32.mrb[0].mxu0
      %8596 = vmatprep.mubr.f32.mxu0 0.0
      %v8597 = vand.u32 %v299, 4294901760
      %8598 = vmatmul.mubr.f32.gmra.mrb[0].mxu0 %v8597
      %v8599 = vpop.f32.mrb[0].mxu0
      %v8600 = vadd.f32 %v8307, %v8599
      %v8601 = vpop.f32.mrb[0].mxu0
      %8602 = vmatprep.mubr.f32.mxu0 0.0
      %v8603 = vand.u32 %v302, 4294901760
      %8604 = vmatmul.mubr.f32.gmra.mrb[0].mxu0 %v8603
      %v8605 = vpop.f32.mrb[0].mxu0
      %v8606 = vadd.f32 %v8315, %v8605
      %v8607 = vpop.f32.mrb[0].mxu0
      %8608 = vmatprep.mubr.f32.mxu0 0.0
      %v8609 = vand.u32 %v305, 4294901760
      %8610 = vmatmul.mubr.f32.gmra.mrb[0].mxu0 %v8609
      %v8611 = vpop.f32.mrb[0].mxu0
      %v8612 = vadd.f32 %v8323, %v8611
      %v8613 = vpop.f32.mrb[0].mxu0
      %8614 = vmatprep.mubr.f32.mxu0 0.0
      %v8615 = vand.u32 %v308, 4294901760
      %8616 = vmatmul.mubr.f32.gmra.mrb[0].mxu0 %v8615
      %v8617 = vpop.f32.mrb[0].mxu0
      %v8618 = vadd.f32 %v8331, %v8617
      %v8619 = vpop.f32.mrb[0].mxu0
      %8620 = vmatprep.mubr.f32.mxu0 0.0
      %v8621 = vand.u32 %v311, 4294901760
      %8622 = vmatmul.mubr.f32.gmra.mrb[0].mxu0 %v8621
      %v8623 = vpop.f32.mrb[0].mxu0
      %v8624 = vadd.f32 %v8339, %v8623
      %v8625 = vpop.f32.mrb[0].mxu0
      %8626 = vmatprep.mubr.f32.mxu0 0.0
      %v8627 = vand.u32 %v314, 4294901760
      %8628 = vmatmul.mubr.f32.gmra.mrb[0].mxu0 %v8627
      %v8629 = vpop.f32.mrb[0].mxu0
      %v8630 = vadd.f32 %v8347, %v8629
      %v8631 = vpop.f32.mrb[0].mxu0
      %8632 = vmatprep.mubr.f32.mxu0 0.0
      %v8633 = vand.u32 %v317, 4294901760
      %8634 = vmatmul.mubr.f32.gmra.mrb[0].mxu0 %v8633
      %v8635 = vpop.f32.mrb[0].mxu0
      %v8636 = vadd.f32 %v8355, %v8635
      %v8637 = vpop.f32.mrb[0].mxu0
      %8638 = vmatprep.mubr.f32.mxu0 0.0
      %v8639 = vand.u32 %v320, 4294901760
      %8640 = vmatmul.mubr.f32.gmra.mrb[0].mxu0 %v8639
      %v8641 = vpop.f32.mrb[0].mxu0
      %v8642 = vadd.f32 %v8363, %v8641
      %v8643 = vpop.f32.mrb[0].mxu0
      %8644 = vmatprep.mubr.f32.mxu0 0.0
      %v8645 = vand.u32 %v323, 4294901760
      %8646 = vmatmul.mubr.f32.gmra.mrb[0].mxu0 %v8645
      %v8647 = vpop.f32.mrb[0].mxu0
      %v8648 = vadd.f32 %v8371, %v8647
      %v8649 = vpop.f32.mrb[0].mxu0
      %8650 = vmatprep.mubr.f32.mxu0 0.0
      %v8651 = vand.u32 %v326, 4294901760
      %8652 = vmatmul.mubr.f32.gmra.mrb[0].mxu0 %v8651
      %v8653 = vpop.f32.mrb[0].mxu0
      %v8654 = vadd.f32 %v8379, %v8653
      %v8655 = vpop.f32.mrb[0].mxu0
      %8656 = vmatprep.mubr.f32.mxu0 0.0
      %v8657 = vand.u32 %v329, 4294901760
      %8658 = vmatmul.mubr.f32.gmra.mrb[0].mxu0 %v8657
      %v8659 = vpop.f32.mrb[0].mxu0
      %v8660 = vadd.f32 %v8387, %v8659
      %v8661 = vpop.f32.mrb[0].mxu0
      %8662 = vmatprep.mubr.f32.mxu0 0.0
      %v8663 = vand.u32 %v332, 4294901760
      %8664 = vmatmul.mubr.f32.gmra.mrb[0].mxu0 %v8663
      %v8665 = vpop.f32.mrb[0].mxu0
      %v8666 = vadd.f32 %v8395, %v8665
      %v8667 = vpop.f32.mrb[0].mxu0
      %8668 = vmatprep.mubr.f32.mxu0 0.0
      %v8669 = vand.u32 %v335, 4294901760
      %8670 = vmatmul.mubr.f32.gmra.mrb[0].mxu0 %v8669
      %v8671 = vpop.f32.mrb[0].mxu0
      %v8672 = vadd.f32 %v8403, %v8671
      %v8673 = vpop.f32.mrb[0].mxu0
      %8674 = vmatprep.mubr.f32.mxu0 0.0
      %v8675 = vand.u32 %v338, 4294901760
      %8676 = vmatmul.mubr.f32.gmra.mrb[0].mxu0 %v8675
      %v8677 = vpop.f32.mrb[0].mxu0
      %v8678 = vadd.f32 %v8411, %v8677
      %v8679 = vpop.f32.mrb[0].mxu0
      %8680 = vmatprep.mubr.f32.mxu0 0.0
      %v8681 = vand.u32 %v341, 4294901760
      %8682 = vmatmul.mubr.f32.gmra.mrb[0].mxu0 %v8681
      %v8683 = vpop.f32.mrb[0].mxu0
      %v8684 = vadd.f32 %v8419, %v8683
      %v8685 = vpop.f32.mrb[0].mxu0
      %8686 = vmatprep.mubr.f32.mxu0 0.0
      %v8687 = vand.u32 %v344, 4294901760
      %8688 = vmatmul.mubr.f32.gmra.mrb[0].mxu0 %v8687
      %v8689 = vpop.f32.mrb[0].mxu0
      %v8690 = vadd.f32 %v8427, %v8689
      %v8691 = vpop.f32.mrb[0].mxu0
      %8692 = vmatprep.mubr.f32.mxu0 0.0
      %v8693 = vand.u32 %v3772, 4294901760
      %8694 = vmatmul.mubr.f32.gmra.mrb[0].mxu0 %v8693
      %v8695 = vpop.f32.mrb[0].mxu0
      %v8696 = vadd.f32 %v8435, %v8695
      %v8697 = vpop.f32.mrb[0].mxu0
      %8698 = vmatprep.mubr.f32.mxu0 0.0
      %v8699 = vand.u32 %v3775, 4294901760
      %8700 = vmatmul.mubr.f32.gmra.mrb[0].mxu0 %v8699
      %v8701 = vpop.f32.mrb[0].mxu0
      %v8702 = vadd.f32 %v8443, %v8701
      %v8703 = vpop.f32.mrb[0].mxu0
      %8704 = vmatprep.mubr.f32.mxu0 0.0
      %v8705 = vand.u32 %v5517, 4294901760
      %8706 = vmatmul.mubr.f32.gmra.mrb[0].mxu0 %v8705
      %v8707 = vpop.f32.mrb[0].mxu0
      %v8708 = vadd.f32 %v8451, %v8707
      %v8709 = vpop.f32.mrb[0].mxu0
      %8710 = vmatprep.mubr.f32.mxu0 0.0
      %v8711 = vand.u32 %v5520, 4294901760
      %8712 = vmatmul.mubr.f32.gmra.mrb[0].mxu0 %v8711
      %v8713 = vpop.f32.mrb[0].mxu0
      %v8714 = vadd.f32 %v8459, %v8713
      %v8715 = vpop.f32.mrb[0].mxu0
      %8716 = vmatprep.mubr.f32.mxu0 0.0
      %v8717 = vand.u32 %v7262, 4294901760
      %8718 = vmatmul.mubr.f32.gmra.mrb[0].mxu0 %v8717
      %v8719 = vpop.f32.mrb[0].mxu0
      %v8720 = vadd.f32 %v8467, %v8719
      %v8721 = vpop.f32.mrb[0].mxu0
      %8722 = vmatprep.mubr.f32.mxu0 0.0
      %v8723 = vand.u32 %v7265, 4294901760
      %8724 = vmatmul.mubr.f32.gmra.mrb[0].mxu0 %v8723
      %v8725 = vpop.f32.mrb[0].mxu0
      %v8726 = vadd.f32 %v8475, %v8725
      %v8727 = vpop.f32.mrb[0].mxu0
      %8728 = vdwg.mxu0
      %8729 = vmatprep.subr.mxu0 0.0
      %v8730 = vand.u32 %v253, 4294901760
      %8731 = vmatpush1.msra.mxu0 %v8730
      %8732 = vmatprep.subr.mxu0 0.0
      %v8733 = vand.u32 %v7268, 4294901760
      %8734 = vmatpush1.msra.mxu0 %v8733
      %8735 = vmatprep.subr.mxu0 0.0
      %8736 = vmatpush1.msra.mxu0 0.0
      %8737 = vmatprep.subr.mxu0 0.0
      %8738 = vmatpush1.msra.mxu0 0.0
      %8739 = vmatprep.subr.mxu0 0.0
      %8740 = vmatpush1.msra.mxu0 0.0
      %8741 = vmatprep.subr.mxu0 0.0
      %8742 = vmatpush1.msra.mxu0 0.0
      %8743 = vmatprep.subr.mxu0 0.0
      %8744 = vmatpush1.msra.mxu0 0.0
      %8745 = vmatprep.subr.mxu0 0.0
      %8746 = vmatpush1.msra.mxu0 0.0
      %8747 = vmatprep.subr.mxu0 0.0
      %8748 = vmatpush1.msra.mxu0 0.0
      %8749 = vmatprep.subr.mxu0 0.0
      %8750 = vmatpush1.msra.mxu0 0.0
      %8751 = vmatprep.subr.mxu0 0.0
      %8752 = vmatpush1.msra.mxu0 0.0
      %8753 = vmatprep.subr.mxu0 0.0
      %8754 = vmatpush1.msra.mxu0 0.0
      %8755 = vmatprep.subr.mxu0 0.0
      %8756 = vmatpush1.msra.mxu0 0.0
      %8757 = vmatprep.subr.mxu0 0.0
      %8758 = vmatpush1.msra.mxu0 0.0
      %8759 = vmatprep.subr.mxu0 0.0
      %8760 = vmatpush1.msra.mxu0 0.0
      %8761 = vmatprep.subr.mxu0 0.0
      %8762 = vmatpush1.msra.mxu0 0.0
      %8763 = vmatprep.subr.mxu0 0.0
      %8764 = vmatpush1.msra.mxu0 0.0
      %8765 = vmatprep.subr.mxu0 0.0
      %8766 = vmatpush1.msra.mxu0 0.0
      %8767 = vmatprep.subr.mxu0 0.0
      %8768 = vmatpush1.msra.mxu0 0.0
      %8769 = vmatprep.subr.mxu0 0.0
      %8770 = vmatpush1.msra.mxu0 0.0
      %8771 = vmatprep.subr.mxu0 0.0
      %8772 = vmatpush1.msra.mxu0 0.0
      %8773 = vmatprep.subr.mxu0 0.0
      %8774 = vmatpush1.msra.mxu0 0.0
      %8775 = vmatprep.subr.mxu0 0.0
      %8776 = vmatpush1.msra.mxu0 0.0
      %8777 = vmatprep.subr.mxu0 0.0
      %8778 = vmatpush1.msra.mxu0 0.0
      %8779 = vmatprep.subr.mxu0 0.0
      %8780 = vmatpush1.msra.mxu0 0.0
      %8781 = vmatprep.subr.mxu0 0.0
      %8782 = vmatpush1.msra.mxu0 0.0
      %8783 = vmatprep.subr.mxu0 0.0
      %8784 = vmatpush1.msra.mxu0 0.0
      %8785 = vmatprep.subr.mxu0 0.0
      %8786 = vmatpush1.msra.mxu0 0.0
      %8787 = vmatprep.subr.mxu0 0.0
      %8788 = vmatpush1.msra.mxu0 0.0
      %8789 = vmatprep.subr.mxu0 0.0
      %8790 = vmatpush1.msra.mxu0 0.0
      %8791 = vmatprep.subr.mxu0 0.0
      %8792 = vmatpush1.msra.mxu0 0.0
      %8793 = vmatprep.subr.mxu0 0.0
      %8794 = vmatpush1.msra.mxu0 0.0
      %8795 = vmatprep.mubr.f32.mxu0 0.0
      %v8796 = vand.u32 %v275, 4294901760
      %8797 = vmatmul.mubr.f32.gmra.mrb[0].mxu0 %v8796
      %v8798 = vpop.f32.mrb[0].mxu0
      %v8799 = vadd.f32 %v8552, %v8798
      %v8800 = vpop.f32.mrb[0].mxu0
      %8801 = vmatprep.mubr.f32.mxu0 0.0
      %v8802 = vand.u32 %v278, 4294901760
      %8803 = vmatmul.mubr.f32.gmra.mrb[0].mxu0 %v8802
      %v8804 = vpop.f32.mrb[0].mxu0
      %v8805 = vadd.f32 %v8558, %v8804
      %v8806 = vpop.f32.mrb[0].mxu0
      %8807 = vmatprep.mubr.f32.mxu0 0.0
      %v8808 = vand.u32 %v281, 4294901760
      %8809 = vmatmul.mubr.f32.gmra.mrb[0].mxu0 %v8808
      %v8810 = vpop.f32.mrb[0].mxu0
      %v8811 = vadd.f32 %v8564, %v8810
      %v8812 = vpop.f32.mrb[0].mxu0
      %8813 = vmatprep.mubr.f32.mxu0 0.0
      %v8814 = vand.u32 %v284, 4294901760
      %8815 = vmatmul.mubr.f32.gmra.mrb[0].mxu0 %v8814
      %v8816 = vpop.f32.mrb[0].mxu0
      %v8817 = vadd.f32 %v8570, %v8816
      %v8818 = vpop.f32.mrb[0].mxu0
      %8819 = vmatprep.mubr.f32.mxu0 0.0
      %v8820 = vand.u32 %v287, 4294901760
      %8821 = vmatmul.mubr.f32.gmra.mrb[0].mxu0 %v8820
      %v8822 = vpop.f32.mrb[0].mxu0
      %v8823 = vadd.f32 %v8576, %v8822
      %v8824 = vpop.f32.mrb[0].mxu0
      %8825 = vmatprep.mubr.f32.mxu0 0.0
      %v8826 = vand.u32 %v290, 4294901760
      %8827 = vmatmul.mubr.f32.gmra.mrb[0].mxu0 %v8826
      %v8828 = vpop.f32.mrb[0].mxu0
      %v8829 = vadd.f32 %v8582, %v8828
      %v8830 = vpop.f32.mrb[0].mxu0
      %8831 = vmatprep.mubr.f32.mxu0 0.0
      %v8832 = vand.u32 %v293, 4294901760
      %8833 = vmatmul.mubr.f32.gmra.mrb[0].mxu0 %v8832
      %v8834 = vpop.f32.mrb[0].mxu0
      %v8835 = vadd.f32 %v8588, %v8834
      %v8836 = vpop.f32.mrb[0].mxu0
      %8837 = vmatprep.mubr.f32.mxu0 0.0
      %v8838 = vand.u32 %v296, 4294901760
      %8839 = vmatmul.mubr.f32.gmra.mrb[0].mxu0 %v8838
      %v8840 = vpop.f32.mrb[0].mxu0
      %v8841 = vadd.f32 %v8594, %v8840
      %v8842 = vpop.f32.mrb[0].mxu0
      %8843 = vmatprep.mubr.f32.mxu0 0.0
      %v8844 = vand.u32 %v299, 4294901760
      %8845 = vmatmul.mubr.f32.gmra.mrb[0].mxu0 %v8844
      %v8846 = vpop.f32.mrb[0].mxu0
      %v8847 = vadd.f32 %v8600, %v8846
      %v8848 = vpop.f32.mrb[0].mxu0
      %8849 = vmatprep.mubr.f32.mxu0 0.0
      %v8850 = vand.u32 %v302, 4294901760
      %8851 = vmatmul.mubr.f32.gmra.mrb[0].mxu0 %v8850
      %v8852 = vpop.f32.mrb[0].mxu0
      %v8853 = vadd.f32 %v8606, %v8852
      %v8854 = vpop.f32.mrb[0].mxu0
      %8855 = vmatprep.mubr.f32.mxu0 0.0
      %v8856 = vand.u32 %v305, 4294901760
      %8857 = vmatmul.mubr.f32.gmra.mrb[0].mxu0 %v8856
      %v8858 = vpop.f32.mrb[0].mxu0
      %v8859 = vadd.f32 %v8612, %v8858
      %v8860 = vpop.f32.mrb[0].mxu0
      %8861 = vmatprep.mubr.f32.mxu0 0.0
      %v8862 = vand.u32 %v308, 4294901760
      %8863 = vmatmul.mubr.f32.gmra.mrb[0].mxu0 %v8862
      %v8864 = vpop.f32.mrb[0].mxu0
      %v8865 = vadd.f32 %v8618, %v8864
      %v8866 = vpop.f32.mrb[0].mxu0
      %8867 = vmatprep.mubr.f32.mxu0 0.0
      %v8868 = vand.u32 %v311, 4294901760
      %8869 = vmatmul.mubr.f32.gmra.mrb[0].mxu0 %v8868
      %v8870 = vpop.f32.mrb[0].mxu0
      %v8871 = vadd.f32 %v8624, %v8870
      %v8872 = vpop.f32.mrb[0].mxu0
      %8873 = vmatprep.mubr.f32.mxu0 0.0
      %v8874 = vand.u32 %v314, 4294901760
      %8875 = vmatmul.mubr.f32.gmra.mrb[0].mxu0 %v8874
      %v8876 = vpop.f32.mrb[0].mxu0
      %v8877 = vadd.f32 %v8630, %v8876
      %v8878 = vpop.f32.mrb[0].mxu0
      %8879 = vmatprep.mubr.f32.mxu0 0.0
      %v8880 = vand.u32 %v317, 4294901760
      %8881 = vmatmul.mubr.f32.gmra.mrb[0].mxu0 %v8880
      %v8882 = vpop.f32.mrb[0].mxu0
      %v8883 = vadd.f32 %v8636, %v8882
      %v8884 = vpop.f32.mrb[0].mxu0
      %8885 = vmatprep.mubr.f32.mxu0 0.0
      %v8886 = vand.u32 %v320, 4294901760
      %8887 = vmatmul.mubr.f32.gmra.mrb[0].mxu0 %v8886
      %v8888 = vpop.f32.mrb[0].mxu0
      %v8889 = vadd.f32 %v8642, %v8888
      %v8890 = vpop.f32.mrb[0].mxu0
      %8891 = vmatprep.mubr.f32.mxu0 0.0
      %v8892 = vand.u32 %v323, 4294901760
      %8893 = vmatmul.mubr.f32.gmra.mrb[0].mxu0 %v8892
      %v8894 = vpop.f32.mrb[0].mxu0
      %v8895 = vadd.f32 %v8648, %v8894
      %v8896 = vpop.f32.mrb[0].mxu0
      %8897 = vmatprep.mubr.f32.mxu0 0.0
      %v8898 = vand.u32 %v326, 4294901760
      %8899 = vmatmul.mubr.f32.gmra.mrb[0].mxu0 %v8898
      %v8900 = vpop.f32.mrb[0].mxu0
      %v8901 = vadd.f32 %v8654, %v8900
      %v8902 = vpop.f32.mrb[0].mxu0
      %8903 = vmatprep.mubr.f32.mxu0 0.0
      %v8904 = vand.u32 %v329, 4294901760
      %8905 = vmatmul.mubr.f32.gmra.mrb[0].mxu0 %v8904
      %v8906 = vpop.f32.mrb[0].mxu0
      %v8907 = vadd.f32 %v8660, %v8906
      %v8908 = vpop.f32.mrb[0].mxu0
      %8909 = vmatprep.mubr.f32.mxu0 0.0
      %v8910 = vand.u32 %v332, 4294901760
      %8911 = vmatmul.mubr.f32.gmra.mrb[0].mxu0 %v8910
      %v8912 = vpop.f32.mrb[0].mxu0
      %v8913 = vadd.f32 %v8666, %v8912
      %v8914 = vpop.f32.mrb[0].mxu0
      %8915 = vmatprep.mubr.f32.mxu0 0.0
      %v8916 = vand.u32 %v335, 4294901760
      %8917 = vmatmul.mubr.f32.gmra.mrb[0].mxu0 %v8916
      %v8918 = vpop.f32.mrb[0].mxu0
      %v8919 = vadd.f32 %v8672, %v8918
      %v8920 = vpop.f32.mrb[0].mxu0
      %8921 = vmatprep.mubr.f32.mxu0 0.0
      %v8922 = vand.u32 %v338, 4294901760
      %8923 = vmatmul.mubr.f32.gmra.mrb[0].mxu0 %v8922
      %v8924 = vpop.f32.mrb[0].mxu0
      %v8925 = vadd.f32 %v8678, %v8924
      %v8926 = vpop.f32.mrb[0].mxu0
      %8927 = vmatprep.mubr.f32.mxu0 0.0
      %v8928 = vand.u32 %v341, 4294901760
      %8929 = vmatmul.mubr.f32.gmra.mrb[0].mxu0 %v8928
      %v8930 = vpop.f32.mrb[0].mxu0
      %v8931 = vadd.f32 %v8684, %v8930
      %v8932 = vpop.f32.mrb[0].mxu0
      %8933 = vmatprep.mubr.f32.mxu0 0.0
      %v8934 = vand.u32 %v344, 4294901760
      %8935 = vmatmul.mubr.f32.gmra.mrb[0].mxu0 %v8934
      %v8936 = vpop.f32.mrb[0].mxu0
      %v8937 = vadd.f32 %v8690, %v8936
      %v8938 = vpop.f32.mrb[0].mxu0
      %8939 = vmatprep.mubr.f32.mxu0 0.0
      %v8940 = vand.u32 %v3772, 4294901760
      %8941 = vmatmul.mubr.f32.gmra.mrb[0].mxu0 %v8940
      %v8942 = vpop.f32.mrb[0].mxu0
      %v8943 = vadd.f32 %v8696, %v8942
      %v8944 = vpop.f32.mrb[0].mxu0
      %8945 = vmatprep.mubr.f32.mxu0 0.0
      %v8946 = vand.u32 %v3775, 4294901760
      %8947 = vmatmul.mubr.f32.gmra.mrb[0].mxu0 %v8946
      %v8948 = vpop.f32.mrb[0].mxu0
      %v8949 = vadd.f32 %v8702, %v8948
      %v8950 = vpop.f32.mrb[0].mxu0
      %8951 = vmatprep.mubr.f32.mxu0 0.0
      %v8952 = vand.u32 %v5517, 4294901760
      %8953 = vmatmul.mubr.f32.gmra.mrb[0].mxu0 %v8952
      %v8954 = vpop.f32.mrb[0].mxu0
      %v8955 = vadd.f32 %v8708, %v8954
      %v8956 = vpop.f32.mrb[0].mxu0
      %8957 = vmatprep.mubr.f32.mxu0 0.0
      %v8958 = vand.u32 %v5520, 4294901760
      %8959 = vmatmul.mubr.f32.gmra.mrb[0].mxu0 %v8958
      %v8960 = vpop.f32.mrb[0].mxu0
      %v8961 = vadd.f32 %v8714, %v8960
      %v8962 = vpop.f32.mrb[0].mxu0
      %8963 = vmatprep.mubr.f32.mxu0 0.0
      %v8964 = vand.u32 %v7262, 4294901760
      %8965 = vmatmul.mubr.f32.gmra.mrb[0].mxu0 %v8964
      %v8966 = vpop.f32.mrb[0].mxu0
      %v8967 = vadd.f32 %v8720, %v8966
      %v8968 = vpop.f32.mrb[0].mxu0
      %8969 = vmatprep.mubr.f32.mxu0 0.0
      %v8970 = vand.u32 %v7265, 4294901760
      %8971 = vmatmul.mubr.f32.gmra.mrb[0].mxu0 %v8970
      %v8972 = vpop.f32.mrb[0].mxu0
      %v8973 = vadd.f32 %v8726, %v8972
      %v8974 = vpop.f32.mrb[0].mxu0
      %8975 = vdwg.mxu0
      %v8976 = vadd.f32 %v7231, %v8799
      %v8977 = vadd.f32 %v7232, %v8805
      %v8978 = vadd.f32 %v7233, %v8811
      %v8979 = vadd.f32 %v7234, %v8817
      %v8980 = vadd.f32 %v7235, %v8823
      %v8981 = vadd.f32 %v7236, %v8829
      %v8982 = vadd.f32 %v7237, %v8835
      %v8983 = vadd.f32 %v7238, %v8841
      %v8984 = vadd.f32 %v7239, %v8847
      %v8985 = vadd.f32 %v7240, %v8853
      %v8986 = vadd.f32 %v7241, %v8859
      %v8987 = vadd.f32 %v7242, %v8865
      %v8988 = vadd.f32 %v7243, %v8871
      %v8989 = vadd.f32 %v7244, %v8877
      %v8990 = vadd.f32 %v7245, %v8883
      %v8991 = vadd.f32 %v7246, %v8889
      %v8992 = vadd.f32 %v7247, %v8895
      %v8993 = vadd.f32 %v7248, %v8901
      %v8994 = vadd.f32 %v7249, %v8907
      %v8995 = vadd.f32 %v7250, %v8913
      %v8996 = vadd.f32 %v7251, %v8919
      %v8997 = vadd.f32 %v7252, %v8925
      %v8998 = vadd.f32 %v7253, %v8931
      %v8999 = vadd.f32 %v7254, %v8937
      %v9000 = vadd.f32 %v7255, %v8943
      %v9001 = vadd.f32 %v7256, %v8949
      %v9002 = vadd.f32 %v7257, %v8955
      %v9003 = vadd.f32 %v7258, %v8961
      %v9004 = vadd.f32 %v7259, %v8967
      %v9005 = vadd.f32 %v7260, %v8973
      %v9006 = vld [vmem:[%s2] sm:$0x1]
      %v9008 = vlaneseq
      %v9009 = vshrl.u32 %v9008, 7
      %v9010 = vsub.s32 0, %v9009
      %v9011 = vrot.slane %v9006, %v9010
      %v9013 = vadd.f32 %v8976, %v9011
      %v9014 = vadd.f32 %v8977, %v9011
      %v9015 = vadd.f32 %v8978, %v9011
      %v9016 = vadd.f32 %v8979, %v9011
      %v9017 = vadd.f32 %v8980, %v9011
      %v9018 = vadd.f32 %v8981, %v9011
      %v9019 = vadd.f32 %v8982, %v9011
      %v9020 = vadd.f32 %v8983, %v9011
      %v9021 = vadd.f32 %v8984, %v9011
      %v9022 = vadd.f32 %v8985, %v9011
      %v9023 = vadd.f32 %v8986, %v9011
      %v9024 = vadd.f32 %v8987, %v9011
      %v9025 = vadd.f32 %v8988, %v9011
      %v9026 = vadd.f32 %v8989, %v9011
      %v9027 = vadd.f32 %v8990, %v9011
      %v9028 = vadd.f32 %v8991, %v9011
      %v9029 = vadd.f32 %v8992, %v9011
      %v9030 = vadd.f32 %v8993, %v9011
      %v9031 = vadd.f32 %v8994, %v9011
      %v9032 = vadd.f32 %v8995, %v9011
      %v9033 = vadd.f32 %v8996, %v9011
      %v9034 = vadd.f32 %v8997, %v9011
      %v9035 = vadd.f32 %v8998, %v9011
      %v9036 = vadd.f32 %v8999, %v9011
      %v9037 = vadd.f32 %v9000, %v9011
      %v9038 = vadd.f32 %v9001, %v9011
      %v9039 = vadd.f32 %v9002, %v9011
      %v9040 = vadd.f32 %v9003, %v9011
      %v9041 = vadd.f32 %v9004, %v9011
      %v9042 = vadd.f32 %v9005, %v9011
      %v9043 = vmax.f32 %v9013, 0.0
      %v9044 = vmax.f32 %v9014, 0.0
      %v9045 = vmax.f32 %v9015, 0.0
      %v9046 = vmax.f32 %v9016, 0.0
      %v9047 = vmax.f32 %v9017, 0.0
      %v9048 = vmax.f32 %v9018, 0.0
      %v9049 = vmax.f32 %v9019, 0.0
      %v9050 = vmax.f32 %v9020, 0.0
      %v9051 = vmax.f32 %v9021, 0.0
      %v9052 = vmax.f32 %v9022, 0.0
      %v9053 = vmax.f32 %v9023, 0.0
      %v9054 = vmax.f32 %v9024, 0.0
      %v9055 = vmax.f32 %v9025, 0.0
      %v9056 = vmax.f32 %v9026, 0.0
      %v9057 = vmax.f32 %v9027, 0.0
      %v9058 = vmax.f32 %v9028, 0.0
      %v9059 = vmax.f32 %v9029, 0.0
      %v9060 = vmax.f32 %v9030, 0.0
      %v9061 = vmax.f32 %v9031, 0.0
      %v9062 = vmax.f32 %v9032, 0.0
      %v9063 = vmax.f32 %v9033, 0.0
      %v9064 = vmax.f32 %v9034, 0.0
      %v9065 = vmax.f32 %v9035, 0.0
      %v9066 = vmax.f32 %v9036, 0.0
      %v9067 = vmax.f32 %v9037, 0.0
      %v9068 = vmax.f32 %v9038, 0.0
      %v9069 = vmax.f32 %v9039, 0.0
      %v9070 = vmax.f32 %v9040, 0.0
      %v9071 = vmax.f32 %v9041, 0.0
      %v9072 = vmax.f32 %v9042, 0.0
      %v9073 = vmul.f32 %v9043, %v9043
      %v9074 = vmul.f32 %v9044, %v9044
      %v9075 = vmul.f32 %v9045, %v9045
      %v9076 = vmul.f32 %v9046, %v9046
      %v9077 = vmul.f32 %v9047, %v9047
      %v9078 = vmul.f32 %v9048, %v9048
      %v9079 = vmul.f32 %v9049, %v9049
      %v9080 = vmul.f32 %v9050, %v9050
      %v9081 = vmul.f32 %v9051, %v9051
      %v9082 = vmul.f32 %v9052, %v9052
      %v9083 = vmul.f32 %v9053, %v9053
      %v9084 = vmul.f32 %v9054, %v9054
      %v9085 = vmul.f32 %v9055, %v9055
      %v9086 = vmul.f32 %v9056, %v9056
      %v9087 = vmul.f32 %v9057, %v9057
      %v9088 = vmul.f32 %v9058, %v9058
      %v9089 = vmul.f32 %v9059, %v9059
      %v9090 = vmul.f32 %v9060, %v9060
      %v9091 = vmul.f32 %v9061, %v9061
      %v9092 = vmul.f32 %v9062, %v9062
      %v9093 = vmul.f32 %v9063, %v9063
      %v9094 = vmul.f32 %v9064, %v9064
      %v9095 = vmul.f32 %v9065, %v9065
      %v9096 = vmul.f32 %v9066, %v9066
      %v9097 = vmul.f32 %v9067, %v9067
      %v9098 = vmul.f32 %v9068, %v9068
      %v9099 = vmul.f32 %v9069, %v9069
      %v9100 = vmul.f32 %v9070, %v9070
      %v9101 = vmul.f32 %v9071, %v9071
      %v9102 = vmul.f32 %v9072, %v9072
      %9103 = vrot.lane.b32.xlu0 %v9073, 1
      %v9104 = vpop.permute.xlu0 %9103
      %9105 = vrot.lane.b32.xlu0 %v9074, 1
      %v9106 = vpop.permute.xlu0 %9105
      %9107 = vrot.lane.b32.xlu0 %v9075, 1
      %v9108 = vpop.permute.xlu0 %9107
      %9109 = vrot.lane.b32.xlu0 %v9076, 1
      %v9110 = vpop.permute.xlu0 %9109
      %9111 = vrot.lane.b32.xlu0 %v9077, 1
      %v9112 = vpop.permute.xlu0 %9111
      %9113 = vrot.lane.b32.xlu0 %v9078, 1
      %v9114 = vpop.permute.xlu0 %9113
      %9115 = vrot.lane.b32.xlu0 %v9079, 1
      %v9116 = vpop.permute.xlu0 %9115
      %9117 = vrot.lane.b32.xlu0 %v9080, 1
      %v9118 = vpop.permute.xlu0 %9117
      %9119 = vrot.lane.b32.xlu0 %v9081, 1
      %v9120 = vpop.permute.xlu0 %9119
      %9121 = vrot.lane.b32.xlu0 %v9082, 1
      %v9122 = vpop.permute.xlu0 %9121
      %9123 = vrot.lane.b32.xlu0 %v9083, 1
      %v9124 = vpop.permute.xlu0 %9123
      %9125 = vrot.lane.b32.xlu0 %v9084, 1
      %v9126 = vpop.permute.xlu0 %9125
      %9127 = vrot.lane.b32.xlu0 %v9085, 1
      %v9128 = vpop.permute.xlu0 %9127
      %9129 = vrot.lane.b32.xlu0 %v9086, 1
      %v9130 = vpop.permute.xlu0 %9129
      %9131 = vrot.lane.b32.xlu0 %v9087, 1
      %v9132 = vpop.permute.xlu0 %9131
      %9133 = vrot.lane.b32.xlu0 %v9088, 1
      %v9134 = vpop.permute.xlu0 %9133
      %9135 = vrot.lane.b32.xlu0 %v9089, 1
      %v9136 = vpop.permute.xlu0 %9135
      %9137 = vrot.lane.b32.xlu0 %v9090, 1
      %v9138 = vpop.permute.xlu0 %9137
      %9139 = vrot.lane.b32.xlu0 %v9091, 1
      %v9140 = vpop.permute.xlu0 %9139
      %9141 = vrot.lane.b32.xlu0 %v9092, 1
      %v9142 = vpop.permute.xlu0 %9141
      %9143 = vrot.lane.b32.xlu0 %v9093, 1
      %v9144 = vpop.permute.xlu0 %9143
      %9145 = vrot.lane.b32.xlu0 %v9094, 1
      %v9146 = vpop.permute.xlu0 %9145
      %9147 = vrot.lane.b32.xlu0 %v9095, 1
      %v9148 = vpop.permute.xlu0 %9147
      %9149 = vrot.lane.b32.xlu0 %v9096, 1
      %v9150 = vpop.permute.xlu0 %9149
      %9151 = vrot.lane.b32.xlu0 %v9097, 1
      %v9152 = vpop.permute.xlu0 %9151
      %9153 = vrot.lane.b32.xlu0 %v9098, 1
      %v9154 = vpop.permute.xlu0 %9153
      %9155 = vrot.lane.b32.xlu0 %v9099, 1
      %v9156 = vpop.permute.xlu0 %9155
      %9157 = vrot.lane.b32.xlu0 %v9100, 1
      %v9158 = vpop.permute.xlu0 %9157
      %9159 = vrot.lane.b32.xlu0 %v9101, 1
      %v9160 = vpop.permute.xlu0 %9159
      %9161 = vrot.lane.b32.xlu0 %v9102, 1
      %v9162 = vpop.permute.xlu0 %9161
      %v9163 = vadd.f32 %v9073, %v9104
      %v9164 = vadd.f32 %v9074, %v9106
      %v9165 = vadd.f32 %v9075, %v9108
      %v9166 = vadd.f32 %v9076, %v9110
      %v9167 = vadd.f32 %v9077, %v9112
      %v9168 = vadd.f32 %v9078, %v9114
      %v9169 = vadd.f32 %v9079, %v9116
      %v9170 = vadd.f32 %v9080, %v9118
      %v9171 = vadd.f32 %v9081, %v9120
      %v9172 = vadd.f32 %v9082, %v9122
      %v9173 = vadd.f32 %v9083, %v9124
      %v9174 = vadd.f32 %v9084, %v9126
      %v9175 = vadd.f32 %v9085, %v9128
      %v9176 = vadd.f32 %v9086, %v9130
      %v9177 = vadd.f32 %v9087, %v9132
      %v9178 = vadd.f32 %v9088, %v9134
      %v9179 = vadd.f32 %v9089, %v9136
      %v9180 = vadd.f32 %v9090, %v9138
      %v9181 = vadd.f32 %v9091, %v9140
      %v9182 = vadd.f32 %v9092, %v9142
      %v9183 = vadd.f32 %v9093, %v9144
      %v9184 = vadd.f32 %v9094, %v9146
      %v9185 = vadd.f32 %v9095, %v9148
      %v9186 = vadd.f32 %v9096, %v9150
      %v9187 = vadd.f32 %v9097, %v9152
      %v9188 = vadd.f32 %v9098, %v9154
      %v9189 = vadd.f32 %v9099, %v9156
      %v9190 = vadd.f32 %v9100, %v9158
      %v9191 = vadd.f32 %v9101, %v9160
      %v9192 = vadd.f32 %v9102, %v9162
      %9193 = vrot.lane.b32.xlu0 %v9073, 127
      %v9194 = vpop.permute.xlu0 %9193
      %9195 = vrot.lane.b32.xlu0 %v9074, 127
      %v9196 = vpop.permute.xlu0 %9195
      %9197 = vrot.lane.b32.xlu0 %v9075, 127
      %v9198 = vpop.permute.xlu0 %9197
      %9199 = vrot.lane.b32.xlu0 %v9076, 127
      %v9200 = vpop.permute.xlu0 %9199
      %9201 = vrot.lane.b32.xlu0 %v9077, 127
      %v9202 = vpop.permute.xlu0 %9201
      %9203 = vrot.lane.b32.xlu0 %v9078, 127
      %v9204 = vpop.permute.xlu0 %9203
      %9205 = vrot.lane.b32.xlu0 %v9079, 127
      %v9206 = vpop.permute.xlu0 %9205
      %9207 = vrot.lane.b32.xlu0 %v9080, 127
      %v9208 = vpop.permute.xlu0 %9207
      %9209 = vrot.lane.b32.xlu0 %v9081, 127
      %v9210 = vpop.permute.xlu0 %9209
      %9211 = vrot.lane.b32.xlu0 %v9082, 127
      %v9212 = vpop.permute.xlu0 %9211
      %9213 = vrot.lane.b32.xlu0 %v9083, 127
      %v9214 = vpop.permute.xlu0 %9213
      %9215 = vrot.lane.b32.xlu0 %v9084, 127
      %v9216 = vpop.permute.xlu0 %9215
      %9217 = vrot.lane.b32.xlu0 %v9085, 127
      %v9218 = vpop.permute.xlu0 %9217
      %9219 = vrot.lane.b32.xlu0 %v9086, 127
      %v9220 = vpop.permute.xlu0 %9219
      %9221 = vrot.lane.b32.xlu0 %v9087, 127
      %v9222 = vpop.permute.xlu0 %9221
      %9223 = vrot.lane.b32.xlu0 %v9088, 127
      %v9224 = vpop.permute.xlu0 %9223
      %9225 = vrot.lane.b32.xlu0 %v9089, 127
      %v9226 = vpop.permute.xlu0 %9225
      %9227 = vrot.lane.b32.xlu0 %v9090, 127
      %v9228 = vpop.permute.xlu0 %9227
      %9229 = vrot.lane.b32.xlu0 %v9091, 127
      %v9230 = vpop.permute.xlu0 %9229
      %9231 = vrot.lane.b32.xlu0 %v9092, 127
      %v9232 = vpop.permute.xlu0 %9231
      %9233 = vrot.lane.b32.xlu0 %v9093, 127
      %v9234 = vpop.permute.xlu0 %9233
      %9235 = vrot.lane.b32.xlu0 %v9094, 127
      %v9236 = vpop.permute.xlu0 %9235
      %9237 = vrot.lane.b32.xlu0 %v9095, 127
      %v9238 = vpop.permute.xlu0 %9237
      %9239 = vrot.lane.b32.xlu0 %v9096, 127
      %v9240 = vpop.permute.xlu0 %9239
      %9241 = vrot.lane.b32.xlu0 %v9097, 127
      %v9242 = vpop.permute.xlu0 %9241
      %9243 = vrot.lane.b32.xlu0 %v9098, 127
      %v9244 = vpop.permute.xlu0 %9243
      %9245 = vrot.lane.b32.xlu0 %v9099, 127
      %v9246 = vpop.permute.xlu0 %9245
      %9247 = vrot.lane.b32.xlu0 %v9100, 127
      %v9248 = vpop.permute.xlu0 %9247
      %9249 = vrot.lane.b32.xlu0 %v9101, 127
      %v9250 = vpop.permute.xlu0 %9249
      %9251 = vrot.lane.b32.xlu0 %v9102, 127
      %v9252 = vpop.permute.xlu0 %9251
      %v9253 = vadd.f32 %v9163, %v9194
      %v9254 = vadd.f32 %v9164, %v9196
      %v9255 = vadd.f32 %v9165, %v9198
      %v9256 = vadd.f32 %v9166, %v9200
      %v9257 = vadd.f32 %v9167, %v9202
      %v9258 = vadd.f32 %v9168, %v9204
      %v9259 = vadd.f32 %v9169, %v9206
      %v9260 = vadd.f32 %v9170, %v9208
      %v9261 = vadd.f32 %v9171, %v9210
      %v9262 = vadd.f32 %v9172, %v9212
      %v9263 = vadd.f32 %v9173, %v9214
      %v9264 = vadd.f32 %v9174, %v9216
      %v9265 = vadd.f32 %v9175, %v9218
      %v9266 = vadd.f32 %v9176, %v9220
      %v9267 = vadd.f32 %v9177, %v9222
      %v9268 = vadd.f32 %v9178, %v9224
      %v9269 = vadd.f32 %v9179, %v9226
      %v9270 = vadd.f32 %v9180, %v9228
      %v9271 = vadd.f32 %v9181, %v9230
      %v9272 = vadd.f32 %v9182, %v9232
      %v9273 = vadd.f32 %v9183, %v9234
      %v9274 = vadd.f32 %v9184, %v9236
      %v9275 = vadd.f32 %v9185, %v9238
      %v9276 = vadd.f32 %v9186, %v9240
      %v9277 = vadd.f32 %v9187, %v9242
      %v9278 = vadd.f32 %v9188, %v9244
      %v9279 = vadd.f32 %v9189, %v9246
      %v9280 = vadd.f32 %v9190, %v9248
      %v9281 = vadd.f32 %v9191, %v9250
      %v9282 = vadd.f32 %v9192, %v9252
      %v9283 = vmul.f32 %v9253, 1.6666667e-05
      %v9284 = vmul.f32 %v9254, 1.6666667e-05
      %v9285 = vmul.f32 %v9255, 1.6666667e-05
      %v9286 = vmul.f32 %v9256, 1.6666667e-05
      %v9287 = vmul.f32 %v9257, 1.6666667e-05
      %v9288 = vmul.f32 %v9258, 1.6666667e-05
      %v9289 = vmul.f32 %v9259, 1.6666667e-05
      %v9290 = vmul.f32 %v9260, 1.6666667e-05
      %v9291 = vmul.f32 %v9261, 1.6666667e-05
      %v9292 = vmul.f32 %v9262, 1.6666667e-05
      %v9293 = vmul.f32 %v9263, 1.6666667e-05
      %v9294 = vmul.f32 %v9264, 1.6666667e-05
      %v9295 = vmul.f32 %v9265, 1.6666667e-05
      %v9296 = vmul.f32 %v9266, 1.6666667e-05
      %v9297 = vmul.f32 %v9267, 1.6666667e-05
      %v9298 = vmul.f32 %v9268, 1.6666667e-05
      %v9299 = vmul.f32 %v9269, 1.6666667e-05
      %v9300 = vmul.f32 %v9270, 1.6666667e-05
      %v9301 = vmul.f32 %v9271, 1.6666667e-05
      %v9302 = vmul.f32 %v9272, 1.6666667e-05
      %v9303 = vmul.f32 %v9273, 1.6666667e-05
      %v9304 = vmul.f32 %v9274, 1.6666667e-05
      %v9305 = vmul.f32 %v9275, 1.6666667e-05
      %v9306 = vmul.f32 %v9276, 1.6666667e-05
      %v9307 = vmul.f32 %v9277, 1.6666667e-05
      %v9308 = vmul.f32 %v9278, 1.6666667e-05
      %v9309 = vmul.f32 %v9279, 1.6666667e-05
      %v9310 = vmul.f32 %v9280, 1.6666667e-05
      %v9311 = vmul.f32 %v9281, 1.6666667e-05
      %v9312 = vmul.f32 %v9282, 1.6666667e-05
      %v9313 = vadd.f32 %v9283, 1.0
      %v9314 = vadd.f32 %v9284, 1.0
      %v9315 = vadd.f32 %v9285, 1.0
      %v9316 = vadd.f32 %v9286, 1.0
      %v9317 = vadd.f32 %v9287, 1.0
      %v9318 = vadd.f32 %v9288, 1.0
      %v9319 = vadd.f32 %v9289, 1.0
      %v9320 = vadd.f32 %v9290, 1.0
      %v9321 = vadd.f32 %v9291, 1.0
      %v9322 = vadd.f32 %v9292, 1.0
      %v9323 = vadd.f32 %v9293, 1.0
      %v9324 = vadd.f32 %v9294, 1.0
      %v9325 = vadd.f32 %v9295, 1.0
      %v9326 = vadd.f32 %v9296, 1.0
      %v9327 = vadd.f32 %v9297, 1.0
      %v9328 = vadd.f32 %v9298, 1.0
      %v9329 = vadd.f32 %v9299, 1.0
      %v9330 = vadd.f32 %v9300, 1.0
      %v9331 = vadd.f32 %v9301, 1.0
      %v9332 = vadd.f32 %v9302, 1.0
      %v9333 = vadd.f32 %v9303, 1.0
      %v9334 = vadd.f32 %v9304, 1.0
      %v9335 = vadd.f32 %v9305, 1.0
      %v9336 = vadd.f32 %v9306, 1.0
      %v9337 = vadd.f32 %v9307, 1.0
      %v9338 = vadd.f32 %v9308, 1.0
      %v9339 = vadd.f32 %v9309, 1.0
      %v9340 = vadd.f32 %v9310, 1.0
      %v9341 = vadd.f32 %v9311, 1.0
      %v9342 = vadd.f32 %v9312, 1.0
      %v9343 = vrsqrt.pop %v9313
      %v9344 = vmul.f32 %v9313, %v9343
      %vm9345 = vcmp.eq.f32.partialorder %v9313, inf
      %v9346 = vsel %vm9345, %v9313, %v9344
      %vm9347 = vcmp.eq.f32.partialorder %v9313, 0.0
      %v9348 = vand.u32 %v9313, 2147483648
      %v9349 = vsel %vm9347, %v9348, %v9346
      %v9350 = vrsqrt.pop %v9314
      %v9351 = vmul.f32 %v9314, %v9350
      %vm9352 = vcmp.eq.f32.partialorder %v9314, inf
      %v9353 = vsel %vm9352, %v9314, %v9351
      %vm9354 = vcmp.eq.f32.partialorder %v9314, 0.0
      %v9355 = vand.u32 %v9314, 2147483648
      %v9356 = vsel %vm9354, %v9355, %v9353
      %v9357 = vrsqrt.pop %v9315
      %v9358 = vmul.f32 %v9315, %v9357
      %vm9359 = vcmp.eq.f32.partialorder %v9315, inf
      %v9360 = vsel %vm9359, %v9315, %v9358
      %vm9361 = vcmp.eq.f32.partialorder %v9315, 0.0
      %v9362 = vand.u32 %v9315, 2147483648
      %v9363 = vsel %vm9361, %v9362, %v9360
      %v9364 = vrsqrt.pop %v9316
      %v9365 = vmul.f32 %v9316, %v9364
      %vm9366 = vcmp.eq.f32.partialorder %v9316, inf
      %v9367 = vsel %vm9366, %v9316, %v9365
      %vm9368 = vcmp.eq.f32.partialorder %v9316, 0.0
      %v9369 = vand.u32 %v9316, 2147483648
      %v9370 = vsel %vm9368, %v9369, %v9367
      %v9371 = vrsqrt.pop %v9317
      %v9372 = vmul.f32 %v9317, %v9371
      %vm9373 = vcmp.eq.f32.partialorder %v9317, inf
      %v9374 = vsel %vm9373, %v9317, %v9372
      %vm9375 = vcmp.eq.f32.partialorder %v9317, 0.0
      %v9376 = vand.u32 %v9317, 2147483648
      %v9377 = vsel %vm9375, %v9376, %v9374
      %v9378 = vrsqrt.pop %v9318
      %v9379 = vmul.f32 %v9318, %v9378
      %vm9380 = vcmp.eq.f32.partialorder %v9318, inf
      %v9381 = vsel %vm9380, %v9318, %v9379
      %vm9382 = vcmp.eq.f32.partialorder %v9318, 0.0
      %v9383 = vand.u32 %v9318, 2147483648
      %v9384 = vsel %vm9382, %v9383, %v9381
      %v9385 = vrsqrt.pop %v9319
      %v9386 = vmul.f32 %v9319, %v9385
      %vm9387 = vcmp.eq.f32.partialorder %v9319, inf
      %v9388 = vsel %vm9387, %v9319, %v9386
      %vm9389 = vcmp.eq.f32.partialorder %v9319, 0.0
      %v9390 = vand.u32 %v9319, 2147483648
      %v9391 = vsel %vm9389, %v9390, %v9388
      %v9392 = vrsqrt.pop %v9320
      %v9393 = vmul.f32 %v9320, %v9392
      %vm9394 = vcmp.eq.f32.partialorder %v9320, inf
      %v9395 = vsel %vm9394, %v9320, %v9393
      %vm9396 = vcmp.eq.f32.partialorder %v9320, 0.0
      %v9397 = vand.u32 %v9320, 2147483648
      %v9398 = vsel %vm9396, %v9397, %v9395
      %v9399 = vrsqrt.pop %v9321
      %v9400 = vmul.f32 %v9321, %v9399
      %vm9401 = vcmp.eq.f32.partialorder %v9321, inf
      %v9402 = vsel %vm9401, %v9321, %v9400
      %vm9403 = vcmp.eq.f32.partialorder %v9321, 0.0
      %v9404 = vand.u32 %v9321, 2147483648
      %v9405 = vsel %vm9403, %v9404, %v9402
      %v9406 = vrsqrt.pop %v9322
      %v9407 = vmul.f32 %v9322, %v9406
      %vm9408 = vcmp.eq.f32.partialorder %v9322, inf
      %v9409 = vsel %vm9408, %v9322, %v9407
      %vm9410 = vcmp.eq.f32.partialorder %v9322, 0.0
      %v9411 = vand.u32 %v9322, 2147483648
      %v9412 = vsel %vm9410, %v9411, %v9409
      %v9413 = vrsqrt.pop %v9323
      %v9414 = vmul.f32 %v9323, %v9413
      %vm9415 = vcmp.eq.f32.partialorder %v9323, inf
      %v9416 = vsel %vm9415, %v9323, %v9414
      %vm9417 = vcmp.eq.f32.partialorder %v9323, 0.0
      %v9418 = vand.u32 %v9323, 2147483648
      %v9419 = vsel %vm9417, %v9418, %v9416
      %v9420 = vrsqrt.pop %v9324
      %v9421 = vmul.f32 %v9324, %v9420
      %vm9422 = vcmp.eq.f32.partialorder %v9324, inf
      %v9423 = vsel %vm9422, %v9324, %v9421
      %vm9424 = vcmp.eq.f32.partialorder %v9324, 0.0
      %v9425 = vand.u32 %v9324, 2147483648
      %v9426 = vsel %vm9424, %v9425, %v9423
      %v9427 = vrsqrt.pop %v9325
      %v9428 = vmul.f32 %v9325, %v9427
      %vm9429 = vcmp.eq.f32.partialorder %v9325, inf
      %v9430 = vsel %vm9429, %v9325, %v9428
      %vm9431 = vcmp.eq.f32.partialorder %v9325, 0.0
      %v9432 = vand.u32 %v9325, 2147483648
      %v9433 = vsel %vm9431, %v9432, %v9430
      %v9434 = vrsqrt.pop %v9326
      %v9435 = vmul.f32 %v9326, %v9434
      %vm9436 = vcmp.eq.f32.partialorder %v9326, inf
      %v9437 = vsel %vm9436, %v9326, %v9435
      %vm9438 = vcmp.eq.f32.partialorder %v9326, 0.0
      %v9439 = vand.u32 %v9326, 2147483648
      %v9440 = vsel %vm9438, %v9439, %v9437
      %v9441 = vrsqrt.pop %v9327
      %v9442 = vmul.f32 %v9327, %v9441
      %vm9443 = vcmp.eq.f32.partialorder %v9327, inf
      %v9444 = vsel %vm9443, %v9327, %v9442
      %vm9445 = vcmp.eq.f32.partialorder %v9327, 0.0
      %v9446 = vand.u32 %v9327, 2147483648
      %v9447 = vsel %vm9445, %v9446, %v9444
      %v9448 = vrsqrt.pop %v9328
      %v9449 = vmul.f32 %v9328, %v9448
      %vm9450 = vcmp.eq.f32.partialorder %v9328, inf
      %v9451 = vsel %vm9450, %v9328, %v9449
      %vm9452 = vcmp.eq.f32.partialorder %v9328, 0.0
      %v9453 = vand.u32 %v9328, 2147483648
      %v9454 = vsel %vm9452, %v9453, %v9451
      %v9455 = vrsqrt.pop %v9329
      %v9456 = vmul.f32 %v9329, %v9455
      %vm9457 = vcmp.eq.f32.partialorder %v9329, inf
      %v9458 = vsel %vm9457, %v9329, %v9456
      %vm9459 = vcmp.eq.f32.partialorder %v9329, 0.0
      %v9460 = vand.u32 %v9329, 2147483648
      %v9461 = vsel %vm9459, %v9460, %v9458
      %v9462 = vrsqrt.pop %v9330
      %v9463 = vmul.f32 %v9330, %v9462
      %vm9464 = vcmp.eq.f32.partialorder %v9330, inf
      %v9465 = vsel %vm9464, %v9330, %v9463
      %vm9466 = vcmp.eq.f32.partialorder %v9330, 0.0
      %v9467 = vand.u32 %v9330, 2147483648
      %v9468 = vsel %vm9466, %v9467, %v9465
      %v9469 = vrsqrt.pop %v9331
      %v9470 = vmul.f32 %v9331, %v9469
      %vm9471 = vcmp.eq.f32.partialorder %v9331, inf
      %v9472 = vsel %vm9471, %v9331, %v9470
      %vm9473 = vcmp.eq.f32.partialorder %v9331, 0.0
      %v9474 = vand.u32 %v9331, 2147483648
      %v9475 = vsel %vm9473, %v9474, %v9472
      %v9476 = vrsqrt.pop %v9332
      %v9477 = vmul.f32 %v9332, %v9476
      %vm9478 = vcmp.eq.f32.partialorder %v9332, inf
      %v9479 = vsel %vm9478, %v9332, %v9477
      %vm9480 = vcmp.eq.f32.partialorder %v9332, 0.0
      %v9481 = vand.u32 %v9332, 2147483648
      %v9482 = vsel %vm9480, %v9481, %v9479
      %v9483 = vrsqrt.pop %v9333
      %v9484 = vmul.f32 %v9333, %v9483
      %vm9485 = vcmp.eq.f32.partialorder %v9333, inf
      %v9486 = vsel %vm9485, %v9333, %v9484
      %vm9487 = vcmp.eq.f32.partialorder %v9333, 0.0
      %v9488 = vand.u32 %v9333, 2147483648
      %v9489 = vsel %vm9487, %v9488, %v9486
      %v9490 = vrsqrt.pop %v9334
      %v9491 = vmul.f32 %v9334, %v9490
      %vm9492 = vcmp.eq.f32.partialorder %v9334, inf
      %v9493 = vsel %vm9492, %v9334, %v9491
      %vm9494 = vcmp.eq.f32.partialorder %v9334, 0.0
      %v9495 = vand.u32 %v9334, 2147483648
      %v9496 = vsel %vm9494, %v9495, %v9493
      %v9497 = vrsqrt.pop %v9335
      %v9498 = vmul.f32 %v9335, %v9497
      %vm9499 = vcmp.eq.f32.partialorder %v9335, inf
      %v9500 = vsel %vm9499, %v9335, %v9498
      %vm9501 = vcmp.eq.f32.partialorder %v9335, 0.0
      %v9502 = vand.u32 %v9335, 2147483648
      %v9503 = vsel %vm9501, %v9502, %v9500
      %v9504 = vrsqrt.pop %v9336
      %v9505 = vmul.f32 %v9336, %v9504
      %vm9506 = vcmp.eq.f32.partialorder %v9336, inf
      %v9507 = vsel %vm9506, %v9336, %v9505
      %vm9508 = vcmp.eq.f32.partialorder %v9336, 0.0
      %v9509 = vand.u32 %v9336, 2147483648
      %v9510 = vsel %vm9508, %v9509, %v9507
      %v9511 = vrsqrt.pop %v9337
      %v9512 = vmul.f32 %v9337, %v9511
      %vm9513 = vcmp.eq.f32.partialorder %v9337, inf
      %v9514 = vsel %vm9513, %v9337, %v9512
      %vm9515 = vcmp.eq.f32.partialorder %v9337, 0.0
      %v9516 = vand.u32 %v9337, 2147483648
      %v9517 = vsel %vm9515, %v9516, %v9514
      %v9518 = vrsqrt.pop %v9338
      %v9519 = vmul.f32 %v9338, %v9518
      %vm9520 = vcmp.eq.f32.partialorder %v9338, inf
      %v9521 = vsel %vm9520, %v9338, %v9519
      %vm9522 = vcmp.eq.f32.partialorder %v9338, 0.0
      %v9523 = vand.u32 %v9338, 2147483648
      %v9524 = vsel %vm9522, %v9523, %v9521
      %v9525 = vrsqrt.pop %v9339
      %v9526 = vmul.f32 %v9339, %v9525
      %vm9527 = vcmp.eq.f32.partialorder %v9339, inf
      %v9528 = vsel %vm9527, %v9339, %v9526
      %vm9529 = vcmp.eq.f32.partialorder %v9339, 0.0
      %v9530 = vand.u32 %v9339, 2147483648
      %v9531 = vsel %vm9529, %v9530, %v9528
      %v9532 = vrsqrt.pop %v9340
      %v9533 = vmul.f32 %v9340, %v9532
      %vm9534 = vcmp.eq.f32.partialorder %v9340, inf
      %v9535 = vsel %vm9534, %v9340, %v9533
      %vm9536 = vcmp.eq.f32.partialorder %v9340, 0.0
      %v9537 = vand.u32 %v9340, 2147483648
      %v9538 = vsel %vm9536, %v9537, %v9535
      %v9539 = vrsqrt.pop %v9341
      %v9540 = vmul.f32 %v9341, %v9539
      %vm9541 = vcmp.eq.f32.partialorder %v9341, inf
      %v9542 = vsel %vm9541, %v9341, %v9540
      %vm9543 = vcmp.eq.f32.partialorder %v9341, 0.0
      %v9544 = vand.u32 %v9341, 2147483648
      %v9545 = vsel %vm9543, %v9544, %v9542
      %v9546 = vrsqrt.pop %v9342
      %v9547 = vmul.f32 %v9342, %v9546
      %vm9548 = vcmp.eq.f32.partialorder %v9342, inf
      %v9549 = vsel %vm9548, %v9342, %v9547
      %vm9550 = vcmp.eq.f32.partialorder %v9342, 0.0
      %v9551 = vand.u32 %v9342, 2147483648
      %v9552 = vsel %vm9550, %v9551, %v9549
      %v9553 = vmul.f32 %v9313, %v9349
      %v9554 = vmul.f32 %v9314, %v9356
      %v9555 = vmul.f32 %v9315, %v9363
      %v9556 = vmul.f32 %v9316, %v9370
      %v9557 = vmul.f32 %v9317, %v9377
      %v9558 = vmul.f32 %v9318, %v9384
      %v9559 = vmul.f32 %v9319, %v9391
      %v9560 = vmul.f32 %v9320, %v9398
      %v9561 = vmul.f32 %v9321, %v9405
      %v9562 = vmul.f32 %v9322, %v9412
      %v9563 = vmul.f32 %v9323, %v9419
      %v9564 = vmul.f32 %v9324, %v9426
      %v9565 = vmul.f32 %v9325, %v9433
      %v9566 = vmul.f32 %v9326, %v9440
      %v9567 = vmul.f32 %v9327, %v9447
      %v9568 = vmul.f32 %v9328, %v9454
      %v9569 = vmul.f32 %v9329, %v9461
      %v9570 = vmul.f32 %v9330, %v9468
      %v9571 = vmul.f32 %v9331, %v9475
      %v9572 = vmul.f32 %v9332, %v9482
      %v9573 = vmul.f32 %v9333, %v9489
      %v9574 = vmul.f32 %v9334, %v9496
      %v9575 = vmul.f32 %v9335, %v9503
      %v9576 = vmul.f32 %v9336, %v9510
      %v9577 = vmul.f32 %v9337, %v9517
      %v9578 = vmul.f32 %v9338, %v9524
      %v9579 = vmul.f32 %v9339, %v9531
      %v9580 = vmul.f32 %v9340, %v9538
      %v9581 = vmul.f32 %v9341, %v9545
      %v9582 = vmul.f32 %v9342, %v9552
      %v9583 = vrsqrt.pop %v9553
      %v9584 = vrsqrt.pop %v9554
      %v9585 = vrsqrt.pop %v9555
      %v9586 = vrsqrt.pop %v9556
      %v9587 = vrsqrt.pop %v9557
      %v9588 = vrsqrt.pop %v9558
      %v9589 = vrsqrt.pop %v9559
      %v9590 = vrsqrt.pop %v9560
      %v9591 = vrsqrt.pop %v9561
      %v9592 = vrsqrt.pop %v9562
      %v9593 = vrsqrt.pop %v9563
      %v9594 = vrsqrt.pop %v9564
      %v9595 = vrsqrt.pop %v9565
      %v9596 = vrsqrt.pop %v9566
      %v9597 = vrsqrt.pop %v9567
      %v9598 = vrsqrt.pop %v9568
      %v9599 = vrsqrt.pop %v9569
      %v9600 = vrsqrt.pop %v9570
      %v9601 = vrsqrt.pop %v9571
      %v9602 = vrsqrt.pop %v9572
      %v9603 = vrsqrt.pop %v9573
      %v9604 = vrsqrt.pop %v9574
      %v9605 = vrsqrt.pop %v9575
      %v9606 = vrsqrt.pop %v9576
      %v9607 = vrsqrt.pop %v9577
      %v9608 = vrsqrt.pop %v9578
      %v9609 = vrsqrt.pop %v9579
      %v9610 = vrsqrt.pop %v9580
      %v9611 = vrsqrt.pop %v9581
      %v9612 = vrsqrt.pop %v9582
      %v9613 = vmul.f32 %v9043, %v9583
      %v9614 = vmul.f32 %v9044, %v9584
      %v9615 = vmul.f32 %v9045, %v9585
      %v9616 = vmul.f32 %v9046, %v9586
      %v9617 = vmul.f32 %v9047, %v9587
      %v9618 = vmul.f32 %v9048, %v9588
      %v9619 = vmul.f32 %v9049, %v9589
      %v9620 = vmul.f32 %v9050, %v9590
      %v9621 = vmul.f32 %v9051, %v9591
      %v9622 = vmul.f32 %v9052, %v9592
      %v9623 = vmul.f32 %v9053, %v9593
      %v9624 = vmul.f32 %v9054, %v9594
      %v9625 = vmul.f32 %v9055, %v9595
      %v9626 = vmul.f32 %v9056, %v9596
      %v9627 = vmul.f32 %v9057, %v9597
      %v9628 = vmul.f32 %v9058, %v9598
      %v9629 = vmul.f32 %v9059, %v9599
      %v9630 = vmul.f32 %v9060, %v9600
      %v9631 = vmul.f32 %v9061, %v9601
      %v9632 = vmul.f32 %v9062, %v9602
      %v9633 = vmul.f32 %v9063, %v9603
      %v9634 = vmul.f32 %v9064, %v9604
      %v9635 = vmul.f32 %v9065, %v9605
      %v9636 = vmul.f32 %v9066, %v9606
      %v9637 = vmul.f32 %v9067, %v9607
      %v9638 = vmul.f32 %v9068, %v9608
      %v9639 = vmul.f32 %v9069, %v9609
      %v9640 = vmul.f32 %v9070, %v9610
      %v9641 = vmul.f32 %v9071, %v9611
      %v9642 = vmul.f32 %v9072, %v9612
      %v9643 = vmax.f32 %v9613, %v9615
      %v9644 = vmax.f32 %v9614, %v9616
      %v9645 = vmax.f32 %v9617, %v9619
      %v9646 = vmax.f32 %v9618, %v9620
      %v9647 = vmax.f32 %v9621, %v9623
      %v9648 = vmax.f32 %v9622, %v9624
      %v9649 = vmax.f32 %v9625, %v9627
      %v9650 = vmax.f32 %v9626, %v9628
      %v9651 = vmax.f32 %v9629, %v9631
      %v9652 = vmax.f32 %v9630, %v9632
      %v9653 = vmax.f32 %v9633, %v9635
      %v9654 = vmax.f32 %v9634, %v9636
      %v9655 = vmax.f32 %v9637, %v9639
      %v9656 = vmax.f32 %v9638, %v9640
      %v9657 = vmax.f32 %v9643, %v9617
      %v9658 = vmax.f32 %v9644, %v9618
      %v9659 = vmax.f32 %v9645, %v9621
      %v9660 = vmax.f32 %v9646, %v9622
      %v9661 = vmax.f32 %v9647, %v9625
      %v9662 = vmax.f32 %v9648, %v9626
      %v9663 = vmax.f32 %v9649, %v9629
      %v9664 = vmax.f32 %v9650, %v9630
      %v9665 = vmax.f32 %v9651, %v9633
      %v9666 = vmax.f32 %v9652, %v9634
      %v9667 = vmax.f32 %v9653, %v9637
      %v9668 = vmax.f32 %v9654, %v9638
      %v9669 = vmax.f32 %v9655, %v9641
      %v9670 = vmax.f32 %v9656, %v9642
      %9671 = vst [vmem:[#allocation2] sm:$0xff] %v9657
      %9672 = vst [vmem:[#allocation2 + $0x8] sm:$0xff] %v9658
      %9673 = vst [vmem:[#allocation2 + $0x10] sm:$0xff] %v9659
      %9674 = vst [vmem:[#allocation2 + $0x18] sm:$0xff] %v9660
      %9675 = vst [vmem:[#allocation2 + $0x20] sm:$0xff] %v9661
      %9676 = vst [vmem:[#allocation2 + $0x28] sm:$0xff] %v9662
      %9677 = vst [vmem:[#allocation2 + $0x30] sm:$0xff] %v9663
      %9678 = vst [vmem:[#allocation2 + $0x38] sm:$0xff] %v9664
      %9679 = vst [vmem:[#allocation2 + $0x40] sm:$0xff] %v9665
      %9680 = vst [vmem:[#allocation2 + $0x48] sm:$0xff] %v9666
      %9681 = vst [vmem:[#allocation2 + $0x50] sm:$0xff] %v9667
      %9682 = vst [vmem:[#allocation2 + $0x58] sm:$0xff] %v9668
      %9683 = vst [vmem:[#allocation2 + $0x60] sm:$0xff] %v9669
      %9684 = vst [vmem:[#allocation2 + $0x68] sm:$0xff] %v9670
      %v9685 = vld [vmem:[#allocation2] ss:$2 sm:$0x7f]
      %s9686 = scalar_lea.vmem [#allocation2], 16
      %v9687 = vld [vmem:[%s9686] ss:$2 sm:$0x7f]
      %s9688 = scalar_lea.vmem [#allocation2], 32
      %v9689 = vld [vmem:[%s9688] ss:$2 sm:$0x7f]
      %s9690 = scalar_lea.vmem [#allocation2], 48
      %v9691 = vld [vmem:[%s9690] ss:$2 sm:$0x7f]
      %s9692 = scalar_lea.vmem [#allocation2], 64
      %v9693 = vld [vmem:[%s9692] ss:$2 sm:$0x7f]
      %s9694 = scalar_lea.vmem [#allocation2], 80
      %v9695 = vld [vmem:[%s9694] ss:$2 sm:$0x7f]
      %s9696 = scalar_lea.vmem [#allocation2], 96
      %v9697 = vld [vmem:[%s9696] ss:$2 sm:$0x7f]
      %s9698 = scalar_lea.vmem [#allocation2], 1
      %v9699 = vld [vmem:[%s9698] ss:$2 sm:$0x7f]
      %s9700 = scalar_lea.vmem [#allocation2], 17
      %v9701 = vld [vmem:[%s9700] ss:$2 sm:$0x7f]
      %s9702 = scalar_lea.vmem [#allocation2], 33
      %v9703 = vld [vmem:[%s9702] ss:$2 sm:$0x7f]
      %s9704 = scalar_lea.vmem [#allocation2], 49
      %v9705 = vld [vmem:[%s9704] ss:$2 sm:$0x7f]
      %s9706 = scalar_lea.vmem [#allocation2], 65
      %v9707 = vld [vmem:[%s9706] ss:$2 sm:$0x7f]
      %s9708 = scalar_lea.vmem [#allocation2], 81
      %v9709 = vld [vmem:[%s9708] ss:$2 sm:$0x7f]
      %s9710 = scalar_lea.vmem [#allocation2], 97
      %v9711 = vld [vmem:[%s9710] ss:$2 sm:$0x7f]
      %s9712 = scalar_lea.vmem [#allocation2], 2
      %v9713 = vld [vmem:[%s9712] ss:$2 sm:$0x7f]
      %s9714 = scalar_lea.vmem [#allocation2], 18
      %v9715 = vld [vmem:[%s9714] ss:$2 sm:$0x7f]
      %s9716 = scalar_lea.vmem [#allocation2], 34
      %v9717 = vld [vmem:[%s9716] ss:$2 sm:$0x7f]
      %s9718 = scalar_lea.vmem [#allocation2], 50
      %v9719 = vld [vmem:[%s9718] ss:$2 sm:$0x7f]
      %s9720 = scalar_lea.vmem [#allocation2], 66
      %v9721 = vld [vmem:[%s9720] ss:$2 sm:$0x7f]
      %s9722 = scalar_lea.vmem [#allocation2], 82
      %v9723 = vld [vmem:[%s9722] ss:$2 sm:$0x7f]
      %s9724 = scalar_lea.vmem [#allocation2], 98
      %v9725 = vld [vmem:[%s9724] ss:$2 sm:$0x7f]
      %v9726 = vmax.f32 %v9685, %v9699
      %v9727 = vmax.f32 %v9687, %v9701
      %v9728 = vmax.f32 %v9689, %v9703
      %v9729 = vmax.f32 %v9691, %v9705
      %v9730 = vmax.f32 %v9693, %v9707
      %v9731 = vmax.f32 %v9695, %v9709
      %v9732 = vmax.f32 %v9697, %v9711
      %v9733 = vmax.f32 %v9726, %v9713
      %v9734 = vmax.f32 %v9727, %v9715
      %v9735 = vmax.f32 %v9728, %v9717
      %v9736 = vmax.f32 %v9729, %v9719
      %v9737 = vmax.f32 %v9730, %v9721
      %v9738 = vmax.f32 %v9731, %v9723
      %v9739 = vmax.f32 %v9732, %v9725
      %9740 = vst [vmem:[%s206] sm:$0x7f] %v9733
      %9741 = vst [vmem:[%s206 + $0x8] sm:$0x7f] %v9734
      %9742 = vst [vmem:[%s206 + $0x10] sm:$0x7f] %v9735
      %9743 = vst [vmem:[%s206 + $0x18] sm:$0x7f] %v9736
      %9744 = vst [vmem:[%s206 + $0x20] sm:$0x7f] %v9737
      %9745 = vst [vmem:[%s206 + $0x28] sm:$0x7f] %v9738
      %9746 = vst [vmem:[%s206 + $0x30] sm:$0x7f] %v9739
      %p9747 = scmp.lt.s32.totalorder %s18, 1
      %s9748 = scalar_select %p9747, %s18, 1
      %p9749 = scmp.lt.s32.totalorder %s19, 0
      %s9750 = scalar_select %p9749, %s19, 0
      %s9751 = smul.addr %s9750, 7
      %s9752 = smul.addr %s9748, 7
      %s9753 = sadd.s32 %s9751, %s9752
      %s9754 = smul.addr %s9753, 8
      %s9755 = scalar_lea.vmem %s3, %s9754
      // Predicated region
      $region33: #{tpu_custom_call.1} parent=31 // pred_check
        %p9756 = pneg %p116
      $region34: #{tpu_custom_call.1} parent=31 // pred_check_branch
        %9758 = sbr.rel (%p9756) target = $region36
      $region35: #{tpu_custom_call.1} parent=31 // pred_region
        _
      $region36: #{tpu_custom_call.1} parent=31 // pred_fallthru
        _
    $region32: #{tpu_custom_call.1} parent=5 // pred_fallthru
      _
    %p9759 = scmp.le.s32.totalorder 2, %s9
    // Predicated region
    $region37: #{tpu_custom_call.1} parent=5 // pred_check
      %p9760 = pneg %p9759
    $region38: #{tpu_custom_call.1} parent=5 // pred_check_branch
      %9762 = sbr.rel (%p9760) target = $region40
    $region39: #{tpu_custom_call.1} parent=5 // pred_region
      %s9763 = ssub.s32 %s9, 2
      // Predicated region
      $region41: #{tpu_custom_call.1} parent=39 // pred_check
        %p9764 = pneg %p122
      $region42: #{tpu_custom_call.1} parent=39 // pred_check_branch
        %9766 = sbr.rel (%p9764) target = $region44
      $region43: #{tpu_custom_call.1} parent=39 // pred_region
        %p9767 = scmp.lt.s32.totalorder %s20, 1
        %s9768 = scalar_select %p9767, %s20, 1
        %p9769 = scmp.lt.s32.totalorder %s21, 0
        %s9770 = scalar_select %p9769, %s21, 0
        %s9771 = smul.addr %s9770, 7
        %s9772 = smul.addr %s9768, 7
        %s9773 = sadd.s32 %s9771, %s9772
        %s9774 = smul.addr %s9773, 8
        %s9775 = scalar_lea.vmem %s3, %s9774
      $region44: #{tpu_custom_call.1} parent=39 // pred_fallthru
        _
    $region40: #{tpu_custom_call.1} parent=5 // pred_fallthru
      _
  $region6: #{tpu_custom_call.1} parent=0 // loop_footer
    %s13 = sadd.s32 1, %s9
  $region7: #{tpu_custom_call.1} parent=0 // loop_footer_branch
    %8 = sbr.rel target = $region3
  $region8: #{tpu_custom_call.1} parent=0 // loop_exit
    _

</llo_original>
